<compile_context>
chip_gen: v7x
topology: tpu7x:2x2x1
jax: 0.10.0
libtpu: 0.0.40
codegen_flags: <defaults>
</compile_context>

<pallas_src>
import numpy as np
import jax
import jax.numpy as jnp
from jax import lax
from jax.experimental import pallas as pl
from jax.experimental.pallas import tpu as pltpu

# ----------------------------- problem sizes -------------------------------
B, C, H, W = 2, 4, 16, 16          # batch, channels(=width), spatial
M1 = M2 = C                        # Fourier modes kept (== width)
HW = H * W
CHW = C * HW                       # 1024
R = C * 2 * M1 * M2 * 2            # 256 packed (re,im) truncated rfft2 modes
F32 = jnp.float32
BF16 = jnp.bfloat16

_VMEM = pl.BlockSpec(memory_space=pltpu.MemorySpace.VMEM)
_SMEM = pl.BlockSpec(memory_space=pltpu.MemorySpace.SMEM)


# ------------------------------ fused kernel --------------------------------
def _fin_fused_kernel(x_ref, v_ref, wab_ref,
                      wA_ref, bA_ref, wB_ref, bB_ref,
                      wc_ref, bc_ref, ww1_ref, bw1_ref, o_ref):
    """Entire FIN forward in one VMEM-resident program."""

    # Hoist every SMEM scalar read ONCE; the fori_loop below is unrolled 4x
    # and JAX does not CSE re-emitted loads/broadcasts.
    def load_conv(w_ref, b_ref):
        w = [[w_ref[o, i] for i in range(C)] for o in range(C)]
        b = [b_ref[0, o] for o in range(C)]
        return w, b

    wA, bA = load_conv(wA_ref, bA_ref)      # SpectralConv2d A  .con
    wB, bB = load_conv(wB_ref, bB_ref)      # SpectralConv2d B  .con
    wc, bc = load_conv(wc_ref, bc_ref)      # FIN.conv2 ∘ conv1 (exact fold)
    w1, b1 = load_conv(ww1_ref, bw1_ref)    # fno.w1

    v_bf = v_ref[...]                       # (CHW, R)     bf16, shared projection
    wab_bf = wab_ref[...]                   # (R, 2*CHW)   bf16, [branchA | branchB]

    def chan_conv(v, w, b):
        # 1x1 channel conv in channel-major layout: Cout x Cin scalar-broadcast
        # FMAs on (B, HW) lane-dense slices (exact f32 VPU work; MXU stays free).
        cols = []
        for o in range(C):
            acc = v[:, 0:HW] * w[o][0]
            for i in range(1, C):
                acc = acc + v[:, i * HW:(i + 1) * HW] * w[o][i]
            cols.append(acc + b[o])
        return jnp.concatenate(cols, axis=1)

    def prelu(z):                           # fresh nn.PReLU() every forward -> slope 0.25
        return jnp.where(z >= 0, z, 0.25 * z)

    x0 = x_ref[...]                                     # (B, CHW) f32; FIN residual
    t = chan_conv(x0, wc, bc)                           # head: conv2 ∘ conv1

    def fno_iter(_, t):
        # Spectral path, low-rank factored:
        #   modes          = trunc-rfft2(t)     -> (B,CHW)x(CHW,R)   MXU matmul
        #   [specA|specB]  = mode-mix ∘ irfft2  -> (B,R)x(R,2*CHW)   MXU matmul
        m = jnp.dot(t.astype(BF16), v_bf, preferred_element_type=jnp.float32)
        s = jnp.dot(m.astype(BF16), wab_bf, preferred_element_type=jnp.float32)
        sa = prelu(s[:, :CHW] + chan_conv(t, wA, bA))   # + .con conv, PReLU (branch A)
        sb = prelu(s[:, CHW:] + chan_conv(t, wB, bB))   # + .con conv, PReLU (branch B)
        # FNO2d: x5 = w1(conv0(x) + conv1(x) + x) + x   (lone w1(x) is dead code)
        return chan_conv(sa + sb + t, w1, b1) + t

    t = lax.fori_loop(0, 4, fno_iter, t, unroll=True)   # same self.fno applied 4x
    o_ref[...] = chan_conv(t, wc, bc) + x0              # tail conv2 ∘ conv1 + residual


# ------------------------------- FIN forward --------------------------------
def fin_forward(x_nchw, P):
    b_, c_, h_, w_ = x_nchw.shape
    xv = x_nchw.reshape(b_, c_ * h_ * w_)               # channel-major flatten (c, h, w)
    out = pl.pallas_call(
        _fin_fused_kernel,
        out_shape=jax.ShapeDtypeStruct((b_, c_ * h_ * w_), F32),
        in_specs=[_VMEM, _VMEM, _VMEM,
                  _SMEM, _SMEM, _SMEM, _SMEM, _SMEM, _SMEM, _SMEM, _SMEM],
        out_specs=_VMEM,
    )(xv, P['V'], P['Wab'],
      P['wA'], P['bA'], P['wB'], P['bB'],
      P['wc'], P['bc'], P['ww1'], P['bw1'])
    return out.reshape(b_, c_, h_, w_)


# --------------------- setup: exact folding of linear maps -------------------
def _fold_mode_projection():
    """V (CHW, R): channel-major x -> packed (re,im) truncated rfft2 modes.

    Built in float64 by pushing the identity basis through rfft2 -> exact.
    Shared by both spectral branches.
    """
    basis = np.eye(CHW, dtype=np.float64).reshape(CHW, C, H, W)
    bft = np.fft.rfft2(basis)                            # (CHW, C, H, W//2+1)
    top = bft[:, :, :M1, :M2]
    bot = bft[:, :, H - M1:, :M2]
    stacked = np.stack([top, bot], axis=2)               # (CHW, C, 2, M1, M2)
    packed = np.stack([stacked.real, stacked.imag], axis=-1)
    return packed.reshape(CHW, R)                        # float64


def _fold_mode_reconstruction(sp):
    """W_branch (R, CHW): packed modes -> irfft2(embed(mode-mix(modes))).

    Built in float64 via the identity basis of the 256-dim packed-mode space;
    the composition V @ W_branch equals the exact spectral branch (con conv and
    its bias are applied separately on the VPU inside the kernel).
    """
    w1c = np.asarray(sp['w1r'], np.float64) + 1j * np.asarray(sp['w1i'], np.float64)
    w2c = np.asarray(sp['w2r'], np.float64) + 1j * np.asarray(sp['w2i'], np.float64)
    eye = np.eye(R, dtype=np.float64).reshape(R, C, 2, M1, M2, 2)
    top_c = eye[:, :, 0, :, :, 0] + 1j * eye[:, :, 0, :, :, 1]   # (R, C, M1, M2)
    bot_c = eye[:, :, 1, :, :, 0] + 1j * eye[:, :, 1, :, :, 1]
    out_ft = np.zeros((R, C, H, W // 2 + 1), np.complex128)
    out_ft[:, :, :M1, :M2] = np.einsum('bixy,ioxy->boxy', top_c, w1c)
    out_ft[:, :, H - M1:, :M2] = np.einsum('bixy,ioxy->boxy', bot_c, w2c)
    y = np.fft.irfft2(out_ft, s=(H, W))                          # (R, C, H, W)
    return y.reshape(R, CHW)                                     # float64


def _fold_head_tail_conv(c1w, c1b, c2w, c2b):
    # conv2(conv1(x)) == (W2@W1) x + (W2@b1 + b2) exactly (no nonlinearity between).
    w = np.asarray(c2w, np.float64) @ np.asarray(c1w, np.float64)
    b = np.asarray(c2w, np.float64) @ np.asarray(c1b, np.float64) + np.asarray(c2b, np.float64)
    return jnp.asarray(w, F32), jnp.asarray(b[None, :], F32)


def _to_bf16(a64):
    return jnp.asarray(np.asarray(a64, np.float32), BF16)


# ------------------------------ JAX reference -------------------------------
def _conv1x1_ref(x, w, b):
    return jnp.einsum('oi,bihw->bohw', w, x) + b[None, :, None, None]


def _spectral_ref(x, p):
    w1c = p['w1r'] + 1j * p['w1i']
    w2c = p['w2r'] + 1j * p['w2i']
    x_ft = jnp.fft.rfft2(x)
    out_ft = jnp.zeros((x.shape[0], C, H, W // 2 + 1), jnp.complex64)
    out_ft = out_ft.at[:, :, :M1, :M2].set(
        jnp.einsum('bixy,ioxy->boxy', x_ft[:, :, :M1, :M2], w1c))
    out_ft = out_ft.at[:, :, H - M1:, :M2].set(
        jnp.einsum('bixy,ioxy->boxy', x_ft[:, :, H - M1:, :M2], w2c))
    y = jnp.fft.irfft2(out_ft, s=(H, W))
    z = y + _conv1x1_ref(x, p['cw'], p['cb'])
    return jnp.where(z >= 0, z, 0.25 * z)


def _fin_ref(x, raw):
    def fno(x):
        sa = _spectral_ref(x, raw['spA'])
        sb = _spectral_ref(x, raw['spB'])
        return _conv1x1_ref(sa + sb + x, raw['w1w'], raw['w1b']) + x
    res = x
    x = _conv1x1_ref(x, raw['c1w'], raw['c1b'])
    x = _conv1x1_ref(x, raw['c2w'], raw['c2b'])
    for _ in range(4):
        x = fno(x)
    x = _conv1x1_ref(x, raw['c1w'], raw['c1b'])
    x = _conv1x1_ref(x, raw['c2w'], raw['c2b'])
    return x + res


# ----------------------------------- main ------------------------------------
if __name__ == "__main__":
    ks = jax.random.split(jax.random.PRNGKey(0), 8)
    x = jax.random.normal(ks[0], (B, C, H, W), F32)

    def conv_init(kk, cin, cout):
        bound = 1.0 / np.sqrt(cin)
        kw, kb = jax.random.split(kk)
        w = jax.random.uniform(kw, (cout, cin), F32, -bound, bound)   # torch layout (out, in)
        b = jax.random.uniform(kb, (cout,), F32, -bound, bound)
        return w, b

    def spec_init(kk):
        scale = 1.0 / (C * C)
        k1, k2, k3, k4, k5 = jax.random.split(kk, 5)
        cw, cb = conv_init(k5, C, C)
        return dict(
            w1r=scale * jax.random.uniform(k1, (C, C, M1, M2), F32),
            w1i=scale * jax.random.uniform(k2, (C, C, M1, M2), F32),
            w2r=scale * jax.random.uniform(k3, (C, C, M1, M2), F32),
            w2i=scale * jax.random.uniform(k4, (C, C, M1, M2), F32),
            cw=cw, cb=cb)

    c1w, c1b = conv_init(ks[1], C, C)     # FIN.conv1 (reused at start and end)
    c2w, c2b = conv_init(ks[2], C, C)     # FIN.conv2 (reused at start and end)
    spA = spec_init(ks[3])                # fno.conv0 (SpectralConv2d)
    spB = spec_init(ks[4])                # fno.conv1 (SpectralConv2d)
    w1w, w1b = conv_init(ks[5], C, C)     # fno.w1

    raw = dict(c1w=c1w, c1b=c1b, c2w=c2w, c2b=c2b, spA=spA, spB=spB, w1w=w1w, w1b=w1b)

    # ---- exact (float64) folding of all fixed linear maps, then bf16 storage ----
    V64 = _fold_mode_projection()                          # shared trunc-rfft2 projection
    WA64 = _fold_mode_reconstruction(spA)                  # branch A: mode-mix ∘ irfft2
    WB64 = _fold_mode_reconstruction(spB)                  # branch B: mode-mix ∘ irfft2
    wc, bc = _fold_head_tail_conv(c1w, c1b, c2w, c2b)

    P = dict(
        V=_to_bf16(V64),                                                  # (1024, 256)  bf16
        Wab=_to_bf16(np.concatenate([WA64, WB64], axis=1)),               # (256, 2048)  bf16
        wA=jnp.asarray(spA['cw'], F32), bA=jnp.asarray(spA['cb'], F32)[None, :],
        wB=jnp.asarray(spB['cw'], F32), bB=jnp.asarray(spB['cb'], F32)[None, :],
        wc=wc, bc=bc,
        ww1=jnp.asarray(w1w, F32), bw1=jnp.asarray(w1b, F32)[None, :],
    )

    out = jax.block_until_ready(jax.jit(fin_forward)(x, P))
    ref = jax.block_until_ready(_fin_ref(x, raw))

    if out.shape != (B, C, H, W):
        raise RuntimeError(f"bad output shape {out.shape}")
    err = float(jnp.max(jnp.abs(out - ref)))
    scale = max(1.0, float(jnp.max(jnp.abs(ref))))
    # 2% of output scale: covers bf16-stored spectral matrices / bf16 MXU operand
    # passes compounded over the 4 stacked FNO iterations, while still catching
    # any semantic error (which would be O(1)).
    if err > 2e-2 * scale:
        raise RuntimeError(f"Pallas FIN mismatch vs JAX reference: "
                           f"max abs err {err:.3e}, ref scale {scale:.3e}")
    print("KERNEL_OK")
</pallas_src>

<mosaic_0001>
module attributes {stable_mosaic.version = 11 : i64} {
  func.func @_fin_fused_kernel(%arg0: memref<2x1024xf32, #tpu.memory_space<vmem>>, %arg1: memref<1024x256xbf16, #tpu.memory_space<vmem>>, %arg2: memref<256x2048xbf16, #tpu.memory_space<vmem>>, %arg3: memref<4x4xf32, #tpu.memory_space<smem>>, %arg4: memref<1x4xf32, #tpu.memory_space<smem>>, %arg5: memref<4x4xf32, #tpu.memory_space<smem>>, %arg6: memref<1x4xf32, #tpu.memory_space<smem>>, %arg7: memref<4x4xf32, #tpu.memory_space<smem>>, %arg8: memref<1x4xf32, #tpu.memory_space<smem>>, %arg9: memref<4x4xf32, #tpu.memory_space<smem>>, %arg10: memref<1x4xf32, #tpu.memory_space<smem>>, %arg11: memref<2x1024xf32, #tpu.memory_space<vmem>>) attributes {dimension_semantics = [], scalar_prefetch = 0 : i64, scratch_operands = 0 : i64, tpu.core_type = #tpu.core_type<tc>} {
    %c0 = arith.constant 0 : index
    %c0_0 = arith.constant 0 : index
    %0 = memref.load %arg3[%c0, %c0_0] : memref<4x4xf32, #tpu.memory_space<smem>>
    %c0_1 = arith.constant 0 : index
    %c1 = arith.constant 1 : index
    %1 = memref.load %arg3[%c0_1, %c1] : memref<4x4xf32, #tpu.memory_space<smem>>
    %c0_2 = arith.constant 0 : index
    %c2 = arith.constant 2 : index
    %2 = memref.load %arg3[%c0_2, %c2] : memref<4x4xf32, #tpu.memory_space<smem>>
    %c0_3 = arith.constant 0 : index
    %c3 = arith.constant 3 : index
    %3 = memref.load %arg3[%c0_3, %c3] : memref<4x4xf32, #tpu.memory_space<smem>>
    %c1_4 = arith.constant 1 : index
    %c0_5 = arith.constant 0 : index
    %4 = memref.load %arg3[%c1_4, %c0_5] : memref<4x4xf32, #tpu.memory_space<smem>>
    %c1_6 = arith.constant 1 : index
    %c1_7 = arith.constant 1 : index
    %5 = memref.load %arg3[%c1_6, %c1_7] : memref<4x4xf32, #tpu.memory_space<smem>>
    %c1_8 = arith.constant 1 : index
    %c2_9 = arith.constant 2 : index
    %6 = memref.load %arg3[%c1_8, %c2_9] : memref<4x4xf32, #tpu.memory_space<smem>>
    %c1_10 = arith.constant 1 : index
    %c3_11 = arith.constant 3 : index
    %7 = memref.load %arg3[%c1_10, %c3_11] : memref<4x4xf32, #tpu.memory_space<smem>>
    %c2_12 = arith.constant 2 : index
    %c0_13 = arith.constant 0 : index
    %8 = memref.load %arg3[%c2_12, %c0_13] : memref<4x4xf32, #tpu.memory_space<smem>>
    %c2_14 = arith.constant 2 : index
    %c1_15 = arith.constant 1 : index
    %9 = memref.load %arg3[%c2_14, %c1_15] : memref<4x4xf32, #tpu.memory_space<smem>>
    %c2_16 = arith.constant 2 : index
    %c2_17 = arith.constant 2 : index
    %10 = memref.load %arg3[%c2_16, %c2_17] : memref<4x4xf32, #tpu.memory_space<smem>>
    %c2_18 = arith.constant 2 : index
    %c3_19 = arith.constant 3 : index
    %11 = memref.load %arg3[%c2_18, %c3_19] : memref<4x4xf32, #tpu.memory_space<smem>>
    %c3_20 = arith.constant 3 : index
    %c0_21 = arith.constant 0 : index
    %12 = memref.load %arg3[%c3_20, %c0_21] : memref<4x4xf32, #tpu.memory_space<smem>>
    %c3_22 = arith.constant 3 : index
    %c1_23 = arith.constant 1 : index
    %13 = memref.load %arg3[%c3_22, %c1_23] : memref<4x4xf32, #tpu.memory_space<smem>>
    %c3_24 = arith.constant 3 : index
    %c2_25 = arith.constant 2 : index
    %14 = memref.load %arg3[%c3_24, %c2_25] : memref<4x4xf32, #tpu.memory_space<smem>>
    %c3_26 = arith.constant 3 : index
    %c3_27 = arith.constant 3 : index
    %15 = memref.load %arg3[%c3_26, %c3_27] : memref<4x4xf32, #tpu.memory_space<smem>>
    %c0_28 = arith.constant 0 : index
    %c0_29 = arith.constant 0 : index
    %16 = memref.load %arg4[%c0_28, %c0_29] : memref<1x4xf32, #tpu.memory_space<smem>>
    %c0_30 = arith.constant 0 : index
    %c1_31 = arith.constant 1 : index
    %17 = memref.load %arg4[%c0_30, %c1_31] : memref<1x4xf32, #tpu.memory_space<smem>>
    %c0_32 = arith.constant 0 : index
    %c2_33 = arith.constant 2 : index
    %18 = memref.load %arg4[%c0_32, %c2_33] : memref<1x4xf32, #tpu.memory_space<smem>>
    %c0_34 = arith.constant 0 : index
    %c3_35 = arith.constant 3 : index
    %19 = memref.load %arg4[%c0_34, %c3_35] : memref<1x4xf32, #tpu.memory_space<smem>>
    %c0_36 = arith.constant 0 : index
    %c0_37 = arith.constant 0 : index
    %20 = memref.load %arg5[%c0_36, %c0_37] : memref<4x4xf32, #tpu.memory_space<smem>>
    %c0_38 = arith.constant 0 : index
    %c1_39 = arith.constant 1 : index
    %21 = memref.load %arg5[%c0_38, %c1_39] : memref<4x4xf32, #tpu.memory_space<smem>>
    %c0_40 = arith.constant 0 : index
    %c2_41 = arith.constant 2 : index
    %22 = memref.load %arg5[%c0_40, %c2_41] : memref<4x4xf32, #tpu.memory_space<smem>>
    %c0_42 = arith.constant 0 : index
    %c3_43 = arith.constant 3 : index
    %23 = memref.load %arg5[%c0_42, %c3_43] : memref<4x4xf32, #tpu.memory_space<smem>>
    %c1_44 = arith.constant 1 : index
    %c0_45 = arith.constant 0 : index
    %24 = memref.load %arg5[%c1_44, %c0_45] : memref<4x4xf32, #tpu.memory_space<smem>>
    %c1_46 = arith.constant 1 : index
    %c1_47 = arith.constant 1 : index
    %25 = memref.load %arg5[%c1_46, %c1_47] : memref<4x4xf32, #tpu.memory_space<smem>>
    %c1_48 = arith.constant 1 : index
    %c2_49 = arith.constant 2 : index
    %26 = memref.load %arg5[%c1_48, %c2_49] : memref<4x4xf32, #tpu.memory_space<smem>>
    %c1_50 = arith.constant 1 : index
    %c3_51 = arith.constant 3 : index
    %27 = memref.load %arg5[%c1_50, %c3_51] : memref<4x4xf32, #tpu.memory_space<smem>>
    %c2_52 = arith.constant 2 : index
    %c0_53 = arith.constant 0 : index
    %28 = memref.load %arg5[%c2_52, %c0_53] : memref<4x4xf32, #tpu.memory_space<smem>>
    %c2_54 = arith.constant 2 : index
    %c1_55 = arith.constant 1 : index
    %29 = memref.load %arg5[%c2_54, %c1_55] : memref<4x4xf32, #tpu.memory_space<smem>>
    %c2_56 = arith.constant 2 : index
    %c2_57 = arith.constant 2 : index
    %30 = memref.load %arg5[%c2_56, %c2_57] : memref<4x4xf32, #tpu.memory_space<smem>>
    %c2_58 = arith.constant 2 : index
    %c3_59 = arith.constant 3 : index
    %31 = memref.load %arg5[%c2_58, %c3_59] : memref<4x4xf32, #tpu.memory_space<smem>>
    %c3_60 = arith.constant 3 : index
    %c0_61 = arith.constant 0 : index
    %32 = memref.load %arg5[%c3_60, %c0_61] : memref<4x4xf32, #tpu.memory_space<smem>>
    %c3_62 = arith.constant 3 : index
    %c1_63 = arith.constant 1 : index
    %33 = memref.load %arg5[%c3_62, %c1_63] : memref<4x4xf32, #tpu.memory_space<smem>>
    %c3_64 = arith.constant 3 : index
    %c2_65 = arith.constant 2 : index
    %34 = memref.load %arg5[%c3_64, %c2_65] : memref<4x4xf32, #tpu.memory_space<smem>>
    %c3_66 = arith.constant 3 : index
    %c3_67 = arith.constant 3 : index
    %35 = memref.load %arg5[%c3_66, %c3_67] : memref<4x4xf32, #tpu.memory_space<smem>>
    %c0_68 = arith.constant 0 : index
    %c0_69 = arith.constant 0 : index
    %36 = memref.load %arg6[%c0_68, %c0_69] : memref<1x4xf32, #tpu.memory_space<smem>>
    %c0_70 = arith.constant 0 : index
    %c1_71 = arith.constant 1 : index
    %37 = memref.load %arg6[%c0_70, %c1_71] : memref<1x4xf32, #tpu.memory_space<smem>>
    %c0_72 = arith.constant 0 : index
    %c2_73 = arith.constant 2 : index
    %38 = memref.load %arg6[%c0_72, %c2_73] : memref<1x4xf32, #tpu.memory_space<smem>>
    %c0_74 = arith.constant 0 : index
    %c3_75 = arith.constant 3 : index
    %39 = memref.load %arg6[%c0_74, %c3_75] : memref<1x4xf32, #tpu.memory_space<smem>>
    %c0_76 = arith.constant 0 : index
    %c0_77 = arith.constant 0 : index
    %40 = memref.load %arg7[%c0_76, %c0_77] : memref<4x4xf32, #tpu.memory_space<smem>>
    %c0_78 = arith.constant 0 : index
    %c1_79 = arith.constant 1 : index
    %41 = memref.load %arg7[%c0_78, %c1_79] : memref<4x4xf32, #tpu.memory_space<smem>>
    %c0_80 = arith.constant 0 : index
    %c2_81 = arith.constant 2 : index
    %42 = memref.load %arg7[%c0_80, %c2_81] : memref<4x4xf32, #tpu.memory_space<smem>>
    %c0_82 = arith.constant 0 : index
    %c3_83 = arith.constant 3 : index
    %43 = memref.load %arg7[%c0_82, %c3_83] : memref<4x4xf32, #tpu.memory_space<smem>>
    %c1_84 = arith.constant 1 : index
    %c0_85 = arith.constant 0 : index
    %44 = memref.load %arg7[%c1_84, %c0_85] : memref<4x4xf32, #tpu.memory_space<smem>>
    %c1_86 = arith.constant 1 : index
    %c1_87 = arith.constant 1 : index
    %45 = memref.load %arg7[%c1_86, %c1_87] : memref<4x4xf32, #tpu.memory_space<smem>>
    %c1_88 = arith.constant 1 : index
    %c2_89 = arith.constant 2 : index
    %46 = memref.load %arg7[%c1_88, %c2_89] : memref<4x4xf32, #tpu.memory_space<smem>>
    %c1_90 = arith.constant 1 : index
    %c3_91 = arith.constant 3 : index
    %47 = memref.load %arg7[%c1_90, %c3_91] : memref<4x4xf32, #tpu.memory_space<smem>>
    %c2_92 = arith.constant 2 : index
    %c0_93 = arith.constant 0 : index
    %48 = memref.load %arg7[%c2_92, %c0_93] : memref<4x4xf32, #tpu.memory_space<smem>>
    %c2_94 = arith.constant 2 : index
    %c1_95 = arith.constant 1 : index
    %49 = memref.load %arg7[%c2_94, %c1_95] : memref<4x4xf32, #tpu.memory_space<smem>>
    %c2_96 = arith.constant 2 : index
    %c2_97 = arith.constant 2 : index
    %50 = memref.load %arg7[%c2_96, %c2_97] : memref<4x4xf32, #tpu.memory_space<smem>>
    %c2_98 = arith.constant 2 : index
    %c3_99 = arith.constant 3 : index
    %51 = memref.load %arg7[%c2_98, %c3_99] : memref<4x4xf32, #tpu.memory_space<smem>>
    %c3_100 = arith.constant 3 : index
    %c0_101 = arith.constant 0 : index
    %52 = memref.load %arg7[%c3_100, %c0_101] : memref<4x4xf32, #tpu.memory_space<smem>>
    %c3_102 = arith.constant 3 : index
    %c1_103 = arith.constant 1 : index
    %53 = memref.load %arg7[%c3_102, %c1_103] : memref<4x4xf32, #tpu.memory_space<smem>>
    %c3_104 = arith.constant 3 : index
    %c2_105 = arith.constant 2 : index
    %54 = memref.load %arg7[%c3_104, %c2_105] : memref<4x4xf32, #tpu.memory_space<smem>>
    %c3_106 = arith.constant 3 : index
    %c3_107 = arith.constant 3 : index
    %55 = memref.load %arg7[%c3_106, %c3_107] : memref<4x4xf32, #tpu.memory_space<smem>>
    %c0_108 = arith.constant 0 : index
    %c0_109 = arith.constant 0 : index
    %56 = memref.load %arg8[%c0_108, %c0_109] : memref<1x4xf32, #tpu.memory_space<smem>>
    %c0_110 = arith.constant 0 : index
    %c1_111 = arith.constant 1 : index
    %57 = memref.load %arg8[%c0_110, %c1_111] : memref<1x4xf32, #tpu.memory_space<smem>>
    %c0_112 = arith.constant 0 : index
    %c2_113 = arith.constant 2 : index
    %58 = memref.load %arg8[%c0_112, %c2_113] : memref<1x4xf32, #tpu.memory_space<smem>>
    %c0_114 = arith.constant 0 : index
    %c3_115 = arith.constant 3 : index
    %59 = memref.load %arg8[%c0_114, %c3_115] : memref<1x4xf32, #tpu.memory_space<smem>>
    %c0_116 = arith.constant 0 : index
    %c0_117 = arith.constant 0 : index
    %60 = memref.load %arg9[%c0_116, %c0_117] : memref<4x4xf32, #tpu.memory_space<smem>>
    %c0_118 = arith.constant 0 : index
    %c1_119 = arith.constant 1 : index
    %61 = memref.load %arg9[%c0_118, %c1_119] : memref<4x4xf32, #tpu.memory_space<smem>>
    %c0_120 = arith.constant 0 : index
    %c2_121 = arith.constant 2 : index
    %62 = memref.load %arg9[%c0_120, %c2_121] : memref<4x4xf32, #tpu.memory_space<smem>>
    %c0_122 = arith.constant 0 : index
    %c3_123 = arith.constant 3 : index
    %63 = memref.load %arg9[%c0_122, %c3_123] : memref<4x4xf32, #tpu.memory_space<smem>>
    %c1_124 = arith.constant 1 : index
    %c0_125 = arith.constant 0 : index
    %64 = memref.load %arg9[%c1_124, %c0_125] : memref<4x4xf32, #tpu.memory_space<smem>>
    %c1_126 = arith.constant 1 : index
    %c1_127 = arith.constant 1 : index
    %65 = memref.load %arg9[%c1_126, %c1_127] : memref<4x4xf32, #tpu.memory_space<smem>>
    %c1_128 = arith.constant 1 : index
    %c2_129 = arith.constant 2 : index
    %66 = memref.load %arg9[%c1_128, %c2_129] : memref<4x4xf32, #tpu.memory_space<smem>>
    %c1_130 = arith.constant 1 : index
    %c3_131 = arith.constant 3 : index
    %67 = memref.load %arg9[%c1_130, %c3_131] : memref<4x4xf32, #tpu.memory_space<smem>>
    %c2_132 = arith.constant 2 : index
    %c0_133 = arith.constant 0 : index
    %68 = memref.load %arg9[%c2_132, %c0_133] : memref<4x4xf32, #tpu.memory_space<smem>>
    %c2_134 = arith.constant 2 : index
    %c1_135 = arith.constant 1 : index
    %69 = memref.load %arg9[%c2_134, %c1_135] : memref<4x4xf32, #tpu.memory_space<smem>>
    %c2_136 = arith.constant 2 : index
    %c2_137 = arith.constant 2 : index
    %70 = memref.load %arg9[%c2_136, %c2_137] : memref<4x4xf32, #tpu.memory_space<smem>>
    %c2_138 = arith.constant 2 : index
    %c3_139 = arith.constant 3 : index
    %71 = memref.load %arg9[%c2_138, %c3_139] : memref<4x4xf32, #tpu.memory_space<smem>>
    %c3_140 = arith.constant 3 : index
    %c0_141 = arith.constant 0 : index
    %72 = memref.load %arg9[%c3_140, %c0_141] : memref<4x4xf32, #tpu.memory_space<smem>>
    %c3_142 = arith.constant 3 : index
    %c1_143 = arith.constant 1 : index
    %73 = memref.load %arg9[%c3_142, %c1_143] : memref<4x4xf32, #tpu.memory_space<smem>>
    %c3_144 = arith.constant 3 : index
    %c2_145 = arith.constant 2 : index
    %74 = memref.load %arg9[%c3_144, %c2_145] : memref<4x4xf32, #tpu.memory_space<smem>>
    %c3_146 = arith.constant 3 : index
    %c3_147 = arith.constant 3 : index
    %75 = memref.load %arg9[%c3_146, %c3_147] : memref<4x4xf32, #tpu.memory_space<smem>>
    %c0_148 = arith.constant 0 : index
    %c0_149 = arith.constant 0 : index
    %76 = memref.load %arg10[%c0_148, %c0_149] : memref<1x4xf32, #tpu.memory_space<smem>>
    %c0_150 = arith.constant 0 : index
    %c1_151 = arith.constant 1 : index
    %77 = memref.load %arg10[%c0_150, %c1_151] : memref<1x4xf32, #tpu.memory_space<smem>>
    %c0_152 = arith.constant 0 : index
    %c2_153 = arith.constant 2 : index
    %78 = memref.load %arg10[%c0_152, %c2_153] : memref<1x4xf32, #tpu.memory_space<smem>>
    %c0_154 = arith.constant 0 : index
    %c3_155 = arith.constant 3 : index
    %79 = memref.load %arg10[%c0_154, %c3_155] : memref<1x4xf32, #tpu.memory_space<smem>>
    %c0_156 = arith.constant 0 : index
    %c0_157 = arith.constant 0 : index
    %80 = vector.load %arg1[%c0_156, %c0_157] : memref<1024x256xbf16, #tpu.memory_space<vmem>>, vector<1024x256xbf16>
    %c0_158 = arith.constant 0 : index
    %c0_159 = arith.constant 0 : index
    %81 = vector.load %arg2[%c0_158, %c0_159] : memref<256x2048xbf16, #tpu.memory_space<vmem>>, vector<256x2048xbf16>
    %c0_160 = arith.constant 0 : index
    %c0_161 = arith.constant 0 : index
    %82 = vector.load %arg0[%c0_160, %c0_161] : memref<2x1024xf32, #tpu.memory_space<vmem>>, vector<2x1024xf32>
    %83 = vector.extract_strided_slice %82 {offsets = [0, 0], sizes = [2, 256], strides = [1, 1]} : vector<2x1024xf32> to vector<2x256xf32>
    %84 = vector.broadcast %40 : f32 to vector<2x256xf32>
    %85 = arith.mulf %83, %84 : vector<2x256xf32>
    %86 = vector.extract_strided_slice %82 {offsets = [0, 256], sizes = [2, 256], strides = [1, 1]} : vector<2x1024xf32> to vector<2x256xf32>
    %87 = vector.broadcast %41 : f32 to vector<2x256xf32>
    %88 = arith.mulf %86, %87 : vector<2x256xf32>
    %89 = arith.addf %85, %88 : vector<2x256xf32>
    %90 = vector.extract_strided_slice %82 {offsets = [0, 512], sizes = [2, 256], strides = [1, 1]} : vector<2x1024xf32> to vector<2x256xf32>
    %91 = vector.broadcast %42 : f32 to vector<2x256xf32>
    %92 = arith.mulf %90, %91 : vector<2x256xf32>
    %93 = arith.addf %89, %92 : vector<2x256xf32>
    %94 = vector.extract_strided_slice %82 {offsets = [0, 768], sizes = [2, 256], strides = [1, 1]} : vector<2x1024xf32> to vector<2x256xf32>
    %95 = vector.broadcast %43 : f32 to vector<2x256xf32>
    %96 = arith.mulf %94, %95 : vector<2x256xf32>
    %97 = arith.addf %93, %96 : vector<2x256xf32>
    %98 = vector.broadcast %56 : f32 to vector<2x256xf32>
    %99 = arith.addf %97, %98 : vector<2x256xf32>
    %100 = vector.extract_strided_slice %82 {offsets = [0, 0], sizes = [2, 256], strides = [1, 1]} : vector<2x1024xf32> to vector<2x256xf32>
    %101 = vector.broadcast %44 : f32 to vector<2x256xf32>
    %102 = arith.mulf %100, %101 : vector<2x256xf32>
    %103 = vector.extract_strided_slice %82 {offsets = [0, 256], sizes = [2, 256], strides = [1, 1]} : vector<2x1024xf32> to vector<2x256xf32>
    %104 = vector.broadcast %45 : f32 to vector<2x256xf32>
    %105 = arith.mulf %103, %104 : vector<2x256xf32>
    %106 = arith.addf %102, %105 : vector<2x256xf32>
    %107 = vector.extract_strided_slice %82 {offsets = [0, 512], sizes = [2, 256], strides = [1, 1]} : vector<2x1024xf32> to vector<2x256xf32>
    %108 = vector.broadcast %46 : f32 to vector<2x256xf32>
    %109 = arith.mulf %107, %108 : vector<2x256xf32>
    %110 = arith.addf %106, %109 : vector<2x256xf32>
    %111 = vector.extract_strided_slice %82 {offsets = [0, 768], sizes = [2, 256], strides = [1, 1]} : vector<2x1024xf32> to vector<2x256xf32>
    %112 = vector.broadcast %47 : f32 to vector<2x256xf32>
    %113 = arith.mulf %111, %112 : vector<2x256xf32>
    %114 = arith.addf %110, %113 : vector<2x256xf32>
    %115 = vector.broadcast %57 : f32 to vector<2x256xf32>
    %116 = arith.addf %114, %115 : vector<2x256xf32>
    %117 = vector.extract_strided_slice %82 {offsets = [0, 0], sizes = [2, 256], strides = [1, 1]} : vector<2x1024xf32> to vector<2x256xf32>
    %118 = vector.broadcast %48 : f32 to vector<2x256xf32>
    %119 = arith.mulf %117, %118 : vector<2x256xf32>
    %120 = vector.extract_strided_slice %82 {offsets = [0, 256], sizes = [2, 256], strides = [1, 1]} : vector<2x1024xf32> to vector<2x256xf32>
    %121 = vector.broadcast %49 : f32 to vector<2x256xf32>
    %122 = arith.mulf %120, %121 : vector<2x256xf32>
    %123 = arith.addf %119, %122 : vector<2x256xf32>
    %124 = vector.extract_strided_slice %82 {offsets = [0, 512], sizes = [2, 256], strides = [1, 1]} : vector<2x1024xf32> to vector<2x256xf32>
    %125 = vector.broadcast %50 : f32 to vector<2x256xf32>
    %126 = arith.mulf %124, %125 : vector<2x256xf32>
    %127 = arith.addf %123, %126 : vector<2x256xf32>
    %128 = vector.extract_strided_slice %82 {offsets = [0, 768], sizes = [2, 256], strides = [1, 1]} : vector<2x1024xf32> to vector<2x256xf32>
    %129 = vector.broadcast %51 : f32 to vector<2x256xf32>
    %130 = arith.mulf %128, %129 : vector<2x256xf32>
    %131 = arith.addf %127, %130 : vector<2x256xf32>
    %132 = vector.broadcast %58 : f32 to vector<2x256xf32>
    %133 = arith.addf %131, %132 : vector<2x256xf32>
    %134 = vector.extract_strided_slice %82 {offsets = [0, 0], sizes = [2, 256], strides = [1, 1]} : vector<2x1024xf32> to vector<2x256xf32>
    %135 = vector.broadcast %52 : f32 to vector<2x256xf32>
    %136 = arith.mulf %134, %135 : vector<2x256xf32>
    %137 = vector.extract_strided_slice %82 {offsets = [0, 256], sizes = [2, 256], strides = [1, 1]} : vector<2x1024xf32> to vector<2x256xf32>
    %138 = vector.broadcast %53 : f32 to vector<2x256xf32>
    %139 = arith.mulf %137, %138 : vector<2x256xf32>
    %140 = arith.addf %136, %139 : vector<2x256xf32>
    %141 = vector.extract_strided_slice %82 {offsets = [0, 512], sizes = [2, 256], strides = [1, 1]} : vector<2x1024xf32> to vector<2x256xf32>
    %142 = vector.broadcast %54 : f32 to vector<2x256xf32>
    %143 = arith.mulf %141, %142 : vector<2x256xf32>
    %144 = arith.addf %140, %143 : vector<2x256xf32>
    %145 = vector.extract_strided_slice %82 {offsets = [0, 768], sizes = [2, 256], strides = [1, 1]} : vector<2x1024xf32> to vector<2x256xf32>
    %146 = vector.broadcast %55 : f32 to vector<2x256xf32>
    %147 = arith.mulf %145, %146 : vector<2x256xf32>
    %148 = arith.addf %144, %147 : vector<2x256xf32>
    %149 = vector.broadcast %59 : f32 to vector<2x256xf32>
    %150 = arith.addf %148, %149 : vector<2x256xf32>
    %151 = tpu.concatenate %99, %116, %133, %150 in 1 : vector<2x256xf32>, vector<2x256xf32>, vector<2x256xf32>, vector<2x256xf32> -> vector<2x1024xf32>
    %c0_i32 = arith.constant 0 : i32
    %152 = arith.truncf %151 : vector<2x1024xf32> to vector<2x1024xbf16>
    %cst = arith.constant dense<0.000000e+00> : vector<2x256xf32>
    %153 = tpu.matmul %152, %80, %cst {dimension_numbers = #tpu.dot_dimension_numbers<[1], [0], [0], [1], [0, 0, 1, 1], [], []>} : vector<2x1024xbf16>, vector<1024x256xbf16>, vector<2x256xf32> -> vector<2x256xf32>
    %154 = arith.truncf %153 : vector<2x256xf32> to vector<2x256xbf16>
    %cst_162 = arith.constant dense<0.000000e+00> : vector<2x2048xf32>
    %155 = tpu.matmul %154, %81, %cst_162 {dimension_numbers = #tpu.dot_dimension_numbers<[1], [0], [0], [1], [0, 0, 1, 1], [], []>} : vector<2x256xbf16>, vector<256x2048xbf16>, vector<2x2048xf32> -> vector<2x2048xf32>
    %156 = vector.extract_strided_slice %155 {offsets = [0, 0], sizes = [2, 1024], strides = [1, 1]} : vector<2x2048xf32> to vector<2x1024xf32>
    %157 = vector.extract_strided_slice %151 {offsets = [0, 0], sizes = [2, 256], strides = [1, 1]} : vector<2x1024xf32> to vector<2x256xf32>
    %158 = vector.broadcast %0 : f32 to vector<2x256xf32>
    %159 = arith.mulf %157, %158 : vector<2x256xf32>
    %160 = vector.extract_strided_slice %151 {offsets = [0, 256], sizes = [2, 256], strides = [1, 1]} : vector<2x1024xf32> to vector<2x256xf32>
    %161 = vector.broadcast %1 : f32 to vector<2x256xf32>
    %162 = arith.mulf %160, %161 : vector<2x256xf32>
    %163 = arith.addf %159, %162 : vector<2x256xf32>
    %164 = vector.extract_strided_slice %151 {offsets = [0, 512], sizes = [2, 256], strides = [1, 1]} : vector<2x1024xf32> to vector<2x256xf32>
    %165 = vector.broadcast %2 : f32 to vector<2x256xf32>
    %166 = arith.mulf %164, %165 : vector<2x256xf32>
    %167 = arith.addf %163, %166 : vector<2x256xf32>
    %168 = vector.extract_strided_slice %151 {offsets = [0, 768], sizes = [2, 256], strides = [1, 1]} : vector<2x1024xf32> to vector<2x256xf32>
    %169 = vector.broadcast %3 : f32 to vector<2x256xf32>
    %170 = arith.mulf %168, %169 : vector<2x256xf32>
    %171 = arith.addf %167, %170 : vector<2x256xf32>
    %172 = vector.broadcast %16 : f32 to vector<2x256xf32>
    %173 = arith.addf %171, %172 : vector<2x256xf32>
    %174 = vector.extract_strided_slice %151 {offsets = [0, 0], sizes = [2, 256], strides = [1, 1]} : vector<2x1024xf32> to vector<2x256xf32>
    %175 = vector.broadcast %4 : f32 to vector<2x256xf32>
    %176 = arith.mulf %174, %175 : vector<2x256xf32>
    %177 = vector.extract_strided_slice %151 {offsets = [0, 256], sizes = [2, 256], strides = [1, 1]} : vector<2x1024xf32> to vector<2x256xf32>
    %178 = vector.broadcast %5 : f32 to vector<2x256xf32>
    %179 = arith.mulf %177, %178 : vector<2x256xf32>
    %180 = arith.addf %176, %179 : vector<2x256xf32>
    %181 = vector.extract_strided_slice %151 {offsets = [0, 512], sizes = [2, 256], strides = [1, 1]} : vector<2x1024xf32> to vector<2x256xf32>
    %182 = vector.broadcast %6 : f32 to vector<2x256xf32>
    %183 = arith.mulf %181, %182 : vector<2x256xf32>
    %184 = arith.addf %180, %183 : vector<2x256xf32>
    %185 = vector.extract_strided_slice %151 {offsets = [0, 768], sizes = [2, 256], strides = [1, 1]} : vector<2x1024xf32> to vector<2x256xf32>
    %186 = vector.broadcast %7 : f32 to vector<2x256xf32>
    %187 = arith.mulf %185, %186 : vector<2x256xf32>
    %188 = arith.addf %184, %187 : vector<2x256xf32>
    %189 = vector.broadcast %17 : f32 to vector<2x256xf32>
    %190 = arith.addf %188, %189 : vector<2x256xf32>
    %191 = vector.extract_strided_slice %151 {offsets = [0, 0], sizes = [2, 256], strides = [1, 1]} : vector<2x1024xf32> to vector<2x256xf32>
    %192 = vector.broadcast %8 : f32 to vector<2x256xf32>
    %193 = arith.mulf %191, %192 : vector<2x256xf32>
    %194 = vector.extract_strided_slice %151 {offsets = [0, 256], sizes = [2, 256], strides = [1, 1]} : vector<2x1024xf32> to vector<2x256xf32>
    %195 = vector.broadcast %9 : f32 to vector<2x256xf32>
    %196 = arith.mulf %194, %195 : vector<2x256xf32>
    %197 = arith.addf %193, %196 : vector<2x256xf32>
    %198 = vector.extract_strided_slice %151 {offsets = [0, 512], sizes = [2, 256], strides = [1, 1]} : vector<2x1024xf32> to vector<2x256xf32>
    %199 = vector.broadcast %10 : f32 to vector<2x256xf32>
    %200 = arith.mulf %198, %199 : vector<2x256xf32>
    %201 = arith.addf %197, %200 : vector<2x256xf32>
    %202 = vector.extract_strided_slice %151 {offsets = [0, 768], sizes = [2, 256], strides = [1, 1]} : vector<2x1024xf32> to vector<2x256xf32>
    %203 = vector.broadcast %11 : f32 to vector<2x256xf32>
    %204 = arith.mulf %202, %203 : vector<2x256xf32>
    %205 = arith.addf %201, %204 : vector<2x256xf32>
    %206 = vector.broadcast %18 : f32 to vector<2x256xf32>
    %207 = arith.addf %205, %206 : vector<2x256xf32>
    %208 = vector.extract_strided_slice %151 {offsets = [0, 0], sizes = [2, 256], strides = [1, 1]} : vector<2x1024xf32> to vector<2x256xf32>
    %209 = vector.broadcast %12 : f32 to vector<2x256xf32>
    %210 = arith.mulf %208, %209 : vector<2x256xf32>
    %211 = vector.extract_strided_slice %151 {offsets = [0, 256], sizes = [2, 256], strides = [1, 1]} : vector<2x1024xf32> to vector<2x256xf32>
    %212 = vector.broadcast %13 : f32 to vector<2x256xf32>
    %213 = arith.mulf %211, %212 : vector<2x256xf32>
    %214 = arith.addf %210, %213 : vector<2x256xf32>
    %215 = vector.extract_strided_slice %151 {offsets = [0, 512], sizes = [2, 256], strides = [1, 1]} : vector<2x1024xf32> to vector<2x256xf32>
    %216 = vector.broadcast %14 : f32 to vector<2x256xf32>
    %217 = arith.mulf %215, %216 : vector<2x256xf32>
    %218 = arith.addf %214, %217 : vector<2x256xf32>
    %219 = vector.extract_strided_slice %151 {offsets = [0, 768], sizes = [2, 256], strides = [1, 1]} : vector<2x1024xf32> to vector<2x256xf32>
    %220 = vector.broadcast %15 : f32 to vector<2x256xf32>
    %221 = arith.mulf %219, %220 : vector<2x256xf32>
    %222 = arith.addf %218, %221 : vector<2x256xf32>
    %223 = vector.broadcast %19 : f32 to vector<2x256xf32>
    %224 = arith.addf %222, %223 : vector<2x256xf32>
    %225 = tpu.concatenate %173, %190, %207, %224 in 1 : vector<2x256xf32>, vector<2x256xf32>, vector<2x256xf32>, vector<2x256xf32> -> vector<2x1024xf32>
    %226 = arith.addf %156, %225 : vector<2x1024xf32>
    %cst_163 = arith.constant 0.000000e+00 : f32
    %227 = vector.broadcast %cst_163 : f32 to vector<2x1024xf32>
    %228 = arith.cmpf oge, %226, %227 : vector<2x1024xf32>
    %cst_164 = arith.constant 2.500000e-01 : f32
    %229 = vector.broadcast %cst_164 : f32 to vector<2x1024xf32>
    %230 = arith.mulf %229, %226 : vector<2x1024xf32>
    %231 = arith.select %228, %226, %230 : vector<2x1024xi1>, vector<2x1024xf32>
    %232 = vector.extract_strided_slice %155 {offsets = [0, 1024], sizes = [2, 1024], strides = [1, 1]} : vector<2x2048xf32> to vector<2x1024xf32>
    %233 = vector.extract_strided_slice %151 {offsets = [0, 0], sizes = [2, 256], strides = [1, 1]} : vector<2x1024xf32> to vector<2x256xf32>
    %234 = vector.broadcast %20 : f32 to vector<2x256xf32>
    %235 = arith.mulf %233, %234 : vector<2x256xf32>
    %236 = vector.extract_strided_slice %151 {offsets = [0, 256], sizes = [2, 256], strides = [1, 1]} : vector<2x1024xf32> to vector<2x256xf32>
    %237 = vector.broadcast %21 : f32 to vector<2x256xf32>
    %238 = arith.mulf %236, %237 : vector<2x256xf32>
    %239 = arith.addf %235, %238 : vector<2x256xf32>
    %240 = vector.extract_strided_slice %151 {offsets = [0, 512], sizes = [2, 256], strides = [1, 1]} : vector<2x1024xf32> to vector<2x256xf32>
    %241 = vector.broadcast %22 : f32 to vector<2x256xf32>
    %242 = arith.mulf %240, %241 : vector<2x256xf32>
    %243 = arith.addf %239, %242 : vector<2x256xf32>
    %244 = vector.extract_strided_slice %151 {offsets = [0, 768], sizes = [2, 256], strides = [1, 1]} : vector<2x1024xf32> to vector<2x256xf32>
    %245 = vector.broadcast %23 : f32 to vector<2x256xf32>
    %246 = arith.mulf %244, %245 : vector<2x256xf32>
    %247 = arith.addf %243, %246 : vector<2x256xf32>
    %248 = vector.broadcast %36 : f32 to vector<2x256xf32>
    %249 = arith.addf %247, %248 : vector<2x256xf32>
    %250 = vector.extract_strided_slice %151 {offsets = [0, 0], sizes = [2, 256], strides = [1, 1]} : vector<2x1024xf32> to vector<2x256xf32>
    %251 = vector.broadcast %24 : f32 to vector<2x256xf32>
    %252 = arith.mulf %250, %251 : vector<2x256xf32>
    %253 = vector.extract_strided_slice %151 {offsets = [0, 256], sizes = [2, 256], strides = [1, 1]} : vector<2x1024xf32> to vector<2x256xf32>
    %254 = vector.broadcast %25 : f32 to vector<2x256xf32>
    %255 = arith.mulf %253, %254 : vector<2x256xf32>
    %256 = arith.addf %252, %255 : vector<2x256xf32>
    %257 = vector.extract_strided_slice %151 {offsets = [0, 512], sizes = [2, 256], strides = [1, 1]} : vector<2x1024xf32> to vector<2x256xf32>
    %258 = vector.broadcast %26 : f32 to vector<2x256xf32>
    %259 = arith.mulf %257, %258 : vector<2x256xf32>
    %260 = arith.addf %256, %259 : vector<2x256xf32>
    %261 = vector.extract_strided_slice %151 {offsets = [0, 768], sizes = [2, 256], strides = [1, 1]} : vector<2x1024xf32> to vector<2x256xf32>
    %262 = vector.broadcast %27 : f32 to vector<2x256xf32>
    %263 = arith.mulf %261, %262 : vector<2x256xf32>
    %264 = arith.addf %260, %263 : vector<2x256xf32>
    %265 = vector.broadcast %37 : f32 to vector<2x256xf32>
    %266 = arith.addf %264, %265 : vector<2x256xf32>
    %267 = vector.extract_strided_slice %151 {offsets = [0, 0], sizes = [2, 256], strides = [1, 1]} : vector<2x1024xf32> to vector<2x256xf32>
    %268 = vector.broadcast %28 : f32 to vector<2x256xf32>
    %269 = arith.mulf %267, %268 : vector<2x256xf32>
    %270 = vector.extract_strided_slice %151 {offsets = [0, 256], sizes = [2, 256], strides = [1, 1]} : vector<2x1024xf32> to vector<2x256xf32>
    %271 = vector.broadcast %29 : f32 to vector<2x256xf32>
    %272 = arith.mulf %270, %271 : vector<2x256xf32>
    %273 = arith.addf %269, %272 : vector<2x256xf32>
    %274 = vector.extract_strided_slice %151 {offsets = [0, 512], sizes = [2, 256], strides = [1, 1]} : vector<2x1024xf32> to vector<2x256xf32>
    %275 = vector.broadcast %30 : f32 to vector<2x256xf32>
    %276 = arith.mulf %274, %275 : vector<2x256xf32>
    %277 = arith.addf %273, %276 : vector<2x256xf32>
    %278 = vector.extract_strided_slice %151 {offsets = [0, 768], sizes = [2, 256], strides = [1, 1]} : vector<2x1024xf32> to vector<2x256xf32>
    %279 = vector.broadcast %31 : f32 to vector<2x256xf32>
    %280 = arith.mulf %278, %279 : vector<2x256xf32>
    %281 = arith.addf %277, %280 : vector<2x256xf32>
    %282 = vector.broadcast %38 : f32 to vector<2x256xf32>
    %283 = arith.addf %281, %282 : vector<2x256xf32>
    %284 = vector.extract_strided_slice %151 {offsets = [0, 0], sizes = [2, 256], strides = [1, 1]} : vector<2x1024xf32> to vector<2x256xf32>
    %285 = vector.broadcast %32 : f32 to vector<2x256xf32>
    %286 = arith.mulf %284, %285 : vector<2x256xf32>
    %287 = vector.extract_strided_slice %151 {offsets = [0, 256], sizes = [2, 256], strides = [1, 1]} : vector<2x1024xf32> to vector<2x256xf32>
    %288 = vector.broadcast %33 : f32 to vector<2x256xf32>
    %289 = arith.mulf %287, %288 : vector<2x256xf32>
    %290 = arith.addf %286, %289 : vector<2x256xf32>
    %291 = vector.extract_strided_slice %151 {offsets = [0, 512], sizes = [2, 256], strides = [1, 1]} : vector<2x1024xf32> to vector<2x256xf32>
    %292 = vector.broadcast %34 : f32 to vector<2x256xf32>
    %293 = arith.mulf %291, %292 : vector<2x256xf32>
    %294 = arith.addf %290, %293 : vector<2x256xf32>
    %295 = vector.extract_strided_slice %151 {offsets = [0, 768], sizes = [2, 256], strides = [1, 1]} : vector<2x1024xf32> to vector<2x256xf32>
    %296 = vector.broadcast %35 : f32 to vector<2x256xf32>
    %297 = arith.mulf %295, %296 : vector<2x256xf32>
    %298 = arith.addf %294, %297 : vector<2x256xf32>
    %299 = vector.broadcast %39 : f32 to vector<2x256xf32>
    %300 = arith.addf %298, %299 : vector<2x256xf32>
    %301 = tpu.concatenate %249, %266, %283, %300 in 1 : vector<2x256xf32>, vector<2x256xf32>, vector<2x256xf32>, vector<2x256xf32> -> vector<2x1024xf32>
    %302 = arith.addf %232, %301 : vector<2x1024xf32>
    %cst_165 = arith.constant 0.000000e+00 : f32
    %303 = vector.broadcast %cst_165 : f32 to vector<2x1024xf32>
    %304 = arith.cmpf oge, %302, %303 : vector<2x1024xf32>
    %cst_166 = arith.constant 2.500000e-01 : f32
    %305 = vector.broadcast %cst_166 : f32 to vector<2x1024xf32>
    %306 = arith.mulf %305, %302 : vector<2x1024xf32>
    %307 = arith.select %304, %302, %306 : vector<2x1024xi1>, vector<2x1024xf32>
    %308 = arith.addf %231, %307 : vector<2x1024xf32>
    %309 = arith.addf %308, %151 : vector<2x1024xf32>
    %310 = vector.extract_strided_slice %309 {offsets = [0, 0], sizes = [2, 256], strides = [1, 1]} : vector<2x1024xf32> to vector<2x256xf32>
    %311 = vector.broadcast %60 : f32 to vector<2x256xf32>
    %312 = arith.mulf %310, %311 : vector<2x256xf32>
    %313 = vector.extract_strided_slice %309 {offsets = [0, 256], sizes = [2, 256], strides = [1, 1]} : vector<2x1024xf32> to vector<2x256xf32>
    %314 = vector.broadcast %61 : f32 to vector<2x256xf32>
    %315 = arith.mulf %313, %314 : vector<2x256xf32>
    %316 = arith.addf %312, %315 : vector<2x256xf32>
    %317 = vector.extract_strided_slice %309 {offsets = [0, 512], sizes = [2, 256], strides = [1, 1]} : vector<2x1024xf32> to vector<2x256xf32>
    %318 = vector.broadcast %62 : f32 to vector<2x256xf32>
    %319 = arith.mulf %317, %318 : vector<2x256xf32>
    %320 = arith.addf %316, %319 : vector<2x256xf32>
    %321 = vector.extract_strided_slice %309 {offsets = [0, 768], sizes = [2, 256], strides = [1, 1]} : vector<2x1024xf32> to vector<2x256xf32>
    %322 = vector.broadcast %63 : f32 to vector<2x256xf32>
    %323 = arith.mulf %321, %322 : vector<2x256xf32>
    %324 = arith.addf %320, %323 : vector<2x256xf32>
    %325 = vector.broadcast %76 : f32 to vector<2x256xf32>
    %326 = arith.addf %324, %325 : vector<2x256xf32>
    %327 = vector.extract_strided_slice %309 {offsets = [0, 0], sizes = [2, 256], strides = [1, 1]} : vector<2x1024xf32> to vector<2x256xf32>
    %328 = vector.broadcast %64 : f32 to vector<2x256xf32>
    %329 = arith.mulf %327, %328 : vector<2x256xf32>
    %330 = vector.extract_strided_slice %309 {offsets = [0, 256], sizes = [2, 256], strides = [1, 1]} : vector<2x1024xf32> to vector<2x256xf32>
    %331 = vector.broadcast %65 : f32 to vector<2x256xf32>
    %332 = arith.mulf %330, %331 : vector<2x256xf32>
    %333 = arith.addf %329, %332 : vector<2x256xf32>
    %334 = vector.extract_strided_slice %309 {offsets = [0, 512], sizes = [2, 256], strides = [1, 1]} : vector<2x1024xf32> to vector<2x256xf32>
    %335 = vector.broadcast %66 : f32 to vector<2x256xf32>
    %336 = arith.mulf %334, %335 : vector<2x256xf32>
    %337 = arith.addf %333, %336 : vector<2x256xf32>
    %338 = vector.extract_strided_slice %309 {offsets = [0, 768], sizes = [2, 256], strides = [1, 1]} : vector<2x1024xf32> to vector<2x256xf32>
    %339 = vector.broadcast %67 : f32 to vector<2x256xf32>
    %340 = arith.mulf %338, %339 : vector<2x256xf32>
    %341 = arith.addf %337, %340 : vector<2x256xf32>
    %342 = vector.broadcast %77 : f32 to vector<2x256xf32>
    %343 = arith.addf %341, %342 : vector<2x256xf32>
    %344 = vector.extract_strided_slice %309 {offsets = [0, 0], sizes = [2, 256], strides = [1, 1]} : vector<2x1024xf32> to vector<2x256xf32>
    %345 = vector.broadcast %68 : f32 to vector<2x256xf32>
    %346 = arith.mulf %344, %345 : vector<2x256xf32>
    %347 = vector.extract_strided_slice %309 {offsets = [0, 256], sizes = [2, 256], strides = [1, 1]} : vector<2x1024xf32> to vector<2x256xf32>
    %348 = vector.broadcast %69 : f32 to vector<2x256xf32>
    %349 = arith.mulf %347, %348 : vector<2x256xf32>
    %350 = arith.addf %346, %349 : vector<2x256xf32>
    %351 = vector.extract_strided_slice %309 {offsets = [0, 512], sizes = [2, 256], strides = [1, 1]} : vector<2x1024xf32> to vector<2x256xf32>
    %352 = vector.broadcast %70 : f32 to vector<2x256xf32>
    %353 = arith.mulf %351, %352 : vector<2x256xf32>
    %354 = arith.addf %350, %353 : vector<2x256xf32>
    %355 = vector.extract_strided_slice %309 {offsets = [0, 768], sizes = [2, 256], strides = [1, 1]} : vector<2x1024xf32> to vector<2x256xf32>
    %356 = vector.broadcast %71 : f32 to vector<2x256xf32>
    %357 = arith.mulf %355, %356 : vector<2x256xf32>
    %358 = arith.addf %354, %357 : vector<2x256xf32>
    %359 = vector.broadcast %78 : f32 to vector<2x256xf32>
    %360 = arith.addf %358, %359 : vector<2x256xf32>
    %361 = vector.extract_strided_slice %309 {offsets = [0, 0], sizes = [2, 256], strides = [1, 1]} : vector<2x1024xf32> to vector<2x256xf32>
    %362 = vector.broadcast %72 : f32 to vector<2x256xf32>
    %363 = arith.mulf %361, %362 : vector<2x256xf32>
    %364 = vector.extract_strided_slice %309 {offsets = [0, 256], sizes = [2, 256], strides = [1, 1]} : vector<2x1024xf32> to vector<2x256xf32>
    %365 = vector.broadcast %73 : f32 to vector<2x256xf32>
    %366 = arith.mulf %364, %365 : vector<2x256xf32>
    %367 = arith.addf %363, %366 : vector<2x256xf32>
    %368 = vector.extract_strided_slice %309 {offsets = [0, 512], sizes = [2, 256], strides = [1, 1]} : vector<2x1024xf32> to vector<2x256xf32>
    %369 = vector.broadcast %74 : f32 to vector<2x256xf32>
    %370 = arith.mulf %368, %369 : vector<2x256xf32>
    %371 = arith.addf %367, %370 : vector<2x256xf32>
    %372 = vector.extract_strided_slice %309 {offsets = [0, 768], sizes = [2, 256], strides = [1, 1]} : vector<2x1024xf32> to vector<2x256xf32>
    %373 = vector.broadcast %75 : f32 to vector<2x256xf32>
    %374 = arith.mulf %372, %373 : vector<2x256xf32>
    %375 = arith.addf %371, %374 : vector<2x256xf32>
    %376 = vector.broadcast %79 : f32 to vector<2x256xf32>
    %377 = arith.addf %375, %376 : vector<2x256xf32>
    %378 = tpu.concatenate %326, %343, %360, %377 in 1 : vector<2x256xf32>, vector<2x256xf32>, vector<2x256xf32>, vector<2x256xf32> -> vector<2x1024xf32>
    %379 = arith.addf %378, %151 : vector<2x1024xf32>
    %c1_i32 = arith.constant 1 : i32
    %380 = arith.truncf %379 : vector<2x1024xf32> to vector<2x1024xbf16>
    %cst_167 = arith.constant dense<0.000000e+00> : vector<2x256xf32>
    %381 = tpu.matmul %380, %80, %cst_167 {dimension_numbers = #tpu.dot_dimension_numbers<[1], [0], [0], [1], [0, 0, 1, 1], [], []>} : vector<2x1024xbf16>, vector<1024x256xbf16>, vector<2x256xf32> -> vector<2x256xf32>
    %382 = arith.truncf %381 : vector<2x256xf32> to vector<2x256xbf16>
    %cst_168 = arith.constant dense<0.000000e+00> : vector<2x2048xf32>
    %383 = tpu.matmul %382, %81, %cst_168 {dimension_numbers = #tpu.dot_dimension_numbers<[1], [0], [0], [1], [0, 0, 1, 1], [], []>} : vector<2x256xbf16>, vector<256x2048xbf16>, vector<2x2048xf32> -> vector<2x2048xf32>
    %384 = vector.extract_strided_slice %383 {offsets = [0, 0], sizes = [2, 1024], strides = [1, 1]} : vector<2x2048xf32> to vector<2x1024xf32>
    %385 = vector.extract_strided_slice %379 {offsets = [0, 0], sizes = [2, 256], strides = [1, 1]} : vector<2x1024xf32> to vector<2x256xf32>
    %386 = vector.broadcast %0 : f32 to vector<2x256xf32>
    %387 = arith.mulf %385, %386 : vector<2x256xf32>
    %388 = vector.extract_strided_slice %379 {offsets = [0, 256], sizes = [2, 256], strides = [1, 1]} : vector<2x1024xf32> to vector<2x256xf32>
    %389 = vector.broadcast %1 : f32 to vector<2x256xf32>
    %390 = arith.mulf %388, %389 : vector<2x256xf32>
    %391 = arith.addf %387, %390 : vector<2x256xf32>
    %392 = vector.extract_strided_slice %379 {offsets = [0, 512], sizes = [2, 256], strides = [1, 1]} : vector<2x1024xf32> to vector<2x256xf32>
    %393 = vector.broadcast %2 : f32 to vector<2x256xf32>
    %394 = arith.mulf %392, %393 : vector<2x256xf32>
    %395 = arith.addf %391, %394 : vector<2x256xf32>
    %396 = vector.extract_strided_slice %379 {offsets = [0, 768], sizes = [2, 256], strides = [1, 1]} : vector<2x1024xf32> to vector<2x256xf32>
    %397 = vector.broadcast %3 : f32 to vector<2x256xf32>
    %398 = arith.mulf %396, %397 : vector<2x256xf32>
    %399 = arith.addf %395, %398 : vector<2x256xf32>
    %400 = vector.broadcast %16 : f32 to vector<2x256xf32>
    %401 = arith.addf %399, %400 : vector<2x256xf32>
    %402 = vector.extract_strided_slice %379 {offsets = [0, 0], sizes = [2, 256], strides = [1, 1]} : vector<2x1024xf32> to vector<2x256xf32>
    %403 = vector.broadcast %4 : f32 to vector<2x256xf32>
    %404 = arith.mulf %402, %403 : vector<2x256xf32>
    %405 = vector.extract_strided_slice %379 {offsets = [0, 256], sizes = [2, 256], strides = [1, 1]} : vector<2x1024xf32> to vector<2x256xf32>
    %406 = vector.broadcast %5 : f32 to vector<2x256xf32>
    %407 = arith.mulf %405, %406 : vector<2x256xf32>
    %408 = arith.addf %404, %407 : vector<2x256xf32>
    %409 = vector.extract_strided_slice %379 {offsets = [0, 512], sizes = [2, 256], strides = [1, 1]} : vector<2x1024xf32> to vector<2x256xf32>
    %410 = vector.broadcast %6 : f32 to vector<2x256xf32>
    %411 = arith.mulf %409, %410 : vector<2x256xf32>
    %412 = arith.addf %408, %411 : vector<2x256xf32>
    %413 = vector.extract_strided_slice %379 {offsets = [0, 768], sizes = [2, 256], strides = [1, 1]} : vector<2x1024xf32> to vector<2x256xf32>
    %414 = vector.broadcast %7 : f32 to vector<2x256xf32>
    %415 = arith.mulf %413, %414 : vector<2x256xf32>
    %416 = arith.addf %412, %415 : vector<2x256xf32>
    %417 = vector.broadcast %17 : f32 to vector<2x256xf32>
    %418 = arith.addf %416, %417 : vector<2x256xf32>
    %419 = vector.extract_strided_slice %379 {offsets = [0, 0], sizes = [2, 256], strides = [1, 1]} : vector<2x1024xf32> to vector<2x256xf32>
    %420 = vector.broadcast %8 : f32 to vector<2x256xf32>
    %421 = arith.mulf %419, %420 : vector<2x256xf32>
    %422 = vector.extract_strided_slice %379 {offsets = [0, 256], sizes = [2, 256], strides = [1, 1]} : vector<2x1024xf32> to vector<2x256xf32>
    %423 = vector.broadcast %9 : f32 to vector<2x256xf32>
    %424 = arith.mulf %422, %423 : vector<2x256xf32>
    %425 = arith.addf %421, %424 : vector<2x256xf32>
    %426 = vector.extract_strided_slice %379 {offsets = [0, 512], sizes = [2, 256], strides = [1, 1]} : vector<2x1024xf32> to vector<2x256xf32>
    %427 = vector.broadcast %10 : f32 to vector<2x256xf32>
    %428 = arith.mulf %426, %427 : vector<2x256xf32>
    %429 = arith.addf %425, %428 : vector<2x256xf32>
    %430 = vector.extract_strided_slice %379 {offsets = [0, 768], sizes = [2, 256], strides = [1, 1]} : vector<2x1024xf32> to vector<2x256xf32>
    %431 = vector.broadcast %11 : f32 to vector<2x256xf32>
    %432 = arith.mulf %430, %431 : vector<2x256xf32>
    %433 = arith.addf %429, %432 : vector<2x256xf32>
    %434 = vector.broadcast %18 : f32 to vector<2x256xf32>
    %435 = arith.addf %433, %434 : vector<2x256xf32>
    %436 = vector.extract_strided_slice %379 {offsets = [0, 0], sizes = [2, 256], strides = [1, 1]} : vector<2x1024xf32> to vector<2x256xf32>
    %437 = vector.broadcast %12 : f32 to vector<2x256xf32>
    %438 = arith.mulf %436, %437 : vector<2x256xf32>
    %439 = vector.extract_strided_slice %379 {offsets = [0, 256], sizes = [2, 256], strides = [1, 1]} : vector<2x1024xf32> to vector<2x256xf32>
    %440 = vector.broadcast %13 : f32 to vector<2x256xf32>
    %441 = arith.mulf %439, %440 : vector<2x256xf32>
    %442 = arith.addf %438, %441 : vector<2x256xf32>
    %443 = vector.extract_strided_slice %379 {offsets = [0, 512], sizes = [2, 256], strides = [1, 1]} : vector<2x1024xf32> to vector<2x256xf32>
    %444 = vector.broadcast %14 : f32 to vector<2x256xf32>
    %445 = arith.mulf %443, %444 : vector<2x256xf32>
    %446 = arith.addf %442, %445 : vector<2x256xf32>
    %447 = vector.extract_strided_slice %379 {offsets = [0, 768], sizes = [2, 256], strides = [1, 1]} : vector<2x1024xf32> to vector<2x256xf32>
    %448 = vector.broadcast %15 : f32 to vector<2x256xf32>
    %449 = arith.mulf %447, %448 : vector<2x256xf32>
    %450 = arith.addf %446, %449 : vector<2x256xf32>
    %451 = vector.broadcast %19 : f32 to vector<2x256xf32>
    %452 = arith.addf %450, %451 : vector<2x256xf32>
    %453 = tpu.concatenate %401, %418, %435, %452 in 1 : vector<2x256xf32>, vector<2x256xf32>, vector<2x256xf32>, vector<2x256xf32> -> vector<2x1024xf32>
    %454 = arith.addf %384, %453 : vector<2x1024xf32>
    %cst_169 = arith.constant 0.000000e+00 : f32
    %455 = vector.broadcast %cst_169 : f32 to vector<2x1024xf32>
    %456 = arith.cmpf oge, %454, %455 : vector<2x1024xf32>
    %cst_170 = arith.constant 2.500000e-01 : f32
    %457 = vector.broadcast %cst_170 : f32 to vector<2x1024xf32>
    %458 = arith.mulf %457, %454 : vector<2x1024xf32>
    %459 = arith.select %456, %454, %458 : vector<2x1024xi1>, vector<2x1024xf32>
    %460 = vector.extract_strided_slice %383 {offsets = [0, 1024], sizes = [2, 1024], strides = [1, 1]} : vector<2x2048xf32> to vector<2x1024xf32>
    %461 = vector.extract_strided_slice %379 {offsets = [0, 0], sizes = [2, 256], strides = [1, 1]} : vector<2x1024xf32> to vector<2x256xf32>
    %462 = vector.broadcast %20 : f32 to vector<2x256xf32>
    %463 = arith.mulf %461, %462 : vector<2x256xf32>
    %464 = vector.extract_strided_slice %379 {offsets = [0, 256], sizes = [2, 256], strides = [1, 1]} : vector<2x1024xf32> to vector<2x256xf32>
    %465 = vector.broadcast %21 : f32 to vector<2x256xf32>
    %466 = arith.mulf %464, %465 : vector<2x256xf32>
    %467 = arith.addf %463, %466 : vector<2x256xf32>
    %468 = vector.extract_strided_slice %379 {offsets = [0, 512], sizes = [2, 256], strides = [1, 1]} : vector<2x1024xf32> to vector<2x256xf32>
    %469 = vector.broadcast %22 : f32 to vector<2x256xf32>
    %470 = arith.mulf %468, %469 : vector<2x256xf32>
    %471 = arith.addf %467, %470 : vector<2x256xf32>
    %472 = vector.extract_strided_slice %379 {offsets = [0, 768], sizes = [2, 256], strides = [1, 1]} : vector<2x1024xf32> to vector<2x256xf32>
    %473 = vector.broadcast %23 : f32 to vector<2x256xf32>
    %474 = arith.mulf %472, %473 : vector<2x256xf32>
    %475 = arith.addf %471, %474 : vector<2x256xf32>
    %476 = vector.broadcast %36 : f32 to vector<2x256xf32>
    %477 = arith.addf %475, %476 : vector<2x256xf32>
    %478 = vector.extract_strided_slice %379 {offsets = [0, 0], sizes = [2, 256], strides = [1, 1]} : vector<2x1024xf32> to vector<2x256xf32>
    %479 = vector.broadcast %24 : f32 to vector<2x256xf32>
    %480 = arith.mulf %478, %479 : vector<2x256xf32>
    %481 = vector.extract_strided_slice %379 {offsets = [0, 256], sizes = [2, 256], strides = [1, 1]} : vector<2x1024xf32> to vector<2x256xf32>
    %482 = vector.broadcast %25 : f32 to vector<2x256xf32>
    %483 = arith.mulf %481, %482 : vector<2x256xf32>
    %484 = arith.addf %480, %483 : vector<2x256xf32>
    %485 = vector.extract_strided_slice %379 {offsets = [0, 512], sizes = [2, 256], strides = [1, 1]} : vector<2x1024xf32> to vector<2x256xf32>
    %486 = vector.broadcast %26 : f32 to vector<2x256xf32>
    %487 = arith.mulf %485, %486 : vector<2x256xf32>
    %488 = arith.addf %484, %487 : vector<2x256xf32>
    %489 = vector.extract_strided_slice %379 {offsets = [0, 768], sizes = [2, 256], strides = [1, 1]} : vector<2x1024xf32> to vector<2x256xf32>
    %490 = vector.broadcast %27 : f32 to vector<2x256xf32>
    %491 = arith.mulf %489, %490 : vector<2x256xf32>
    %492 = arith.addf %488, %491 : vector<2x256xf32>
    %493 = vector.broadcast %37 : f32 to vector<2x256xf32>
    %494 = arith.addf %492, %493 : vector<2x256xf32>
    %495 = vector.extract_strided_slice %379 {offsets = [0, 0], sizes = [2, 256], strides = [1, 1]} : vector<2x1024xf32> to vector<2x256xf32>
    %496 = vector.broadcast %28 : f32 to vector<2x256xf32>
    %497 = arith.mulf %495, %496 : vector<2x256xf32>
    %498 = vector.extract_strided_slice %379 {offsets = [0, 256], sizes = [2, 256], strides = [1, 1]} : vector<2x1024xf32> to vector<2x256xf32>
    %499 = vector.broadcast %29 : f32 to vector<2x256xf32>
    %500 = arith.mulf %498, %499 : vector<2x256xf32>
    %501 = arith.addf %497, %500 : vector<2x256xf32>
    %502 = vector.extract_strided_slice %379 {offsets = [0, 512], sizes = [2, 256], strides = [1, 1]} : vector<2x1024xf32> to vector<2x256xf32>
    %503 = vector.broadcast %30 : f32 to vector<2x256xf32>
    %504 = arith.mulf %502, %503 : vector<2x256xf32>
    %505 = arith.addf %501, %504 : vector<2x256xf32>
    %506 = vector.extract_strided_slice %379 {offsets = [0, 768], sizes = [2, 256], strides = [1, 1]} : vector<2x1024xf32> to vector<2x256xf32>
    %507 = vector.broadcast %31 : f32 to vector<2x256xf32>
    %508 = arith.mulf %506, %507 : vector<2x256xf32>
    %509 = arith.addf %505, %508 : vector<2x256xf32>
    %510 = vector.broadcast %38 : f32 to vector<2x256xf32>
    %511 = arith.addf %509, %510 : vector<2x256xf32>
    %512 = vector.extract_strided_slice %379 {offsets = [0, 0], sizes = [2, 256], strides = [1, 1]} : vector<2x1024xf32> to vector<2x256xf32>
    %513 = vector.broadcast %32 : f32 to vector<2x256xf32>
    %514 = arith.mulf %512, %513 : vector<2x256xf32>
    %515 = vector.extract_strided_slice %379 {offsets = [0, 256], sizes = [2, 256], strides = [1, 1]} : vector<2x1024xf32> to vector<2x256xf32>
    %516 = vector.broadcast %33 : f32 to vector<2x256xf32>
    %517 = arith.mulf %515, %516 : vector<2x256xf32>
    %518 = arith.addf %514, %517 : vector<2x256xf32>
    %519 = vector.extract_strided_slice %379 {offsets = [0, 512], sizes = [2, 256], strides = [1, 1]} : vector<2x1024xf32> to vector<2x256xf32>
    %520 = vector.broadcast %34 : f32 to vector<2x256xf32>
    %521 = arith.mulf %519, %520 : vector<2x256xf32>
    %522 = arith.addf %518, %521 : vector<2x256xf32>
    %523 = vector.extract_strided_slice %379 {offsets = [0, 768], sizes = [2, 256], strides = [1, 1]} : vector<2x1024xf32> to vector<2x256xf32>
    %524 = vector.broadcast %35 : f32 to vector<2x256xf32>
    %525 = arith.mulf %523, %524 : vector<2x256xf32>
    %526 = arith.addf %522, %525 : vector<2x256xf32>
    %527 = vector.broadcast %39 : f32 to vector<2x256xf32>
    %528 = arith.addf %526, %527 : vector<2x256xf32>
    %529 = tpu.concatenate %477, %494, %511, %528 in 1 : vector<2x256xf32>, vector<2x256xf32>, vector<2x256xf32>, vector<2x256xf32> -> vector<2x1024xf32>
    %530 = arith.addf %460, %529 : vector<2x1024xf32>
    %cst_171 = arith.constant 0.000000e+00 : f32
    %531 = vector.broadcast %cst_171 : f32 to vector<2x1024xf32>
    %532 = arith.cmpf oge, %530, %531 : vector<2x1024xf32>
    %cst_172 = arith.constant 2.500000e-01 : f32
    %533 = vector.broadcast %cst_172 : f32 to vector<2x1024xf32>
    %534 = arith.mulf %533, %530 : vector<2x1024xf32>
    %535 = arith.select %532, %530, %534 : vector<2x1024xi1>, vector<2x1024xf32>
    %536 = arith.addf %459, %535 : vector<2x1024xf32>
    %537 = arith.addf %536, %379 : vector<2x1024xf32>
    %538 = vector.extract_strided_slice %537 {offsets = [0, 0], sizes = [2, 256], strides = [1, 1]} : vector<2x1024xf32> to vector<2x256xf32>
    %539 = vector.broadcast %60 : f32 to vector<2x256xf32>
    %540 = arith.mulf %538, %539 : vector<2x256xf32>
    %541 = vector.extract_strided_slice %537 {offsets = [0, 256], sizes = [2, 256], strides = [1, 1]} : vector<2x1024xf32> to vector<2x256xf32>
    %542 = vector.broadcast %61 : f32 to vector<2x256xf32>
    %543 = arith.mulf %541, %542 : vector<2x256xf32>
    %544 = arith.addf %540, %543 : vector<2x256xf32>
    %545 = vector.extract_strided_slice %537 {offsets = [0, 512], sizes = [2, 256], strides = [1, 1]} : vector<2x1024xf32> to vector<2x256xf32>
    %546 = vector.broadcast %62 : f32 to vector<2x256xf32>
    %547 = arith.mulf %545, %546 : vector<2x256xf32>
    %548 = arith.addf %544, %547 : vector<2x256xf32>
    %549 = vector.extract_strided_slice %537 {offsets = [0, 768], sizes = [2, 256], strides = [1, 1]} : vector<2x1024xf32> to vector<2x256xf32>
    %550 = vector.broadcast %63 : f32 to vector<2x256xf32>
    %551 = arith.mulf %549, %550 : vector<2x256xf32>
    %552 = arith.addf %548, %551 : vector<2x256xf32>
    %553 = vector.broadcast %76 : f32 to vector<2x256xf32>
    %554 = arith.addf %552, %553 : vector<2x256xf32>
    %555 = vector.extract_strided_slice %537 {offsets = [0, 0], sizes = [2, 256], strides = [1, 1]} : vector<2x1024xf32> to vector<2x256xf32>
    %556 = vector.broadcast %64 : f32 to vector<2x256xf32>
    %557 = arith.mulf %555, %556 : vector<2x256xf32>
    %558 = vector.extract_strided_slice %537 {offsets = [0, 256], sizes = [2, 256], strides = [1, 1]} : vector<2x1024xf32> to vector<2x256xf32>
    %559 = vector.broadcast %65 : f32 to vector<2x256xf32>
    %560 = arith.mulf %558, %559 : vector<2x256xf32>
    %561 = arith.addf %557, %560 : vector<2x256xf32>
    %562 = vector.extract_strided_slice %537 {offsets = [0, 512], sizes = [2, 256], strides = [1, 1]} : vector<2x1024xf32> to vector<2x256xf32>
    %563 = vector.broadcast %66 : f32 to vector<2x256xf32>
    %564 = arith.mulf %562, %563 : vector<2x256xf32>
    %565 = arith.addf %561, %564 : vector<2x256xf32>
    %566 = vector.extract_strided_slice %537 {offsets = [0, 768], sizes = [2, 256], strides = [1, 1]} : vector<2x1024xf32> to vector<2x256xf32>
    %567 = vector.broadcast %67 : f32 to vector<2x256xf32>
    %568 = arith.mulf %566, %567 : vector<2x256xf32>
    %569 = arith.addf %565, %568 : vector<2x256xf32>
    %570 = vector.broadcast %77 : f32 to vector<2x256xf32>
    %571 = arith.addf %569, %570 : vector<2x256xf32>
    %572 = vector.extract_strided_slice %537 {offsets = [0, 0], sizes = [2, 256], strides = [1, 1]} : vector<2x1024xf32> to vector<2x256xf32>
    %573 = vector.broadcast %68 : f32 to vector<2x256xf32>
    %574 = arith.mulf %572, %573 : vector<2x256xf32>
    %575 = vector.extract_strided_slice %537 {offsets = [0, 256], sizes = [2, 256], strides = [1, 1]} : vector<2x1024xf32> to vector<2x256xf32>
    %576 = vector.broadcast %69 : f32 to vector<2x256xf32>
    %577 = arith.mulf %575, %576 : vector<2x256xf32>
    %578 = arith.addf %574, %577 : vector<2x256xf32>
    %579 = vector.extract_strided_slice %537 {offsets = [0, 512], sizes = [2, 256], strides = [1, 1]} : vector<2x1024xf32> to vector<2x256xf32>
    %580 = vector.broadcast %70 : f32 to vector<2x256xf32>
    %581 = arith.mulf %579, %580 : vector<2x256xf32>
    %582 = arith.addf %578, %581 : vector<2x256xf32>
    %583 = vector.extract_strided_slice %537 {offsets = [0, 768], sizes = [2, 256], strides = [1, 1]} : vector<2x1024xf32> to vector<2x256xf32>
    %584 = vector.broadcast %71 : f32 to vector<2x256xf32>
    %585 = arith.mulf %583, %584 : vector<2x256xf32>
    %586 = arith.addf %582, %585 : vector<2x256xf32>
    %587 = vector.broadcast %78 : f32 to vector<2x256xf32>
    %588 = arith.addf %586, %587 : vector<2x256xf32>
    %589 = vector.extract_strided_slice %537 {offsets = [0, 0], sizes = [2, 256], strides = [1, 1]} : vector<2x1024xf32> to vector<2x256xf32>
    %590 = vector.broadcast %72 : f32 to vector<2x256xf32>
    %591 = arith.mulf %589, %590 : vector<2x256xf32>
    %592 = vector.extract_strided_slice %537 {offsets = [0, 256], sizes = [2, 256], strides = [1, 1]} : vector<2x1024xf32> to vector<2x256xf32>
    %593 = vector.broadcast %73 : f32 to vector<2x256xf32>
    %594 = arith.mulf %592, %593 : vector<2x256xf32>
    %595 = arith.addf %591, %594 : vector<2x256xf32>
    %596 = vector.extract_strided_slice %537 {offsets = [0, 512], sizes = [2, 256], strides = [1, 1]} : vector<2x1024xf32> to vector<2x256xf32>
    %597 = vector.broadcast %74 : f32 to vector<2x256xf32>
    %598 = arith.mulf %596, %597 : vector<2x256xf32>
    %599 = arith.addf %595, %598 : vector<2x256xf32>
    %600 = vector.extract_strided_slice %537 {offsets = [0, 768], sizes = [2, 256], strides = [1, 1]} : vector<2x1024xf32> to vector<2x256xf32>
    %601 = vector.broadcast %75 : f32 to vector<2x256xf32>
    %602 = arith.mulf %600, %601 : vector<2x256xf32>
    %603 = arith.addf %599, %602 : vector<2x256xf32>
    %604 = vector.broadcast %79 : f32 to vector<2x256xf32>
    %605 = arith.addf %603, %604 : vector<2x256xf32>
    %606 = tpu.concatenate %554, %571, %588, %605 in 1 : vector<2x256xf32>, vector<2x256xf32>, vector<2x256xf32>, vector<2x256xf32> -> vector<2x1024xf32>
    %607 = arith.addf %606, %379 : vector<2x1024xf32>
    %c2_i32 = arith.constant 2 : i32
    %608 = arith.truncf %607 : vector<2x1024xf32> to vector<2x1024xbf16>
    %cst_173 = arith.constant dense<0.000000e+00> : vector<2x256xf32>
    %609 = tpu.matmul %608, %80, %cst_173 {dimension_numbers = #tpu.dot_dimension_numbers<[1], [0], [0], [1], [0, 0, 1, 1], [], []>} : vector<2x1024xbf16>, vector<1024x256xbf16>, vector<2x256xf32> -> vector<2x256xf32>
    %610 = arith.truncf %609 : vector<2x256xf32> to vector<2x256xbf16>
    %cst_174 = arith.constant dense<0.000000e+00> : vector<2x2048xf32>
    %611 = tpu.matmul %610, %81, %cst_174 {dimension_numbers = #tpu.dot_dimension_numbers<[1], [0], [0], [1], [0, 0, 1, 1], [], []>} : vector<2x256xbf16>, vector<256x2048xbf16>, vector<2x2048xf32> -> vector<2x2048xf32>
    %612 = vector.extract_strided_slice %611 {offsets = [0, 0], sizes = [2, 1024], strides = [1, 1]} : vector<2x2048xf32> to vector<2x1024xf32>
    %613 = vector.extract_strided_slice %607 {offsets = [0, 0], sizes = [2, 256], strides = [1, 1]} : vector<2x1024xf32> to vector<2x256xf32>
    %614 = vector.broadcast %0 : f32 to vector<2x256xf32>
    %615 = arith.mulf %613, %614 : vector<2x256xf32>
    %616 = vector.extract_strided_slice %607 {offsets = [0, 256], sizes = [2, 256], strides = [1, 1]} : vector<2x1024xf32> to vector<2x256xf32>
    %617 = vector.broadcast %1 : f32 to vector<2x256xf32>
    %618 = arith.mulf %616, %617 : vector<2x256xf32>
    %619 = arith.addf %615, %618 : vector<2x256xf32>
    %620 = vector.extract_strided_slice %607 {offsets = [0, 512], sizes = [2, 256], strides = [1, 1]} : vector<2x1024xf32> to vector<2x256xf32>
    %621 = vector.broadcast %2 : f32 to vector<2x256xf32>
    %622 = arith.mulf %620, %621 : vector<2x256xf32>
    %623 = arith.addf %619, %622 : vector<2x256xf32>
    %624 = vector.extract_strided_slice %607 {offsets = [0, 768], sizes = [2, 256], strides = [1, 1]} : vector<2x1024xf32> to vector<2x256xf32>
    %625 = vector.broadcast %3 : f32 to vector<2x256xf32>
    %626 = arith.mulf %624, %625 : vector<2x256xf32>
    %627 = arith.addf %623, %626 : vector<2x256xf32>
    %628 = vector.broadcast %16 : f32 to vector<2x256xf32>
    %629 = arith.addf %627, %628 : vector<2x256xf32>
    %630 = vector.extract_strided_slice %607 {offsets = [0, 0], sizes = [2, 256], strides = [1, 1]} : vector<2x1024xf32> to vector<2x256xf32>
    %631 = vector.broadcast %4 : f32 to vector<2x256xf32>
    %632 = arith.mulf %630, %631 : vector<2x256xf32>
    %633 = vector.extract_strided_slice %607 {offsets = [0, 256], sizes = [2, 256], strides = [1, 1]} : vector<2x1024xf32> to vector<2x256xf32>
    %634 = vector.broadcast %5 : f32 to vector<2x256xf32>
    %635 = arith.mulf %633, %634 : vector<2x256xf32>
    %636 = arith.addf %632, %635 : vector<2x256xf32>
    %637 = vector.extract_strided_slice %607 {offsets = [0, 512], sizes = [2, 256], strides = [1, 1]} : vector<2x1024xf32> to vector<2x256xf32>
    %638 = vector.broadcast %6 : f32 to vector<2x256xf32>
    %639 = arith.mulf %637, %638 : vector<2x256xf32>
    %640 = arith.addf %636, %639 : vector<2x256xf32>
    %641 = vector.extract_strided_slice %607 {offsets = [0, 768], sizes = [2, 256], strides = [1, 1]} : vector<2x1024xf32> to vector<2x256xf32>
    %642 = vector.broadcast %7 : f32 to vector<2x256xf32>
    %643 = arith.mulf %641, %642 : vector<2x256xf32>
    %644 = arith.addf %640, %643 : vector<2x256xf32>
    %645 = vector.broadcast %17 : f32 to vector<2x256xf32>
    %646 = arith.addf %644, %645 : vector<2x256xf32>
    %647 = vector.extract_strided_slice %607 {offsets = [0, 0], sizes = [2, 256], strides = [1, 1]} : vector<2x1024xf32> to vector<2x256xf32>
    %648 = vector.broadcast %8 : f32 to vector<2x256xf32>
    %649 = arith.mulf %647, %648 : vector<2x256xf32>
    %650 = vector.extract_strided_slice %607 {offsets = [0, 256], sizes = [2, 256], strides = [1, 1]} : vector<2x1024xf32> to vector<2x256xf32>
    %651 = vector.broadcast %9 : f32 to vector<2x256xf32>
    %652 = arith.mulf %650, %651 : vector<2x256xf32>
    %653 = arith.addf %649, %652 : vector<2x256xf32>
    %654 = vector.extract_strided_slice %607 {offsets = [0, 512], sizes = [2, 256], strides = [1, 1]} : vector<2x1024xf32> to vector<2x256xf32>
    %655 = vector.broadcast %10 : f32 to vector<2x256xf32>
    %656 = arith.mulf %654, %655 : vector<2x256xf32>
    %657 = arith.addf %653, %656 : vector<2x256xf32>
    %658 = vector.extract_strided_slice %607 {offsets = [0, 768], sizes = [2, 256], strides = [1, 1]} : vector<2x1024xf32> to vector<2x256xf32>
    %659 = vector.broadcast %11 : f32 to vector<2x256xf32>
    %660 = arith.mulf %658, %659 : vector<2x256xf32>
    %661 = arith.addf %657, %660 : vector<2x256xf32>
    %662 = vector.broadcast %18 : f32 to vector<2x256xf32>
    %663 = arith.addf %661, %662 : vector<2x256xf32>
    %664 = vector.extract_strided_slice %607 {offsets = [0, 0], sizes = [2, 256], strides = [1, 1]} : vector<2x1024xf32> to vector<2x256xf32>
    %665 = vector.broadcast %12 : f32 to vector<2x256xf32>
    %666 = arith.mulf %664, %665 : vector<2x256xf32>
    %667 = vector.extract_strided_slice %607 {offsets = [0, 256], sizes = [2, 256], strides = [1, 1]} : vector<2x1024xf32> to vector<2x256xf32>
    %668 = vector.broadcast %13 : f32 to vector<2x256xf32>
    %669 = arith.mulf %667, %668 : vector<2x256xf32>
    %670 = arith.addf %666, %669 : vector<2x256xf32>
    %671 = vector.extract_strided_slice %607 {offsets = [0, 512], sizes = [2, 256], strides = [1, 1]} : vector<2x1024xf32> to vector<2x256xf32>
    %672 = vector.broadcast %14 : f32 to vector<2x256xf32>
    %673 = arith.mulf %671, %672 : vector<2x256xf32>
    %674 = arith.addf %670, %673 : vector<2x256xf32>
    %675 = vector.extract_strided_slice %607 {offsets = [0, 768], sizes = [2, 256], strides = [1, 1]} : vector<2x1024xf32> to vector<2x256xf32>
    %676 = vector.broadcast %15 : f32 to vector<2x256xf32>
    %677 = arith.mulf %675, %676 : vector<2x256xf32>
    %678 = arith.addf %674, %677 : vector<2x256xf32>
    %679 = vector.broadcast %19 : f32 to vector<2x256xf32>
    %680 = arith.addf %678, %679 : vector<2x256xf32>
    %681 = tpu.concatenate %629, %646, %663, %680 in 1 : vector<2x256xf32>, vector<2x256xf32>, vector<2x256xf32>, vector<2x256xf32> -> vector<2x1024xf32>
    %682 = arith.addf %612, %681 : vector<2x1024xf32>
    %cst_175 = arith.constant 0.000000e+00 : f32
    %683 = vector.broadcast %cst_175 : f32 to vector<2x1024xf32>
    %684 = arith.cmpf oge, %682, %683 : vector<2x1024xf32>
    %cst_176 = arith.constant 2.500000e-01 : f32
    %685 = vector.broadcast %cst_176 : f32 to vector<2x1024xf32>
    %686 = arith.mulf %685, %682 : vector<2x1024xf32>
    %687 = arith.select %684, %682, %686 : vector<2x1024xi1>, vector<2x1024xf32>
    %688 = vector.extract_strided_slice %611 {offsets = [0, 1024], sizes = [2, 1024], strides = [1, 1]} : vector<2x2048xf32> to vector<2x1024xf32>
    %689 = vector.extract_strided_slice %607 {offsets = [0, 0], sizes = [2, 256], strides = [1, 1]} : vector<2x1024xf32> to vector<2x256xf32>
    %690 = vector.broadcast %20 : f32 to vector<2x256xf32>
    %691 = arith.mulf %689, %690 : vector<2x256xf32>
    %692 = vector.extract_strided_slice %607 {offsets = [0, 256], sizes = [2, 256], strides = [1, 1]} : vector<2x1024xf32> to vector<2x256xf32>
    %693 = vector.broadcast %21 : f32 to vector<2x256xf32>
    %694 = arith.mulf %692, %693 : vector<2x256xf32>
    %695 = arith.addf %691, %694 : vector<2x256xf32>
    %696 = vector.extract_strided_slice %607 {offsets = [0, 512], sizes = [2, 256], strides = [1, 1]} : vector<2x1024xf32> to vector<2x256xf32>
    %697 = vector.broadcast %22 : f32 to vector<2x256xf32>
    %698 = arith.mulf %696, %697 : vector<2x256xf32>
    %699 = arith.addf %695, %698 : vector<2x256xf32>
    %700 = vector.extract_strided_slice %607 {offsets = [0, 768], sizes = [2, 256], strides = [1, 1]} : vector<2x1024xf32> to vector<2x256xf32>
    %701 = vector.broadcast %23 : f32 to vector<2x256xf32>
    %702 = arith.mulf %700, %701 : vector<2x256xf32>
    %703 = arith.addf %699, %702 : vector<2x256xf32>
    %704 = vector.broadcast %36 : f32 to vector<2x256xf32>
    %705 = arith.addf %703, %704 : vector<2x256xf32>
    %706 = vector.extract_strided_slice %607 {offsets = [0, 0], sizes = [2, 256], strides = [1, 1]} : vector<2x1024xf32> to vector<2x256xf32>
    %707 = vector.broadcast %24 : f32 to vector<2x256xf32>
    %708 = arith.mulf %706, %707 : vector<2x256xf32>
    %709 = vector.extract_strided_slice %607 {offsets = [0, 256], sizes = [2, 256], strides = [1, 1]} : vector<2x1024xf32> to vector<2x256xf32>
    %710 = vector.broadcast %25 : f32 to vector<2x256xf32>
    %711 = arith.mulf %709, %710 : vector<2x256xf32>
    %712 = arith.addf %708, %711 : vector<2x256xf32>
    %713 = vector.extract_strided_slice %607 {offsets = [0, 512], sizes = [2, 256], strides = [1, 1]} : vector<2x1024xf32> to vector<2x256xf32>
    %714 = vector.broadcast %26 : f32 to vector<2x256xf32>
    %715 = arith.mulf %713, %714 : vector<2x256xf32>
    %716 = arith.addf %712, %715 : vector<2x256xf32>
    %717 = vector.extract_strided_slice %607 {offsets = [0, 768], sizes = [2, 256], strides = [1, 1]} : vector<2x1024xf32> to vector<2x256xf32>
    %718 = vector.broadcast %27 : f32 to vector<2x256xf32>
    %719 = arith.mulf %717, %718 : vector<2x256xf32>
    %720 = arith.addf %716, %719 : vector<2x256xf32>
    %721 = vector.broadcast %37 : f32 to vector<2x256xf32>
    %722 = arith.addf %720, %721 : vector<2x256xf32>
    %723 = vector.extract_strided_slice %607 {offsets = [0, 0], sizes = [2, 256], strides = [1, 1]} : vector<2x1024xf32> to vector<2x256xf32>
    %724 = vector.broadcast %28 : f32 to vector<2x256xf32>
    %725 = arith.mulf %723, %724 : vector<2x256xf32>
    %726 = vector.extract_strided_slice %607 {offsets = [0, 256], sizes = [2, 256], strides = [1, 1]} : vector<2x1024xf32> to vector<2x256xf32>
    %727 = vector.broadcast %29 : f32 to vector<2x256xf32>
    %728 = arith.mulf %726, %727 : vector<2x256xf32>
    %729 = arith.addf %725, %728 : vector<2x256xf32>
    %730 = vector.extract_strided_slice %607 {offsets = [0, 512], sizes = [2, 256], strides = [1, 1]} : vector<2x1024xf32> to vector<2x256xf32>
    %731 = vector.broadcast %30 : f32 to vector<2x256xf32>
    %732 = arith.mulf %730, %731 : vector<2x256xf32>
    %733 = arith.addf %729, %732 : vector<2x256xf32>
    %734 = vector.extract_strided_slice %607 {offsets = [0, 768], sizes = [2, 256], strides = [1, 1]} : vector<2x1024xf32> to vector<2x256xf32>
    %735 = vector.broadcast %31 : f32 to vector<2x256xf32>
    %736 = arith.mulf %734, %735 : vector<2x256xf32>
    %737 = arith.addf %733, %736 : vector<2x256xf32>
    %738 = vector.broadcast %38 : f32 to vector<2x256xf32>
    %739 = arith.addf %737, %738 : vector<2x256xf32>
    %740 = vector.extract_strided_slice %607 {offsets = [0, 0], sizes = [2, 256], strides = [1, 1]} : vector<2x1024xf32> to vector<2x256xf32>
    %741 = vector.broadcast %32 : f32 to vector<2x256xf32>
    %742 = arith.mulf %740, %741 : vector<2x256xf32>
    %743 = vector.extract_strided_slice %607 {offsets = [0, 256], sizes = [2, 256], strides = [1, 1]} : vector<2x1024xf32> to vector<2x256xf32>
    %744 = vector.broadcast %33 : f32 to vector<2x256xf32>
    %745 = arith.mulf %743, %744 : vector<2x256xf32>
    %746 = arith.addf %742, %745 : vector<2x256xf32>
    %747 = vector.extract_strided_slice %607 {offsets = [0, 512], sizes = [2, 256], strides = [1, 1]} : vector<2x1024xf32> to vector<2x256xf32>
    %748 = vector.broadcast %34 : f32 to vector<2x256xf32>
    %749 = arith.mulf %747, %748 : vector<2x256xf32>
    %750 = arith.addf %746, %749 : vector<2x256xf32>
    %751 = vector.extract_strided_slice %607 {offsets = [0, 768], sizes = [2, 256], strides = [1, 1]} : vector<2x1024xf32> to vector<2x256xf32>
    %752 = vector.broadcast %35 : f32 to vector<2x256xf32>
    %753 = arith.mulf %751, %752 : vector<2x256xf32>
    %754 = arith.addf %750, %753 : vector<2x256xf32>
    %755 = vector.broadcast %39 : f32 to vector<2x256xf32>
    %756 = arith.addf %754, %755 : vector<2x256xf32>
    %757 = tpu.concatenate %705, %722, %739, %756 in 1 : vector<2x256xf32>, vector<2x256xf32>, vector<2x256xf32>, vector<2x256xf32> -> vector<2x1024xf32>
    %758 = arith.addf %688, %757 : vector<2x1024xf32>
    %cst_177 = arith.constant 0.000000e+00 : f32
    %759 = vector.broadcast %cst_177 : f32 to vector<2x1024xf32>
    %760 = arith.cmpf oge, %758, %759 : vector<2x1024xf32>
    %cst_178 = arith.constant 2.500000e-01 : f32
    %761 = vector.broadcast %cst_178 : f32 to vector<2x1024xf32>
    %762 = arith.mulf %761, %758 : vector<2x1024xf32>
    %763 = arith.select %760, %758, %762 : vector<2x1024xi1>, vector<2x1024xf32>
    %764 = arith.addf %687, %763 : vector<2x1024xf32>
    %765 = arith.addf %764, %607 : vector<2x1024xf32>
    %766 = vector.extract_strided_slice %765 {offsets = [0, 0], sizes = [2, 256], strides = [1, 1]} : vector<2x1024xf32> to vector<2x256xf32>
    %767 = vector.broadcast %60 : f32 to vector<2x256xf32>
    %768 = arith.mulf %766, %767 : vector<2x256xf32>
    %769 = vector.extract_strided_slice %765 {offsets = [0, 256], sizes = [2, 256], strides = [1, 1]} : vector<2x1024xf32> to vector<2x256xf32>
    %770 = vector.broadcast %61 : f32 to vector<2x256xf32>
    %771 = arith.mulf %769, %770 : vector<2x256xf32>
    %772 = arith.addf %768, %771 : vector<2x256xf32>
    %773 = vector.extract_strided_slice %765 {offsets = [0, 512], sizes = [2, 256], strides = [1, 1]} : vector<2x1024xf32> to vector<2x256xf32>
    %774 = vector.broadcast %62 : f32 to vector<2x256xf32>
    %775 = arith.mulf %773, %774 : vector<2x256xf32>
    %776 = arith.addf %772, %775 : vector<2x256xf32>
    %777 = vector.extract_strided_slice %765 {offsets = [0, 768], sizes = [2, 256], strides = [1, 1]} : vector<2x1024xf32> to vector<2x256xf32>
    %778 = vector.broadcast %63 : f32 to vector<2x256xf32>
    %779 = arith.mulf %777, %778 : vector<2x256xf32>
    %780 = arith.addf %776, %779 : vector<2x256xf32>
    %781 = vector.broadcast %76 : f32 to vector<2x256xf32>
    %782 = arith.addf %780, %781 : vector<2x256xf32>
    %783 = vector.extract_strided_slice %765 {offsets = [0, 0], sizes = [2, 256], strides = [1, 1]} : vector<2x1024xf32> to vector<2x256xf32>
    %784 = vector.broadcast %64 : f32 to vector<2x256xf32>
    %785 = arith.mulf %783, %784 : vector<2x256xf32>
    %786 = vector.extract_strided_slice %765 {offsets = [0, 256], sizes = [2, 256], strides = [1, 1]} : vector<2x1024xf32> to vector<2x256xf32>
    %787 = vector.broadcast %65 : f32 to vector<2x256xf32>
    %788 = arith.mulf %786, %787 : vector<2x256xf32>
    %789 = arith.addf %785, %788 : vector<2x256xf32>
    %790 = vector.extract_strided_slice %765 {offsets = [0, 512], sizes = [2, 256], strides = [1, 1]} : vector<2x1024xf32> to vector<2x256xf32>
    %791 = vector.broadcast %66 : f32 to vector<2x256xf32>
    %792 = arith.mulf %790, %791 : vector<2x256xf32>
    %793 = arith.addf %789, %792 : vector<2x256xf32>
    %794 = vector.extract_strided_slice %765 {offsets = [0, 768], sizes = [2, 256], strides = [1, 1]} : vector<2x1024xf32> to vector<2x256xf32>
    %795 = vector.broadcast %67 : f32 to vector<2x256xf32>
    %796 = arith.mulf %794, %795 : vector<2x256xf32>
    %797 = arith.addf %793, %796 : vector<2x256xf32>
    %798 = vector.broadcast %77 : f32 to vector<2x256xf32>
    %799 = arith.addf %797, %798 : vector<2x256xf32>
    %800 = vector.extract_strided_slice %765 {offsets = [0, 0], sizes = [2, 256], strides = [1, 1]} : vector<2x1024xf32> to vector<2x256xf32>
    %801 = vector.broadcast %68 : f32 to vector<2x256xf32>
    %802 = arith.mulf %800, %801 : vector<2x256xf32>
    %803 = vector.extract_strided_slice %765 {offsets = [0, 256], sizes = [2, 256], strides = [1, 1]} : vector<2x1024xf32> to vector<2x256xf32>
    %804 = vector.broadcast %69 : f32 to vector<2x256xf32>
    %805 = arith.mulf %803, %804 : vector<2x256xf32>
    %806 = arith.addf %802, %805 : vector<2x256xf32>
    %807 = vector.extract_strided_slice %765 {offsets = [0, 512], sizes = [2, 256], strides = [1, 1]} : vector<2x1024xf32> to vector<2x256xf32>
    %808 = vector.broadcast %70 : f32 to vector<2x256xf32>
    %809 = arith.mulf %807, %808 : vector<2x256xf32>
    %810 = arith.addf %806, %809 : vector<2x256xf32>
    %811 = vector.extract_strided_slice %765 {offsets = [0, 768], sizes = [2, 256], strides = [1, 1]} : vector<2x1024xf32> to vector<2x256xf32>
    %812 = vector.broadcast %71 : f32 to vector<2x256xf32>
    %813 = arith.mulf %811, %812 : vector<2x256xf32>
    %814 = arith.addf %810, %813 : vector<2x256xf32>
    %815 = vector.broadcast %78 : f32 to vector<2x256xf32>
    %816 = arith.addf %814, %815 : vector<2x256xf32>
    %817 = vector.extract_strided_slice %765 {offsets = [0, 0], sizes = [2, 256], strides = [1, 1]} : vector<2x1024xf32> to vector<2x256xf32>
    %818 = vector.broadcast %72 : f32 to vector<2x256xf32>
    %819 = arith.mulf %817, %818 : vector<2x256xf32>
    %820 = vector.extract_strided_slice %765 {offsets = [0, 256], sizes = [2, 256], strides = [1, 1]} : vector<2x1024xf32> to vector<2x256xf32>
    %821 = vector.broadcast %73 : f32 to vector<2x256xf32>
    %822 = arith.mulf %820, %821 : vector<2x256xf32>
    %823 = arith.addf %819, %822 : vector<2x256xf32>
    %824 = vector.extract_strided_slice %765 {offsets = [0, 512], sizes = [2, 256], strides = [1, 1]} : vector<2x1024xf32> to vector<2x256xf32>
    %825 = vector.broadcast %74 : f32 to vector<2x256xf32>
    %826 = arith.mulf %824, %825 : vector<2x256xf32>
    %827 = arith.addf %823, %826 : vector<2x256xf32>
    %828 = vector.extract_strided_slice %765 {offsets = [0, 768], sizes = [2, 256], strides = [1, 1]} : vector<2x1024xf32> to vector<2x256xf32>
    %829 = vector.broadcast %75 : f32 to vector<2x256xf32>
    %830 = arith.mulf %828, %829 : vector<2x256xf32>
    %831 = arith.addf %827, %830 : vector<2x256xf32>
    %832 = vector.broadcast %79 : f32 to vector<2x256xf32>
    %833 = arith.addf %831, %832 : vector<2x256xf32>
    %834 = tpu.concatenate %782, %799, %816, %833 in 1 : vector<2x256xf32>, vector<2x256xf32>, vector<2x256xf32>, vector<2x256xf32> -> vector<2x1024xf32>
    %835 = arith.addf %834, %607 : vector<2x1024xf32>
    %c3_i32 = arith.constant 3 : i32
    %836 = arith.truncf %835 : vector<2x1024xf32> to vector<2x1024xbf16>
    %cst_179 = arith.constant dense<0.000000e+00> : vector<2x256xf32>
    %837 = tpu.matmul %836, %80, %cst_179 {dimension_numbers = #tpu.dot_dimension_numbers<[1], [0], [0], [1], [0, 0, 1, 1], [], []>} : vector<2x1024xbf16>, vector<1024x256xbf16>, vector<2x256xf32> -> vector<2x256xf32>
    %838 = arith.truncf %837 : vector<2x256xf32> to vector<2x256xbf16>
    %cst_180 = arith.constant dense<0.000000e+00> : vector<2x2048xf32>
    %839 = tpu.matmul %838, %81, %cst_180 {dimension_numbers = #tpu.dot_dimension_numbers<[1], [0], [0], [1], [0, 0, 1, 1], [], []>} : vector<2x256xbf16>, vector<256x2048xbf16>, vector<2x2048xf32> -> vector<2x2048xf32>
    %840 = vector.extract_strided_slice %839 {offsets = [0, 0], sizes = [2, 1024], strides = [1, 1]} : vector<2x2048xf32> to vector<2x1024xf32>
    %841 = vector.extract_strided_slice %835 {offsets = [0, 0], sizes = [2, 256], strides = [1, 1]} : vector<2x1024xf32> to vector<2x256xf32>
    %842 = vector.broadcast %0 : f32 to vector<2x256xf32>
    %843 = arith.mulf %841, %842 : vector<2x256xf32>
    %844 = vector.extract_strided_slice %835 {offsets = [0, 256], sizes = [2, 256], strides = [1, 1]} : vector<2x1024xf32> to vector<2x256xf32>
    %845 = vector.broadcast %1 : f32 to vector<2x256xf32>
    %846 = arith.mulf %844, %845 : vector<2x256xf32>
    %847 = arith.addf %843, %846 : vector<2x256xf32>
    %848 = vector.extract_strided_slice %835 {offsets = [0, 512], sizes = [2, 256], strides = [1, 1]} : vector<2x1024xf32> to vector<2x256xf32>
    %849 = vector.broadcast %2 : f32 to vector<2x256xf32>
    %850 = arith.mulf %848, %849 : vector<2x256xf32>
    %851 = arith.addf %847, %850 : vector<2x256xf32>
    %852 = vector.extract_strided_slice %835 {offsets = [0, 768], sizes = [2, 256], strides = [1, 1]} : vector<2x1024xf32> to vector<2x256xf32>
    %853 = vector.broadcast %3 : f32 to vector<2x256xf32>
    %854 = arith.mulf %852, %853 : vector<2x256xf32>
    %855 = arith.addf %851, %854 : vector<2x256xf32>
    %856 = vector.broadcast %16 : f32 to vector<2x256xf32>
    %857 = arith.addf %855, %856 : vector<2x256xf32>
    %858 = vector.extract_strided_slice %835 {offsets = [0, 0], sizes = [2, 256], strides = [1, 1]} : vector<2x1024xf32> to vector<2x256xf32>
    %859 = vector.broadcast %4 : f32 to vector<2x256xf32>
    %860 = arith.mulf %858, %859 : vector<2x256xf32>
    %861 = vector.extract_strided_slice %835 {offsets = [0, 256], sizes = [2, 256], strides = [1, 1]} : vector<2x1024xf32> to vector<2x256xf32>
    %862 = vector.broadcast %5 : f32 to vector<2x256xf32>
    %863 = arith.mulf %861, %862 : vector<2x256xf32>
    %864 = arith.addf %860, %863 : vector<2x256xf32>
    %865 = vector.extract_strided_slice %835 {offsets = [0, 512], sizes = [2, 256], strides = [1, 1]} : vector<2x1024xf32> to vector<2x256xf32>
    %866 = vector.broadcast %6 : f32 to vector<2x256xf32>
    %867 = arith.mulf %865, %866 : vector<2x256xf32>
    %868 = arith.addf %864, %867 : vector<2x256xf32>
    %869 = vector.extract_strided_slice %835 {offsets = [0, 768], sizes = [2, 256], strides = [1, 1]} : vector<2x1024xf32> to vector<2x256xf32>
    %870 = vector.broadcast %7 : f32 to vector<2x256xf32>
    %871 = arith.mulf %869, %870 : vector<2x256xf32>
    %872 = arith.addf %868, %871 : vector<2x256xf32>
    %873 = vector.broadcast %17 : f32 to vector<2x256xf32>
    %874 = arith.addf %872, %873 : vector<2x256xf32>
    %875 = vector.extract_strided_slice %835 {offsets = [0, 0], sizes = [2, 256], strides = [1, 1]} : vector<2x1024xf32> to vector<2x256xf32>
    %876 = vector.broadcast %8 : f32 to vector<2x256xf32>
    %877 = arith.mulf %875, %876 : vector<2x256xf32>
    %878 = vector.extract_strided_slice %835 {offsets = [0, 256], sizes = [2, 256], strides = [1, 1]} : vector<2x1024xf32> to vector<2x256xf32>
    %879 = vector.broadcast %9 : f32 to vector<2x256xf32>
    %880 = arith.mulf %878, %879 : vector<2x256xf32>
    %881 = arith.addf %877, %880 : vector<2x256xf32>
    %882 = vector.extract_strided_slice %835 {offsets = [0, 512], sizes = [2, 256], strides = [1, 1]} : vector<2x1024xf32> to vector<2x256xf32>
    %883 = vector.broadcast %10 : f32 to vector<2x256xf32>
    %884 = arith.mulf %882, %883 : vector<2x256xf32>
    %885 = arith.addf %881, %884 : vector<2x256xf32>
    %886 = vector.extract_strided_slice %835 {offsets = [0, 768], sizes = [2, 256], strides = [1, 1]} : vector<2x1024xf32> to vector<2x256xf32>
    %887 = vector.broadcast %11 : f32 to vector<2x256xf32>
    %888 = arith.mulf %886, %887 : vector<2x256xf32>
    %889 = arith.addf %885, %888 : vector<2x256xf32>
    %890 = vector.broadcast %18 : f32 to vector<2x256xf32>
    %891 = arith.addf %889, %890 : vector<2x256xf32>
    %892 = vector.extract_strided_slice %835 {offsets = [0, 0], sizes = [2, 256], strides = [1, 1]} : vector<2x1024xf32> to vector<2x256xf32>
    %893 = vector.broadcast %12 : f32 to vector<2x256xf32>
    %894 = arith.mulf %892, %893 : vector<2x256xf32>
    %895 = vector.extract_strided_slice %835 {offsets = [0, 256], sizes = [2, 256], strides = [1, 1]} : vector<2x1024xf32> to vector<2x256xf32>
    %896 = vector.broadcast %13 : f32 to vector<2x256xf32>
    %897 = arith.mulf %895, %896 : vector<2x256xf32>
    %898 = arith.addf %894, %897 : vector<2x256xf32>
    %899 = vector.extract_strided_slice %835 {offsets = [0, 512], sizes = [2, 256], strides = [1, 1]} : vector<2x1024xf32> to vector<2x256xf32>
    %900 = vector.broadcast %14 : f32 to vector<2x256xf32>
    %901 = arith.mulf %899, %900 : vector<2x256xf32>
    %902 = arith.addf %898, %901 : vector<2x256xf32>
    %903 = vector.extract_strided_slice %835 {offsets = [0, 768], sizes = [2, 256], strides = [1, 1]} : vector<2x1024xf32> to vector<2x256xf32>
    %904 = vector.broadcast %15 : f32 to vector<2x256xf32>
    %905 = arith.mulf %903, %904 : vector<2x256xf32>
    %906 = arith.addf %902, %905 : vector<2x256xf32>
    %907 = vector.broadcast %19 : f32 to vector<2x256xf32>
    %908 = arith.addf %906, %907 : vector<2x256xf32>
    %909 = tpu.concatenate %857, %874, %891, %908 in 1 : vector<2x256xf32>, vector<2x256xf32>, vector<2x256xf32>, vector<2x256xf32> -> vector<2x1024xf32>
    %910 = arith.addf %840, %909 : vector<2x1024xf32>
    %cst_181 = arith.constant 0.000000e+00 : f32
    %911 = vector.broadcast %cst_181 : f32 to vector<2x1024xf32>
    %912 = arith.cmpf oge, %910, %911 : vector<2x1024xf32>
    %cst_182 = arith.constant 2.500000e-01 : f32
    %913 = vector.broadcast %cst_182 : f32 to vector<2x1024xf32>
    %914 = arith.mulf %913, %910 : vector<2x1024xf32>
    %915 = arith.select %912, %910, %914 : vector<2x1024xi1>, vector<2x1024xf32>
    %916 = vector.extract_strided_slice %839 {offsets = [0, 1024], sizes = [2, 1024], strides = [1, 1]} : vector<2x2048xf32> to vector<2x1024xf32>
    %917 = vector.extract_strided_slice %835 {offsets = [0, 0], sizes = [2, 256], strides = [1, 1]} : vector<2x1024xf32> to vector<2x256xf32>
    %918 = vector.broadcast %20 : f32 to vector<2x256xf32>
    %919 = arith.mulf %917, %918 : vector<2x256xf32>
    %920 = vector.extract_strided_slice %835 {offsets = [0, 256], sizes = [2, 256], strides = [1, 1]} : vector<2x1024xf32> to vector<2x256xf32>
    %921 = vector.broadcast %21 : f32 to vector<2x256xf32>
    %922 = arith.mulf %920, %921 : vector<2x256xf32>
    %923 = arith.addf %919, %922 : vector<2x256xf32>
    %924 = vector.extract_strided_slice %835 {offsets = [0, 512], sizes = [2, 256], strides = [1, 1]} : vector<2x1024xf32> to vector<2x256xf32>
    %925 = vector.broadcast %22 : f32 to vector<2x256xf32>
    %926 = arith.mulf %924, %925 : vector<2x256xf32>
    %927 = arith.addf %923, %926 : vector<2x256xf32>
    %928 = vector.extract_strided_slice %835 {offsets = [0, 768], sizes = [2, 256], strides = [1, 1]} : vector<2x1024xf32> to vector<2x256xf32>
    %929 = vector.broadcast %23 : f32 to vector<2x256xf32>
    %930 = arith.mulf %928, %929 : vector<2x256xf32>
    %931 = arith.addf %927, %930 : vector<2x256xf32>
    %932 = vector.broadcast %36 : f32 to vector<2x256xf32>
    %933 = arith.addf %931, %932 : vector<2x256xf32>
    %934 = vector.extract_strided_slice %835 {offsets = [0, 0], sizes = [2, 256], strides = [1, 1]} : vector<2x1024xf32> to vector<2x256xf32>
    %935 = vector.broadcast %24 : f32 to vector<2x256xf32>
    %936 = arith.mulf %934, %935 : vector<2x256xf32>
    %937 = vector.extract_strided_slice %835 {offsets = [0, 256], sizes = [2, 256], strides = [1, 1]} : vector<2x1024xf32> to vector<2x256xf32>
    %938 = vector.broadcast %25 : f32 to vector<2x256xf32>
    %939 = arith.mulf %937, %938 : vector<2x256xf32>
    %940 = arith.addf %936, %939 : vector<2x256xf32>
    %941 = vector.extract_strided_slice %835 {offsets = [0, 512], sizes = [2, 256], strides = [1, 1]} : vector<2x1024xf32> to vector<2x256xf32>
    %942 = vector.broadcast %26 : f32 to vector<2x256xf32>
    %943 = arith.mulf %941, %942 : vector<2x256xf32>
    %944 = arith.addf %940, %943 : vector<2x256xf32>
    %945 = vector.extract_strided_slice %835 {offsets = [0, 768], sizes = [2, 256], strides = [1, 1]} : vector<2x1024xf32> to vector<2x256xf32>
    %946 = vector.broadcast %27 : f32 to vector<2x256xf32>
    %947 = arith.mulf %945, %946 : vector<2x256xf32>
    %948 = arith.addf %944, %947 : vector<2x256xf32>
    %949 = vector.broadcast %37 : f32 to vector<2x256xf32>
    %950 = arith.addf %948, %949 : vector<2x256xf32>
    %951 = vector.extract_strided_slice %835 {offsets = [0, 0], sizes = [2, 256], strides = [1, 1]} : vector<2x1024xf32> to vector<2x256xf32>
    %952 = vector.broadcast %28 : f32 to vector<2x256xf32>
    %953 = arith.mulf %951, %952 : vector<2x256xf32>
    %954 = vector.extract_strided_slice %835 {offsets = [0, 256], sizes = [2, 256], strides = [1, 1]} : vector<2x1024xf32> to vector<2x256xf32>
    %955 = vector.broadcast %29 : f32 to vector<2x256xf32>
    %956 = arith.mulf %954, %955 : vector<2x256xf32>
    %957 = arith.addf %953, %956 : vector<2x256xf32>
    %958 = vector.extract_strided_slice %835 {offsets = [0, 512], sizes = [2, 256], strides = [1, 1]} : vector<2x1024xf32> to vector<2x256xf32>
    %959 = vector.broadcast %30 : f32 to vector<2x256xf32>
    %960 = arith.mulf %958, %959 : vector<2x256xf32>
    %961 = arith.addf %957, %960 : vector<2x256xf32>
    %962 = vector.extract_strided_slice %835 {offsets = [0, 768], sizes = [2, 256], strides = [1, 1]} : vector<2x1024xf32> to vector<2x256xf32>
    %963 = vector.broadcast %31 : f32 to vector<2x256xf32>
    %964 = arith.mulf %962, %963 : vector<2x256xf32>
    %965 = arith.addf %961, %964 : vector<2x256xf32>
    %966 = vector.broadcast %38 : f32 to vector<2x256xf32>
    %967 = arith.addf %965, %966 : vector<2x256xf32>
    %968 = vector.extract_strided_slice %835 {offsets = [0, 0], sizes = [2, 256], strides = [1, 1]} : vector<2x1024xf32> to vector<2x256xf32>
    %969 = vector.broadcast %32 : f32 to vector<2x256xf32>
    %970 = arith.mulf %968, %969 : vector<2x256xf32>
    %971 = vector.extract_strided_slice %835 {offsets = [0, 256], sizes = [2, 256], strides = [1, 1]} : vector<2x1024xf32> to vector<2x256xf32>
    %972 = vector.broadcast %33 : f32 to vector<2x256xf32>
    %973 = arith.mulf %971, %972 : vector<2x256xf32>
    %974 = arith.addf %970, %973 : vector<2x256xf32>
    %975 = vector.extract_strided_slice %835 {offsets = [0, 512], sizes = [2, 256], strides = [1, 1]} : vector<2x1024xf32> to vector<2x256xf32>
    %976 = vector.broadcast %34 : f32 to vector<2x256xf32>
    %977 = arith.mulf %975, %976 : vector<2x256xf32>
    %978 = arith.addf %974, %977 : vector<2x256xf32>
    %979 = vector.extract_strided_slice %835 {offsets = [0, 768], sizes = [2, 256], strides = [1, 1]} : vector<2x1024xf32> to vector<2x256xf32>
    %980 = vector.broadcast %35 : f32 to vector<2x256xf32>
    %981 = arith.mulf %979, %980 : vector<2x256xf32>
    %982 = arith.addf %978, %981 : vector<2x256xf32>
    %983 = vector.broadcast %39 : f32 to vector<2x256xf32>
    %984 = arith.addf %982, %983 : vector<2x256xf32>
    %985 = tpu.concatenate %933, %950, %967, %984 in 1 : vector<2x256xf32>, vector<2x256xf32>, vector<2x256xf32>, vector<2x256xf32> -> vector<2x1024xf32>
    %986 = arith.addf %916, %985 : vector<2x1024xf32>
    %cst_183 = arith.constant 0.000000e+00 : f32
    %987 = vector.broadcast %cst_183 : f32 to vector<2x1024xf32>
    %988 = arith.cmpf oge, %986, %987 : vector<2x1024xf32>
    %cst_184 = arith.constant 2.500000e-01 : f32
    %989 = vector.broadcast %cst_184 : f32 to vector<2x1024xf32>
    %990 = arith.mulf %989, %986 : vector<2x1024xf32>
    %991 = arith.select %988, %986, %990 : vector<2x1024xi1>, vector<2x1024xf32>
    %992 = arith.addf %915, %991 : vector<2x1024xf32>
    %993 = arith.addf %992, %835 : vector<2x1024xf32>
    %994 = vector.extract_strided_slice %993 {offsets = [0, 0], sizes = [2, 256], strides = [1, 1]} : vector<2x1024xf32> to vector<2x256xf32>
    %995 = vector.broadcast %60 : f32 to vector<2x256xf32>
    %996 = arith.mulf %994, %995 : vector<2x256xf32>
    %997 = vector.extract_strided_slice %993 {offsets = [0, 256], sizes = [2, 256], strides = [1, 1]} : vector<2x1024xf32> to vector<2x256xf32>
    %998 = vector.broadcast %61 : f32 to vector<2x256xf32>
    %999 = arith.mulf %997, %998 : vector<2x256xf32>
    %1000 = arith.addf %996, %999 : vector<2x256xf32>
    %1001 = vector.extract_strided_slice %993 {offsets = [0, 512], sizes = [2, 256], strides = [1, 1]} : vector<2x1024xf32> to vector<2x256xf32>
    %1002 = vector.broadcast %62 : f32 to vector<2x256xf32>
    %1003 = arith.mulf %1001, %1002 : vector<2x256xf32>
    %1004 = arith.addf %1000, %1003 : vector<2x256xf32>
    %1005 = vector.extract_strided_slice %993 {offsets = [0, 768], sizes = [2, 256], strides = [1, 1]} : vector<2x1024xf32> to vector<2x256xf32>
    %1006 = vector.broadcast %63 : f32 to vector<2x256xf32>
    %1007 = arith.mulf %1005, %1006 : vector<2x256xf32>
    %1008 = arith.addf %1004, %1007 : vector<2x256xf32>
    %1009 = vector.broadcast %76 : f32 to vector<2x256xf32>
    %1010 = arith.addf %1008, %1009 : vector<2x256xf32>
    %1011 = vector.extract_strided_slice %993 {offsets = [0, 0], sizes = [2, 256], strides = [1, 1]} : vector<2x1024xf32> to vector<2x256xf32>
    %1012 = vector.broadcast %64 : f32 to vector<2x256xf32>
    %1013 = arith.mulf %1011, %1012 : vector<2x256xf32>
    %1014 = vector.extract_strided_slice %993 {offsets = [0, 256], sizes = [2, 256], strides = [1, 1]} : vector<2x1024xf32> to vector<2x256xf32>
    %1015 = vector.broadcast %65 : f32 to vector<2x256xf32>
    %1016 = arith.mulf %1014, %1015 : vector<2x256xf32>
    %1017 = arith.addf %1013, %1016 : vector<2x256xf32>
    %1018 = vector.extract_strided_slice %993 {offsets = [0, 512], sizes = [2, 256], strides = [1, 1]} : vector<2x1024xf32> to vector<2x256xf32>
    %1019 = vector.broadcast %66 : f32 to vector<2x256xf32>
    %1020 = arith.mulf %1018, %1019 : vector<2x256xf32>
    %1021 = arith.addf %1017, %1020 : vector<2x256xf32>
    %1022 = vector.extract_strided_slice %993 {offsets = [0, 768], sizes = [2, 256], strides = [1, 1]} : vector<2x1024xf32> to vector<2x256xf32>
    %1023 = vector.broadcast %67 : f32 to vector<2x256xf32>
    %1024 = arith.mulf %1022, %1023 : vector<2x256xf32>
    %1025 = arith.addf %1021, %1024 : vector<2x256xf32>
    %1026 = vector.broadcast %77 : f32 to vector<2x256xf32>
    %1027 = arith.addf %1025, %1026 : vector<2x256xf32>
    %1028 = vector.extract_strided_slice %993 {offsets = [0, 0], sizes = [2, 256], strides = [1, 1]} : vector<2x1024xf32> to vector<2x256xf32>
    %1029 = vector.broadcast %68 : f32 to vector<2x256xf32>
    %1030 = arith.mulf %1028, %1029 : vector<2x256xf32>
    %1031 = vector.extract_strided_slice %993 {offsets = [0, 256], sizes = [2, 256], strides = [1, 1]} : vector<2x1024xf32> to vector<2x256xf32>
    %1032 = vector.broadcast %69 : f32 to vector<2x256xf32>
    %1033 = arith.mulf %1031, %1032 : vector<2x256xf32>
    %1034 = arith.addf %1030, %1033 : vector<2x256xf32>
    %1035 = vector.extract_strided_slice %993 {offsets = [0, 512], sizes = [2, 256], strides = [1, 1]} : vector<2x1024xf32> to vector<2x256xf32>
    %1036 = vector.broadcast %70 : f32 to vector<2x256xf32>
    %1037 = arith.mulf %1035, %1036 : vector<2x256xf32>
    %1038 = arith.addf %1034, %1037 : vector<2x256xf32>
    %1039 = vector.extract_strided_slice %993 {offsets = [0, 768], sizes = [2, 256], strides = [1, 1]} : vector<2x1024xf32> to vector<2x256xf32>
    %1040 = vector.broadcast %71 : f32 to vector<2x256xf32>
    %1041 = arith.mulf %1039, %1040 : vector<2x256xf32>
    %1042 = arith.addf %1038, %1041 : vector<2x256xf32>
    %1043 = vector.broadcast %78 : f32 to vector<2x256xf32>
    %1044 = arith.addf %1042, %1043 : vector<2x256xf32>
    %1045 = vector.extract_strided_slice %993 {offsets = [0, 0], sizes = [2, 256], strides = [1, 1]} : vector<2x1024xf32> to vector<2x256xf32>
    %1046 = vector.broadcast %72 : f32 to vector<2x256xf32>
    %1047 = arith.mulf %1045, %1046 : vector<2x256xf32>
    %1048 = vector.extract_strided_slice %993 {offsets = [0, 256], sizes = [2, 256], strides = [1, 1]} : vector<2x1024xf32> to vector<2x256xf32>
    %1049 = vector.broadcast %73 : f32 to vector<2x256xf32>
    %1050 = arith.mulf %1048, %1049 : vector<2x256xf32>
    %1051 = arith.addf %1047, %1050 : vector<2x256xf32>
    %1052 = vector.extract_strided_slice %993 {offsets = [0, 512], sizes = [2, 256], strides = [1, 1]} : vector<2x1024xf32> to vector<2x256xf32>
    %1053 = vector.broadcast %74 : f32 to vector<2x256xf32>
    %1054 = arith.mulf %1052, %1053 : vector<2x256xf32>
    %1055 = arith.addf %1051, %1054 : vector<2x256xf32>
    %1056 = vector.extract_strided_slice %993 {offsets = [0, 768], sizes = [2, 256], strides = [1, 1]} : vector<2x1024xf32> to vector<2x256xf32>
    %1057 = vector.broadcast %75 : f32 to vector<2x256xf32>
    %1058 = arith.mulf %1056, %1057 : vector<2x256xf32>
    %1059 = arith.addf %1055, %1058 : vector<2x256xf32>
    %1060 = vector.broadcast %79 : f32 to vector<2x256xf32>
    %1061 = arith.addf %1059, %1060 : vector<2x256xf32>
    %1062 = tpu.concatenate %1010, %1027, %1044, %1061 in 1 : vector<2x256xf32>, vector<2x256xf32>, vector<2x256xf32>, vector<2x256xf32> -> vector<2x1024xf32>
    %1063 = arith.addf %1062, %835 : vector<2x1024xf32>
    %1064 = vector.extract_strided_slice %1063 {offsets = [0, 0], sizes = [2, 256], strides = [1, 1]} : vector<2x1024xf32> to vector<2x256xf32>
    %1065 = vector.broadcast %40 : f32 to vector<2x256xf32>
    %1066 = arith.mulf %1064, %1065 : vector<2x256xf32>
    %1067 = vector.extract_strided_slice %1063 {offsets = [0, 256], sizes = [2, 256], strides = [1, 1]} : vector<2x1024xf32> to vector<2x256xf32>
    %1068 = vector.broadcast %41 : f32 to vector<2x256xf32>
    %1069 = arith.mulf %1067, %1068 : vector<2x256xf32>
    %1070 = arith.addf %1066, %1069 : vector<2x256xf32>
    %1071 = vector.extract_strided_slice %1063 {offsets = [0, 512], sizes = [2, 256], strides = [1, 1]} : vector<2x1024xf32> to vector<2x256xf32>
    %1072 = vector.broadcast %42 : f32 to vector<2x256xf32>
    %1073 = arith.mulf %1071, %1072 : vector<2x256xf32>
    %1074 = arith.addf %1070, %1073 : vector<2x256xf32>
    %1075 = vector.extract_strided_slice %1063 {offsets = [0, 768], sizes = [2, 256], strides = [1, 1]} : vector<2x1024xf32> to vector<2x256xf32>
    %1076 = vector.broadcast %43 : f32 to vector<2x256xf32>
    %1077 = arith.mulf %1075, %1076 : vector<2x256xf32>
    %1078 = arith.addf %1074, %1077 : vector<2x256xf32>
    %1079 = vector.broadcast %56 : f32 to vector<2x256xf32>
    %1080 = arith.addf %1078, %1079 : vector<2x256xf32>
    %1081 = vector.extract_strided_slice %1063 {offsets = [0, 0], sizes = [2, 256], strides = [1, 1]} : vector<2x1024xf32> to vector<2x256xf32>
    %1082 = vector.broadcast %44 : f32 to vector<2x256xf32>
    %1083 = arith.mulf %1081, %1082 : vector<2x256xf32>
    %1084 = vector.extract_strided_slice %1063 {offsets = [0, 256], sizes = [2, 256], strides = [1, 1]} : vector<2x1024xf32> to vector<2x256xf32>
    %1085 = vector.broadcast %45 : f32 to vector<2x256xf32>
    %1086 = arith.mulf %1084, %1085 : vector<2x256xf32>
    %1087 = arith.addf %1083, %1086 : vector<2x256xf32>
    %1088 = vector.extract_strided_slice %1063 {offsets = [0, 512], sizes = [2, 256], strides = [1, 1]} : vector<2x1024xf32> to vector<2x256xf32>
    %1089 = vector.broadcast %46 : f32 to vector<2x256xf32>
    %1090 = arith.mulf %1088, %1089 : vector<2x256xf32>
    %1091 = arith.addf %1087, %1090 : vector<2x256xf32>
    %1092 = vector.extract_strided_slice %1063 {offsets = [0, 768], sizes = [2, 256], strides = [1, 1]} : vector<2x1024xf32> to vector<2x256xf32>
    %1093 = vector.broadcast %47 : f32 to vector<2x256xf32>
    %1094 = arith.mulf %1092, %1093 : vector<2x256xf32>
    %1095 = arith.addf %1091, %1094 : vector<2x256xf32>
    %1096 = vector.broadcast %57 : f32 to vector<2x256xf32>
    %1097 = arith.addf %1095, %1096 : vector<2x256xf32>
    %1098 = vector.extract_strided_slice %1063 {offsets = [0, 0], sizes = [2, 256], strides = [1, 1]} : vector<2x1024xf32> to vector<2x256xf32>
    %1099 = vector.broadcast %48 : f32 to vector<2x256xf32>
    %1100 = arith.mulf %1098, %1099 : vector<2x256xf32>
    %1101 = vector.extract_strided_slice %1063 {offsets = [0, 256], sizes = [2, 256], strides = [1, 1]} : vector<2x1024xf32> to vector<2x256xf32>
    %1102 = vector.broadcast %49 : f32 to vector<2x256xf32>
    %1103 = arith.mulf %1101, %1102 : vector<2x256xf32>
    %1104 = arith.addf %1100, %1103 : vector<2x256xf32>
    %1105 = vector.extract_strided_slice %1063 {offsets = [0, 512], sizes = [2, 256], strides = [1, 1]} : vector<2x1024xf32> to vector<2x256xf32>
    %1106 = vector.broadcast %50 : f32 to vector<2x256xf32>
    %1107 = arith.mulf %1105, %1106 : vector<2x256xf32>
    %1108 = arith.addf %1104, %1107 : vector<2x256xf32>
    %1109 = vector.extract_strided_slice %1063 {offsets = [0, 768], sizes = [2, 256], strides = [1, 1]} : vector<2x1024xf32> to vector<2x256xf32>
    %1110 = vector.broadcast %51 : f32 to vector<2x256xf32>
    %1111 = arith.mulf %1109, %1110 : vector<2x256xf32>
    %1112 = arith.addf %1108, %1111 : vector<2x256xf32>
    %1113 = vector.broadcast %58 : f32 to vector<2x256xf32>
    %1114 = arith.addf %1112, %1113 : vector<2x256xf32>
    %1115 = vector.extract_strided_slice %1063 {offsets = [0, 0], sizes = [2, 256], strides = [1, 1]} : vector<2x1024xf32> to vector<2x256xf32>
    %1116 = vector.broadcast %52 : f32 to vector<2x256xf32>
    %1117 = arith.mulf %1115, %1116 : vector<2x256xf32>
    %1118 = vector.extract_strided_slice %1063 {offsets = [0, 256], sizes = [2, 256], strides = [1, 1]} : vector<2x1024xf32> to vector<2x256xf32>
    %1119 = vector.broadcast %53 : f32 to vector<2x256xf32>
    %1120 = arith.mulf %1118, %1119 : vector<2x256xf32>
    %1121 = arith.addf %1117, %1120 : vector<2x256xf32>
    %1122 = vector.extract_strided_slice %1063 {offsets = [0, 512], sizes = [2, 256], strides = [1, 1]} : vector<2x1024xf32> to vector<2x256xf32>
    %1123 = vector.broadcast %54 : f32 to vector<2x256xf32>
    %1124 = arith.mulf %1122, %1123 : vector<2x256xf32>
    %1125 = arith.addf %1121, %1124 : vector<2x256xf32>
    %1126 = vector.extract_strided_slice %1063 {offsets = [0, 768], sizes = [2, 256], strides = [1, 1]} : vector<2x1024xf32> to vector<2x256xf32>
    %1127 = vector.broadcast %55 : f32 to vector<2x256xf32>
    %1128 = arith.mulf %1126, %1127 : vector<2x256xf32>
    %1129 = arith.addf %1125, %1128 : vector<2x256xf32>
    %1130 = vector.broadcast %59 : f32 to vector<2x256xf32>
    %1131 = arith.addf %1129, %1130 : vector<2x256xf32>
    %1132 = tpu.concatenate %1080, %1097, %1114, %1131 in 1 : vector<2x256xf32>, vector<2x256xf32>, vector<2x256xf32>, vector<2x256xf32> -> vector<2x1024xf32>
    %1133 = arith.addf %1132, %82 : vector<2x1024xf32>
    %c0_185 = arith.constant 0 : index
    %c0_186 = arith.constant 0 : index
    %1134 = vector.load %arg11[%c0_185, %c0_186] : memref<2x1024xf32, #tpu.memory_space<vmem>>, vector<2x1024xf32>
    tpu.vector_store %arg11[%c0_185, %c0_186], %1133 {strides = array<i32>} : memref<2x1024xf32, #tpu.memory_space<vmem>>, vector<2x1024xf32>,
    return
  }
}

</mosaic_0001>

<llo_original>
// kernel: fin_forward.1
$region0: #{fin_forward.1}
  #allocation0 [shape = 'u32[]', space=smem, size = 0x4, offset = 0x4, fixed_abs, tag = 'smem constant byte address 0x4 - core index']
  #allocation1 [shape = 'u32[144,128]{1,0:T(1,128)}', space=vmem, size = 0x12000, scoped, tag = 'internal scratch']
  %s0 = inlined_call_operand.vmem [shape: f32[2,1024], index: 0, kind: input, shape index: {}]
  %s1 = inlined_call_operand.hbm [shape: bf16[1024,256], index: 1, kind: input, shape index: {}]
  %s2 = inlined_call_operand.hbm [shape: bf16[256,2048], index: 2, kind: input, shape index: {}]
  %s3 = inlined_call_operand.vmem [shape: f32[4,4], index: 3, kind: input, shape index: {}]
  %s4 = inlined_call_operand.vmem [shape: f32[1,4], index: 4, kind: input, shape index: {}]
  %s5 = inlined_call_operand.vmem [shape: f32[4,4], index: 5, kind: input, shape index: {}]
  %s6 = inlined_call_operand.vmem [shape: f32[1,4], index: 6, kind: input, shape index: {}]
  %s7 = inlined_call_operand.vmem [shape: f32[4,4], index: 7, kind: input, shape index: {}]
  %s8 = inlined_call_operand.vmem [shape: f32[1,4], index: 8, kind: input, shape index: {}]
  %s9 = inlined_call_operand.vmem [shape: f32[4,4], index: 9, kind: input, shape index: {}]
  %s10 = inlined_call_operand.vmem [shape: f32[1,4], index: 10, kind: input, shape index: {}]
  %s11 = inlined_call_operand.vmem [shape: f32[2,1024], index: 11, kind: output, shape index: {}]
  %s12 = sld [smem:[#allocation0]]
  $region94: #{fin_forward.1} parent=0
    _
  %s14 = ssub.s32 1, %s12
  %s15 = scalar_select 0, %s14, %s12
  $region1: #{fin_forward.1} parent=0
    #allocation2 [shape = 'u8[524288]{0}', space=vmem, size = 0x80000, scoped, tag = 'input window, operand 1, single buffered']
    #allocation3 [shape = 's32[1]{0}', space=sflag, size = 0x4, scoped, tag = 'scoped memory for fin_forward.1']
    #allocation4 [shape = 's32[1]{0}', space=sflag, size = 0x4, scoped, tag = 'scoped memory for fin_forward.1']
    #allocation5 [shape = 'u8[1048576]{0}', space=vmem, size = 0x100000, scoped, tag = 'input window, operand 2, single buffered']
    #allocation6 [shape = 's32[1]{0}', space=sflag, size = 0x4, scoped, tag = 'scoped memory for fin_forward.1']
    #allocation7 [shape = 'u8[2048]{0}', space=smem, size = 0x800, scoped, tag = 'input window, operand 3, single buffered']
    #allocation8 [shape = 'u8[512]{0}', space=smem, size = 0x200, scoped, tag = 'input window, operand 4, single buffered']
    #allocation9 [shape = 's32[1]{0}', space=sflag, size = 0x4, scoped, tag = 'scoped memory for fin_forward.1']
    #allocation10 [shape = 'u8[2048]{0}', space=smem, size = 0x800, scoped, tag = 'input window, operand 5, single buffered']
    #allocation11 [shape = 'u8[512]{0}', space=smem, size = 0x200, scoped, tag = 'input window, operand 6, single buffered']
    #allocation12 [shape = 's32[1]{0}', space=sflag, size = 0x4, scoped, tag = 'scoped memory for fin_forward.1']
    #allocation13 [shape = 'u8[2048]{0}', space=smem, size = 0x800, scoped, tag = 'input window, operand 7, single buffered']
    #allocation14 [shape = 'u8[512]{0}', space=smem, size = 0x200, scoped, tag = 'input window, operand 8, single buffered']
    #allocation15 [shape = 's32[1]{0}', space=sflag, size = 0x4, scoped, tag = 'scoped memory for fin_forward.1']
    #allocation16 [shape = 'u8[2048]{0}', space=smem, size = 0x800, scoped, tag = 'input window, operand 9, single buffered']
    #allocation17 [shape = 'u8[512]{0}', space=smem, size = 0x200, scoped, tag = 'input window, operand 10, single buffered']
    #allocation18 [shape = 's32[1]{0}', space=sflag, size = 0x4, scoped, tag = 'scoped memory for fin_forward.1']
    %16 = vsyncpa [#allocation3], 0
    %17 = vsyncpa [#allocation6], 0
    %18 = vsyncpa [#allocation4], 0
    %19 = vsyncpa [#allocation9], 0
    %20 = vsyncpa [#allocation12], 0
    %21 = vsyncpa [#allocation15], 0
    %22 = vsyncpa [#allocation18], 0
    // Predicated region
    $region2: #{fin_forward.1} parent=1 // pred_check
      _
    $region3: #{fin_forward.1} parent=1 // pred_check_branch
      %24 = sbr.rel (0) target = $region5
    $region4: #{fin_forward.1} parent=1 // pred_region
      _
    $region5: #{fin_forward.1} parent=1 // pred_fallthru
      _
    // Predicated region
    $region6: #{fin_forward.1} parent=1 // pred_check
      _
    $region7: #{fin_forward.1} parent=1 // pred_check_branch
      %26 = sbr.rel (0) target = $region9
    $region8: #{fin_forward.1} parent=1 // pred_region
      %s28 = ssub.s32 16384, 16384
      %29 = vsyncadd [#allocation3], %s28
      %s30 = sshll.u32 [#allocation2], 4
      %s31 = int_to_ptr.vmem [resolvable:$true] %s30
      %36 = dma.hbm_to_vmem [thread:$0]  %s1, 16384, %s31, [#allocation3], 128, 128, 8
    $region9: #{fin_forward.1} parent=1 // pred_fallthru
      _
    // Predicated region
    $region10: #{fin_forward.1} parent=1 // pred_check
      _
    $region11: #{fin_forward.1} parent=1 // pred_check_branch
      %38 = sbr.rel (0) target = $region13
    $region12: #{fin_forward.1} parent=1 // pred_region
      %s40 = ssub.s32 32768, 32768
      %41 = vsyncadd [#allocation6], %s40
      %s42 = sshll.u32 [#allocation5], 4
      %s43 = int_to_ptr.vmem [resolvable:$true] %s42
      %48 = dma.hbm_to_vmem [thread:$0]  %s2, 32768, %s43, [#allocation6], 1024, 1024, 64
    $region13: #{fin_forward.1} parent=1 // pred_fallthru
      _
    // Predicated region
    $region14: #{fin_forward.1} parent=1 // pred_check
      _
    $region15: #{fin_forward.1} parent=1 // pred_check_branch
      %50 = sbr.rel (0) target = $region17
    $region16: #{fin_forward.1} parent=1 // pred_region
      %s52 = ssub.s32 64, 64
      %53 = vsyncadd [#allocation4], %s52
      %s55 = sshll.u32 %s3, 4
      %s56 = int_to_ptr.vmem [resolvable:$true] %s55
      %58 = dma.vmem_to_smem %s56, 64, [#allocation7], [#allocation4]
    $region17: #{fin_forward.1} parent=1 // pred_fallthru
      _
    // Predicated region
    $region18: #{fin_forward.1} parent=1 // pred_check
      _
    $region19: #{fin_forward.1} parent=1 // pred_check_branch
      %60 = sbr.rel (0) target = $region21
    $region20: #{fin_forward.1} parent=1 // pred_region
      %s62 = ssub.s32 16, 16
      %63 = vsyncadd [#allocation9], %s62
      %s65 = sshll.u32 %s4, 4
      %s66 = int_to_ptr.vmem [resolvable:$true] %s65
      %68 = dma.vmem_to_smem %s66, 16, [#allocation8], [#allocation9]
    $region21: #{fin_forward.1} parent=1 // pred_fallthru
      _
    // Predicated region
    $region22: #{fin_forward.1} parent=1 // pred_check
      _
    $region23: #{fin_forward.1} parent=1 // pred_check_branch
      %70 = sbr.rel (0) target = $region25
    $region24: #{fin_forward.1} parent=1 // pred_region
      %s72 = ssub.s32 64, 64
      %73 = vsyncadd [#allocation9], %s72
      %s75 = sshll.u32 %s5, 4
      %s76 = int_to_ptr.vmem [resolvable:$true] %s75
      %78 = dma.vmem_to_smem %s76, 64, [#allocation10], [#allocation9]
    $region25: #{fin_forward.1} parent=1 // pred_fallthru
      _
    // Predicated region
    $region26: #{fin_forward.1} parent=1 // pred_check
      _
    $region27: #{fin_forward.1} parent=1 // pred_check_branch
      %80 = sbr.rel (0) target = $region29
    $region28: #{fin_forward.1} parent=1 // pred_region
      %s82 = ssub.s32 16, 16
      %83 = vsyncadd [#allocation12], %s82
      %s85 = sshll.u32 %s6, 4
      %s86 = int_to_ptr.vmem [resolvable:$true] %s85
      %88 = dma.vmem_to_smem %s86, 16, [#allocation11], [#allocation12]
    $region29: #{fin_forward.1} parent=1 // pred_fallthru
      _
    // Predicated region
    $region30: #{fin_forward.1} parent=1 // pred_check
      _
    $region31: #{fin_forward.1} parent=1 // pred_check_branch
      %90 = sbr.rel (0) target = $region33
    $region32: #{fin_forward.1} parent=1 // pred_region
      %s92 = ssub.s32 64, 64
      %93 = vsyncadd [#allocation12], %s92
      %s95 = sshll.u32 %s7, 4
      %s96 = int_to_ptr.vmem [resolvable:$true] %s95
      %98 = dma.vmem_to_smem %s96, 64, [#allocation13], [#allocation12]
    $region33: #{fin_forward.1} parent=1 // pred_fallthru
      _
    // Predicated region
    $region34: #{fin_forward.1} parent=1 // pred_check
      _
    $region35: #{fin_forward.1} parent=1 // pred_check_branch
      %100 = sbr.rel (0) target = $region37
    $region36: #{fin_forward.1} parent=1 // pred_region
      %s102 = ssub.s32 16, 16
      %103 = vsyncadd [#allocation15], %s102
      %s105 = sshll.u32 %s8, 4
      %s106 = int_to_ptr.vmem [resolvable:$true] %s105
      %108 = dma.vmem_to_smem %s106, 16, [#allocation14], [#allocation15]
    $region37: #{fin_forward.1} parent=1 // pred_fallthru
      _
    // Predicated region
    $region38: #{fin_forward.1} parent=1 // pred_check
      _
    $region39: #{fin_forward.1} parent=1 // pred_check_branch
      %110 = sbr.rel (0) target = $region41
    $region40: #{fin_forward.1} parent=1 // pred_region
      %s112 = ssub.s32 64, 64
      %113 = vsyncadd [#allocation15], %s112
      %s115 = sshll.u32 %s9, 4
      %s116 = int_to_ptr.vmem [resolvable:$true] %s115
      %118 = dma.vmem_to_smem %s116, 64, [#allocation16], [#allocation15]
    $region41: #{fin_forward.1} parent=1 // pred_fallthru
      _
    // Predicated region
    $region42: #{fin_forward.1} parent=1 // pred_check
      _
    $region43: #{fin_forward.1} parent=1 // pred_check_branch
      %120 = sbr.rel (0) target = $region45
    $region44: #{fin_forward.1} parent=1 // pred_region
      %s122 = ssub.s32 16, 16
      %123 = vsyncadd [#allocation18], %s122
      %s125 = sshll.u32 %s10, 4
      %s126 = int_to_ptr.vmem [resolvable:$true] %s125
      %128 = dma.vmem_to_smem %s126, 16, [#allocation17], [#allocation18]
    $region45: #{fin_forward.1} parent=1 // pred_fallthru
      _
    // Predicated region
    $region46: #{fin_forward.1} parent=1 // pred_check
      _
    $region47: #{fin_forward.1} parent=1 // pred_check_branch
      %130 = sbr.rel (0) target = $region49
    $region48: #{fin_forward.1} parent=1 // pred_region
      %131 = dma.done [#allocation3], 16384
    $region49: #{fin_forward.1} parent=1 // pred_fallthru
      _
    // Predicated region
    $region50: #{fin_forward.1} parent=1 // pred_check
      _
    $region51: #{fin_forward.1} parent=1 // pred_check_branch
      %133 = sbr.rel (0) target = $region53
    $region52: #{fin_forward.1} parent=1 // pred_region
      %134 = dma.done [#allocation6], 32768
    $region53: #{fin_forward.1} parent=1 // pred_fallthru
      _
    // Predicated region
    $region54: #{fin_forward.1} parent=1 // pred_check
      _
    $region55: #{fin_forward.1} parent=1 // pred_check_branch
      %136 = sbr.rel (0) target = $region57
    $region56: #{fin_forward.1} parent=1 // pred_region
      %137 = dma.done [#allocation4], 64
    $region57: #{fin_forward.1} parent=1 // pred_fallthru
      _
    // Predicated region
    $region58: #{fin_forward.1} parent=1 // pred_check
      _
    $region59: #{fin_forward.1} parent=1 // pred_check_branch
      %139 = sbr.rel (0) target = $region61
    $region60: #{fin_forward.1} parent=1 // pred_region
      %140 = dma.done [#allocation9], 16
    $region61: #{fin_forward.1} parent=1 // pred_fallthru
      _
    // Predicated region
    $region62: #{fin_forward.1} parent=1 // pred_check
      _
    $region63: #{fin_forward.1} parent=1 // pred_check_branch
      %142 = sbr.rel (0) target = $region65
    $region64: #{fin_forward.1} parent=1 // pred_region
      %143 = dma.done [#allocation9], 64
    $region65: #{fin_forward.1} parent=1 // pred_fallthru
      _
    // Predicated region
    $region66: #{fin_forward.1} parent=1 // pred_check
      _
    $region67: #{fin_forward.1} parent=1 // pred_check_branch
      %145 = sbr.rel (0) target = $region69
    $region68: #{fin_forward.1} parent=1 // pred_region
      %146 = dma.done [#allocation12], 16
    $region69: #{fin_forward.1} parent=1 // pred_fallthru
      _
    // Predicated region
    $region70: #{fin_forward.1} parent=1 // pred_check
      _
    $region71: #{fin_forward.1} parent=1 // pred_check_branch
      %148 = sbr.rel (0) target = $region73
    $region72: #{fin_forward.1} parent=1 // pred_region
      %149 = dma.done [#allocation12], 64
    $region73: #{fin_forward.1} parent=1 // pred_fallthru
      _
    // Predicated region
    $region74: #{fin_forward.1} parent=1 // pred_check
      _
    $region75: #{fin_forward.1} parent=1 // pred_check_branch
      %151 = sbr.rel (0) target = $region77
    $region76: #{fin_forward.1} parent=1 // pred_region
      %152 = dma.done [#allocation15], 16
    $region77: #{fin_forward.1} parent=1 // pred_fallthru
      _
    // Predicated region
    $region78: #{fin_forward.1} parent=1 // pred_check
      _
    $region79: #{fin_forward.1} parent=1 // pred_check_branch
      %154 = sbr.rel (0) target = $region81
    $region80: #{fin_forward.1} parent=1 // pred_region
      %155 = dma.done [#allocation15], 64
    $region81: #{fin_forward.1} parent=1 // pred_fallthru
      _
    // Predicated region
    $region82: #{fin_forward.1} parent=1 // pred_check
      _
    $region83: #{fin_forward.1} parent=1 // pred_check_branch
      %157 = sbr.rel (0) target = $region85
    $region84: #{fin_forward.1} parent=1 // pred_region
      %158 = dma.done [#allocation18], 16
    $region85: #{fin_forward.1} parent=1 // pred_fallthru
      _
    %159 = sfence
    %s160 = sld [smem:[#allocation7]]
    %s161 = sld [smem:[#allocation7 + $0x1]]
    %s162 = sld [smem:[#allocation7 + $0x2]]
    %s163 = sld [smem:[#allocation7 + $0x3]]
    %s164 = sld [smem:[#allocation7 + $0x80]]
    %s165 = sld [smem:[#allocation7 + $0x81]]
    %s166 = sld [smem:[#allocation7 + $0x82]]
    %s167 = sld [smem:[#allocation7 + $0x83]]
    %s168 = sld [smem:[#allocation7 + $0x100]]
    %s169 = sld [smem:[#allocation7 + $0x101]]
    %s170 = sld [smem:[#allocation7 + $0x102]]
    %s171 = sld [smem:[#allocation7 + $0x103]]
    %s172 = sld [smem:[#allocation7 + $0x180]]
    %s173 = sld [smem:[#allocation7 + $0x181]]
    %s174 = sld [smem:[#allocation7 + $0x182]]
    %s175 = sld [smem:[#allocation7 + $0x183]]
    %s176 = sld [smem:[#allocation8]]
    %s177 = sld [smem:[#allocation8 + $0x1]]
    %s178 = sld [smem:[#allocation8 + $0x2]]
    %s179 = sld [smem:[#allocation8 + $0x3]]
    %s180 = sld [smem:[#allocation10]]
    %s181 = sld [smem:[#allocation10 + $0x1]]
    %s182 = sld [smem:[#allocation10 + $0x2]]
    %s183 = sld [smem:[#allocation10 + $0x3]]
    %s184 = sld [smem:[#allocation10 + $0x80]]
    %s185 = sld [smem:[#allocation10 + $0x81]]
    %s186 = sld [smem:[#allocation10 + $0x82]]
    %s187 = sld [smem:[#allocation10 + $0x83]]
    %s188 = sld [smem:[#allocation10 + $0x100]]
    %s189 = sld [smem:[#allocation10 + $0x101]]
    %s190 = sld [smem:[#allocation10 + $0x102]]
    %s191 = sld [smem:[#allocation10 + $0x103]]
    %s192 = sld [smem:[#allocation10 + $0x180]]
    %s193 = sld [smem:[#allocation10 + $0x181]]
    %s194 = sld [smem:[#allocation10 + $0x182]]
    %s195 = sld [smem:[#allocation10 + $0x183]]
    %s196 = sld [smem:[#allocation11]]
    %s197 = sld [smem:[#allocation11 + $0x1]]
    %s198 = sld [smem:[#allocation11 + $0x2]]
    %s199 = sld [smem:[#allocation11 + $0x3]]
    %s200 = sld [smem:[#allocation13]]
    %s201 = sld [smem:[#allocation13 + $0x1]]
    %s202 = sld [smem:[#allocation13 + $0x2]]
    %s203 = sld [smem:[#allocation13 + $0x3]]
    %s204 = sld [smem:[#allocation13 + $0x80]]
    %s205 = sld [smem:[#allocation13 + $0x81]]
    %s206 = sld [smem:[#allocation13 + $0x82]]
    %s207 = sld [smem:[#allocation13 + $0x83]]
    %s208 = sld [smem:[#allocation13 + $0x100]]
    %s209 = sld [smem:[#allocation13 + $0x101]]
    %s210 = sld [smem:[#allocation13 + $0x102]]
    %s211 = sld [smem:[#allocation13 + $0x103]]
    %s212 = sld [smem:[#allocation13 + $0x180]]
    %s213 = sld [smem:[#allocation13 + $0x181]]
    %s214 = sld [smem:[#allocation13 + $0x182]]
    %s215 = sld [smem:[#allocation13 + $0x183]]
    %s216 = sld [smem:[#allocation14]]
    %s217 = sld [smem:[#allocation14 + $0x1]]
    %s218 = sld [smem:[#allocation14 + $0x2]]
    %s219 = sld [smem:[#allocation14 + $0x3]]
    %s220 = sld [smem:[#allocation16]]
    %s221 = sld [smem:[#allocation16 + $0x1]]
    %s222 = sld [smem:[#allocation16 + $0x2]]
    %s223 = sld [smem:[#allocation16 + $0x3]]
    %s224 = sld [smem:[#allocation16 + $0x80]]
    %s225 = sld [smem:[#allocation16 + $0x81]]
    %s226 = sld [smem:[#allocation16 + $0x82]]
    %s227 = sld [smem:[#allocation16 + $0x83]]
    %s228 = sld [smem:[#allocation16 + $0x100]]
    %s229 = sld [smem:[#allocation16 + $0x101]]
    %s230 = sld [smem:[#allocation16 + $0x102]]
    %s231 = sld [smem:[#allocation16 + $0x103]]
    %s232 = sld [smem:[#allocation16 + $0x180]]
    %s233 = sld [smem:[#allocation16 + $0x181]]
    %s234 = sld [smem:[#allocation16 + $0x182]]
    %s235 = sld [smem:[#allocation16 + $0x183]]
    %s236 = sld [smem:[#allocation17]]
    %s237 = sld [smem:[#allocation17 + $0x1]]
    %s238 = sld [smem:[#allocation17 + $0x2]]
    %s239 = sld [smem:[#allocation17 + $0x3]]
    %v240 = vld [vmem:[#allocation2] sm:$0xff]
    %v241 = vld [vmem:[#allocation2 + $0x8] sm:$0xff]
    %v242 = vld [vmem:[#allocation2 + $0x10] sm:$0xff]
    %v243 = vld [vmem:[#allocation2 + $0x18] sm:$0xff]
    %v244 = vld [vmem:[#allocation2 + $0x20] sm:$0xff]
    %v245 = vld [vmem:[#allocation2 + $0x28] sm:$0xff]
    %v246 = vld [vmem:[#allocation2 + $0x30] sm:$0xff]
    %v247 = vld [vmem:[#allocation2 + $0x38] sm:$0xff]
    %v248 = vld [vmem:[#allocation2 + $0x40] sm:$0xff]
    %v249 = vld [vmem:[#allocation2 + $0x48] sm:$0xff]
    %v250 = vld [vmem:[#allocation2 + $0x50] sm:$0xff]
    %v251 = vld [vmem:[#allocation2 + $0x58] sm:$0xff]
    %v252 = vld [vmem:[#allocation2 + $0x60] sm:$0xff]
    %v253 = vld [vmem:[#allocation2 + $0x68] sm:$0xff]
    %v254 = vld [vmem:[#allocation2 + $0x70] sm:$0xff]
    %v255 = vld [vmem:[#allocation2 + $0x78] sm:$0xff]
    %v256 = vld [vmem:[#allocation2 + $0x80] sm:$0xff]
    %v257 = vld [vmem:[#allocation2 + $0x88] sm:$0xff]
    %v258 = vld [vmem:[#allocation2 + $0x90] sm:$0xff]
    %v259 = vld [vmem:[#allocation2 + $0x98] sm:$0xff]
    %v260 = vld [vmem:[#allocation2 + $0xa0] sm:$0xff]
    %v261 = vld [vmem:[#allocation2 + $0xa8] sm:$0xff]
    %v262 = vld [vmem:[#allocation2 + $0xb0] sm:$0xff]
    %v263 = vld [vmem:[#allocation2 + $0xb8] sm:$0xff]
    %v264 = vld [vmem:[#allocation2 + $0xc0] sm:$0xff]
    %v265 = vld [vmem:[#allocation2 + $0xc8] sm:$0xff]
    %v266 = vld [vmem:[#allocation2 + $0xd0] sm:$0xff]
    %v267 = vld [vmem:[#allocation2 + $0xd8] sm:$0xff]
    %v268 = vld [vmem:[#allocation2 + $0xe0] sm:$0xff]
    %v269 = vld [vmem:[#allocation2 + $0xe8] sm:$0xff]
    %v270 = vld [vmem:[#allocation2 + $0xf0] sm:$0xff]
    %v271 = vld [vmem:[#allocation2 + $0xf8] sm:$0xff]
    %v272 = vld [vmem:[#allocation2 + $0x100] sm:$0xff]
    %v273 = vld [vmem:[#allocation2 + $0x108] sm:$0xff]
    %v274 = vld [vmem:[#allocation2 + $0x110] sm:$0xff]
    %v275 = vld [vmem:[#allocation2 + $0x118] sm:$0xff]
    %v276 = vld [vmem:[#allocation2 + $0x120] sm:$0xff]
    %v277 = vld [vmem:[#allocation2 + $0x128] sm:$0xff]
    %v278 = vld [vmem:[#allocation2 + $0x130] sm:$0xff]
    %v279 = vld [vmem:[#allocation2 + $0x138] sm:$0xff]
    %v280 = vld [vmem:[#allocation2 + $0x140] sm:$0xff]
    %v281 = vld [vmem:[#allocation2 + $0x148] sm:$0xff]
    %v282 = vld [vmem:[#allocation2 + $0x150] sm:$0xff]
    %v283 = vld [vmem:[#allocation2 + $0x158] sm:$0xff]
    %v284 = vld [vmem:[#allocation2 + $0x160] sm:$0xff]
    %v285 = vld [vmem:[#allocation2 + $0x168] sm:$0xff]
    %v286 = vld [vmem:[#allocation2 + $0x170] sm:$0xff]
    %v287 = vld [vmem:[#allocation2 + $0x178] sm:$0xff]
    %v288 = vld [vmem:[#allocation2 + $0x180] sm:$0xff]
    %v289 = vld [vmem:[#allocation2 + $0x188] sm:$0xff]
    %v290 = vld [vmem:[#allocation2 + $0x190] sm:$0xff]
    %v291 = vld [vmem:[#allocation2 + $0x198] sm:$0xff]
    %v292 = vld [vmem:[#allocation2 + $0x1a0] sm:$0xff]
    %v293 = vld [vmem:[#allocation2 + $0x1a8] sm:$0xff]
    %v294 = vld [vmem:[#allocation2 + $0x1b0] sm:$0xff]
    %v295 = vld [vmem:[#allocation2 + $0x1b8] sm:$0xff]
    %v296 = vld [vmem:[#allocation2 + $0x1c0] sm:$0xff]
    %v297 = vld [vmem:[#allocation2 + $0x1c8] sm:$0xff]
    %v298 = vld [vmem:[#allocation2 + $0x1d0] sm:$0xff]
    %v299 = vld [vmem:[#allocation2 + $0x1d8] sm:$0xff]
    %v300 = vld [vmem:[#allocation2 + $0x1e0] sm:$0xff]
    %v301 = vld [vmem:[#allocation2 + $0x1e8] sm:$0xff]
    %v302 = vld [vmem:[#allocation2 + $0x1f0] sm:$0xff]
    %v303 = vld [vmem:[#allocation2 + $0x1f8] sm:$0xff]
    %v304 = vld [vmem:[#allocation2 + $0x200] sm:$0xff]
    %v305 = vld [vmem:[#allocation2 + $0x208] sm:$0xff]
    %v306 = vld [vmem:[#allocation2 + $0x210] sm:$0xff]
    %v307 = vld [vmem:[#allocation2 + $0x218] sm:$0xff]
    %v308 = vld [vmem:[#allocation2 + $0x220] sm:$0xff]
    %v309 = vld [vmem:[#allocation2 + $0x228] sm:$0xff]
    %v310 = vld [vmem:[#allocation2 + $0x230] sm:$0xff]
    %v311 = vld [vmem:[#allocation2 + $0x238] sm:$0xff]
    %v312 = vld [vmem:[#allocation2 + $0x240] sm:$0xff]
    %v313 = vld [vmem:[#allocation2 + $0x248] sm:$0xff]
    %v314 = vld [vmem:[#allocation2 + $0x250] sm:$0xff]
    %v315 = vld [vmem:[#allocation2 + $0x258] sm:$0xff]
    %v316 = vld [vmem:[#allocation2 + $0x260] sm:$0xff]
    %v317 = vld [vmem:[#allocation2 + $0x268] sm:$0xff]
    %v318 = vld [vmem:[#allocation2 + $0x270] sm:$0xff]
    %v319 = vld [vmem:[#allocation2 + $0x278] sm:$0xff]
    %v320 = vld [vmem:[#allocation2 + $0x280] sm:$0xff]
    %v321 = vld [vmem:[#allocation2 + $0x288] sm:$0xff]
    %v322 = vld [vmem:[#allocation2 + $0x290] sm:$0xff]
    %v323 = vld [vmem:[#allocation2 + $0x298] sm:$0xff]
    %v324 = vld [vmem:[#allocation2 + $0x2a0] sm:$0xff]
    %v325 = vld [vmem:[#allocation2 + $0x2a8] sm:$0xff]
    %v326 = vld [vmem:[#allocation2 + $0x2b0] sm:$0xff]
    %v327 = vld [vmem:[#allocation2 + $0x2b8] sm:$0xff]
    %v328 = vld [vmem:[#allocation2 + $0x2c0] sm:$0xff]
    %v329 = vld [vmem:[#allocation2 + $0x2c8] sm:$0xff]
    %v330 = vld [vmem:[#allocation2 + $0x2d0] sm:$0xff]
    %v331 = vld [vmem:[#allocation2 + $0x2d8] sm:$0xff]
    %v332 = vld [vmem:[#allocation2 + $0x2e0] sm:$0xff]
    %v333 = vld [vmem:[#allocation2 + $0x2e8] sm:$0xff]
    %v334 = vld [vmem:[#allocation2 + $0x2f0] sm:$0xff]
    %v335 = vld [vmem:[#allocation2 + $0x2f8] sm:$0xff]
    %v336 = vld [vmem:[#allocation2 + $0x300] sm:$0xff]
    %v337 = vld [vmem:[#allocation2 + $0x308] sm:$0xff]
    %v338 = vld [vmem:[#allocation2 + $0x310] sm:$0xff]
    %v339 = vld [vmem:[#allocation2 + $0x318] sm:$0xff]
    %v340 = vld [vmem:[#allocation2 + $0x320] sm:$0xff]
    %v341 = vld [vmem:[#allocation2 + $0x328] sm:$0xff]
    %v342 = vld [vmem:[#allocation2 + $0x330] sm:$0xff]
    %v343 = vld [vmem:[#allocation2 + $0x338] sm:$0xff]
    %v344 = vld [vmem:[#allocation2 + $0x340] sm:$0xff]
    %v345 = vld [vmem:[#allocation2 + $0x348] sm:$0xff]
    %v346 = vld [vmem:[#allocation2 + $0x350] sm:$0xff]
    %v347 = vld [vmem:[#allocation2 + $0x358] sm:$0xff]
    %v348 = vld [vmem:[#allocation2 + $0x360] sm:$0xff]
    %v349 = vld [vmem:[#allocation2 + $0x368] sm:$0xff]
    %v350 = vld [vmem:[#allocation2 + $0x370] sm:$0xff]
    %v351 = vld [vmem:[#allocation2 + $0x378] sm:$0xff]
    %v352 = vld [vmem:[#allocation2 + $0x380] sm:$0xff]
    %v353 = vld [vmem:[#allocation2 + $0x388] sm:$0xff]
    %v354 = vld [vmem:[#allocation2 + $0x390] sm:$0xff]
    %v355 = vld [vmem:[#allocation2 + $0x398] sm:$0xff]
    %v356 = vld [vmem:[#allocation2 + $0x3a0] sm:$0xff]
    %v357 = vld [vmem:[#allocation2 + $0x3a8] sm:$0xff]
    %v358 = vld [vmem:[#allocation2 + $0x3b0] sm:$0xff]
    %v359 = vld [vmem:[#allocation2 + $0x3b8] sm:$0xff]
    %v360 = vld [vmem:[#allocation2 + $0x3c0] sm:$0xff]
    %v361 = vld [vmem:[#allocation2 + $0x3c8] sm:$0xff]
    %v362 = vld [vmem:[#allocation2 + $0x3d0] sm:$0xff]
    %v363 = vld [vmem:[#allocation2 + $0x3d8] sm:$0xff]
    %v364 = vld [vmem:[#allocation2 + $0x3e0] sm:$0xff]
    %v365 = vld [vmem:[#allocation2 + $0x3e8] sm:$0xff]
    %v366 = vld [vmem:[#allocation2 + $0x3f0] sm:$0xff]
    %v367 = vld [vmem:[#allocation2 + $0x3f8] sm:$0xff]
    %v368 = vld [vmem:[#allocation5] sm:$0xff]
    %v369 = vld [vmem:[#allocation5 + $0x8] sm:$0xff]
    %v370 = vld [vmem:[#allocation5 + $0x10] sm:$0xff]
    %v371 = vld [vmem:[#allocation5 + $0x18] sm:$0xff]
    %v372 = vld [vmem:[#allocation5 + $0x20] sm:$0xff]
    %v373 = vld [vmem:[#allocation5 + $0x28] sm:$0xff]
    %v374 = vld [vmem:[#allocation5 + $0x30] sm:$0xff]
    %v375 = vld [vmem:[#allocation5 + $0x38] sm:$0xff]
    %v376 = vld [vmem:[#allocation5 + $0x40] sm:$0xff]
    %v377 = vld [vmem:[#allocation5 + $0x48] sm:$0xff]
    %v378 = vld [vmem:[#allocation5 + $0x50] sm:$0xff]
    %v379 = vld [vmem:[#allocation5 + $0x58] sm:$0xff]
    %v380 = vld [vmem:[#allocation5 + $0x60] sm:$0xff]
    %v381 = vld [vmem:[#allocation5 + $0x68] sm:$0xff]
    %v382 = vld [vmem:[#allocation5 + $0x70] sm:$0xff]
    %v383 = vld [vmem:[#allocation5 + $0x78] sm:$0xff]
    %v384 = vld [vmem:[#allocation5 + $0x80] sm:$0xff]
    %v385 = vld [vmem:[#allocation5 + $0x88] sm:$0xff]
    %v386 = vld [vmem:[#allocation5 + $0x90] sm:$0xff]
    %v387 = vld [vmem:[#allocation5 + $0x98] sm:$0xff]
    %v388 = vld [vmem:[#allocation5 + $0xa0] sm:$0xff]
    %v389 = vld [vmem:[#allocation5 + $0xa8] sm:$0xff]
    %v390 = vld [vmem:[#allocation5 + $0xb0] sm:$0xff]
    %v391 = vld [vmem:[#allocation5 + $0xb8] sm:$0xff]
    %v392 = vld [vmem:[#allocation5 + $0xc0] sm:$0xff]
    %v393 = vld [vmem:[#allocation5 + $0xc8] sm:$0xff]
    %v394 = vld [vmem:[#allocation5 + $0xd0] sm:$0xff]
    %v395 = vld [vmem:[#allocation5 + $0xd8] sm:$0xff]
    %v396 = vld [vmem:[#allocation5 + $0xe0] sm:$0xff]
    %v397 = vld [vmem:[#allocation5 + $0xe8] sm:$0xff]
    %v398 = vld [vmem:[#allocation5 + $0xf0] sm:$0xff]
    %v399 = vld [vmem:[#allocation5 + $0xf8] sm:$0xff]
    %v400 = vld [vmem:[#allocation5 + $0x100] sm:$0xff]
    %v401 = vld [vmem:[#allocation5 + $0x108] sm:$0xff]
    %v402 = vld [vmem:[#allocation5 + $0x110] sm:$0xff]
    %v403 = vld [vmem:[#allocation5 + $0x118] sm:$0xff]
    %v404 = vld [vmem:[#allocation5 + $0x120] sm:$0xff]
    %v405 = vld [vmem:[#allocation5 + $0x128] sm:$0xff]
    %v406 = vld [vmem:[#allocation5 + $0x130] sm:$0xff]
    %v407 = vld [vmem:[#allocation5 + $0x138] sm:$0xff]
    %v408 = vld [vmem:[#allocation5 + $0x140] sm:$0xff]
    %v409 = vld [vmem:[#allocation5 + $0x148] sm:$0xff]
    %v410 = vld [vmem:[#allocation5 + $0x150] sm:$0xff]
    %v411 = vld [vmem:[#allocation5 + $0x158] sm:$0xff]
    %v412 = vld [vmem:[#allocation5 + $0x160] sm:$0xff]
    %v413 = vld [vmem:[#allocation5 + $0x168] sm:$0xff]
    %v414 = vld [vmem:[#allocation5 + $0x170] sm:$0xff]
    %v415 = vld [vmem:[#allocation5 + $0x178] sm:$0xff]
    %v416 = vld [vmem:[#allocation5 + $0x180] sm:$0xff]
    %v417 = vld [vmem:[#allocation5 + $0x188] sm:$0xff]
    %v418 = vld [vmem:[#allocation5 + $0x190] sm:$0xff]
    %v419 = vld [vmem:[#allocation5 + $0x198] sm:$0xff]
    %v420 = vld [vmem:[#allocation5 + $0x1a0] sm:$0xff]
    %v421 = vld [vmem:[#allocation5 + $0x1a8] sm:$0xff]
    %v422 = vld [vmem:[#allocation5 + $0x1b0] sm:$0xff]
    %v423 = vld [vmem:[#allocation5 + $0x1b8] sm:$0xff]
    %v424 = vld [vmem:[#allocation5 + $0x1c0] sm:$0xff]
    %v425 = vld [vmem:[#allocation5 + $0x1c8] sm:$0xff]
    %v426 = vld [vmem:[#allocation5 + $0x1d0] sm:$0xff]
    %v427 = vld [vmem:[#allocation5 + $0x1d8] sm:$0xff]
    %v428 = vld [vmem:[#allocation5 + $0x1e0] sm:$0xff]
    %v429 = vld [vmem:[#allocation5 + $0x1e8] sm:$0xff]
    %v430 = vld [vmem:[#allocation5 + $0x1f0] sm:$0xff]
    %v431 = vld [vmem:[#allocation5 + $0x1f8] sm:$0xff]
    %v432 = vld [vmem:[#allocation5 + $0x200] sm:$0xff]
    %v433 = vld [vmem:[#allocation5 + $0x208] sm:$0xff]
    %v434 = vld [vmem:[#allocation5 + $0x210] sm:$0xff]
    %v435 = vld [vmem:[#allocation5 + $0x218] sm:$0xff]
    %v436 = vld [vmem:[#allocation5 + $0x220] sm:$0xff]
    %v437 = vld [vmem:[#allocation5 + $0x228] sm:$0xff]
    %v438 = vld [vmem:[#allocation5 + $0x230] sm:$0xff]
    %v439 = vld [vmem:[#allocation5 + $0x238] sm:$0xff]
    %v440 = vld [vmem:[#allocation5 + $0x240] sm:$0xff]
    %v441 = vld [vmem:[#allocation5 + $0x248] sm:$0xff]
    %v442 = vld [vmem:[#allocation5 + $0x250] sm:$0xff]
    %v443 = vld [vmem:[#allocation5 + $0x258] sm:$0xff]
    %v444 = vld [vmem:[#allocation5 + $0x260] sm:$0xff]
    %v445 = vld [vmem:[#allocation5 + $0x268] sm:$0xff]
    %v446 = vld [vmem:[#allocation5 + $0x270] sm:$0xff]
    %v447 = vld [vmem:[#allocation5 + $0x278] sm:$0xff]
    %v448 = vld [vmem:[#allocation5 + $0x280] sm:$0xff]
    %v449 = vld [vmem:[#allocation5 + $0x288] sm:$0xff]
    %v450 = vld [vmem:[#allocation5 + $0x290] sm:$0xff]
    %v451 = vld [vmem:[#allocation5 + $0x298] sm:$0xff]
    %v452 = vld [vmem:[#allocation5 + $0x2a0] sm:$0xff]
    %v453 = vld [vmem:[#allocation5 + $0x2a8] sm:$0xff]
    %v454 = vld [vmem:[#allocation5 + $0x2b0] sm:$0xff]
    %v455 = vld [vmem:[#allocation5 + $0x2b8] sm:$0xff]
    %v456 = vld [vmem:[#allocation5 + $0x2c0] sm:$0xff]
    %v457 = vld [vmem:[#allocation5 + $0x2c8] sm:$0xff]
    %v458 = vld [vmem:[#allocation5 + $0x2d0] sm:$0xff]
    %v459 = vld [vmem:[#allocation5 + $0x2d8] sm:$0xff]
    %v460 = vld [vmem:[#allocation5 + $0x2e0] sm:$0xff]
    %v461 = vld [vmem:[#allocation5 + $0x2e8] sm:$0xff]
    %v462 = vld [vmem:[#allocation5 + $0x2f0] sm:$0xff]
    %v463 = vld [vmem:[#allocation5 + $0x2f8] sm:$0xff]
    %v464 = vld [vmem:[#allocation5 + $0x300] sm:$0xff]
    %v465 = vld [vmem:[#allocation5 + $0x308] sm:$0xff]
    %v466 = vld [vmem:[#allocation5 + $0x310] sm:$0xff]
    %v467 = vld [vmem:[#allocation5 + $0x318] sm:$0xff]
    %v468 = vld [vmem:[#allocation5 + $0x320] sm:$0xff]
    %v469 = vld [vmem:[#allocation5 + $0x328] sm:$0xff]
    %v470 = vld [vmem:[#allocation5 + $0x330] sm:$0xff]
    %v471 = vld [vmem:[#allocation5 + $0x338] sm:$0xff]
    %v472 = vld [vmem:[#allocation5 + $0x340] sm:$0xff]
    %v473 = vld [vmem:[#allocation5 + $0x348] sm:$0xff]
    %v474 = vld [vmem:[#allocation5 + $0x350] sm:$0xff]
    %v475 = vld [vmem:[#allocation5 + $0x358] sm:$0xff]
    %v476 = vld [vmem:[#allocation5 + $0x360] sm:$0xff]
    %v477 = vld [vmem:[#allocation5 + $0x368] sm:$0xff]
    %v478 = vld [vmem:[#allocation5 + $0x370] sm:$0xff]
    %v479 = vld [vmem:[#allocation5 + $0x378] sm:$0xff]
    %v480 = vld [vmem:[#allocation5 + $0x380] sm:$0xff]
    %v481 = vld [vmem:[#allocation5 + $0x388] sm:$0xff]
    %v482 = vld [vmem:[#allocation5 + $0x390] sm:$0xff]
    %v483 = vld [vmem:[#allocation5 + $0x398] sm:$0xff]
    %v484 = vld [vmem:[#allocation5 + $0x3a0] sm:$0xff]
    %v485 = vld [vmem:[#allocation5 + $0x3a8] sm:$0xff]
    %v486 = vld [vmem:[#allocation5 + $0x3b0] sm:$0xff]
    %v487 = vld [vmem:[#allocation5 + $0x3b8] sm:$0xff]
    %v488 = vld [vmem:[#allocation5 + $0x3c0] sm:$0xff]
    %v489 = vld [vmem:[#allocation5 + $0x3c8] sm:$0xff]
    %v490 = vld [vmem:[#allocation5 + $0x3d0] sm:$0xff]
    %v491 = vld [vmem:[#allocation5 + $0x3d8] sm:$0xff]
    %v492 = vld [vmem:[#allocation5 + $0x3e0] sm:$0xff]
    %v493 = vld [vmem:[#allocation5 + $0x3e8] sm:$0xff]
    %v494 = vld [vmem:[#allocation5 + $0x3f0] sm:$0xff]
    %v495 = vld [vmem:[#allocation5 + $0x3f8] sm:$0xff]
    %v496 = vld [vmem:[#allocation5 + $0x400] sm:$0xff]
    %v497 = vld [vmem:[#allocation5 + $0x408] sm:$0xff]
    %v498 = vld [vmem:[#allocation5 + $0x410] sm:$0xff]
    %v499 = vld [vmem:[#allocation5 + $0x418] sm:$0xff]
    %v500 = vld [vmem:[#allocation5 + $0x420] sm:$0xff]
    %v501 = vld [vmem:[#allocation5 + $0x428] sm:$0xff]
    %v502 = vld [vmem:[#allocation5 + $0x430] sm:$0xff]
    %v503 = vld [vmem:[#allocation5 + $0x438] sm:$0xff]
    %v504 = vld [vmem:[#allocation5 + $0x440] sm:$0xff]
    %v505 = vld [vmem:[#allocation5 + $0x448] sm:$0xff]
    %v506 = vld [vmem:[#allocation5 + $0x450] sm:$0xff]
    %v507 = vld [vmem:[#allocation5 + $0x458] sm:$0xff]
    %v508 = vld [vmem:[#allocation5 + $0x460] sm:$0xff]
    %v509 = vld [vmem:[#allocation5 + $0x468] sm:$0xff]
    %v510 = vld [vmem:[#allocation5 + $0x470] sm:$0xff]
    %v511 = vld [vmem:[#allocation5 + $0x478] sm:$0xff]
    %v512 = vld [vmem:[#allocation5 + $0x480] sm:$0xff]
    %v513 = vld [vmem:[#allocation5 + $0x488] sm:$0xff]
    %v514 = vld [vmem:[#allocation5 + $0x490] sm:$0xff]
    %v515 = vld [vmem:[#allocation5 + $0x498] sm:$0xff]
    %v516 = vld [vmem:[#allocation5 + $0x4a0] sm:$0xff]
    %v517 = vld [vmem:[#allocation5 + $0x4a8] sm:$0xff]
    %v518 = vld [vmem:[#allocation5 + $0x4b0] sm:$0xff]
    %v519 = vld [vmem:[#allocation5 + $0x4b8] sm:$0xff]
    %v520 = vld [vmem:[#allocation5 + $0x4c0] sm:$0xff]
    %v521 = vld [vmem:[#allocation5 + $0x4c8] sm:$0xff]
    %v522 = vld [vmem:[#allocation5 + $0x4d0] sm:$0xff]
    %v523 = vld [vmem:[#allocation5 + $0x4d8] sm:$0xff]
    %v524 = vld [vmem:[#allocation5 + $0x4e0] sm:$0xff]
    %v525 = vld [vmem:[#allocation5 + $0x4e8] sm:$0xff]
    %v526 = vld [vmem:[#allocation5 + $0x4f0] sm:$0xff]
    %v527 = vld [vmem:[#allocation5 + $0x4f8] sm:$0xff]
    %v528 = vld [vmem:[#allocation5 + $0x500] sm:$0xff]
    %v529 = vld [vmem:[#allocation5 + $0x508] sm:$0xff]
    %v530 = vld [vmem:[#allocation5 + $0x510] sm:$0xff]
    %v531 = vld [vmem:[#allocation5 + $0x518] sm:$0xff]
    %v532 = vld [vmem:[#allocation5 + $0x520] sm:$0xff]
    %v533 = vld [vmem:[#allocation5 + $0x528] sm:$0xff]
    %v534 = vld [vmem:[#allocation5 + $0x530] sm:$0xff]
    %v535 = vld [vmem:[#allocation5 + $0x538] sm:$0xff]
    %v536 = vld [vmem:[#allocation5 + $0x540] sm:$0xff]
    %v537 = vld [vmem:[#allocation5 + $0x548] sm:$0xff]
    %v538 = vld [vmem:[#allocation5 + $0x550] sm:$0xff]
    %v539 = vld [vmem:[#allocation5 + $0x558] sm:$0xff]
    %v540 = vld [vmem:[#allocation5 + $0x560] sm:$0xff]
    %v541 = vld [vmem:[#allocation5 + $0x568] sm:$0xff]
    %v542 = vld [vmem:[#allocation5 + $0x570] sm:$0xff]
    %v543 = vld [vmem:[#allocation5 + $0x578] sm:$0xff]
    %v544 = vld [vmem:[#allocation5 + $0x580] sm:$0xff]
    %v545 = vld [vmem:[#allocation5 + $0x588] sm:$0xff]
    %v546 = vld [vmem:[#allocation5 + $0x590] sm:$0xff]
    %v547 = vld [vmem:[#allocation5 + $0x598] sm:$0xff]
    %v548 = vld [vmem:[#allocation5 + $0x5a0] sm:$0xff]
    %v549 = vld [vmem:[#allocation5 + $0x5a8] sm:$0xff]
    %v550 = vld [vmem:[#allocation5 + $0x5b0] sm:$0xff]
    %v551 = vld [vmem:[#allocation5 + $0x5b8] sm:$0xff]
    %v552 = vld [vmem:[#allocation5 + $0x5c0] sm:$0xff]
    %v553 = vld [vmem:[#allocation5 + $0x5c8] sm:$0xff]
    %v554 = vld [vmem:[#allocation5 + $0x5d0] sm:$0xff]
    %v555 = vld [vmem:[#allocation5 + $0x5d8] sm:$0xff]
    %v556 = vld [vmem:[#allocation5 + $0x5e0] sm:$0xff]
    %v557 = vld [vmem:[#allocation5 + $0x5e8] sm:$0xff]
    %v558 = vld [vmem:[#allocation5 + $0x5f0] sm:$0xff]
    %v559 = vld [vmem:[#allocation5 + $0x5f8] sm:$0xff]
    %v560 = vld [vmem:[#allocation5 + $0x600] sm:$0xff]
    %v561 = vld [vmem:[#allocation5 + $0x608] sm:$0xff]
    %v562 = vld [vmem:[#allocation5 + $0x610] sm:$0xff]
    %v563 = vld [vmem:[#allocation5 + $0x618] sm:$0xff]
    %v564 = vld [vmem:[#allocation5 + $0x620] sm:$0xff]
    %v565 = vld [vmem:[#allocation5 + $0x628] sm:$0xff]
    %v566 = vld [vmem:[#allocation5 + $0x630] sm:$0xff]
    %v567 = vld [vmem:[#allocation5 + $0x638] sm:$0xff]
    %v568 = vld [vmem:[#allocation5 + $0x640] sm:$0xff]
    %v569 = vld [vmem:[#allocation5 + $0x648] sm:$0xff]
    %v570 = vld [vmem:[#allocation5 + $0x650] sm:$0xff]
    %v571 = vld [vmem:[#allocation5 + $0x658] sm:$0xff]
    %v572 = vld [vmem:[#allocation5 + $0x660] sm:$0xff]
    %v573 = vld [vmem:[#allocation5 + $0x668] sm:$0xff]
    %v574 = vld [vmem:[#allocation5 + $0x670] sm:$0xff]
    %v575 = vld [vmem:[#allocation5 + $0x678] sm:$0xff]
    %v576 = vld [vmem:[#allocation5 + $0x680] sm:$0xff]
    %v577 = vld [vmem:[#allocation5 + $0x688] sm:$0xff]
    %v578 = vld [vmem:[#allocation5 + $0x690] sm:$0xff]
    %v579 = vld [vmem:[#allocation5 + $0x698] sm:$0xff]
    %v580 = vld [vmem:[#allocation5 + $0x6a0] sm:$0xff]
    %v581 = vld [vmem:[#allocation5 + $0x6a8] sm:$0xff]
    %v582 = vld [vmem:[#allocation5 + $0x6b0] sm:$0xff]
    %v583 = vld [vmem:[#allocation5 + $0x6b8] sm:$0xff]
    %v584 = vld [vmem:[#allocation5 + $0x6c0] sm:$0xff]
    %v585 = vld [vmem:[#allocation5 + $0x6c8] sm:$0xff]
    %v586 = vld [vmem:[#allocation5 + $0x6d0] sm:$0xff]
    %v587 = vld [vmem:[#allocation5 + $0x6d8] sm:$0xff]
    %v588 = vld [vmem:[#allocation5 + $0x6e0] sm:$0xff]
    %v589 = vld [vmem:[#allocation5 + $0x6e8] sm:$0xff]
    %v590 = vld [vmem:[#allocation5 + $0x6f0] sm:$0xff]
    %v591 = vld [vmem:[#allocation5 + $0x6f8] sm:$0xff]
    %v592 = vld [vmem:[#allocation5 + $0x700] sm:$0xff]
    %v593 = vld [vmem:[#allocation5 + $0x708] sm:$0xff]
    %v594 = vld [vmem:[#allocation5 + $0x710] sm:$0xff]
    %v595 = vld [vmem:[#allocation5 + $0x718] sm:$0xff]
    %v596 = vld [vmem:[#allocation5 + $0x720] sm:$0xff]
    %v597 = vld [vmem:[#allocation5 + $0x728] sm:$0xff]
    %v598 = vld [vmem:[#allocation5 + $0x730] sm:$0xff]
    %v599 = vld [vmem:[#allocation5 + $0x738] sm:$0xff]
    %v600 = vld [vmem:[#allocation5 + $0x740] sm:$0xff]
    %v601 = vld [vmem:[#allocation5 + $0x748] sm:$0xff]
    %v602 = vld [vmem:[#allocation5 + $0x750] sm:$0xff]
    %v603 = vld [vmem:[#allocation5 + $0x758] sm:$0xff]
    %v604 = vld [vmem:[#allocation5 + $0x760] sm:$0xff]
    %v605 = vld [vmem:[#allocation5 + $0x768] sm:$0xff]
    %v606 = vld [vmem:[#allocation5 + $0x770] sm:$0xff]
    %v607 = vld [vmem:[#allocation5 + $0x778] sm:$0xff]
    %v608 = vld [vmem:[#allocation5 + $0x780] sm:$0xff]
    %v609 = vld [vmem:[#allocation5 + $0x788] sm:$0xff]
    %v610 = vld [vmem:[#allocation5 + $0x790] sm:$0xff]
    %v611 = vld [vmem:[#allocation5 + $0x798] sm:$0xff]
    %v612 = vld [vmem:[#allocation5 + $0x7a0] sm:$0xff]
    %v613 = vld [vmem:[#allocation5 + $0x7a8] sm:$0xff]
    %v614 = vld [vmem:[#allocation5 + $0x7b0] sm:$0xff]
    %v615 = vld [vmem:[#allocation5 + $0x7b8] sm:$0xff]
    %v616 = vld [vmem:[#allocation5 + $0x7c0] sm:$0xff]
    %v617 = vld [vmem:[#allocation5 + $0x7c8] sm:$0xff]
    %v618 = vld [vmem:[#allocation5 + $0x7d0] sm:$0xff]
    %v619 = vld [vmem:[#allocation5 + $0x7d8] sm:$0xff]
    %v620 = vld [vmem:[#allocation5 + $0x7e0] sm:$0xff]
    %v621 = vld [vmem:[#allocation5 + $0x7e8] sm:$0xff]
    %v622 = vld [vmem:[#allocation5 + $0x7f0] sm:$0xff]
    %v623 = vld [vmem:[#allocation5 + $0x7f8] sm:$0xff]
    %v624 = vld [vmem:[%s0] sm:$0xff]
    %v625 = vld [vmem:[%s0 + $0x8] sm:$0xff]
    %v626 = vstv %s200
    %v627 = vmul.f32 %v624, %v626
    %v628 = vstv %s201
    %v630 = vrot.slane %v624, 4
    %v632 = vmul.f32 %v630, %v628
    %v633 = vadd.f32 %v627, %v632
    %v634 = vstv %s202
    %v635 = vmul.f32 %v625, %v634
    %v636 = vadd.f32 %v633, %v635
    %v637 = vstv %s203
    %v639 = vrot.slane %v625, 4
    %v641 = vmul.f32 %v639, %v637
    %v642 = vadd.f32 %v636, %v641
    %v643 = vstv %s216
    %v644 = vadd.f32 %v642, %v643
    %v645 = vstv %s204
    %v646 = vmul.f32 %v624, %v645
    %v647 = vstv %s205
    %v648 = vmul.f32 %v630, %v647
    %v649 = vadd.f32 %v646, %v648
    %v650 = vstv %s206
    %v651 = vmul.f32 %v625, %v650
    %v652 = vadd.f32 %v649, %v651
    %v653 = vstv %s207
    %v654 = vmul.f32 %v639, %v653
    %v655 = vadd.f32 %v652, %v654
    %v656 = vstv %s217
    %v657 = vadd.f32 %v655, %v656
    %v658 = vstv %s208
    %v659 = vmul.f32 %v624, %v658
    %v660 = vstv %s209
    %v661 = vmul.f32 %v630, %v660
    %v662 = vadd.f32 %v659, %v661
    %v663 = vstv %s210
    %v664 = vmul.f32 %v625, %v663
    %v665 = vadd.f32 %v662, %v664
    %v666 = vstv %s211
    %v667 = vmul.f32 %v639, %v666
    %v668 = vadd.f32 %v665, %v667
    %v669 = vstv %s218
    %v670 = vadd.f32 %v668, %v669
    %v671 = vstv %s212
    %v672 = vmul.f32 %v624, %v671
    %v673 = vstv %s213
    %v674 = vmul.f32 %v630, %v673
    %v675 = vadd.f32 %v672, %v674
    %v676 = vstv %s214
    %v677 = vmul.f32 %v625, %v676
    %v678 = vadd.f32 %v675, %v677
    %v679 = vstv %s215
    %v680 = vmul.f32 %v639, %v679
    %v681 = vadd.f32 %v678, %v680
    %v682 = vstv %s219
    %v683 = vadd.f32 %v681, %v682
    %v686 = vunpack.c.l.s4 1983009808
    %v687 = vunpack.c.0.s8 %v686
    %v688 = vlaneseq
    %v689 = vshrl.u32 %v688, 7
    %v690 = vsub.s32 %v687, %v689
    %v691 = vrot.slane %v644, %v690
    %v692 = vcombine.high %v691, %v691
    %v697 = vunpack.c.l.s4 1983009808
    %v698 = vunpack.c.0.s8 %v697
    %v699 = vlaneseq
    %v700 = vshrl.u32 %v699, 7
    %v701 = vsub.s32 %v698, %v700
    %v702 = vrot.slane %v657, %v701
    %v703 = vcombine.high %v702, %v702
    %v708 = vunpack.c.l.s4 1983009808
    %v709 = vunpack.c.0.s8 %v708
    %v710 = vlaneseq
    %v711 = vshrl.u32 %v710, 7
    %v712 = vsub.s32 %v709, %v711
    %v713 = vrot.slane %v670, %v712
    %v714 = vcombine.high %v713, %v713
    %v719 = vunpack.c.l.s4 1983009808
    %v720 = vunpack.c.0.s8 %v719
    %v721 = vlaneseq
    %v722 = vshrl.u32 %v721, 7
    %v723 = vsub.s32 %v720, %v722
    %v724 = vrot.slane %v683, %v723
    %v725 = vcombine.high %v724, %v724
    %v728 = vpack.c.bf16 %v691, %v691
    %v729 = vpack.c.bf16 %v692, %v692
    %v730 = vpack.c.bf16 %v702, %v702
    %v731 = vpack.c.bf16 %v703, %v703
    %v732 = vpack.c.bf16 %v713, %v713
    %v733 = vpack.c.bf16 %v714, %v714
    %v734 = vpack.c.bf16 %v724, %v724
    %v735 = vpack.c.bf16 %v725, %v725
    %v864 = vunpack.c.l.b16 %v240
    %v865 = vunpack.c.h.b16 %v240
    %v866 = vunpack.c.l.b16 %v241
    %v867 = vunpack.c.h.b16 %v241
    %v868 = vunpack.c.l.b16 %v242
    %v869 = vunpack.c.h.b16 %v242
    %v870 = vunpack.c.l.b16 %v243
    %v871 = vunpack.c.h.b16 %v243
    %v872 = vunpack.c.l.b16 %v244
    %v873 = vunpack.c.h.b16 %v244
    %v874 = vunpack.c.l.b16 %v245
    %v875 = vunpack.c.h.b16 %v245
    %v876 = vunpack.c.l.b16 %v246
    %v877 = vunpack.c.h.b16 %v246
    %v878 = vunpack.c.l.b16 %v247
    %v879 = vunpack.c.h.b16 %v247
    %v880 = vunpack.c.l.b16 %v248
    %v881 = vunpack.c.h.b16 %v248
    %v882 = vunpack.c.l.b16 %v249
    %v883 = vunpack.c.h.b16 %v249
    %v884 = vunpack.c.l.b16 %v250
    %v885 = vunpack.c.h.b16 %v250
    %v886 = vunpack.c.l.b16 %v251
    %v887 = vunpack.c.h.b16 %v251
    %v888 = vunpack.c.l.b16 %v252
    %v889 = vunpack.c.h.b16 %v252
    %v890 = vunpack.c.l.b16 %v253
    %v891 = vunpack.c.h.b16 %v253
    %v892 = vunpack.c.l.b16 %v254
    %v893 = vunpack.c.h.b16 %v254
    %v894 = vunpack.c.l.b16 %v255
    %v895 = vunpack.c.h.b16 %v255
    %v896 = vunpack.c.l.b16 %v256
    %v897 = vunpack.c.h.b16 %v256
    %v898 = vunpack.c.l.b16 %v257
    %v899 = vunpack.c.h.b16 %v257
    %v900 = vunpack.c.l.b16 %v258
    %v901 = vunpack.c.h.b16 %v258
    %v902 = vunpack.c.l.b16 %v259
    %v903 = vunpack.c.h.b16 %v259
    %v904 = vunpack.c.l.b16 %v260
    %v905 = vunpack.c.h.b16 %v260
    %v906 = vunpack.c.l.b16 %v261
    %v907 = vunpack.c.h.b16 %v261
    %v908 = vunpack.c.l.b16 %v262
    %v909 = vunpack.c.h.b16 %v262
    %v910 = vunpack.c.l.b16 %v263
    %v911 = vunpack.c.h.b16 %v263
    %v912 = vunpack.c.l.b16 %v264
    %v913 = vunpack.c.h.b16 %v264
    %v914 = vunpack.c.l.b16 %v265
    %v915 = vunpack.c.h.b16 %v265
    %v916 = vunpack.c.l.b16 %v266
    %v917 = vunpack.c.h.b16 %v266
    %v918 = vunpack.c.l.b16 %v267
    %v919 = vunpack.c.h.b16 %v267
    %v920 = vunpack.c.l.b16 %v268
    %v921 = vunpack.c.h.b16 %v268
    %v922 = vunpack.c.l.b16 %v269
    %v923 = vunpack.c.h.b16 %v269
    %v924 = vunpack.c.l.b16 %v270
    %v925 = vunpack.c.h.b16 %v270
    %v926 = vunpack.c.l.b16 %v271
    %v927 = vunpack.c.h.b16 %v271
    %v928 = vunpack.c.l.b16 %v272
    %v929 = vunpack.c.h.b16 %v272
    %v930 = vunpack.c.l.b16 %v273
    %v931 = vunpack.c.h.b16 %v273
    %v932 = vunpack.c.l.b16 %v274
    %v933 = vunpack.c.h.b16 %v274
    %v934 = vunpack.c.l.b16 %v275
    %v935 = vunpack.c.h.b16 %v275
    %v936 = vunpack.c.l.b16 %v276
    %v937 = vunpack.c.h.b16 %v276
    %v938 = vunpack.c.l.b16 %v277
    %v939 = vunpack.c.h.b16 %v277
    %v940 = vunpack.c.l.b16 %v278
    %v941 = vunpack.c.h.b16 %v278
    %v942 = vunpack.c.l.b16 %v279
    %v943 = vunpack.c.h.b16 %v279
    %v944 = vunpack.c.l.b16 %v280
    %v945 = vunpack.c.h.b16 %v280
    %v946 = vunpack.c.l.b16 %v281
    %v947 = vunpack.c.h.b16 %v281
    %v948 = vunpack.c.l.b16 %v282
    %v949 = vunpack.c.h.b16 %v282
    %v950 = vunpack.c.l.b16 %v283
    %v951 = vunpack.c.h.b16 %v283
    %v952 = vunpack.c.l.b16 %v284
    %v953 = vunpack.c.h.b16 %v284
    %v954 = vunpack.c.l.b16 %v285
    %v955 = vunpack.c.h.b16 %v285
    %v956 = vunpack.c.l.b16 %v286
    %v957 = vunpack.c.h.b16 %v286
    %v958 = vunpack.c.l.b16 %v287
    %v959 = vunpack.c.h.b16 %v287
    %v960 = vunpack.c.l.b16 %v288
    %v961 = vunpack.c.h.b16 %v288
    %v962 = vunpack.c.l.b16 %v289
    %v963 = vunpack.c.h.b16 %v289
    %v964 = vunpack.c.l.b16 %v290
    %v965 = vunpack.c.h.b16 %v290
    %v966 = vunpack.c.l.b16 %v291
    %v967 = vunpack.c.h.b16 %v291
    %v968 = vunpack.c.l.b16 %v292
    %v969 = vunpack.c.h.b16 %v292
    %v970 = vunpack.c.l.b16 %v293
    %v971 = vunpack.c.h.b16 %v293
    %v972 = vunpack.c.l.b16 %v294
    %v973 = vunpack.c.h.b16 %v294
    %v974 = vunpack.c.l.b16 %v295
    %v975 = vunpack.c.h.b16 %v295
    %v976 = vunpack.c.l.b16 %v296
    %v977 = vunpack.c.h.b16 %v296
    %v978 = vunpack.c.l.b16 %v297
    %v979 = vunpack.c.h.b16 %v297
    %v980 = vunpack.c.l.b16 %v298
    %v981 = vunpack.c.h.b16 %v298
    %v982 = vunpack.c.l.b16 %v299
    %v983 = vunpack.c.h.b16 %v299
    %v984 = vunpack.c.l.b16 %v300
    %v985 = vunpack.c.h.b16 %v300
    %v986 = vunpack.c.l.b16 %v301
    %v987 = vunpack.c.h.b16 %v301
    %v988 = vunpack.c.l.b16 %v302
    %v989 = vunpack.c.h.b16 %v302
    %v990 = vunpack.c.l.b16 %v303
    %v991 = vunpack.c.h.b16 %v303
    %v992 = vunpack.c.l.b16 %v304
    %v993 = vunpack.c.h.b16 %v304
    %v994 = vunpack.c.l.b16 %v305
    %v995 = vunpack.c.h.b16 %v305
    %v996 = vunpack.c.l.b16 %v306
    %v997 = vunpack.c.h.b16 %v306
    %v998 = vunpack.c.l.b16 %v307
    %v999 = vunpack.c.h.b16 %v307
    %v1000 = vunpack.c.l.b16 %v308
    %v1001 = vunpack.c.h.b16 %v308
    %v1002 = vunpack.c.l.b16 %v309
    %v1003 = vunpack.c.h.b16 %v309
    %v1004 = vunpack.c.l.b16 %v310
    %v1005 = vunpack.c.h.b16 %v310
    %v1006 = vunpack.c.l.b16 %v311
    %v1007 = vunpack.c.h.b16 %v311
    %v1008 = vunpack.c.l.b16 %v312
    %v1009 = vunpack.c.h.b16 %v312
    %v1010 = vunpack.c.l.b16 %v313
    %v1011 = vunpack.c.h.b16 %v313
    %v1012 = vunpack.c.l.b16 %v314
    %v1013 = vunpack.c.h.b16 %v314
    %v1014 = vunpack.c.l.b16 %v315
    %v1015 = vunpack.c.h.b16 %v315
    %v1016 = vunpack.c.l.b16 %v316
    %v1017 = vunpack.c.h.b16 %v316
    %v1018 = vunpack.c.l.b16 %v317
    %v1019 = vunpack.c.h.b16 %v317
    %v1020 = vunpack.c.l.b16 %v318
    %v1021 = vunpack.c.h.b16 %v318
    %v1022 = vunpack.c.l.b16 %v319
    %v1023 = vunpack.c.h.b16 %v319
    %v1024 = vunpack.c.l.b16 %v320
    %v1025 = vunpack.c.h.b16 %v320
    %v1026 = vunpack.c.l.b16 %v321
    %v1027 = vunpack.c.h.b16 %v321
    %v1028 = vunpack.c.l.b16 %v322
    %v1029 = vunpack.c.h.b16 %v322
    %v1030 = vunpack.c.l.b16 %v323
    %v1031 = vunpack.c.h.b16 %v323
    %v1032 = vunpack.c.l.b16 %v324
    %v1033 = vunpack.c.h.b16 %v324
    %v1034 = vunpack.c.l.b16 %v325
    %v1035 = vunpack.c.h.b16 %v325
    %v1036 = vunpack.c.l.b16 %v326
    %v1037 = vunpack.c.h.b16 %v326
    %v1038 = vunpack.c.l.b16 %v327
    %v1039 = vunpack.c.h.b16 %v327
    %v1040 = vunpack.c.l.b16 %v328
    %v1041 = vunpack.c.h.b16 %v328
    %v1042 = vunpack.c.l.b16 %v329
    %v1043 = vunpack.c.h.b16 %v329
    %v1044 = vunpack.c.l.b16 %v330
    %v1045 = vunpack.c.h.b16 %v330
    %v1046 = vunpack.c.l.b16 %v331
    %v1047 = vunpack.c.h.b16 %v331
    %v1048 = vunpack.c.l.b16 %v332
    %v1049 = vunpack.c.h.b16 %v332
    %v1050 = vunpack.c.l.b16 %v333
    %v1051 = vunpack.c.h.b16 %v333
    %v1052 = vunpack.c.l.b16 %v334
    %v1053 = vunpack.c.h.b16 %v334
    %v1054 = vunpack.c.l.b16 %v335
    %v1055 = vunpack.c.h.b16 %v335
    %v1056 = vunpack.c.l.b16 %v336
    %v1057 = vunpack.c.h.b16 %v336
    %v1058 = vunpack.c.l.b16 %v337
    %v1059 = vunpack.c.h.b16 %v337
    %v1060 = vunpack.c.l.b16 %v338
    %v1061 = vunpack.c.h.b16 %v338
    %v1062 = vunpack.c.l.b16 %v339
    %v1063 = vunpack.c.h.b16 %v339
    %v1064 = vunpack.c.l.b16 %v340
    %v1065 = vunpack.c.h.b16 %v340
    %v1066 = vunpack.c.l.b16 %v341
    %v1067 = vunpack.c.h.b16 %v341
    %v1068 = vunpack.c.l.b16 %v342
    %v1069 = vunpack.c.h.b16 %v342
    %v1070 = vunpack.c.l.b16 %v343
    %v1071 = vunpack.c.h.b16 %v343
    %v1072 = vunpack.c.l.b16 %v344
    %v1073 = vunpack.c.h.b16 %v344
    %v1074 = vunpack.c.l.b16 %v345
    %v1075 = vunpack.c.h.b16 %v345
    %v1076 = vunpack.c.l.b16 %v346
    %v1077 = vunpack.c.h.b16 %v346
    %v1078 = vunpack.c.l.b16 %v347
    %v1079 = vunpack.c.h.b16 %v347
    %v1080 = vunpack.c.l.b16 %v348
    %v1081 = vunpack.c.h.b16 %v348
    %v1082 = vunpack.c.l.b16 %v349
    %v1083 = vunpack.c.h.b16 %v349
    %v1084 = vunpack.c.l.b16 %v350
    %v1085 = vunpack.c.h.b16 %v350
    %v1086 = vunpack.c.l.b16 %v351
    %v1087 = vunpack.c.h.b16 %v351
    %v1088 = vunpack.c.l.b16 %v352
    %v1089 = vunpack.c.h.b16 %v352
    %v1090 = vunpack.c.l.b16 %v353
    %v1091 = vunpack.c.h.b16 %v353
    %v1092 = vunpack.c.l.b16 %v354
    %v1093 = vunpack.c.h.b16 %v354
    %v1094 = vunpack.c.l.b16 %v355
    %v1095 = vunpack.c.h.b16 %v355
    %v1096 = vunpack.c.l.b16 %v356
    %v1097 = vunpack.c.h.b16 %v356
    %v1098 = vunpack.c.l.b16 %v357
    %v1099 = vunpack.c.h.b16 %v357
    %v1100 = vunpack.c.l.b16 %v358
    %v1101 = vunpack.c.h.b16 %v358
    %v1102 = vunpack.c.l.b16 %v359
    %v1103 = vunpack.c.h.b16 %v359
    %v1104 = vunpack.c.l.b16 %v360
    %v1105 = vunpack.c.h.b16 %v360
    %v1106 = vunpack.c.l.b16 %v361
    %v1107 = vunpack.c.h.b16 %v361
    %v1108 = vunpack.c.l.b16 %v362
    %v1109 = vunpack.c.h.b16 %v362
    %v1110 = vunpack.c.l.b16 %v363
    %v1111 = vunpack.c.h.b16 %v363
    %v1112 = vunpack.c.l.b16 %v364
    %v1113 = vunpack.c.h.b16 %v364
    %v1114 = vunpack.c.l.b16 %v365
    %v1115 = vunpack.c.h.b16 %v365
    %v1116 = vunpack.c.l.b16 %v366
    %v1117 = vunpack.c.h.b16 %v366
    %v1118 = vunpack.c.l.b16 %v367
    %v1119 = vunpack.c.h.b16 %v367
    %v1120 = vpack.c.b16 %v866, %v864
    %v1121 = vpack.c.b16 %v867, %v865
    %v1122 = vpack.c.b16 %v870, %v868
    %v1123 = vpack.c.b16 %v871, %v869
    %v1124 = vpack.c.b16 %v874, %v872
    %v1125 = vpack.c.b16 %v875, %v873
    %v1126 = vpack.c.b16 %v878, %v876
    %v1127 = vpack.c.b16 %v879, %v877
    %v1128 = vpack.c.b16 %v882, %v880
    %v1129 = vpack.c.b16 %v883, %v881
    %v1130 = vpack.c.b16 %v886, %v884
    %v1131 = vpack.c.b16 %v887, %v885
    %v1132 = vpack.c.b16 %v890, %v888
    %v1133 = vpack.c.b16 %v891, %v889
    %v1134 = vpack.c.b16 %v894, %v892
    %v1135 = vpack.c.b16 %v895, %v893
    %v1136 = vpack.c.b16 %v898, %v896
    %v1137 = vpack.c.b16 %v899, %v897
    %v1138 = vpack.c.b16 %v902, %v900
    %v1139 = vpack.c.b16 %v903, %v901
    %v1140 = vpack.c.b16 %v906, %v904
    %v1141 = vpack.c.b16 %v907, %v905
    %v1142 = vpack.c.b16 %v910, %v908
    %v1143 = vpack.c.b16 %v911, %v909
    %v1144 = vpack.c.b16 %v914, %v912
    %v1145 = vpack.c.b16 %v915, %v913
    %v1146 = vpack.c.b16 %v918, %v916
    %v1147 = vpack.c.b16 %v919, %v917
    %v1148 = vpack.c.b16 %v922, %v920
    %v1149 = vpack.c.b16 %v923, %v921
    %v1150 = vpack.c.b16 %v926, %v924
    %v1151 = vpack.c.b16 %v927, %v925
    %v1152 = vpack.c.b16 %v930, %v928
    %v1153 = vpack.c.b16 %v931, %v929
    %v1154 = vpack.c.b16 %v934, %v932
    %v1155 = vpack.c.b16 %v935, %v933
    %v1156 = vpack.c.b16 %v938, %v936
    %v1157 = vpack.c.b16 %v939, %v937
    %v1158 = vpack.c.b16 %v942, %v940
    %v1159 = vpack.c.b16 %v943, %v941
    %v1160 = vpack.c.b16 %v946, %v944
    %v1161 = vpack.c.b16 %v947, %v945
    %v1162 = vpack.c.b16 %v950, %v948
    %v1163 = vpack.c.b16 %v951, %v949
    %v1164 = vpack.c.b16 %v954, %v952
    %v1165 = vpack.c.b16 %v955, %v953
    %v1166 = vpack.c.b16 %v958, %v956
    %v1167 = vpack.c.b16 %v959, %v957
    %v1168 = vpack.c.b16 %v962, %v960
    %v1169 = vpack.c.b16 %v963, %v961
    %v1170 = vpack.c.b16 %v966, %v964
    %v1171 = vpack.c.b16 %v967, %v965
    %v1172 = vpack.c.b16 %v970, %v968
    %v1173 = vpack.c.b16 %v971, %v969
    %v1174 = vpack.c.b16 %v974, %v972
    %v1175 = vpack.c.b16 %v975, %v973
    %v1176 = vpack.c.b16 %v978, %v976
    %v1177 = vpack.c.b16 %v979, %v977
    %v1178 = vpack.c.b16 %v982, %v980
    %v1179 = vpack.c.b16 %v983, %v981
    %v1180 = vpack.c.b16 %v986, %v984
    %v1181 = vpack.c.b16 %v987, %v985
    %v1182 = vpack.c.b16 %v990, %v988
    %v1183 = vpack.c.b16 %v991, %v989
    %v1184 = vpack.c.b16 %v994, %v992
    %v1185 = vpack.c.b16 %v995, %v993
    %v1186 = vpack.c.b16 %v998, %v996
    %v1187 = vpack.c.b16 %v999, %v997
    %v1188 = vpack.c.b16 %v1002, %v1000
    %v1189 = vpack.c.b16 %v1003, %v1001
    %v1190 = vpack.c.b16 %v1006, %v1004
    %v1191 = vpack.c.b16 %v1007, %v1005
    %v1192 = vpack.c.b16 %v1010, %v1008
    %v1193 = vpack.c.b16 %v1011, %v1009
    %v1194 = vpack.c.b16 %v1014, %v1012
    %v1195 = vpack.c.b16 %v1015, %v1013
    %v1196 = vpack.c.b16 %v1018, %v1016
    %v1197 = vpack.c.b16 %v1019, %v1017
    %v1198 = vpack.c.b16 %v1022, %v1020
    %v1199 = vpack.c.b16 %v1023, %v1021
    %v1200 = vpack.c.b16 %v1026, %v1024
    %v1201 = vpack.c.b16 %v1027, %v1025
    %v1202 = vpack.c.b16 %v1030, %v1028
    %v1203 = vpack.c.b16 %v1031, %v1029
    %v1204 = vpack.c.b16 %v1034, %v1032
    %v1205 = vpack.c.b16 %v1035, %v1033
    %v1206 = vpack.c.b16 %v1038, %v1036
    %v1207 = vpack.c.b16 %v1039, %v1037
    %v1208 = vpack.c.b16 %v1042, %v1040
    %v1209 = vpack.c.b16 %v1043, %v1041
    %v1210 = vpack.c.b16 %v1046, %v1044
    %v1211 = vpack.c.b16 %v1047, %v1045
    %v1212 = vpack.c.b16 %v1050, %v1048
    %v1213 = vpack.c.b16 %v1051, %v1049
    %v1214 = vpack.c.b16 %v1054, %v1052
    %v1215 = vpack.c.b16 %v1055, %v1053
    %v1216 = vpack.c.b16 %v1058, %v1056
    %v1217 = vpack.c.b16 %v1059, %v1057
    %v1218 = vpack.c.b16 %v1062, %v1060
    %v1219 = vpack.c.b16 %v1063, %v1061
    %v1220 = vpack.c.b16 %v1066, %v1064
    %v1221 = vpack.c.b16 %v1067, %v1065
    %v1222 = vpack.c.b16 %v1070, %v1068
    %v1223 = vpack.c.b16 %v1071, %v1069
    %v1224 = vpack.c.b16 %v1074, %v1072
    %v1225 = vpack.c.b16 %v1075, %v1073
    %v1226 = vpack.c.b16 %v1078, %v1076
    %v1227 = vpack.c.b16 %v1079, %v1077
    %v1228 = vpack.c.b16 %v1082, %v1080
    %v1229 = vpack.c.b16 %v1083, %v1081
    %v1230 = vpack.c.b16 %v1086, %v1084
    %v1231 = vpack.c.b16 %v1087, %v1085
    %v1232 = vpack.c.b16 %v1090, %v1088
    %v1233 = vpack.c.b16 %v1091, %v1089
    %v1234 = vpack.c.b16 %v1094, %v1092
    %v1235 = vpack.c.b16 %v1095, %v1093
    %v1236 = vpack.c.b16 %v1098, %v1096
    %v1237 = vpack.c.b16 %v1099, %v1097
    %v1238 = vpack.c.b16 %v1102, %v1100
    %v1239 = vpack.c.b16 %v1103, %v1101
    %v1240 = vpack.c.b16 %v1106, %v1104
    %v1241 = vpack.c.b16 %v1107, %v1105
    %v1242 = vpack.c.b16 %v1110, %v1108
    %v1243 = vpack.c.b16 %v1111, %v1109
    %v1244 = vpack.c.b16 %v1114, %v1112
    %v1245 = vpack.c.b16 %v1115, %v1113
    %v1246 = vpack.c.b16 %v1118, %v1116
    %v1247 = vpack.c.b16 %v1119, %v1117
    %1376 = vmatprep.subr.bf16.mxu0 %v1121
    %1377 = vmatpush1.bf16.msra.mxu0 %v1120
    %1378 = vmatprep.subr.bf16.mxu0 %v1123
    %1379 = vmatpush1.bf16.msra.mxu0 %v1122
    %1380 = vmatprep.subr.bf16.mxu0 %v1125
    %1381 = vmatpush1.bf16.msra.mxu0 %v1124
    %1382 = vmatprep.subr.bf16.mxu0 %v1127
    %1383 = vmatpush1.bf16.msra.mxu0 %v1126
    %1384 = vmatprep.subr.bf16.mxu0 %v1129
    %1385 = vmatpush1.bf16.msra.mxu0 %v1128
    %1386 = vmatprep.subr.bf16.mxu0 %v1131
    %1387 = vmatpush1.bf16.msra.mxu0 %v1130
    %1388 = vmatprep.subr.bf16.mxu0 %v1133
    %1389 = vmatpush1.bf16.msra.mxu0 %v1132
    %1390 = vmatprep.subr.bf16.mxu0 %v1135
    %1391 = vmatpush1.bf16.msra.mxu0 %v1134
    %1392 = vmatprep.subr.bf16.mxu0 %v1137
    %1393 = vmatpush1.bf16.msra.mxu0 %v1136
    %1394 = vmatprep.subr.bf16.mxu0 %v1139
    %1395 = vmatpush1.bf16.msra.mxu0 %v1138
    %1396 = vmatprep.subr.bf16.mxu0 %v1141
    %1397 = vmatpush1.bf16.msra.mxu0 %v1140
    %1398 = vmatprep.subr.bf16.mxu0 %v1143
    %1399 = vmatpush1.bf16.msra.mxu0 %v1142
    %1400 = vmatprep.subr.bf16.mxu0 %v1145
    %1401 = vmatpush1.bf16.msra.mxu0 %v1144
    %1402 = vmatprep.subr.bf16.mxu0 %v1147
    %1403 = vmatpush1.bf16.msra.mxu0 %v1146
    %1404 = vmatprep.subr.bf16.mxu0 %v1149
    %1405 = vmatpush1.bf16.msra.mxu0 %v1148
    %1406 = vmatprep.subr.bf16.mxu0 %v1151
    %1407 = vmatpush1.bf16.msra.mxu0 %v1150
    %1408 = vmatprep.mubr.bf16.mxu0 %v729
    %1409 = vmatmul.mubr.bf16.gmra.mrb[0].mxu0 %v728
    %v1410 = vpop.f32.mrb[0].mxu0
    %v1411 = vadd.f32 0.0, %v1410
    %v1412 = vpop.f32.mrb[0].mxu0
    %v1413 = vadd.f32 0.0, %v1412
    %v1414 = vpop.f32.mrb[0].mxu0
    %v1415 = vpop.f32.mrb[0].mxu0
    %1416 = vdwg.mxu0
    %1417 = vmatprep.subr.bf16.mxu0 %v1153
    %1418 = vmatpush1.bf16.msra.mxu0 %v1152
    %1419 = vmatprep.subr.bf16.mxu0 %v1155
    %1420 = vmatpush1.bf16.msra.mxu0 %v1154
    %1421 = vmatprep.subr.bf16.mxu0 %v1157
    %1422 = vmatpush1.bf16.msra.mxu0 %v1156
    %1423 = vmatprep.subr.bf16.mxu0 %v1159
    %1424 = vmatpush1.bf16.msra.mxu0 %v1158
    %1425 = vmatprep.subr.bf16.mxu0 %v1161
    %1426 = vmatpush1.bf16.msra.mxu0 %v1160
    %1427 = vmatprep.subr.bf16.mxu0 %v1163
    %1428 = vmatpush1.bf16.msra.mxu0 %v1162
    %1429 = vmatprep.subr.bf16.mxu0 %v1165
    %1430 = vmatpush1.bf16.msra.mxu0 %v1164
    %1431 = vmatprep.subr.bf16.mxu0 %v1167
    %1432 = vmatpush1.bf16.msra.mxu0 %v1166
    %1433 = vmatprep.subr.bf16.mxu0 %v1169
    %1434 = vmatpush1.bf16.msra.mxu0 %v1168
    %1435 = vmatprep.subr.bf16.mxu0 %v1171
    %1436 = vmatpush1.bf16.msra.mxu0 %v1170
    %1437 = vmatprep.subr.bf16.mxu0 %v1173
    %1438 = vmatpush1.bf16.msra.mxu0 %v1172
    %1439 = vmatprep.subr.bf16.mxu0 %v1175
    %1440 = vmatpush1.bf16.msra.mxu0 %v1174
    %1441 = vmatprep.subr.bf16.mxu0 %v1177
    %1442 = vmatpush1.bf16.msra.mxu0 %v1176
    %1443 = vmatprep.subr.bf16.mxu0 %v1179
    %1444 = vmatpush1.bf16.msra.mxu0 %v1178
    %1445 = vmatprep.subr.bf16.mxu0 %v1181
    %1446 = vmatpush1.bf16.msra.mxu0 %v1180
    %1447 = vmatprep.subr.bf16.mxu0 %v1183
    %1448 = vmatpush1.bf16.msra.mxu0 %v1182
    %1449 = vmatprep.mubr.bf16.mxu0 %v731
    %1450 = vmatmul.mubr.bf16.gmra.mrb[0].mxu0 %v730
    %v1451 = vpop.f32.mrb[0].mxu0
    %v1452 = vadd.f32 %v1411, %v1451
    %v1453 = vpop.f32.mrb[0].mxu0
    %v1454 = vadd.f32 %v1413, %v1453
    %v1455 = vpop.f32.mrb[0].mxu0
    %v1456 = vpop.f32.mrb[0].mxu0
    %1457 = vdwg.mxu0
    %1458 = vmatprep.subr.bf16.mxu0 %v1185
    %1459 = vmatpush1.bf16.msra.mxu0 %v1184
    %1460 = vmatprep.subr.bf16.mxu0 %v1187
    %1461 = vmatpush1.bf16.msra.mxu0 %v1186
    %1462 = vmatprep.subr.bf16.mxu0 %v1189
    %1463 = vmatpush1.bf16.msra.mxu0 %v1188
    %1464 = vmatprep.subr.bf16.mxu0 %v1191
    %1465 = vmatpush1.bf16.msra.mxu0 %v1190
    %1466 = vmatprep.subr.bf16.mxu0 %v1193
    %1467 = vmatpush1.bf16.msra.mxu0 %v1192
    %1468 = vmatprep.subr.bf16.mxu0 %v1195
    %1469 = vmatpush1.bf16.msra.mxu0 %v1194
    %1470 = vmatprep.subr.bf16.mxu0 %v1197
    %1471 = vmatpush1.bf16.msra.mxu0 %v1196
    %1472 = vmatprep.subr.bf16.mxu0 %v1199
    %1473 = vmatpush1.bf16.msra.mxu0 %v1198
    %1474 = vmatprep.subr.bf16.mxu0 %v1201
    %1475 = vmatpush1.bf16.msra.mxu0 %v1200
    %1476 = vmatprep.subr.bf16.mxu0 %v1203
    %1477 = vmatpush1.bf16.msra.mxu0 %v1202
    %1478 = vmatprep.subr.bf16.mxu0 %v1205
    %1479 = vmatpush1.bf16.msra.mxu0 %v1204
    %1480 = vmatprep.subr.bf16.mxu0 %v1207
    %1481 = vmatpush1.bf16.msra.mxu0 %v1206
    %1482 = vmatprep.subr.bf16.mxu0 %v1209
    %1483 = vmatpush1.bf16.msra.mxu0 %v1208
    %1484 = vmatprep.subr.bf16.mxu0 %v1211
    %1485 = vmatpush1.bf16.msra.mxu0 %v1210
    %1486 = vmatprep.subr.bf16.mxu0 %v1213
    %1487 = vmatpush1.bf16.msra.mxu0 %v1212
    %1488 = vmatprep.subr.bf16.mxu0 %v1215
    %1489 = vmatpush1.bf16.msra.mxu0 %v1214
    %1490 = vmatprep.mubr.bf16.mxu0 %v733
    %1491 = vmatmul.mubr.bf16.gmra.mrb[0].mxu0 %v732
    %v1492 = vpop.f32.mrb[0].mxu0
    %v1493 = vadd.f32 %v1452, %v1492
    %v1494 = vpop.f32.mrb[0].mxu0
    %v1495 = vadd.f32 %v1454, %v1494
    %v1496 = vpop.f32.mrb[0].mxu0
    %v1497 = vpop.f32.mrb[0].mxu0
    %1498 = vdwg.mxu0
    %1499 = vmatprep.subr.bf16.mxu0 %v1217
    %1500 = vmatpush1.bf16.msra.mxu0 %v1216
    %1501 = vmatprep.subr.bf16.mxu0 %v1219
    %1502 = vmatpush1.bf16.msra.mxu0 %v1218
    %1503 = vmatprep.subr.bf16.mxu0 %v1221
    %1504 = vmatpush1.bf16.msra.mxu0 %v1220
    %1505 = vmatprep.subr.bf16.mxu0 %v1223
    %1506 = vmatpush1.bf16.msra.mxu0 %v1222
    %1507 = vmatprep.subr.bf16.mxu0 %v1225
    %1508 = vmatpush1.bf16.msra.mxu0 %v1224
    %1509 = vmatprep.subr.bf16.mxu0 %v1227
    %1510 = vmatpush1.bf16.msra.mxu0 %v1226
    %1511 = vmatprep.subr.bf16.mxu0 %v1229
    %1512 = vmatpush1.bf16.msra.mxu0 %v1228
    %1513 = vmatprep.subr.bf16.mxu0 %v1231
    %1514 = vmatpush1.bf16.msra.mxu0 %v1230
    %1515 = vmatprep.subr.bf16.mxu0 %v1233
    %1516 = vmatpush1.bf16.msra.mxu0 %v1232
    %1517 = vmatprep.subr.bf16.mxu0 %v1235
    %1518 = vmatpush1.bf16.msra.mxu0 %v1234
    %1519 = vmatprep.subr.bf16.mxu0 %v1237
    %1520 = vmatpush1.bf16.msra.mxu0 %v1236
    %1521 = vmatprep.subr.bf16.mxu0 %v1239
    %1522 = vmatpush1.bf16.msra.mxu0 %v1238
    %1523 = vmatprep.subr.bf16.mxu0 %v1241
    %1524 = vmatpush1.bf16.msra.mxu0 %v1240
    %1525 = vmatprep.subr.bf16.mxu0 %v1243
    %1526 = vmatpush1.bf16.msra.mxu0 %v1242
    %1527 = vmatprep.subr.bf16.mxu0 %v1245
    %1528 = vmatpush1.bf16.msra.mxu0 %v1244
    %1529 = vmatprep.subr.bf16.mxu0 %v1247
    %1530 = vmatpush1.bf16.msra.mxu0 %v1246
    %1531 = vmatprep.mubr.bf16.mxu0 %v735
    %1532 = vmatmul.mubr.bf16.gmra.mrb[0].mxu0 %v734
    %v1533 = vpop.f32.mrb[0].mxu0
    %v1534 = vadd.f32 %v1493, %v1533
    %v1535 = vpop.f32.mrb[0].mxu0
    %v1536 = vadd.f32 %v1495, %v1535
    %v1537 = vpop.f32.mrb[0].mxu0
    %v1538 = vpop.f32.mrb[0].mxu0
    %1539 = vdwg.mxu0
    %v1540 = vpack.c.bf16 %v1534, %v1534
    %v1541 = vpack.c.bf16 %v1536, %v1536
    %v1798 = vunpack.c.l.b16 %v368
    %v1799 = vunpack.c.h.b16 %v368
    %v1800 = vunpack.c.l.b16 %v369
    %v1801 = vunpack.c.h.b16 %v369
    %v1802 = vunpack.c.l.b16 %v370
    %v1803 = vunpack.c.h.b16 %v370
    %v1804 = vunpack.c.l.b16 %v371
    %v1805 = vunpack.c.h.b16 %v371
    %v1806 = vunpack.c.l.b16 %v372
    %v1807 = vunpack.c.h.b16 %v372
    %v1808 = vunpack.c.l.b16 %v373
    %v1809 = vunpack.c.h.b16 %v373
    %v1810 = vunpack.c.l.b16 %v374
    %v1811 = vunpack.c.h.b16 %v374
    %v1812 = vunpack.c.l.b16 %v375
    %v1813 = vunpack.c.h.b16 %v375
    %v1814 = vunpack.c.l.b16 %v376
    %v1815 = vunpack.c.h.b16 %v376
    %v1816 = vunpack.c.l.b16 %v377
    %v1817 = vunpack.c.h.b16 %v377
    %v1818 = vunpack.c.l.b16 %v378
    %v1819 = vunpack.c.h.b16 %v378
    %v1820 = vunpack.c.l.b16 %v379
    %v1821 = vunpack.c.h.b16 %v379
    %v1822 = vunpack.c.l.b16 %v380
    %v1823 = vunpack.c.h.b16 %v380
    %v1824 = vunpack.c.l.b16 %v381
    %v1825 = vunpack.c.h.b16 %v381
    %v1826 = vunpack.c.l.b16 %v382
    %v1827 = vunpack.c.h.b16 %v382
    %v1828 = vunpack.c.l.b16 %v383
    %v1829 = vunpack.c.h.b16 %v383
    %v1830 = vunpack.c.l.b16 %v384
    %v1831 = vunpack.c.h.b16 %v384
    %v1832 = vunpack.c.l.b16 %v385
    %v1833 = vunpack.c.h.b16 %v385
    %v1834 = vunpack.c.l.b16 %v386
    %v1835 = vunpack.c.h.b16 %v386
    %v1836 = vunpack.c.l.b16 %v387
    %v1837 = vunpack.c.h.b16 %v387
    %v1838 = vunpack.c.l.b16 %v388
    %v1839 = vunpack.c.h.b16 %v388
    %v1840 = vunpack.c.l.b16 %v389
    %v1841 = vunpack.c.h.b16 %v389
    %v1842 = vunpack.c.l.b16 %v390
    %v1843 = vunpack.c.h.b16 %v390
    %v1844 = vunpack.c.l.b16 %v391
    %v1845 = vunpack.c.h.b16 %v391
    %v1846 = vunpack.c.l.b16 %v392
    %v1847 = vunpack.c.h.b16 %v392
    %v1848 = vunpack.c.l.b16 %v393
    %v1849 = vunpack.c.h.b16 %v393
    %v1850 = vunpack.c.l.b16 %v394
    %v1851 = vunpack.c.h.b16 %v394
    %v1852 = vunpack.c.l.b16 %v395
    %v1853 = vunpack.c.h.b16 %v395
    %v1854 = vunpack.c.l.b16 %v396
    %v1855 = vunpack.c.h.b16 %v396
    %v1856 = vunpack.c.l.b16 %v397
    %v1857 = vunpack.c.h.b16 %v397
    %v1858 = vunpack.c.l.b16 %v398
    %v1859 = vunpack.c.h.b16 %v398
    %v1860 = vunpack.c.l.b16 %v399
    %v1861 = vunpack.c.h.b16 %v399
    %v1862 = vunpack.c.l.b16 %v400
    %v1863 = vunpack.c.h.b16 %v400
    %v1864 = vunpack.c.l.b16 %v401
    %v1865 = vunpack.c.h.b16 %v401
    %v1866 = vunpack.c.l.b16 %v402
    %v1867 = vunpack.c.h.b16 %v402
    %v1868 = vunpack.c.l.b16 %v403
    %v1869 = vunpack.c.h.b16 %v403
    %v1870 = vunpack.c.l.b16 %v404
    %v1871 = vunpack.c.h.b16 %v404
    %v1872 = vunpack.c.l.b16 %v405
    %v1873 = vunpack.c.h.b16 %v405
    %v1874 = vunpack.c.l.b16 %v406
    %v1875 = vunpack.c.h.b16 %v406
    %v1876 = vunpack.c.l.b16 %v407
    %v1877 = vunpack.c.h.b16 %v407
    %v1878 = vunpack.c.l.b16 %v408
    %v1879 = vunpack.c.h.b16 %v408
    %v1880 = vunpack.c.l.b16 %v409
    %v1881 = vunpack.c.h.b16 %v409
    %v1882 = vunpack.c.l.b16 %v410
    %v1883 = vunpack.c.h.b16 %v410
    %v1884 = vunpack.c.l.b16 %v411
    %v1885 = vunpack.c.h.b16 %v411
    %v1886 = vunpack.c.l.b16 %v412
    %v1887 = vunpack.c.h.b16 %v412
    %v1888 = vunpack.c.l.b16 %v413
    %v1889 = vunpack.c.h.b16 %v413
    %v1890 = vunpack.c.l.b16 %v414
    %v1891 = vunpack.c.h.b16 %v414
    %v1892 = vunpack.c.l.b16 %v415
    %v1893 = vunpack.c.h.b16 %v415
    %v1894 = vunpack.c.l.b16 %v416
    %v1895 = vunpack.c.h.b16 %v416
    %v1896 = vunpack.c.l.b16 %v417
    %v1897 = vunpack.c.h.b16 %v417
    %v1898 = vunpack.c.l.b16 %v418
    %v1899 = vunpack.c.h.b16 %v418
    %v1900 = vunpack.c.l.b16 %v419
    %v1901 = vunpack.c.h.b16 %v419
    %v1902 = vunpack.c.l.b16 %v420
    %v1903 = vunpack.c.h.b16 %v420
    %v1904 = vunpack.c.l.b16 %v421
    %v1905 = vunpack.c.h.b16 %v421
    %v1906 = vunpack.c.l.b16 %v422
    %v1907 = vunpack.c.h.b16 %v422
    %v1908 = vunpack.c.l.b16 %v423
    %v1909 = vunpack.c.h.b16 %v423
    %v1910 = vunpack.c.l.b16 %v424
    %v1911 = vunpack.c.h.b16 %v424
    %v1912 = vunpack.c.l.b16 %v425
    %v1913 = vunpack.c.h.b16 %v425
    %v1914 = vunpack.c.l.b16 %v426
    %v1915 = vunpack.c.h.b16 %v426
    %v1916 = vunpack.c.l.b16 %v427
    %v1917 = vunpack.c.h.b16 %v427
    %v1918 = vunpack.c.l.b16 %v428
    %v1919 = vunpack.c.h.b16 %v428
    %v1920 = vunpack.c.l.b16 %v429
    %v1921 = vunpack.c.h.b16 %v429
    %v1922 = vunpack.c.l.b16 %v430
    %v1923 = vunpack.c.h.b16 %v430
    %v1924 = vunpack.c.l.b16 %v431
    %v1925 = vunpack.c.h.b16 %v431
    %v1926 = vunpack.c.l.b16 %v432
    %v1927 = vunpack.c.h.b16 %v432
    %v1928 = vunpack.c.l.b16 %v433
    %v1929 = vunpack.c.h.b16 %v433
    %v1930 = vunpack.c.l.b16 %v434
    %v1931 = vunpack.c.h.b16 %v434
    %v1932 = vunpack.c.l.b16 %v435
    %v1933 = vunpack.c.h.b16 %v435
    %v1934 = vunpack.c.l.b16 %v436
    %v1935 = vunpack.c.h.b16 %v436
    %v1936 = vunpack.c.l.b16 %v437
    %v1937 = vunpack.c.h.b16 %v437
    %v1938 = vunpack.c.l.b16 %v438
    %v1939 = vunpack.c.h.b16 %v438
    %v1940 = vunpack.c.l.b16 %v439
    %v1941 = vunpack.c.h.b16 %v439
    %v1942 = vunpack.c.l.b16 %v440
    %v1943 = vunpack.c.h.b16 %v440
    %v1944 = vunpack.c.l.b16 %v441
    %v1945 = vunpack.c.h.b16 %v441
    %v1946 = vunpack.c.l.b16 %v442
    %v1947 = vunpack.c.h.b16 %v442
    %v1948 = vunpack.c.l.b16 %v443
    %v1949 = vunpack.c.h.b16 %v443
    %v1950 = vunpack.c.l.b16 %v444
    %v1951 = vunpack.c.h.b16 %v444
    %v1952 = vunpack.c.l.b16 %v445
    %v1953 = vunpack.c.h.b16 %v445
    %v1954 = vunpack.c.l.b16 %v446
    %v1955 = vunpack.c.h.b16 %v446
    %v1956 = vunpack.c.l.b16 %v447
    %v1957 = vunpack.c.h.b16 %v447
    %v1958 = vunpack.c.l.b16 %v448
    %v1959 = vunpack.c.h.b16 %v448
    %v1960 = vunpack.c.l.b16 %v449
    %v1961 = vunpack.c.h.b16 %v449
    %v1962 = vunpack.c.l.b16 %v450
    %v1963 = vunpack.c.h.b16 %v450
    %v1964 = vunpack.c.l.b16 %v451
    %v1965 = vunpack.c.h.b16 %v451
    %v1966 = vunpack.c.l.b16 %v452
    %v1967 = vunpack.c.h.b16 %v452
    %v1968 = vunpack.c.l.b16 %v453
    %v1969 = vunpack.c.h.b16 %v453
    %v1970 = vunpack.c.l.b16 %v454
    %v1971 = vunpack.c.h.b16 %v454
    %v1972 = vunpack.c.l.b16 %v455
    %v1973 = vunpack.c.h.b16 %v455
    %v1974 = vunpack.c.l.b16 %v456
    %v1975 = vunpack.c.h.b16 %v456
    %v1976 = vunpack.c.l.b16 %v457
    %v1977 = vunpack.c.h.b16 %v457
    %v1978 = vunpack.c.l.b16 %v458
    %v1979 = vunpack.c.h.b16 %v458
    %v1980 = vunpack.c.l.b16 %v459
    %v1981 = vunpack.c.h.b16 %v459
    %v1982 = vunpack.c.l.b16 %v460
    %v1983 = vunpack.c.h.b16 %v460
    %v1984 = vunpack.c.l.b16 %v461
    %v1985 = vunpack.c.h.b16 %v461
    %v1986 = vunpack.c.l.b16 %v462
    %v1987 = vunpack.c.h.b16 %v462
    %v1988 = vunpack.c.l.b16 %v463
    %v1989 = vunpack.c.h.b16 %v463
    %v1990 = vunpack.c.l.b16 %v464
    %v1991 = vunpack.c.h.b16 %v464
    %v1992 = vunpack.c.l.b16 %v465
    %v1993 = vunpack.c.h.b16 %v465
    %v1994 = vunpack.c.l.b16 %v466
    %v1995 = vunpack.c.h.b16 %v466
    %v1996 = vunpack.c.l.b16 %v467
    %v1997 = vunpack.c.h.b16 %v467
    %v1998 = vunpack.c.l.b16 %v468
    %v1999 = vunpack.c.h.b16 %v468
    %v2000 = vunpack.c.l.b16 %v469
    %v2001 = vunpack.c.h.b16 %v469
    %v2002 = vunpack.c.l.b16 %v470
    %v2003 = vunpack.c.h.b16 %v470
    %v2004 = vunpack.c.l.b16 %v471
    %v2005 = vunpack.c.h.b16 %v471
    %v2006 = vunpack.c.l.b16 %v472
    %v2007 = vunpack.c.h.b16 %v472
    %v2008 = vunpack.c.l.b16 %v473
    %v2009 = vunpack.c.h.b16 %v473
    %v2010 = vunpack.c.l.b16 %v474
    %v2011 = vunpack.c.h.b16 %v474
    %v2012 = vunpack.c.l.b16 %v475
    %v2013 = vunpack.c.h.b16 %v475
    %v2014 = vunpack.c.l.b16 %v476
    %v2015 = vunpack.c.h.b16 %v476
    %v2016 = vunpack.c.l.b16 %v477
    %v2017 = vunpack.c.h.b16 %v477
    %v2018 = vunpack.c.l.b16 %v478
    %v2019 = vunpack.c.h.b16 %v478
    %v2020 = vunpack.c.l.b16 %v479
    %v2021 = vunpack.c.h.b16 %v479
    %v2022 = vunpack.c.l.b16 %v480
    %v2023 = vunpack.c.h.b16 %v480
    %v2024 = vunpack.c.l.b16 %v481
    %v2025 = vunpack.c.h.b16 %v481
    %v2026 = vunpack.c.l.b16 %v482
    %v2027 = vunpack.c.h.b16 %v482
    %v2028 = vunpack.c.l.b16 %v483
    %v2029 = vunpack.c.h.b16 %v483
    %v2030 = vunpack.c.l.b16 %v484
    %v2031 = vunpack.c.h.b16 %v484
    %v2032 = vunpack.c.l.b16 %v485
    %v2033 = vunpack.c.h.b16 %v485
    %v2034 = vunpack.c.l.b16 %v486
    %v2035 = vunpack.c.h.b16 %v486
    %v2036 = vunpack.c.l.b16 %v487
    %v2037 = vunpack.c.h.b16 %v487
    %v2038 = vunpack.c.l.b16 %v488
    %v2039 = vunpack.c.h.b16 %v488
    %v2040 = vunpack.c.l.b16 %v489
    %v2041 = vunpack.c.h.b16 %v489
    %v2042 = vunpack.c.l.b16 %v490
    %v2043 = vunpack.c.h.b16 %v490
    %v2044 = vunpack.c.l.b16 %v491
    %v2045 = vunpack.c.h.b16 %v491
    %v2046 = vunpack.c.l.b16 %v492
    %v2047 = vunpack.c.h.b16 %v492
    %v2048 = vunpack.c.l.b16 %v493
    %v2049 = vunpack.c.h.b16 %v493
    %v2050 = vunpack.c.l.b16 %v494
    %v2051 = vunpack.c.h.b16 %v494
    %v2052 = vunpack.c.l.b16 %v495
    %v2053 = vunpack.c.h.b16 %v495
    %v2054 = vunpack.c.l.b16 %v496
    %v2055 = vunpack.c.h.b16 %v496
    %v2056 = vunpack.c.l.b16 %v497
    %v2057 = vunpack.c.h.b16 %v497
    %v2058 = vunpack.c.l.b16 %v498
    %v2059 = vunpack.c.h.b16 %v498
    %v2060 = vunpack.c.l.b16 %v499
    %v2061 = vunpack.c.h.b16 %v499
    %v2062 = vunpack.c.l.b16 %v500
    %v2063 = vunpack.c.h.b16 %v500
    %v2064 = vunpack.c.l.b16 %v501
    %v2065 = vunpack.c.h.b16 %v501
    %v2066 = vunpack.c.l.b16 %v502
    %v2067 = vunpack.c.h.b16 %v502
    %v2068 = vunpack.c.l.b16 %v503
    %v2069 = vunpack.c.h.b16 %v503
    %v2070 = vunpack.c.l.b16 %v504
    %v2071 = vunpack.c.h.b16 %v504
    %v2072 = vunpack.c.l.b16 %v505
    %v2073 = vunpack.c.h.b16 %v505
    %v2074 = vunpack.c.l.b16 %v506
    %v2075 = vunpack.c.h.b16 %v506
    %v2076 = vunpack.c.l.b16 %v507
    %v2077 = vunpack.c.h.b16 %v507
    %v2078 = vunpack.c.l.b16 %v508
    %v2079 = vunpack.c.h.b16 %v508
    %v2080 = vunpack.c.l.b16 %v509
    %v2081 = vunpack.c.h.b16 %v509
    %v2082 = vunpack.c.l.b16 %v510
    %v2083 = vunpack.c.h.b16 %v510
    %v2084 = vunpack.c.l.b16 %v511
    %v2085 = vunpack.c.h.b16 %v511
    %v2086 = vunpack.c.l.b16 %v512
    %v2087 = vunpack.c.h.b16 %v512
    %v2088 = vunpack.c.l.b16 %v513
    %v2089 = vunpack.c.h.b16 %v513
    %v2090 = vunpack.c.l.b16 %v514
    %v2091 = vunpack.c.h.b16 %v514
    %v2092 = vunpack.c.l.b16 %v515
    %v2093 = vunpack.c.h.b16 %v515
    %v2094 = vunpack.c.l.b16 %v516
    %v2095 = vunpack.c.h.b16 %v516
    %v2096 = vunpack.c.l.b16 %v517
    %v2097 = vunpack.c.h.b16 %v517
    %v2098 = vunpack.c.l.b16 %v518
    %v2099 = vunpack.c.h.b16 %v518
    %v2100 = vunpack.c.l.b16 %v519
    %v2101 = vunpack.c.h.b16 %v519
    %v2102 = vunpack.c.l.b16 %v520
    %v2103 = vunpack.c.h.b16 %v520
    %v2104 = vunpack.c.l.b16 %v521
    %v2105 = vunpack.c.h.b16 %v521
    %v2106 = vunpack.c.l.b16 %v522
    %v2107 = vunpack.c.h.b16 %v522
    %v2108 = vunpack.c.l.b16 %v523
    %v2109 = vunpack.c.h.b16 %v523
    %v2110 = vunpack.c.l.b16 %v524
    %v2111 = vunpack.c.h.b16 %v524
    %v2112 = vunpack.c.l.b16 %v525
    %v2113 = vunpack.c.h.b16 %v525
    %v2114 = vunpack.c.l.b16 %v526
    %v2115 = vunpack.c.h.b16 %v526
    %v2116 = vunpack.c.l.b16 %v527
    %v2117 = vunpack.c.h.b16 %v527
    %v2118 = vunpack.c.l.b16 %v528
    %v2119 = vunpack.c.h.b16 %v528
    %v2120 = vunpack.c.l.b16 %v529
    %v2121 = vunpack.c.h.b16 %v529
    %v2122 = vunpack.c.l.b16 %v530
    %v2123 = vunpack.c.h.b16 %v530
    %v2124 = vunpack.c.l.b16 %v531
    %v2125 = vunpack.c.h.b16 %v531
    %v2126 = vunpack.c.l.b16 %v532
    %v2127 = vunpack.c.h.b16 %v532
    %v2128 = vunpack.c.l.b16 %v533
    %v2129 = vunpack.c.h.b16 %v533
    %v2130 = vunpack.c.l.b16 %v534
    %v2131 = vunpack.c.h.b16 %v534
    %v2132 = vunpack.c.l.b16 %v535
    %v2133 = vunpack.c.h.b16 %v535
    %v2134 = vunpack.c.l.b16 %v536
    %v2135 = vunpack.c.h.b16 %v536
    %v2136 = vunpack.c.l.b16 %v537
    %v2137 = vunpack.c.h.b16 %v537
    %v2138 = vunpack.c.l.b16 %v538
    %v2139 = vunpack.c.h.b16 %v538
    %v2140 = vunpack.c.l.b16 %v539
    %v2141 = vunpack.c.h.b16 %v539
    %v2142 = vunpack.c.l.b16 %v540
    %v2143 = vunpack.c.h.b16 %v540
    %v2144 = vunpack.c.l.b16 %v541
    %v2145 = vunpack.c.h.b16 %v541
    %v2146 = vunpack.c.l.b16 %v542
    %v2147 = vunpack.c.h.b16 %v542
    %v2148 = vunpack.c.l.b16 %v543
    %v2149 = vunpack.c.h.b16 %v543
    %v2150 = vunpack.c.l.b16 %v544
    %v2151 = vunpack.c.h.b16 %v544
    %v2152 = vunpack.c.l.b16 %v545
    %v2153 = vunpack.c.h.b16 %v545
    %v2154 = vunpack.c.l.b16 %v546
    %v2155 = vunpack.c.h.b16 %v546
    %v2156 = vunpack.c.l.b16 %v547
    %v2157 = vunpack.c.h.b16 %v547
    %v2158 = vunpack.c.l.b16 %v548
    %v2159 = vunpack.c.h.b16 %v548
    %v2160 = vunpack.c.l.b16 %v549
    %v2161 = vunpack.c.h.b16 %v549
    %v2162 = vunpack.c.l.b16 %v550
    %v2163 = vunpack.c.h.b16 %v550
    %v2164 = vunpack.c.l.b16 %v551
    %v2165 = vunpack.c.h.b16 %v551
    %v2166 = vunpack.c.l.b16 %v552
    %v2167 = vunpack.c.h.b16 %v552
    %v2168 = vunpack.c.l.b16 %v553
    %v2169 = vunpack.c.h.b16 %v553
    %v2170 = vunpack.c.l.b16 %v554
    %v2171 = vunpack.c.h.b16 %v554
    %v2172 = vunpack.c.l.b16 %v555
    %v2173 = vunpack.c.h.b16 %v555
    %v2174 = vunpack.c.l.b16 %v556
    %v2175 = vunpack.c.h.b16 %v556
    %v2176 = vunpack.c.l.b16 %v557
    %v2177 = vunpack.c.h.b16 %v557
    %v2178 = vunpack.c.l.b16 %v558
    %v2179 = vunpack.c.h.b16 %v558
    %v2180 = vunpack.c.l.b16 %v559
    %v2181 = vunpack.c.h.b16 %v559
    %v2182 = vunpack.c.l.b16 %v560
    %v2183 = vunpack.c.h.b16 %v560
    %v2184 = vunpack.c.l.b16 %v561
    %v2185 = vunpack.c.h.b16 %v561
    %v2186 = vunpack.c.l.b16 %v562
    %v2187 = vunpack.c.h.b16 %v562
    %v2188 = vunpack.c.l.b16 %v563
    %v2189 = vunpack.c.h.b16 %v563
    %v2190 = vunpack.c.l.b16 %v564
    %v2191 = vunpack.c.h.b16 %v564
    %v2192 = vunpack.c.l.b16 %v565
    %v2193 = vunpack.c.h.b16 %v565
    %v2194 = vunpack.c.l.b16 %v566
    %v2195 = vunpack.c.h.b16 %v566
    %v2196 = vunpack.c.l.b16 %v567
    %v2197 = vunpack.c.h.b16 %v567
    %v2198 = vunpack.c.l.b16 %v568
    %v2199 = vunpack.c.h.b16 %v568
    %v2200 = vunpack.c.l.b16 %v569
    %v2201 = vunpack.c.h.b16 %v569
    %v2202 = vunpack.c.l.b16 %v570
    %v2203 = vunpack.c.h.b16 %v570
    %v2204 = vunpack.c.l.b16 %v571
    %v2205 = vunpack.c.h.b16 %v571
    %v2206 = vunpack.c.l.b16 %v572
    %v2207 = vunpack.c.h.b16 %v572
    %v2208 = vunpack.c.l.b16 %v573
    %v2209 = vunpack.c.h.b16 %v573
    %v2210 = vunpack.c.l.b16 %v574
    %v2211 = vunpack.c.h.b16 %v574
    %v2212 = vunpack.c.l.b16 %v575
    %v2213 = vunpack.c.h.b16 %v575
    %v2214 = vunpack.c.l.b16 %v576
    %v2215 = vunpack.c.h.b16 %v576
    %v2216 = vunpack.c.l.b16 %v577
    %v2217 = vunpack.c.h.b16 %v577
    %v2218 = vunpack.c.l.b16 %v578
    %v2219 = vunpack.c.h.b16 %v578
    %v2220 = vunpack.c.l.b16 %v579
    %v2221 = vunpack.c.h.b16 %v579
    %v2222 = vunpack.c.l.b16 %v580
    %v2223 = vunpack.c.h.b16 %v580
    %v2224 = vunpack.c.l.b16 %v581
    %v2225 = vunpack.c.h.b16 %v581
    %v2226 = vunpack.c.l.b16 %v582
    %v2227 = vunpack.c.h.b16 %v582
    %v2228 = vunpack.c.l.b16 %v583
    %v2229 = vunpack.c.h.b16 %v583
    %v2230 = vunpack.c.l.b16 %v584
    %v2231 = vunpack.c.h.b16 %v584
    %v2232 = vunpack.c.l.b16 %v585
    %v2233 = vunpack.c.h.b16 %v585
    %v2234 = vunpack.c.l.b16 %v586
    %v2235 = vunpack.c.h.b16 %v586
    %v2236 = vunpack.c.l.b16 %v587
    %v2237 = vunpack.c.h.b16 %v587
    %v2238 = vunpack.c.l.b16 %v588
    %v2239 = vunpack.c.h.b16 %v588
    %v2240 = vunpack.c.l.b16 %v589
    %v2241 = vunpack.c.h.b16 %v589
    %v2242 = vunpack.c.l.b16 %v590
    %v2243 = vunpack.c.h.b16 %v590
    %v2244 = vunpack.c.l.b16 %v591
    %v2245 = vunpack.c.h.b16 %v591
    %v2246 = vunpack.c.l.b16 %v592
    %v2247 = vunpack.c.h.b16 %v592
    %v2248 = vunpack.c.l.b16 %v593
    %v2249 = vunpack.c.h.b16 %v593
    %v2250 = vunpack.c.l.b16 %v594
    %v2251 = vunpack.c.h.b16 %v594
    %v2252 = vunpack.c.l.b16 %v595
    %v2253 = vunpack.c.h.b16 %v595
    %v2254 = vunpack.c.l.b16 %v596
    %v2255 = vunpack.c.h.b16 %v596
    %v2256 = vunpack.c.l.b16 %v597
    %v2257 = vunpack.c.h.b16 %v597
    %v2258 = vunpack.c.l.b16 %v598
    %v2259 = vunpack.c.h.b16 %v598
    %v2260 = vunpack.c.l.b16 %v599
    %v2261 = vunpack.c.h.b16 %v599
    %v2262 = vunpack.c.l.b16 %v600
    %v2263 = vunpack.c.h.b16 %v600
    %v2264 = vunpack.c.l.b16 %v601
    %v2265 = vunpack.c.h.b16 %v601
    %v2266 = vunpack.c.l.b16 %v602
    %v2267 = vunpack.c.h.b16 %v602
    %v2268 = vunpack.c.l.b16 %v603
    %v2269 = vunpack.c.h.b16 %v603
    %v2270 = vunpack.c.l.b16 %v604
    %v2271 = vunpack.c.h.b16 %v604
    %v2272 = vunpack.c.l.b16 %v605
    %v2273 = vunpack.c.h.b16 %v605
    %v2274 = vunpack.c.l.b16 %v606
    %v2275 = vunpack.c.h.b16 %v606
    %v2276 = vunpack.c.l.b16 %v607
    %v2277 = vunpack.c.h.b16 %v607
    %v2278 = vunpack.c.l.b16 %v608
    %v2279 = vunpack.c.h.b16 %v608
    %v2280 = vunpack.c.l.b16 %v609
    %v2281 = vunpack.c.h.b16 %v609
    %v2282 = vunpack.c.l.b16 %v610
    %v2283 = vunpack.c.h.b16 %v610
    %v2284 = vunpack.c.l.b16 %v611
    %v2285 = vunpack.c.h.b16 %v611
    %v2286 = vunpack.c.l.b16 %v612
    %v2287 = vunpack.c.h.b16 %v612
    %v2288 = vunpack.c.l.b16 %v613
    %v2289 = vunpack.c.h.b16 %v613
    %v2290 = vunpack.c.l.b16 %v614
    %v2291 = vunpack.c.h.b16 %v614
    %v2292 = vunpack.c.l.b16 %v615
    %v2293 = vunpack.c.h.b16 %v615
    %v2294 = vunpack.c.l.b16 %v616
    %v2295 = vunpack.c.h.b16 %v616
    %v2296 = vunpack.c.l.b16 %v617
    %v2297 = vunpack.c.h.b16 %v617
    %v2298 = vunpack.c.l.b16 %v618
    %v2299 = vunpack.c.h.b16 %v618
    %v2300 = vunpack.c.l.b16 %v619
    %v2301 = vunpack.c.h.b16 %v619
    %v2302 = vunpack.c.l.b16 %v620
    %v2303 = vunpack.c.h.b16 %v620
    %v2304 = vunpack.c.l.b16 %v621
    %v2305 = vunpack.c.h.b16 %v621
    %v2306 = vunpack.c.l.b16 %v622
    %v2307 = vunpack.c.h.b16 %v622
    %v2308 = vunpack.c.l.b16 %v623
    %v2309 = vunpack.c.h.b16 %v623
    %v2310 = vpack.c.b16 %v1814, %v1798
    %v2311 = vpack.c.b16 %v1815, %v1799
    %v2312 = vpack.c.b16 %v1816, %v1800
    %v2313 = vpack.c.b16 %v1817, %v1801
    %v2314 = vpack.c.b16 %v1818, %v1802
    %v2315 = vpack.c.b16 %v1819, %v1803
    %v2316 = vpack.c.b16 %v1820, %v1804
    %v2317 = vpack.c.b16 %v1821, %v1805
    %v2318 = vpack.c.b16 %v1822, %v1806
    %v2319 = vpack.c.b16 %v1823, %v1807
    %v2320 = vpack.c.b16 %v1824, %v1808
    %v2321 = vpack.c.b16 %v1825, %v1809
    %v2322 = vpack.c.b16 %v1826, %v1810
    %v2323 = vpack.c.b16 %v1827, %v1811
    %v2324 = vpack.c.b16 %v1828, %v1812
    %v2325 = vpack.c.b16 %v1829, %v1813
    %v2326 = vpack.c.b16 %v1846, %v1830
    %v2327 = vpack.c.b16 %v1847, %v1831
    %v2328 = vpack.c.b16 %v1848, %v1832
    %v2329 = vpack.c.b16 %v1849, %v1833
    %v2330 = vpack.c.b16 %v1850, %v1834
    %v2331 = vpack.c.b16 %v1851, %v1835
    %v2332 = vpack.c.b16 %v1852, %v1836
    %v2333 = vpack.c.b16 %v1853, %v1837
    %v2334 = vpack.c.b16 %v1854, %v1838
    %v2335 = vpack.c.b16 %v1855, %v1839
    %v2336 = vpack.c.b16 %v1856, %v1840
    %v2337 = vpack.c.b16 %v1857, %v1841
    %v2338 = vpack.c.b16 %v1858, %v1842
    %v2339 = vpack.c.b16 %v1859, %v1843
    %v2340 = vpack.c.b16 %v1860, %v1844
    %v2341 = vpack.c.b16 %v1861, %v1845
    %v2342 = vpack.c.b16 %v1878, %v1862
    %v2343 = vpack.c.b16 %v1879, %v1863
    %v2344 = vpack.c.b16 %v1880, %v1864
    %v2345 = vpack.c.b16 %v1881, %v1865
    %v2346 = vpack.c.b16 %v1882, %v1866
    %v2347 = vpack.c.b16 %v1883, %v1867
    %v2348 = vpack.c.b16 %v1884, %v1868
    %v2349 = vpack.c.b16 %v1885, %v1869
    %v2350 = vpack.c.b16 %v1886, %v1870
    %v2351 = vpack.c.b16 %v1887, %v1871
    %v2352 = vpack.c.b16 %v1888, %v1872
    %v2353 = vpack.c.b16 %v1889, %v1873
    %v2354 = vpack.c.b16 %v1890, %v1874
    %v2355 = vpack.c.b16 %v1891, %v1875
    %v2356 = vpack.c.b16 %v1892, %v1876
    %v2357 = vpack.c.b16 %v1893, %v1877
    %v2358 = vpack.c.b16 %v1910, %v1894
    %v2359 = vpack.c.b16 %v1911, %v1895
    %v2360 = vpack.c.b16 %v1912, %v1896
    %v2361 = vpack.c.b16 %v1913, %v1897
    %v2362 = vpack.c.b16 %v1914, %v1898
    %v2363 = vpack.c.b16 %v1915, %v1899
    %v2364 = vpack.c.b16 %v1916, %v1900
    %v2365 = vpack.c.b16 %v1917, %v1901
    %v2366 = vpack.c.b16 %v1918, %v1902
    %v2367 = vpack.c.b16 %v1919, %v1903
    %v2368 = vpack.c.b16 %v1920, %v1904
    %v2369 = vpack.c.b16 %v1921, %v1905
    %v2370 = vpack.c.b16 %v1922, %v1906
    %v2371 = vpack.c.b16 %v1923, %v1907
    %v2372 = vpack.c.b16 %v1924, %v1908
    %v2373 = vpack.c.b16 %v1925, %v1909
    %v2374 = vpack.c.b16 %v1942, %v1926
    %v2375 = vpack.c.b16 %v1943, %v1927
    %v2376 = vpack.c.b16 %v1944, %v1928
    %v2377 = vpack.c.b16 %v1945, %v1929
    %v2378 = vpack.c.b16 %v1946, %v1930
    %v2379 = vpack.c.b16 %v1947, %v1931
    %v2380 = vpack.c.b16 %v1948, %v1932
    %v2381 = vpack.c.b16 %v1949, %v1933
    %v2382 = vpack.c.b16 %v1950, %v1934
    %v2383 = vpack.c.b16 %v1951, %v1935
    %v2384 = vpack.c.b16 %v1952, %v1936
    %v2385 = vpack.c.b16 %v1953, %v1937
    %v2386 = vpack.c.b16 %v1954, %v1938
    %v2387 = vpack.c.b16 %v1955, %v1939
    %v2388 = vpack.c.b16 %v1956, %v1940
    %v2389 = vpack.c.b16 %v1957, %v1941
    %v2390 = vpack.c.b16 %v1974, %v1958
    %v2391 = vpack.c.b16 %v1975, %v1959
    %v2392 = vpack.c.b16 %v1976, %v1960
    %v2393 = vpack.c.b16 %v1977, %v1961
    %v2394 = vpack.c.b16 %v1978, %v1962
    %v2395 = vpack.c.b16 %v1979, %v1963
    %v2396 = vpack.c.b16 %v1980, %v1964
    %v2397 = vpack.c.b16 %v1981, %v1965
    %v2398 = vpack.c.b16 %v1982, %v1966
    %v2399 = vpack.c.b16 %v1983, %v1967
    %v2400 = vpack.c.b16 %v1984, %v1968
    %v2401 = vpack.c.b16 %v1985, %v1969
    %v2402 = vpack.c.b16 %v1986, %v1970
    %v2403 = vpack.c.b16 %v1987, %v1971
    %v2404 = vpack.c.b16 %v1988, %v1972
    %v2405 = vpack.c.b16 %v1989, %v1973
    %v2406 = vpack.c.b16 %v2006, %v1990
    %v2407 = vpack.c.b16 %v2007, %v1991
    %v2408 = vpack.c.b16 %v2008, %v1992
    %v2409 = vpack.c.b16 %v2009, %v1993
    %v2410 = vpack.c.b16 %v2010, %v1994
    %v2411 = vpack.c.b16 %v2011, %v1995
    %v2412 = vpack.c.b16 %v2012, %v1996
    %v2413 = vpack.c.b16 %v2013, %v1997
    %v2414 = vpack.c.b16 %v2014, %v1998
    %v2415 = vpack.c.b16 %v2015, %v1999
    %v2416 = vpack.c.b16 %v2016, %v2000
    %v2417 = vpack.c.b16 %v2017, %v2001
    %v2418 = vpack.c.b16 %v2018, %v2002
    %v2419 = vpack.c.b16 %v2019, %v2003
    %v2420 = vpack.c.b16 %v2020, %v2004
    %v2421 = vpack.c.b16 %v2021, %v2005
    %v2422 = vpack.c.b16 %v2038, %v2022
    %v2423 = vpack.c.b16 %v2039, %v2023
    %v2424 = vpack.c.b16 %v2040, %v2024
    %v2425 = vpack.c.b16 %v2041, %v2025
    %v2426 = vpack.c.b16 %v2042, %v2026
    %v2427 = vpack.c.b16 %v2043, %v2027
    %v2428 = vpack.c.b16 %v2044, %v2028
    %v2429 = vpack.c.b16 %v2045, %v2029
    %v2430 = vpack.c.b16 %v2046, %v2030
    %v2431 = vpack.c.b16 %v2047, %v2031
    %v2432 = vpack.c.b16 %v2048, %v2032
    %v2433 = vpack.c.b16 %v2049, %v2033
    %v2434 = vpack.c.b16 %v2050, %v2034
    %v2435 = vpack.c.b16 %v2051, %v2035
    %v2436 = vpack.c.b16 %v2052, %v2036
    %v2437 = vpack.c.b16 %v2053, %v2037
    %v2438 = vpack.c.b16 %v2070, %v2054
    %v2439 = vpack.c.b16 %v2071, %v2055
    %v2440 = vpack.c.b16 %v2072, %v2056
    %v2441 = vpack.c.b16 %v2073, %v2057
    %v2442 = vpack.c.b16 %v2074, %v2058
    %v2443 = vpack.c.b16 %v2075, %v2059
    %v2444 = vpack.c.b16 %v2076, %v2060
    %v2445 = vpack.c.b16 %v2077, %v2061
    %v2446 = vpack.c.b16 %v2078, %v2062
    %v2447 = vpack.c.b16 %v2079, %v2063
    %v2448 = vpack.c.b16 %v2080, %v2064
    %v2449 = vpack.c.b16 %v2081, %v2065
    %v2450 = vpack.c.b16 %v2082, %v2066
    %v2451 = vpack.c.b16 %v2083, %v2067
    %v2452 = vpack.c.b16 %v2084, %v2068
    %v2453 = vpack.c.b16 %v2085, %v2069
    %v2454 = vpack.c.b16 %v2102, %v2086
    %v2455 = vpack.c.b16 %v2103, %v2087
    %v2456 = vpack.c.b16 %v2104, %v2088
    %v2457 = vpack.c.b16 %v2105, %v2089
    %v2458 = vpack.c.b16 %v2106, %v2090
    %v2459 = vpack.c.b16 %v2107, %v2091
    %v2460 = vpack.c.b16 %v2108, %v2092
    %v2461 = vpack.c.b16 %v2109, %v2093
    %v2462 = vpack.c.b16 %v2110, %v2094
    %v2463 = vpack.c.b16 %v2111, %v2095
    %v2464 = vpack.c.b16 %v2112, %v2096
    %v2465 = vpack.c.b16 %v2113, %v2097
    %v2466 = vpack.c.b16 %v2114, %v2098
    %v2467 = vpack.c.b16 %v2115, %v2099
    %v2468 = vpack.c.b16 %v2116, %v2100
    %v2469 = vpack.c.b16 %v2117, %v2101
    %v2470 = vpack.c.b16 %v2134, %v2118
    %v2471 = vpack.c.b16 %v2135, %v2119
    %v2472 = vpack.c.b16 %v2136, %v2120
    %v2473 = vpack.c.b16 %v2137, %v2121
    %v2474 = vpack.c.b16 %v2138, %v2122
    %v2475 = vpack.c.b16 %v2139, %v2123
    %v2476 = vpack.c.b16 %v2140, %v2124
    %v2477 = vpack.c.b16 %v2141, %v2125
    %v2478 = vpack.c.b16 %v2142, %v2126
    %v2479 = vpack.c.b16 %v2143, %v2127
    %v2480 = vpack.c.b16 %v2144, %v2128
    %v2481 = vpack.c.b16 %v2145, %v2129
    %v2482 = vpack.c.b16 %v2146, %v2130
    %v2483 = vpack.c.b16 %v2147, %v2131
    %v2484 = vpack.c.b16 %v2148, %v2132
    %v2485 = vpack.c.b16 %v2149, %v2133
    %v2486 = vpack.c.b16 %v2166, %v2150
    %v2487 = vpack.c.b16 %v2167, %v2151
    %v2488 = vpack.c.b16 %v2168, %v2152
    %v2489 = vpack.c.b16 %v2169, %v2153
    %v2490 = vpack.c.b16 %v2170, %v2154
    %v2491 = vpack.c.b16 %v2171, %v2155
    %v2492 = vpack.c.b16 %v2172, %v2156
    %v2493 = vpack.c.b16 %v2173, %v2157
    %v2494 = vpack.c.b16 %v2174, %v2158
    %v2495 = vpack.c.b16 %v2175, %v2159
    %v2496 = vpack.c.b16 %v2176, %v2160
    %v2497 = vpack.c.b16 %v2177, %v2161
    %v2498 = vpack.c.b16 %v2178, %v2162
    %v2499 = vpack.c.b16 %v2179, %v2163
    %v2500 = vpack.c.b16 %v2180, %v2164
    %v2501 = vpack.c.b16 %v2181, %v2165
    %v2502 = vpack.c.b16 %v2198, %v2182
    %v2503 = vpack.c.b16 %v2199, %v2183
    %v2504 = vpack.c.b16 %v2200, %v2184
    %v2505 = vpack.c.b16 %v2201, %v2185
    %v2506 = vpack.c.b16 %v2202, %v2186
    %v2507 = vpack.c.b16 %v2203, %v2187
    %v2508 = vpack.c.b16 %v2204, %v2188
    %v2509 = vpack.c.b16 %v2205, %v2189
    %v2510 = vpack.c.b16 %v2206, %v2190
    %v2511 = vpack.c.b16 %v2207, %v2191
    %v2512 = vpack.c.b16 %v2208, %v2192
    %v2513 = vpack.c.b16 %v2209, %v2193
    %v2514 = vpack.c.b16 %v2210, %v2194
    %v2515 = vpack.c.b16 %v2211, %v2195
    %v2516 = vpack.c.b16 %v2212, %v2196
    %v2517 = vpack.c.b16 %v2213, %v2197
    %v2518 = vpack.c.b16 %v2230, %v2214
    %v2519 = vpack.c.b16 %v2231, %v2215
    %v2520 = vpack.c.b16 %v2232, %v2216
    %v2521 = vpack.c.b16 %v2233, %v2217
    %v2522 = vpack.c.b16 %v2234, %v2218
    %v2523 = vpack.c.b16 %v2235, %v2219
    %v2524 = vpack.c.b16 %v2236, %v2220
    %v2525 = vpack.c.b16 %v2237, %v2221
    %v2526 = vpack.c.b16 %v2238, %v2222
    %v2527 = vpack.c.b16 %v2239, %v2223
    %v2528 = vpack.c.b16 %v2240, %v2224
    %v2529 = vpack.c.b16 %v2241, %v2225
    %v2530 = vpack.c.b16 %v2242, %v2226
    %v2531 = vpack.c.b16 %v2243, %v2227
    %v2532 = vpack.c.b16 %v2244, %v2228
    %v2533 = vpack.c.b16 %v2245, %v2229
    %v2534 = vpack.c.b16 %v2262, %v2246
    %v2535 = vpack.c.b16 %v2263, %v2247
    %v2536 = vpack.c.b16 %v2264, %v2248
    %v2537 = vpack.c.b16 %v2265, %v2249
    %v2538 = vpack.c.b16 %v2266, %v2250
    %v2539 = vpack.c.b16 %v2267, %v2251
    %v2540 = vpack.c.b16 %v2268, %v2252
    %v2541 = vpack.c.b16 %v2269, %v2253
    %v2542 = vpack.c.b16 %v2270, %v2254
    %v2543 = vpack.c.b16 %v2271, %v2255
    %v2544 = vpack.c.b16 %v2272, %v2256
    %v2545 = vpack.c.b16 %v2273, %v2257
    %v2546 = vpack.c.b16 %v2274, %v2258
    %v2547 = vpack.c.b16 %v2275, %v2259
    %v2548 = vpack.c.b16 %v2276, %v2260
    %v2549 = vpack.c.b16 %v2277, %v2261
    %v2550 = vpack.c.b16 %v2294, %v2278
    %v2551 = vpack.c.b16 %v2295, %v2279
    %v2552 = vpack.c.b16 %v2296, %v2280
    %v2553 = vpack.c.b16 %v2297, %v2281
    %v2554 = vpack.c.b16 %v2298, %v2282
    %v2555 = vpack.c.b16 %v2299, %v2283
    %v2556 = vpack.c.b16 %v2300, %v2284
    %v2557 = vpack.c.b16 %v2301, %v2285
    %v2558 = vpack.c.b16 %v2302, %v2286
    %v2559 = vpack.c.b16 %v2303, %v2287
    %v2560 = vpack.c.b16 %v2304, %v2288
    %v2561 = vpack.c.b16 %v2305, %v2289
    %v2562 = vpack.c.b16 %v2306, %v2290
    %v2563 = vpack.c.b16 %v2307, %v2291
    %v2564 = vpack.c.b16 %v2308, %v2292
    %v2565 = vpack.c.b16 %v2309, %v2293
    %2822 = vmatprep.subr.bf16.mxu0 %v2311
    %2823 = vmatpush1.bf16.msra.mxu0 %v2310
    %2824 = vmatprep.subr.bf16.mxu0 %v2327
    %2825 = vmatpush1.bf16.msra.mxu0 %v2326
    %2826 = vmatprep.subr.bf16.mxu0 %v2343
    %2827 = vmatpush1.bf16.msra.mxu0 %v2342
    %2828 = vmatprep.subr.bf16.mxu0 %v2359
    %2829 = vmatpush1.bf16.msra.mxu0 %v2358
    %2830 = vmatprep.subr.bf16.mxu0 %v2375
    %2831 = vmatpush1.bf16.msra.mxu0 %v2374
    %2832 = vmatprep.subr.bf16.mxu0 %v2391
    %2833 = vmatpush1.bf16.msra.mxu0 %v2390
    %2834 = vmatprep.subr.bf16.mxu0 %v2407
    %2835 = vmatpush1.bf16.msra.mxu0 %v2406
    %2836 = vmatprep.subr.bf16.mxu0 %v2423
    %2837 = vmatpush1.bf16.msra.mxu0 %v2422
    %2838 = vmatprep.subr.bf16.mxu0 %v2439
    %2839 = vmatpush1.bf16.msra.mxu0 %v2438
    %2840 = vmatprep.subr.bf16.mxu0 %v2455
    %2841 = vmatpush1.bf16.msra.mxu0 %v2454
    %2842 = vmatprep.subr.bf16.mxu0 %v2471
    %2843 = vmatpush1.bf16.msra.mxu0 %v2470
    %2844 = vmatprep.subr.bf16.mxu0 %v2487
    %2845 = vmatpush1.bf16.msra.mxu0 %v2486
    %2846 = vmatprep.subr.bf16.mxu0 %v2503
    %2847 = vmatpush1.bf16.msra.mxu0 %v2502
    %2848 = vmatprep.subr.bf16.mxu0 %v2519
    %2849 = vmatpush1.bf16.msra.mxu0 %v2518
    %2850 = vmatprep.subr.bf16.mxu0 %v2535
    %2851 = vmatpush1.bf16.msra.mxu0 %v2534
    %2852 = vmatprep.subr.bf16.mxu0 %v2551
    %2853 = vmatpush1.bf16.msra.mxu0 %v2550
    %2854 = vmatprep.mubr.bf16.mxu0 %v1541
    %2855 = vmatmul.mubr.bf16.gmra.mrb[0].mxu0 %v1540
    %v2856 = vpop.f32.mrb[0].mxu0
    %v2857 = vadd.f32 0.0, %v2856
    %v2858 = vpop.f32.mrb[0].mxu0
    %v2859 = vadd.f32 0.0, %v2858
    %v2860 = vpop.f32.mrb[0].mxu0
    %v2861 = vpop.f32.mrb[0].mxu0
    %2862 = vdwg.mxu0
    %2863 = vmatprep.subr.bf16.mxu0 %v2313
    %2864 = vmatpush1.bf16.msra.mxu0 %v2312
    %2865 = vmatprep.subr.bf16.mxu0 %v2329
    %2866 = vmatpush1.bf16.msra.mxu0 %v2328
    %2867 = vmatprep.subr.bf16.mxu0 %v2345
    %2868 = vmatpush1.bf16.msra.mxu0 %v2344
    %2869 = vmatprep.subr.bf16.mxu0 %v2361
    %2870 = vmatpush1.bf16.msra.mxu0 %v2360
    %2871 = vmatprep.subr.bf16.mxu0 %v2377
    %2872 = vmatpush1.bf16.msra.mxu0 %v2376
    %2873 = vmatprep.subr.bf16.mxu0 %v2393
    %2874 = vmatpush1.bf16.msra.mxu0 %v2392
    %2875 = vmatprep.subr.bf16.mxu0 %v2409
    %2876 = vmatpush1.bf16.msra.mxu0 %v2408
    %2877 = vmatprep.subr.bf16.mxu0 %v2425
    %2878 = vmatpush1.bf16.msra.mxu0 %v2424
    %2879 = vmatprep.subr.bf16.mxu0 %v2441
    %2880 = vmatpush1.bf16.msra.mxu0 %v2440
    %2881 = vmatprep.subr.bf16.mxu0 %v2457
    %2882 = vmatpush1.bf16.msra.mxu0 %v2456
    %2883 = vmatprep.subr.bf16.mxu0 %v2473
    %2884 = vmatpush1.bf16.msra.mxu0 %v2472
    %2885 = vmatprep.subr.bf16.mxu0 %v2489
    %2886 = vmatpush1.bf16.msra.mxu0 %v2488
    %2887 = vmatprep.subr.bf16.mxu0 %v2505
    %2888 = vmatpush1.bf16.msra.mxu0 %v2504
    %2889 = vmatprep.subr.bf16.mxu0 %v2521
    %2890 = vmatpush1.bf16.msra.mxu0 %v2520
    %2891 = vmatprep.subr.bf16.mxu0 %v2537
    %2892 = vmatpush1.bf16.msra.mxu0 %v2536
    %2893 = vmatprep.subr.bf16.mxu0 %v2553
    %2894 = vmatpush1.bf16.msra.mxu0 %v2552
    %2895 = vmatprep.mubr.bf16.mxu0 %v1541
    %2896 = vmatmul.mubr.bf16.gmra.mrb[0].mxu0 %v1540
    %v2897 = vpop.f32.mrb[0].mxu0
    %v2898 = vadd.f32 0.0, %v2897
    %v2899 = vpop.f32.mrb[0].mxu0
    %v2900 = vadd.f32 0.0, %v2899
    %v2901 = vpop.f32.mrb[0].mxu0
    %v2902 = vpop.f32.mrb[0].mxu0
    %2903 = vdwg.mxu0
    %2904 = vmatprep.subr.bf16.mxu0 %v2315
    %2905 = vmatpush1.bf16.msra.mxu0 %v2314
    %2906 = vmatprep.subr.bf16.mxu0 %v2331
    %2907 = vmatpush1.bf16.msra.mxu0 %v2330
    %2908 = vmatprep.subr.bf16.mxu0 %v2347
    %2909 = vmatpush1.bf16.msra.mxu0 %v2346
    %2910 = vmatprep.subr.bf16.mxu0 %v2363
    %2911 = vmatpush1.bf16.msra.mxu0 %v2362
    %2912 = vmatprep.subr.bf16.mxu0 %v2379
    %2913 = vmatpush1.bf16.msra.mxu0 %v2378
    %2914 = vmatprep.subr.bf16.mxu0 %v2395
    %2915 = vmatpush1.bf16.msra.mxu0 %v2394
    %2916 = vmatprep.subr.bf16.mxu0 %v2411
    %2917 = vmatpush1.bf16.msra.mxu0 %v2410
    %2918 = vmatprep.subr.bf16.mxu0 %v2427
    %2919 = vmatpush1.bf16.msra.mxu0 %v2426
    %2920 = vmatprep.subr.bf16.mxu0 %v2443
    %2921 = vmatpush1.bf16.msra.mxu0 %v2442
    %2922 = vmatprep.subr.bf16.mxu0 %v2459
    %2923 = vmatpush1.bf16.msra.mxu0 %v2458
    %2924 = vmatprep.subr.bf16.mxu0 %v2475
    %2925 = vmatpush1.bf16.msra.mxu0 %v2474
    %2926 = vmatprep.subr.bf16.mxu0 %v2491
    %2927 = vmatpush1.bf16.msra.mxu0 %v2490
    %2928 = vmatprep.subr.bf16.mxu0 %v2507
    %2929 = vmatpush1.bf16.msra.mxu0 %v2506
    %2930 = vmatprep.subr.bf16.mxu0 %v2523
    %2931 = vmatpush1.bf16.msra.mxu0 %v2522
    %2932 = vmatprep.subr.bf16.mxu0 %v2539
    %2933 = vmatpush1.bf16.msra.mxu0 %v2538
    %2934 = vmatprep.subr.bf16.mxu0 %v2555
    %2935 = vmatpush1.bf16.msra.mxu0 %v2554
    %2936 = vmatprep.mubr.bf16.mxu0 %v1541
    %2937 = vmatmul.mubr.bf16.gmra.mrb[0].mxu0 %v1540
    %v2938 = vpop.f32.mrb[0].mxu0
    %v2939 = vadd.f32 0.0, %v2938
    %v2940 = vpop.f32.mrb[0].mxu0
    %v2941 = vadd.f32 0.0, %v2940
    %v2942 = vpop.f32.mrb[0].mxu0
    %v2943 = vpop.f32.mrb[0].mxu0
    %2944 = vdwg.mxu0
    %2945 = vmatprep.subr.bf16.mxu0 %v2317
    %2946 = vmatpush1.bf16.msra.mxu0 %v2316
    %2947 = vmatprep.subr.bf16.mxu0 %v2333
    %2948 = vmatpush1.bf16.msra.mxu0 %v2332
    %2949 = vmatprep.subr.bf16.mxu0 %v2349
    %2950 = vmatpush1.bf16.msra.mxu0 %v2348
    %2951 = vmatprep.subr.bf16.mxu0 %v2365
    %2952 = vmatpush1.bf16.msra.mxu0 %v2364
    %2953 = vmatprep.subr.bf16.mxu0 %v2381
    %2954 = vmatpush1.bf16.msra.mxu0 %v2380
    %2955 = vmatprep.subr.bf16.mxu0 %v2397
    %2956 = vmatpush1.bf16.msra.mxu0 %v2396
    %2957 = vmatprep.subr.bf16.mxu0 %v2413
    %2958 = vmatpush1.bf16.msra.mxu0 %v2412
    %2959 = vmatprep.subr.bf16.mxu0 %v2429
    %2960 = vmatpush1.bf16.msra.mxu0 %v2428
    %2961 = vmatprep.subr.bf16.mxu0 %v2445
    %2962 = vmatpush1.bf16.msra.mxu0 %v2444
    %2963 = vmatprep.subr.bf16.mxu0 %v2461
    %2964 = vmatpush1.bf16.msra.mxu0 %v2460
    %2965 = vmatprep.subr.bf16.mxu0 %v2477
    %2966 = vmatpush1.bf16.msra.mxu0 %v2476
    %2967 = vmatprep.subr.bf16.mxu0 %v2493
    %2968 = vmatpush1.bf16.msra.mxu0 %v2492
    %2969 = vmatprep.subr.bf16.mxu0 %v2509
    %2970 = vmatpush1.bf16.msra.mxu0 %v2508
    %2971 = vmatprep.subr.bf16.mxu0 %v2525
    %2972 = vmatpush1.bf16.msra.mxu0 %v2524
    %2973 = vmatprep.subr.bf16.mxu0 %v2541
    %2974 = vmatpush1.bf16.msra.mxu0 %v2540
    %2975 = vmatprep.subr.bf16.mxu0 %v2557
    %2976 = vmatpush1.bf16.msra.mxu0 %v2556
    %2977 = vmatprep.mubr.bf16.mxu0 %v1541
    %2978 = vmatmul.mubr.bf16.gmra.mrb[0].mxu0 %v1540
    %v2979 = vpop.f32.mrb[0].mxu0
    %v2980 = vadd.f32 0.0, %v2979
    %v2981 = vpop.f32.mrb[0].mxu0
    %v2982 = vadd.f32 0.0, %v2981
    %v2983 = vpop.f32.mrb[0].mxu0
    %v2984 = vpop.f32.mrb[0].mxu0
    %2985 = vdwg.mxu0
    %2986 = vmatprep.subr.bf16.mxu0 %v2319
    %2987 = vmatpush1.bf16.msra.mxu0 %v2318
    %2988 = vmatprep.subr.bf16.mxu0 %v2335
    %2989 = vmatpush1.bf16.msra.mxu0 %v2334
    %2990 = vmatprep.subr.bf16.mxu0 %v2351
    %2991 = vmatpush1.bf16.msra.mxu0 %v2350
    %2992 = vmatprep.subr.bf16.mxu0 %v2367
    %2993 = vmatpush1.bf16.msra.mxu0 %v2366
    %2994 = vmatprep.subr.bf16.mxu0 %v2383
    %2995 = vmatpush1.bf16.msra.mxu0 %v2382
    %2996 = vmatprep.subr.bf16.mxu0 %v2399
    %2997 = vmatpush1.bf16.msra.mxu0 %v2398
    %2998 = vmatprep.subr.bf16.mxu0 %v2415
    %2999 = vmatpush1.bf16.msra.mxu0 %v2414
    %3000 = vmatprep.subr.bf16.mxu0 %v2431
    %3001 = vmatpush1.bf16.msra.mxu0 %v2430
    %3002 = vmatprep.subr.bf16.mxu0 %v2447
    %3003 = vmatpush1.bf16.msra.mxu0 %v2446
    %3004 = vmatprep.subr.bf16.mxu0 %v2463
    %3005 = vmatpush1.bf16.msra.mxu0 %v2462
    %3006 = vmatprep.subr.bf16.mxu0 %v2479
    %3007 = vmatpush1.bf16.msra.mxu0 %v2478
    %3008 = vmatprep.subr.bf16.mxu0 %v2495
    %3009 = vmatpush1.bf16.msra.mxu0 %v2494
    %3010 = vmatprep.subr.bf16.mxu0 %v2511
    %3011 = vmatpush1.bf16.msra.mxu0 %v2510
    %3012 = vmatprep.subr.bf16.mxu0 %v2527
    %3013 = vmatpush1.bf16.msra.mxu0 %v2526
    %3014 = vmatprep.subr.bf16.mxu0 %v2543
    %3015 = vmatpush1.bf16.msra.mxu0 %v2542
    %3016 = vmatprep.subr.bf16.mxu0 %v2559
    %3017 = vmatpush1.bf16.msra.mxu0 %v2558
    %3018 = vmatprep.mubr.bf16.mxu0 %v1541
    %3019 = vmatmul.mubr.bf16.gmra.mrb[0].mxu0 %v1540
    %v3020 = vpop.f32.mrb[0].mxu0
    %v3021 = vadd.f32 0.0, %v3020
    %v3022 = vpop.f32.mrb[0].mxu0
    %v3023 = vadd.f32 0.0, %v3022
    %v3024 = vpop.f32.mrb[0].mxu0
    %v3025 = vpop.f32.mrb[0].mxu0
    %3026 = vdwg.mxu0
    %3027 = vmatprep.subr.bf16.mxu0 %v2321
    %3028 = vmatpush1.bf16.msra.mxu0 %v2320
    %3029 = vmatprep.subr.bf16.mxu0 %v2337
    %3030 = vmatpush1.bf16.msra.mxu0 %v2336
    %3031 = vmatprep.subr.bf16.mxu0 %v2353
    %3032 = vmatpush1.bf16.msra.mxu0 %v2352
    %3033 = vmatprep.subr.bf16.mxu0 %v2369
    %3034 = vmatpush1.bf16.msra.mxu0 %v2368
    %3035 = vmatprep.subr.bf16.mxu0 %v2385
    %3036 = vmatpush1.bf16.msra.mxu0 %v2384
    %3037 = vmatprep.subr.bf16.mxu0 %v2401
    %3038 = vmatpush1.bf16.msra.mxu0 %v2400
    %3039 = vmatprep.subr.bf16.mxu0 %v2417
    %3040 = vmatpush1.bf16.msra.mxu0 %v2416
    %3041 = vmatprep.subr.bf16.mxu0 %v2433
    %3042 = vmatpush1.bf16.msra.mxu0 %v2432
    %3043 = vmatprep.subr.bf16.mxu0 %v2449
    %3044 = vmatpush1.bf16.msra.mxu0 %v2448
    %3045 = vmatprep.subr.bf16.mxu0 %v2465
    %3046 = vmatpush1.bf16.msra.mxu0 %v2464
    %3047 = vmatprep.subr.bf16.mxu0 %v2481
    %3048 = vmatpush1.bf16.msra.mxu0 %v2480
    %3049 = vmatprep.subr.bf16.mxu0 %v2497
    %3050 = vmatpush1.bf16.msra.mxu0 %v2496
    %3051 = vmatprep.subr.bf16.mxu0 %v2513
    %3052 = vmatpush1.bf16.msra.mxu0 %v2512
    %3053 = vmatprep.subr.bf16.mxu0 %v2529
    %3054 = vmatpush1.bf16.msra.mxu0 %v2528
    %3055 = vmatprep.subr.bf16.mxu0 %v2545
    %3056 = vmatpush1.bf16.msra.mxu0 %v2544
    %3057 = vmatprep.subr.bf16.mxu0 %v2561
    %3058 = vmatpush1.bf16.msra.mxu0 %v2560
    %3059 = vmatprep.mubr.bf16.mxu0 %v1541
    %3060 = vmatmul.mubr.bf16.gmra.mrb[0].mxu0 %v1540
    %v3061 = vpop.f32.mrb[0].mxu0
    %v3062 = vadd.f32 0.0, %v3061
    %v3063 = vpop.f32.mrb[0].mxu0
    %v3064 = vadd.f32 0.0, %v3063
    %v3065 = vpop.f32.mrb[0].mxu0
    %v3066 = vpop.f32.mrb[0].mxu0
    %3067 = vdwg.mxu0
    %3068 = vmatprep.subr.bf16.mxu0 %v2323
    %3069 = vmatpush1.bf16.msra.mxu0 %v2322
    %3070 = vmatprep.subr.bf16.mxu0 %v2339
    %3071 = vmatpush1.bf16.msra.mxu0 %v2338
    %3072 = vmatprep.subr.bf16.mxu0 %v2355
    %3073 = vmatpush1.bf16.msra.mxu0 %v2354
    %3074 = vmatprep.subr.bf16.mxu0 %v2371
    %3075 = vmatpush1.bf16.msra.mxu0 %v2370
    %3076 = vmatprep.subr.bf16.mxu0 %v2387
    %3077 = vmatpush1.bf16.msra.mxu0 %v2386
    %3078 = vmatprep.subr.bf16.mxu0 %v2403
    %3079 = vmatpush1.bf16.msra.mxu0 %v2402
    %3080 = vmatprep.subr.bf16.mxu0 %v2419
    %3081 = vmatpush1.bf16.msra.mxu0 %v2418
    %3082 = vmatprep.subr.bf16.mxu0 %v2435
    %3083 = vmatpush1.bf16.msra.mxu0 %v2434
    %3084 = vmatprep.subr.bf16.mxu0 %v2451
    %3085 = vmatpush1.bf16.msra.mxu0 %v2450
    %3086 = vmatprep.subr.bf16.mxu0 %v2467
    %3087 = vmatpush1.bf16.msra.mxu0 %v2466
    %3088 = vmatprep.subr.bf16.mxu0 %v2483
    %3089 = vmatpush1.bf16.msra.mxu0 %v2482
    %3090 = vmatprep.subr.bf16.mxu0 %v2499
    %3091 = vmatpush1.bf16.msra.mxu0 %v2498
    %3092 = vmatprep.subr.bf16.mxu0 %v2515
    %3093 = vmatpush1.bf16.msra.mxu0 %v2514
    %3094 = vmatprep.subr.bf16.mxu0 %v2531
    %3095 = vmatpush1.bf16.msra.mxu0 %v2530
    %3096 = vmatprep.subr.bf16.mxu0 %v2547
    %3097 = vmatpush1.bf16.msra.mxu0 %v2546
    %3098 = vmatprep.subr.bf16.mxu0 %v2563
    %3099 = vmatpush1.bf16.msra.mxu0 %v2562
    %3100 = vmatprep.mubr.bf16.mxu0 %v1541
    %3101 = vmatmul.mubr.bf16.gmra.mrb[0].mxu0 %v1540
    %v3102 = vpop.f32.mrb[0].mxu0
    %v3103 = vadd.f32 0.0, %v3102
    %v3104 = vpop.f32.mrb[0].mxu0
    %v3105 = vadd.f32 0.0, %v3104
    %v3106 = vpop.f32.mrb[0].mxu0
    %v3107 = vpop.f32.mrb[0].mxu0
    %3108 = vdwg.mxu0
    %3109 = vmatprep.subr.bf16.mxu0 %v2325
    %3110 = vmatpush1.bf16.msra.mxu0 %v2324
    %3111 = vmatprep.subr.bf16.mxu0 %v2341
    %3112 = vmatpush1.bf16.msra.mxu0 %v2340
    %3113 = vmatprep.subr.bf16.mxu0 %v2357
    %3114 = vmatpush1.bf16.msra.mxu0 %v2356
    %3115 = vmatprep.subr.bf16.mxu0 %v2373
    %3116 = vmatpush1.bf16.msra.mxu0 %v2372
    %3117 = vmatprep.subr.bf16.mxu0 %v2389
    %3118 = vmatpush1.bf16.msra.mxu0 %v2388
    %3119 = vmatprep.subr.bf16.mxu0 %v2405
    %3120 = vmatpush1.bf16.msra.mxu0 %v2404
    %3121 = vmatprep.subr.bf16.mxu0 %v2421
    %3122 = vmatpush1.bf16.msra.mxu0 %v2420
    %3123 = vmatprep.subr.bf16.mxu0 %v2437
    %3124 = vmatpush1.bf16.msra.mxu0 %v2436
    %3125 = vmatprep.subr.bf16.mxu0 %v2453
    %3126 = vmatpush1.bf16.msra.mxu0 %v2452
    %3127 = vmatprep.subr.bf16.mxu0 %v2469
    %3128 = vmatpush1.bf16.msra.mxu0 %v2468
    %3129 = vmatprep.subr.bf16.mxu0 %v2485
    %3130 = vmatpush1.bf16.msra.mxu0 %v2484
    %3131 = vmatprep.subr.bf16.mxu0 %v2501
    %3132 = vmatpush1.bf16.msra.mxu0 %v2500
    %3133 = vmatprep.subr.bf16.mxu0 %v2517
    %3134 = vmatpush1.bf16.msra.mxu0 %v2516
    %3135 = vmatprep.subr.bf16.mxu0 %v2533
    %3136 = vmatpush1.bf16.msra.mxu0 %v2532
    %3137 = vmatprep.subr.bf16.mxu0 %v2549
    %3138 = vmatpush1.bf16.msra.mxu0 %v2548
    %3139 = vmatprep.subr.bf16.mxu0 %v2565
    %3140 = vmatpush1.bf16.msra.mxu0 %v2564
    %3141 = vmatprep.mubr.bf16.mxu0 %v1541
    %3142 = vmatmul.mubr.bf16.gmra.mrb[0].mxu0 %v1540
    %v3143 = vpop.f32.mrb[0].mxu0
    %v3144 = vadd.f32 0.0, %v3143
    %v3145 = vpop.f32.mrb[0].mxu0
    %v3146 = vadd.f32 0.0, %v3145
    %v3147 = vpop.f32.mrb[0].mxu0
    %v3148 = vpop.f32.mrb[0].mxu0
    %3149 = vdwg.mxu0
    %v3150 = vstv %s160
    %v3151 = vmul.f32 %v691, %v3150
    %v3152 = vmul.f32 %v692, %v3150
    %v3153 = vstv %s161
    %v3154 = vmul.f32 %v702, %v3153
    %v3155 = vmul.f32 %v703, %v3153
    %v3156 = vadd.f32 %v3151, %v3154
    %v3157 = vadd.f32 %v3152, %v3155
    %v3158 = vstv %s162
    %v3159 = vmul.f32 %v713, %v3158
    %v3160 = vmul.f32 %v714, %v3158
    %v3161 = vadd.f32 %v3156, %v3159
    %v3162 = vadd.f32 %v3157, %v3160
    %v3163 = vstv %s163
    %v3164 = vmul.f32 %v724, %v3163
    %v3165 = vmul.f32 %v725, %v3163
    %v3166 = vadd.f32 %v3161, %v3164
    %v3167 = vadd.f32 %v3162, %v3165
    %v3168 = vstv %s176
    %v3169 = vadd.f32 %v3166, %v3168
    %v3170 = vadd.f32 %v3167, %v3168
    %v3171 = vstv %s164
    %v3172 = vmul.f32 %v691, %v3171
    %v3173 = vmul.f32 %v692, %v3171
    %v3174 = vstv %s165
    %v3175 = vmul.f32 %v702, %v3174
    %v3176 = vmul.f32 %v703, %v3174
    %v3177 = vadd.f32 %v3172, %v3175
    %v3178 = vadd.f32 %v3173, %v3176
    %v3179 = vstv %s166
    %v3180 = vmul.f32 %v713, %v3179
    %v3181 = vmul.f32 %v714, %v3179
    %v3182 = vadd.f32 %v3177, %v3180
    %v3183 = vadd.f32 %v3178, %v3181
    %v3184 = vstv %s167
    %v3185 = vmul.f32 %v724, %v3184
    %v3186 = vmul.f32 %v725, %v3184
    %v3187 = vadd.f32 %v3182, %v3185
    %v3188 = vadd.f32 %v3183, %v3186
    %v3189 = vstv %s177
    %v3190 = vadd.f32 %v3187, %v3189
    %v3191 = vadd.f32 %v3188, %v3189
    %v3192 = vstv %s168
    %v3193 = vmul.f32 %v691, %v3192
    %v3194 = vmul.f32 %v692, %v3192
    %v3195 = vstv %s169
    %v3196 = vmul.f32 %v702, %v3195
    %v3197 = vmul.f32 %v703, %v3195
    %v3198 = vadd.f32 %v3193, %v3196
    %v3199 = vadd.f32 %v3194, %v3197
    %v3200 = vstv %s170
    %v3201 = vmul.f32 %v713, %v3200
    %v3202 = vmul.f32 %v714, %v3200
    %v3203 = vadd.f32 %v3198, %v3201
    %v3204 = vadd.f32 %v3199, %v3202
    %v3205 = vstv %s171
    %v3206 = vmul.f32 %v724, %v3205
    %v3207 = vmul.f32 %v725, %v3205
    %v3208 = vadd.f32 %v3203, %v3206
    %v3209 = vadd.f32 %v3204, %v3207
    %v3210 = vstv %s178
    %v3211 = vadd.f32 %v3208, %v3210
    %v3212 = vadd.f32 %v3209, %v3210
    %v3213 = vstv %s172
    %v3214 = vmul.f32 %v691, %v3213
    %v3215 = vmul.f32 %v692, %v3213
    %v3216 = vstv %s173
    %v3217 = vmul.f32 %v702, %v3216
    %v3218 = vmul.f32 %v703, %v3216
    %v3219 = vadd.f32 %v3214, %v3217
    %v3220 = vadd.f32 %v3215, %v3218
    %v3221 = vstv %s174
    %v3222 = vmul.f32 %v713, %v3221
    %v3223 = vmul.f32 %v714, %v3221
    %v3224 = vadd.f32 %v3219, %v3222
    %v3225 = vadd.f32 %v3220, %v3223
    %v3226 = vstv %s175
    %v3227 = vmul.f32 %v724, %v3226
    %v3228 = vmul.f32 %v725, %v3226
    %v3229 = vadd.f32 %v3224, %v3227
    %v3230 = vadd.f32 %v3225, %v3228
    %v3231 = vstv %s179
    %v3232 = vadd.f32 %v3229, %v3231
    %v3233 = vadd.f32 %v3230, %v3231
    %v3234 = vadd.f32 %v2857, %v3169
    %v3235 = vadd.f32 %v2859, %v3170
    %v3236 = vadd.f32 %v2898, %v3190
    %v3237 = vadd.f32 %v2900, %v3191
    %v3238 = vadd.f32 %v2939, %v3211
    %v3239 = vadd.f32 %v2941, %v3212
    %v3240 = vadd.f32 %v2980, %v3232
    %v3241 = vadd.f32 %v2982, %v3233
    %vm3242 = vcmp.ge.f32.partialorder %v3234, 0.0
    %vm3243 = vcmp.ge.f32.partialorder %v3235, 0.0
    %vm3244 = vcmp.ge.f32.partialorder %v3236, 0.0
    %vm3245 = vcmp.ge.f32.partialorder %v3237, 0.0
    %vm3246 = vcmp.ge.f32.partialorder %v3238, 0.0
    %vm3247 = vcmp.ge.f32.partialorder %v3239, 0.0
    %vm3248 = vcmp.ge.f32.partialorder %v3240, 0.0
    %vm3249 = vcmp.ge.f32.partialorder %v3241, 0.0
    %v3250 = vmul.f32 %v3234, 0.25
    %v3251 = vmul.f32 %v3235, 0.25
    %v3252 = vmul.f32 %v3236, 0.25
    %v3253 = vmul.f32 %v3237, 0.25
    %v3254 = vmul.f32 %v3238, 0.25
    %v3255 = vmul.f32 %v3239, 0.25
    %v3256 = vmul.f32 %v3240, 0.25
    %v3257 = vmul.f32 %v3241, 0.25
    %v3258 = vsel %vm3242, %v3234, %v3250
    %v3259 = vsel %vm3243, %v3235, %v3251
    %v3260 = vsel %vm3244, %v3236, %v3252
    %v3261 = vsel %vm3245, %v3237, %v3253
    %v3262 = vsel %vm3246, %v3238, %v3254
    %v3263 = vsel %vm3247, %v3239, %v3255
    %v3264 = vsel %vm3248, %v3240, %v3256
    %v3265 = vsel %vm3249, %v3241, %v3257
    %v3266 = vstv %s180
    %v3267 = vmul.f32 %v691, %v3266
    %v3268 = vmul.f32 %v692, %v3266
    %v3269 = vstv %s181
    %v3270 = vmul.f32 %v702, %v3269
    %v3271 = vmul.f32 %v703, %v3269
    %v3272 = vadd.f32 %v3267, %v3270
    %v3273 = vadd.f32 %v3268, %v3271
    %v3274 = vstv %s182
    %v3275 = vmul.f32 %v713, %v3274
    %v3276 = vmul.f32 %v714, %v3274
    %v3277 = vadd.f32 %v3272, %v3275
    %v3278 = vadd.f32 %v3273, %v3276
    %v3279 = vstv %s183
    %v3280 = vmul.f32 %v724, %v3279
    %v3281 = vmul.f32 %v725, %v3279
    %v3282 = vadd.f32 %v3277, %v3280
    %v3283 = vadd.f32 %v3278, %v3281
    %v3284 = vstv %s196
    %v3285 = vadd.f32 %v3282, %v3284
    %v3286 = vadd.f32 %v3283, %v3284
    %v3287 = vstv %s184
    %v3288 = vmul.f32 %v691, %v3287
    %v3289 = vmul.f32 %v692, %v3287
    %v3290 = vstv %s185
    %v3291 = vmul.f32 %v702, %v3290
    %v3292 = vmul.f32 %v703, %v3290
    %v3293 = vadd.f32 %v3288, %v3291
    %v3294 = vadd.f32 %v3289, %v3292
    %v3295 = vstv %s186
    %v3296 = vmul.f32 %v713, %v3295
    %v3297 = vmul.f32 %v714, %v3295
    %v3298 = vadd.f32 %v3293, %v3296
    %v3299 = vadd.f32 %v3294, %v3297
    %v3300 = vstv %s187
    %v3301 = vmul.f32 %v724, %v3300
    %v3302 = vmul.f32 %v725, %v3300
    %v3303 = vadd.f32 %v3298, %v3301
    %v3304 = vadd.f32 %v3299, %v3302
    %v3305 = vstv %s197
    %v3306 = vadd.f32 %v3303, %v3305
    %v3307 = vadd.f32 %v3304, %v3305
    %v3308 = vstv %s188
    %v3309 = vmul.f32 %v691, %v3308
    %v3310 = vmul.f32 %v692, %v3308
    %v3311 = vstv %s189
    %v3312 = vmul.f32 %v702, %v3311
    %v3313 = vmul.f32 %v703, %v3311
    %v3314 = vadd.f32 %v3309, %v3312
    %v3315 = vadd.f32 %v3310, %v3313
    %v3316 = vstv %s190
    %v3317 = vmul.f32 %v713, %v3316
    %v3318 = vmul.f32 %v714, %v3316
    %v3319 = vadd.f32 %v3314, %v3317
    %v3320 = vadd.f32 %v3315, %v3318
    %v3321 = vstv %s191
    %v3322 = vmul.f32 %v724, %v3321
    %v3323 = vmul.f32 %v725, %v3321
    %v3324 = vadd.f32 %v3319, %v3322
    %v3325 = vadd.f32 %v3320, %v3323
    %v3326 = vstv %s198
    %v3327 = vadd.f32 %v3324, %v3326
    %v3328 = vadd.f32 %v3325, %v3326
    %v3329 = vstv %s192
    %v3330 = vmul.f32 %v691, %v3329
    %v3331 = vmul.f32 %v692, %v3329
    %v3332 = vstv %s193
    %v3333 = vmul.f32 %v702, %v3332
    %v3334 = vmul.f32 %v703, %v3332
    %v3335 = vadd.f32 %v3330, %v3333
    %v3336 = vadd.f32 %v3331, %v3334
    %v3337 = vstv %s194
    %v3338 = vmul.f32 %v713, %v3337
    %v3339 = vmul.f32 %v714, %v3337
    %v3340 = vadd.f32 %v3335, %v3338
    %v3341 = vadd.f32 %v3336, %v3339
    %v3342 = vstv %s195
    %v3343 = vmul.f32 %v724, %v3342
    %v3344 = vmul.f32 %v725, %v3342
    %v3345 = vadd.f32 %v3340, %v3343
    %v3346 = vadd.f32 %v3341, %v3344
    %v3347 = vstv %s199
    %v3348 = vadd.f32 %v3345, %v3347
    %v3349 = vadd.f32 %v3346, %v3347
    %v3350 = vadd.f32 %v3021, %v3285
    %v3351 = vadd.f32 %v3023, %v3286
    %v3352 = vadd.f32 %v3062, %v3306
    %v3353 = vadd.f32 %v3064, %v3307
    %v3354 = vadd.f32 %v3103, %v3327
    %v3355 = vadd.f32 %v3105, %v3328
    %v3356 = vadd.f32 %v3144, %v3348
    %v3357 = vadd.f32 %v3146, %v3349
    %vm3358 = vcmp.ge.f32.partialorder %v3350, 0.0
    %vm3359 = vcmp.ge.f32.partialorder %v3351, 0.0
    %vm3360 = vcmp.ge.f32.partialorder %v3352, 0.0
    %vm3361 = vcmp.ge.f32.partialorder %v3353, 0.0
    %vm3362 = vcmp.ge.f32.partialorder %v3354, 0.0
    %vm3363 = vcmp.ge.f32.partialorder %v3355, 0.0
    %vm3364 = vcmp.ge.f32.partialorder %v3356, 0.0
    %vm3365 = vcmp.ge.f32.partialorder %v3357, 0.0
    %v3366 = vmul.f32 %v3350, 0.25
    %v3367 = vmul.f32 %v3351, 0.25
    %v3368 = vmul.f32 %v3352, 0.25
    %v3369 = vmul.f32 %v3353, 0.25
    %v3370 = vmul.f32 %v3354, 0.25
    %v3371 = vmul.f32 %v3355, 0.25
    %v3372 = vmul.f32 %v3356, 0.25
    %v3373 = vmul.f32 %v3357, 0.25
    %v3374 = vsel %vm3358, %v3350, %v3366
    %v3375 = vsel %vm3359, %v3351, %v3367
    %v3376 = vsel %vm3360, %v3352, %v3368
    %v3377 = vsel %vm3361, %v3353, %v3369
    %v3378 = vsel %vm3362, %v3354, %v3370
    %v3379 = vsel %vm3363, %v3355, %v3371
    %v3380 = vsel %vm3364, %v3356, %v3372
    %v3381 = vsel %vm3365, %v3357, %v3373
    %v3382 = vadd.f32 %v3258, %v3374
    %v3383 = vadd.f32 %v3259, %v3375
    %v3384 = vadd.f32 %v3260, %v3376
    %v3385 = vadd.f32 %v3261, %v3377
    %v3386 = vadd.f32 %v3262, %v3378
    %v3387 = vadd.f32 %v3263, %v3379
    %v3388 = vadd.f32 %v3264, %v3380
    %v3389 = vadd.f32 %v3265, %v3381
    %v3390 = vadd.f32 %v3382, %v691
    %v3391 = vadd.f32 %v3383, %v692
    %v3392 = vadd.f32 %v3384, %v702
    %v3393 = vadd.f32 %v3385, %v703
    %v3394 = vadd.f32 %v3386, %v713
    %v3395 = vadd.f32 %v3387, %v714
    %v3396 = vadd.f32 %v3388, %v724
    %v3397 = vadd.f32 %v3389, %v725
    %v3398 = vstv %s220
    %v3399 = vmul.f32 %v3390, %v3398
    %v3400 = vmul.f32 %v3391, %v3398
    %v3401 = vstv %s221
    %v3402 = vmul.f32 %v3392, %v3401
    %v3403 = vmul.f32 %v3393, %v3401
    %v3404 = vadd.f32 %v3399, %v3402
    %v3405 = vadd.f32 %v3400, %v3403
    %v3406 = vstv %s222
    %v3407 = vmul.f32 %v3394, %v3406
    %v3408 = vmul.f32 %v3395, %v3406
    %v3409 = vadd.f32 %v3404, %v3407
    %v3410 = vadd.f32 %v3405, %v3408
    %v3411 = vstv %s223
    %v3412 = vmul.f32 %v3396, %v3411
    %v3413 = vmul.f32 %v3397, %v3411
    %v3414 = vadd.f32 %v3409, %v3412
    %v3415 = vadd.f32 %v3410, %v3413
    %v3416 = vstv %s236
    %v3417 = vadd.f32 %v3414, %v3416
    %v3418 = vadd.f32 %v3415, %v3416
    %v3419 = vstv %s224
    %v3420 = vmul.f32 %v3390, %v3419
    %v3421 = vmul.f32 %v3391, %v3419
    %v3422 = vstv %s225
    %v3423 = vmul.f32 %v3392, %v3422
    %v3424 = vmul.f32 %v3393, %v3422
    %v3425 = vadd.f32 %v3420, %v3423
    %v3426 = vadd.f32 %v3421, %v3424
    %v3427 = vstv %s226
    %v3428 = vmul.f32 %v3394, %v3427
    %v3429 = vmul.f32 %v3395, %v3427
    %v3430 = vadd.f32 %v3425, %v3428
    %v3431 = vadd.f32 %v3426, %v3429
    %v3432 = vstv %s227
    %v3433 = vmul.f32 %v3396, %v3432
    %v3434 = vmul.f32 %v3397, %v3432
    %v3435 = vadd.f32 %v3430, %v3433
    %v3436 = vadd.f32 %v3431, %v3434
    %v3437 = vstv %s237
    %v3438 = vadd.f32 %v3435, %v3437
    %v3439 = vadd.f32 %v3436, %v3437
    %v3440 = vstv %s228
    %v3441 = vmul.f32 %v3390, %v3440
    %v3442 = vmul.f32 %v3391, %v3440
    %v3443 = vstv %s229
    %v3444 = vmul.f32 %v3392, %v3443
    %v3445 = vmul.f32 %v3393, %v3443
    %v3446 = vadd.f32 %v3441, %v3444
    %v3447 = vadd.f32 %v3442, %v3445
    %v3448 = vstv %s230
    %v3449 = vmul.f32 %v3394, %v3448
    %v3450 = vmul.f32 %v3395, %v3448
    %v3451 = vadd.f32 %v3446, %v3449
    %v3452 = vadd.f32 %v3447, %v3450
    %v3453 = vstv %s231
    %v3454 = vmul.f32 %v3396, %v3453
    %v3455 = vmul.f32 %v3397, %v3453
    %v3456 = vadd.f32 %v3451, %v3454
    %v3457 = vadd.f32 %v3452, %v3455
    %v3458 = vstv %s238
    %v3459 = vadd.f32 %v3456, %v3458
    %v3460 = vadd.f32 %v3457, %v3458
    %v3461 = vstv %s232
    %v3462 = vmul.f32 %v3390, %v3461
    %v3463 = vmul.f32 %v3391, %v3461
    %v3464 = vstv %s233
    %v3465 = vmul.f32 %v3392, %v3464
    %v3466 = vmul.f32 %v3393, %v3464
    %v3467 = vadd.f32 %v3462, %v3465
    %v3468 = vadd.f32 %v3463, %v3466
    %v3469 = vstv %s234
    %v3470 = vmul.f32 %v3394, %v3469
    %v3471 = vmul.f32 %v3395, %v3469
    %v3472 = vadd.f32 %v3467, %v3470
    %v3473 = vadd.f32 %v3468, %v3471
    %v3474 = vstv %s235
    %v3475 = vmul.f32 %v3396, %v3474
    %v3476 = vmul.f32 %v3397, %v3474
    %v3477 = vadd.f32 %v3472, %v3475
    %v3478 = vadd.f32 %v3473, %v3476
    %v3479 = vstv %s239
    %v3480 = vadd.f32 %v3477, %v3479
    %v3481 = vadd.f32 %v3478, %v3479
    %v3482 = vadd.f32 %v3417, %v691
    %v3483 = vadd.f32 %v3418, %v692
    %v3484 = vadd.f32 %v3438, %v702
    %v3485 = vadd.f32 %v3439, %v703
    %v3486 = vadd.f32 %v3459, %v713
    %v3487 = vadd.f32 %v3460, %v714
    %v3488 = vadd.f32 %v3480, %v724
    %v3489 = vadd.f32 %v3481, %v725
    %v3490 = vpack.c.bf16 %v3482, %v3482
    %v3491 = vpack.c.bf16 %v3483, %v3483
    %v3492 = vpack.c.bf16 %v3484, %v3484
    %v3493 = vpack.c.bf16 %v3485, %v3485
    %v3494 = vpack.c.bf16 %v3486, %v3486
    %v3495 = vpack.c.bf16 %v3487, %v3487
    %v3496 = vpack.c.bf16 %v3488, %v3488
    %v3497 = vpack.c.bf16 %v3489, %v3489
    %3498 = vmatprep.subr.bf16.mxu0 %v1121
    %3499 = vmatpush1.bf16.msra.mxu0 %v1120
    %3500 = vmatprep.subr.bf16.mxu0 %v1123
    %3501 = vmatpush1.bf16.msra.mxu0 %v1122
    %3502 = vmatprep.subr.bf16.mxu0 %v1125
    %3503 = vmatpush1.bf16.msra.mxu0 %v1124
    %3504 = vmatprep.subr.bf16.mxu0 %v1127
    %3505 = vmatpush1.bf16.msra.mxu0 %v1126
    %3506 = vmatprep.subr.bf16.mxu0 %v1129
    %3507 = vmatpush1.bf16.msra.mxu0 %v1128
    %3508 = vmatprep.subr.bf16.mxu0 %v1131
    %3509 = vmatpush1.bf16.msra.mxu0 %v1130
    %3510 = vmatprep.subr.bf16.mxu0 %v1133
    %3511 = vmatpush1.bf16.msra.mxu0 %v1132
    %3512 = vmatprep.subr.bf16.mxu0 %v1135
    %3513 = vmatpush1.bf16.msra.mxu0 %v1134
    %3514 = vmatprep.subr.bf16.mxu0 %v1137
    %3515 = vmatpush1.bf16.msra.mxu0 %v1136
    %3516 = vmatprep.subr.bf16.mxu0 %v1139
    %3517 = vmatpush1.bf16.msra.mxu0 %v1138
    %3518 = vmatprep.subr.bf16.mxu0 %v1141
    %3519 = vmatpush1.bf16.msra.mxu0 %v1140
    %3520 = vmatprep.subr.bf16.mxu0 %v1143
    %3521 = vmatpush1.bf16.msra.mxu0 %v1142
    %3522 = vmatprep.subr.bf16.mxu0 %v1145
    %3523 = vmatpush1.bf16.msra.mxu0 %v1144
    %3524 = vmatprep.subr.bf16.mxu0 %v1147
    %3525 = vmatpush1.bf16.msra.mxu0 %v1146
    %3526 = vmatprep.subr.bf16.mxu0 %v1149
    %3527 = vmatpush1.bf16.msra.mxu0 %v1148
    %3528 = vmatprep.subr.bf16.mxu0 %v1151
    %3529 = vmatpush1.bf16.msra.mxu0 %v1150
    %3530 = vmatprep.mubr.bf16.mxu0 %v3491
    %3531 = vmatmul.mubr.bf16.gmra.mrb[0].mxu0 %v3490
    %v3532 = vpop.f32.mrb[0].mxu0
    %v3533 = vadd.f32 0.0, %v3532
    %v3534 = vpop.f32.mrb[0].mxu0
    %v3535 = vadd.f32 0.0, %v3534
    %v3536 = vpop.f32.mrb[0].mxu0
    %v3537 = vpop.f32.mrb[0].mxu0
    %3538 = vdwg.mxu0
    %3539 = vmatprep.subr.bf16.mxu0 %v1153
    %3540 = vmatpush1.bf16.msra.mxu0 %v1152
    %3541 = vmatprep.subr.bf16.mxu0 %v1155
    %3542 = vmatpush1.bf16.msra.mxu0 %v1154
    %3543 = vmatprep.subr.bf16.mxu0 %v1157
    %3544 = vmatpush1.bf16.msra.mxu0 %v1156
    %3545 = vmatprep.subr.bf16.mxu0 %v1159
    %3546 = vmatpush1.bf16.msra.mxu0 %v1158
    %3547 = vmatprep.subr.bf16.mxu0 %v1161
    %3548 = vmatpush1.bf16.msra.mxu0 %v1160
    %3549 = vmatprep.subr.bf16.mxu0 %v1163
    %3550 = vmatpush1.bf16.msra.mxu0 %v1162
    %3551 = vmatprep.subr.bf16.mxu0 %v1165
    %3552 = vmatpush1.bf16.msra.mxu0 %v1164
    %3553 = vmatprep.subr.bf16.mxu0 %v1167
    %3554 = vmatpush1.bf16.msra.mxu0 %v1166
    %3555 = vmatprep.subr.bf16.mxu0 %v1169
    %3556 = vmatpush1.bf16.msra.mxu0 %v1168
    %3557 = vmatprep.subr.bf16.mxu0 %v1171
    %3558 = vmatpush1.bf16.msra.mxu0 %v1170
    %3559 = vmatprep.subr.bf16.mxu0 %v1173
    %3560 = vmatpush1.bf16.msra.mxu0 %v1172
    %3561 = vmatprep.subr.bf16.mxu0 %v1175
    %3562 = vmatpush1.bf16.msra.mxu0 %v1174
    %3563 = vmatprep.subr.bf16.mxu0 %v1177
    %3564 = vmatpush1.bf16.msra.mxu0 %v1176
    %3565 = vmatprep.subr.bf16.mxu0 %v1179
    %3566 = vmatpush1.bf16.msra.mxu0 %v1178
    %3567 = vmatprep.subr.bf16.mxu0 %v1181
    %3568 = vmatpush1.bf16.msra.mxu0 %v1180
    %3569 = vmatprep.subr.bf16.mxu0 %v1183
    %3570 = vmatpush1.bf16.msra.mxu0 %v1182
    %3571 = vmatprep.mubr.bf16.mxu0 %v3493
    %3572 = vmatmul.mubr.bf16.gmra.mrb[0].mxu0 %v3492
    %v3573 = vpop.f32.mrb[0].mxu0
    %v3574 = vadd.f32 %v3533, %v3573
    %v3575 = vpop.f32.mrb[0].mxu0
    %v3576 = vadd.f32 %v3535, %v3575
    %v3577 = vpop.f32.mrb[0].mxu0
    %v3578 = vpop.f32.mrb[0].mxu0
    %3579 = vdwg.mxu0
    %3580 = vmatprep.subr.bf16.mxu0 %v1185
    %3581 = vmatpush1.bf16.msra.mxu0 %v1184
    %3582 = vmatprep.subr.bf16.mxu0 %v1187
    %3583 = vmatpush1.bf16.msra.mxu0 %v1186
    %3584 = vmatprep.subr.bf16.mxu0 %v1189
    %3585 = vmatpush1.bf16.msra.mxu0 %v1188
    %3586 = vmatprep.subr.bf16.mxu0 %v1191
    %3587 = vmatpush1.bf16.msra.mxu0 %v1190
    %3588 = vmatprep.subr.bf16.mxu0 %v1193
    %3589 = vmatpush1.bf16.msra.mxu0 %v1192
    %3590 = vmatprep.subr.bf16.mxu0 %v1195
    %3591 = vmatpush1.bf16.msra.mxu0 %v1194
    %3592 = vmatprep.subr.bf16.mxu0 %v1197
    %3593 = vmatpush1.bf16.msra.mxu0 %v1196
    %3594 = vmatprep.subr.bf16.mxu0 %v1199
    %3595 = vmatpush1.bf16.msra.mxu0 %v1198
    %3596 = vmatprep.subr.bf16.mxu0 %v1201
    %3597 = vmatpush1.bf16.msra.mxu0 %v1200
    %3598 = vmatprep.subr.bf16.mxu0 %v1203
    %3599 = vmatpush1.bf16.msra.mxu0 %v1202
    %3600 = vmatprep.subr.bf16.mxu0 %v1205
    %3601 = vmatpush1.bf16.msra.mxu0 %v1204
    %3602 = vmatprep.subr.bf16.mxu0 %v1207
    %3603 = vmatpush1.bf16.msra.mxu0 %v1206
    %3604 = vmatprep.subr.bf16.mxu0 %v1209
    %3605 = vmatpush1.bf16.msra.mxu0 %v1208
    %3606 = vmatprep.subr.bf16.mxu0 %v1211
    %3607 = vmatpush1.bf16.msra.mxu0 %v1210
    %3608 = vmatprep.subr.bf16.mxu0 %v1213
    %3609 = vmatpush1.bf16.msra.mxu0 %v1212
    %3610 = vmatprep.subr.bf16.mxu0 %v1215
    %3611 = vmatpush1.bf16.msra.mxu0 %v1214
    %3612 = vmatprep.mubr.bf16.mxu0 %v3495
    %3613 = vmatmul.mubr.bf16.gmra.mrb[0].mxu0 %v3494
    %v3614 = vpop.f32.mrb[0].mxu0
    %v3615 = vadd.f32 %v3574, %v3614
    %v3616 = vpop.f32.mrb[0].mxu0
    %v3617 = vadd.f32 %v3576, %v3616
    %v3618 = vpop.f32.mrb[0].mxu0
    %v3619 = vpop.f32.mrb[0].mxu0
    %3620 = vdwg.mxu0
    %3621 = vmatprep.subr.bf16.mxu0 %v1217
    %3622 = vmatpush1.bf16.msra.mxu0 %v1216
    %3623 = vmatprep.subr.bf16.mxu0 %v1219
    %3624 = vmatpush1.bf16.msra.mxu0 %v1218
    %3625 = vmatprep.subr.bf16.mxu0 %v1221
    %3626 = vmatpush1.bf16.msra.mxu0 %v1220
    %3627 = vmatprep.subr.bf16.mxu0 %v1223
    %3628 = vmatpush1.bf16.msra.mxu0 %v1222
    %3629 = vmatprep.subr.bf16.mxu0 %v1225
    %3630 = vmatpush1.bf16.msra.mxu0 %v1224
    %3631 = vmatprep.subr.bf16.mxu0 %v1227
    %3632 = vmatpush1.bf16.msra.mxu0 %v1226
    %3633 = vmatprep.subr.bf16.mxu0 %v1229
    %3634 = vmatpush1.bf16.msra.mxu0 %v1228
    %3635 = vmatprep.subr.bf16.mxu0 %v1231
    %3636 = vmatpush1.bf16.msra.mxu0 %v1230
    %3637 = vmatprep.subr.bf16.mxu0 %v1233
    %3638 = vmatpush1.bf16.msra.mxu0 %v1232
    %3639 = vmatprep.subr.bf16.mxu0 %v1235
    %3640 = vmatpush1.bf16.msra.mxu0 %v1234
    %3641 = vmatprep.subr.bf16.mxu0 %v1237
    %3642 = vmatpush1.bf16.msra.mxu0 %v1236
    %3643 = vmatprep.subr.bf16.mxu0 %v1239
    %3644 = vmatpush1.bf16.msra.mxu0 %v1238
    %3645 = vmatprep.subr.bf16.mxu0 %v1241
    %3646 = vmatpush1.bf16.msra.mxu0 %v1240
    %3647 = vmatprep.subr.bf16.mxu0 %v1243
    %3648 = vmatpush1.bf16.msra.mxu0 %v1242
    %3649 = vmatprep.subr.bf16.mxu0 %v1245
    %3650 = vmatpush1.bf16.msra.mxu0 %v1244
    %3651 = vmatprep.subr.bf16.mxu0 %v1247
    %3652 = vmatpush1.bf16.msra.mxu0 %v1246
    %3653 = vmatprep.mubr.bf16.mxu0 %v3497
    %3654 = vmatmul.mubr.bf16.gmra.mrb[0].mxu0 %v3496
    %v3655 = vpop.f32.mrb[0].mxu0
    %v3656 = vadd.f32 %v3615, %v3655
    %v3657 = vpop.f32.mrb[0].mxu0
    %v3658 = vadd.f32 %v3617, %v3657
    %v3659 = vpop.f32.mrb[0].mxu0
    %v3660 = vpop.f32.mrb[0].mxu0
    %3661 = vdwg.mxu0
    %v3662 = vpack.c.bf16 %v3656, %v3656
    %v3663 = vpack.c.bf16 %v3658, %v3658
    %3664 = vmatprep.subr.bf16.mxu0 %v2311
    %3665 = vmatpush1.bf16.msra.mxu0 %v2310
    %3666 = vmatprep.subr.bf16.mxu0 %v2327
    %3667 = vmatpush1.bf16.msra.mxu0 %v2326
    %3668 = vmatprep.subr.bf16.mxu0 %v2343
    %3669 = vmatpush1.bf16.msra.mxu0 %v2342
    %3670 = vmatprep.subr.bf16.mxu0 %v2359
    %3671 = vmatpush1.bf16.msra.mxu0 %v2358
    %3672 = vmatprep.subr.bf16.mxu0 %v2375
    %3673 = vmatpush1.bf16.msra.mxu0 %v2374
    %3674 = vmatprep.subr.bf16.mxu0 %v2391
    %3675 = vmatpush1.bf16.msra.mxu0 %v2390
    %3676 = vmatprep.subr.bf16.mxu0 %v2407
    %3677 = vmatpush1.bf16.msra.mxu0 %v2406
    %3678 = vmatprep.subr.bf16.mxu0 %v2423
    %3679 = vmatpush1.bf16.msra.mxu0 %v2422
    %3680 = vmatprep.subr.bf16.mxu0 %v2439
    %3681 = vmatpush1.bf16.msra.mxu0 %v2438
    %3682 = vmatprep.subr.bf16.mxu0 %v2455
    %3683 = vmatpush1.bf16.msra.mxu0 %v2454
    %3684 = vmatprep.subr.bf16.mxu0 %v2471
    %3685 = vmatpush1.bf16.msra.mxu0 %v2470
    %3686 = vmatprep.subr.bf16.mxu0 %v2487
    %3687 = vmatpush1.bf16.msra.mxu0 %v2486
    %3688 = vmatprep.subr.bf16.mxu0 %v2503
    %3689 = vmatpush1.bf16.msra.mxu0 %v2502
    %3690 = vmatprep.subr.bf16.mxu0 %v2519
    %3691 = vmatpush1.bf16.msra.mxu0 %v2518
    %3692 = vmatprep.subr.bf16.mxu0 %v2535
    %3693 = vmatpush1.bf16.msra.mxu0 %v2534
    %3694 = vmatprep.subr.bf16.mxu0 %v2551
    %3695 = vmatpush1.bf16.msra.mxu0 %v2550
    %3696 = vmatprep.mubr.bf16.mxu0 %v3663
    %3697 = vmatmul.mubr.bf16.gmra.mrb[0].mxu0 %v3662
    %v3698 = vpop.f32.mrb[0].mxu0
    %v3699 = vadd.f32 0.0, %v3698
    %v3700 = vpop.f32.mrb[0].mxu0
    %v3701 = vadd.f32 0.0, %v3700
    %v3702 = vpop.f32.mrb[0].mxu0
    %v3703 = vpop.f32.mrb[0].mxu0
    %3704 = vdwg.mxu0
    %3705 = vmatprep.subr.bf16.mxu0 %v2313
    %3706 = vmatpush1.bf16.msra.mxu0 %v2312
    %3707 = vmatprep.subr.bf16.mxu0 %v2329
    %3708 = vmatpush1.bf16.msra.mxu0 %v2328
    %3709 = vmatprep.subr.bf16.mxu0 %v2345
    %3710 = vmatpush1.bf16.msra.mxu0 %v2344
    %3711 = vmatprep.subr.bf16.mxu0 %v2361
    %3712 = vmatpush1.bf16.msra.mxu0 %v2360
    %3713 = vmatprep.subr.bf16.mxu0 %v2377
    %3714 = vmatpush1.bf16.msra.mxu0 %v2376
    %3715 = vmatprep.subr.bf16.mxu0 %v2393
    %3716 = vmatpush1.bf16.msra.mxu0 %v2392
    %3717 = vmatprep.subr.bf16.mxu0 %v2409
    %3718 = vmatpush1.bf16.msra.mxu0 %v2408
    %3719 = vmatprep.subr.bf16.mxu0 %v2425
    %3720 = vmatpush1.bf16.msra.mxu0 %v2424
    %3721 = vmatprep.subr.bf16.mxu0 %v2441
    %3722 = vmatpush1.bf16.msra.mxu0 %v2440
    %3723 = vmatprep.subr.bf16.mxu0 %v2457
    %3724 = vmatpush1.bf16.msra.mxu0 %v2456
    %3725 = vmatprep.subr.bf16.mxu0 %v2473
    %3726 = vmatpush1.bf16.msra.mxu0 %v2472
    %3727 = vmatprep.subr.bf16.mxu0 %v2489
    %3728 = vmatpush1.bf16.msra.mxu0 %v2488
    %3729 = vmatprep.subr.bf16.mxu0 %v2505
    %3730 = vmatpush1.bf16.msra.mxu0 %v2504
    %3731 = vmatprep.subr.bf16.mxu0 %v2521
    %3732 = vmatpush1.bf16.msra.mxu0 %v2520
    %3733 = vmatprep.subr.bf16.mxu0 %v2537
    %3734 = vmatpush1.bf16.msra.mxu0 %v2536
    %3735 = vmatprep.subr.bf16.mxu0 %v2553
    %3736 = vmatpush1.bf16.msra.mxu0 %v2552
    %3737 = vmatprep.mubr.bf16.mxu0 %v3663
    %3738 = vmatmul.mubr.bf16.gmra.mrb[0].mxu0 %v3662
    %v3739 = vpop.f32.mrb[0].mxu0
    %v3740 = vadd.f32 0.0, %v3739
    %v3741 = vpop.f32.mrb[0].mxu0
    %v3742 = vadd.f32 0.0, %v3741
    %v3743 = vpop.f32.mrb[0].mxu0
    %v3744 = vpop.f32.mrb[0].mxu0
    %3745 = vdwg.mxu0
    %3746 = vmatprep.subr.bf16.mxu0 %v2315
    %3747 = vmatpush1.bf16.msra.mxu0 %v2314
    %3748 = vmatprep.subr.bf16.mxu0 %v2331
    %3749 = vmatpush1.bf16.msra.mxu0 %v2330
    %3750 = vmatprep.subr.bf16.mxu0 %v2347
    %3751 = vmatpush1.bf16.msra.mxu0 %v2346
    %3752 = vmatprep.subr.bf16.mxu0 %v2363
    %3753 = vmatpush1.bf16.msra.mxu0 %v2362
    %3754 = vmatprep.subr.bf16.mxu0 %v2379
    %3755 = vmatpush1.bf16.msra.mxu0 %v2378
    %3756 = vmatprep.subr.bf16.mxu0 %v2395
    %3757 = vmatpush1.bf16.msra.mxu0 %v2394
    %3758 = vmatprep.subr.bf16.mxu0 %v2411
    %3759 = vmatpush1.bf16.msra.mxu0 %v2410
    %3760 = vmatprep.subr.bf16.mxu0 %v2427
    %3761 = vmatpush1.bf16.msra.mxu0 %v2426
    %3762 = vmatprep.subr.bf16.mxu0 %v2443
    %3763 = vmatpush1.bf16.msra.mxu0 %v2442
    %3764 = vmatprep.subr.bf16.mxu0 %v2459
    %3765 = vmatpush1.bf16.msra.mxu0 %v2458
    %3766 = vmatprep.subr.bf16.mxu0 %v2475
    %3767 = vmatpush1.bf16.msra.mxu0 %v2474
    %3768 = vmatprep.subr.bf16.mxu0 %v2491
    %3769 = vmatpush1.bf16.msra.mxu0 %v2490
    %3770 = vmatprep.subr.bf16.mxu0 %v2507
    %3771 = vmatpush1.bf16.msra.mxu0 %v2506
    %3772 = vmatprep.subr.bf16.mxu0 %v2523
    %3773 = vmatpush1.bf16.msra.mxu0 %v2522
    %3774 = vmatprep.subr.bf16.mxu0 %v2539
    %3775 = vmatpush1.bf16.msra.mxu0 %v2538
    %3776 = vmatprep.subr.bf16.mxu0 %v2555
    %3777 = vmatpush1.bf16.msra.mxu0 %v2554
    %3778 = vmatprep.mubr.bf16.mxu0 %v3663
    %3779 = vmatmul.mubr.bf16.gmra.mrb[0].mxu0 %v3662
    %v3780 = vpop.f32.mrb[0].mxu0
    %v3781 = vadd.f32 0.0, %v3780
    %v3782 = vpop.f32.mrb[0].mxu0
    %v3783 = vadd.f32 0.0, %v3782
    %v3784 = vpop.f32.mrb[0].mxu0
    %v3785 = vpop.f32.mrb[0].mxu0
    %3786 = vdwg.mxu0
    %3787 = vmatprep.subr.bf16.mxu0 %v2317
    %3788 = vmatpush1.bf16.msra.mxu0 %v2316
    %3789 = vmatprep.subr.bf16.mxu0 %v2333
    %3790 = vmatpush1.bf16.msra.mxu0 %v2332
    %3791 = vmatprep.subr.bf16.mxu0 %v2349
    %3792 = vmatpush1.bf16.msra.mxu0 %v2348
    %3793 = vmatprep.subr.bf16.mxu0 %v2365
    %3794 = vmatpush1.bf16.msra.mxu0 %v2364
    %3795 = vmatprep.subr.bf16.mxu0 %v2381
    %3796 = vmatpush1.bf16.msra.mxu0 %v2380
    %3797 = vmatprep.subr.bf16.mxu0 %v2397
    %3798 = vmatpush1.bf16.msra.mxu0 %v2396
    %3799 = vmatprep.subr.bf16.mxu0 %v2413
    %3800 = vmatpush1.bf16.msra.mxu0 %v2412
    %3801 = vmatprep.subr.bf16.mxu0 %v2429
    %3802 = vmatpush1.bf16.msra.mxu0 %v2428
    %3803 = vmatprep.subr.bf16.mxu0 %v2445
    %3804 = vmatpush1.bf16.msra.mxu0 %v2444
    %3805 = vmatprep.subr.bf16.mxu0 %v2461
    %3806 = vmatpush1.bf16.msra.mxu0 %v2460
    %3807 = vmatprep.subr.bf16.mxu0 %v2477
    %3808 = vmatpush1.bf16.msra.mxu0 %v2476
    %3809 = vmatprep.subr.bf16.mxu0 %v2493
    %3810 = vmatpush1.bf16.msra.mxu0 %v2492
    %3811 = vmatprep.subr.bf16.mxu0 %v2509
    %3812 = vmatpush1.bf16.msra.mxu0 %v2508
    %3813 = vmatprep.subr.bf16.mxu0 %v2525
    %3814 = vmatpush1.bf16.msra.mxu0 %v2524
    %3815 = vmatprep.subr.bf16.mxu0 %v2541
    %3816 = vmatpush1.bf16.msra.mxu0 %v2540
    %3817 = vmatprep.subr.bf16.mxu0 %v2557
    %3818 = vmatpush1.bf16.msra.mxu0 %v2556
    %3819 = vmatprep.mubr.bf16.mxu0 %v3663
    %3820 = vmatmul.mubr.bf16.gmra.mrb[0].mxu0 %v3662
    %v3821 = vpop.f32.mrb[0].mxu0
    %v3822 = vadd.f32 0.0, %v3821
    %v3823 = vpop.f32.mrb[0].mxu0
    %v3824 = vadd.f32 0.0, %v3823
    %v3825 = vpop.f32.mrb[0].mxu0
    %v3826 = vpop.f32.mrb[0].mxu0
    %3827 = vdwg.mxu0
    %3828 = vmatprep.subr.bf16.mxu0 %v2319
    %3829 = vmatpush1.bf16.msra.mxu0 %v2318
    %3830 = vmatprep.subr.bf16.mxu0 %v2335
    %3831 = vmatpush1.bf16.msra.mxu0 %v2334
    %3832 = vmatprep.subr.bf16.mxu0 %v2351
    %3833 = vmatpush1.bf16.msra.mxu0 %v2350
    %3834 = vmatprep.subr.bf16.mxu0 %v2367
    %3835 = vmatpush1.bf16.msra.mxu0 %v2366
    %3836 = vmatprep.subr.bf16.mxu0 %v2383
    %3837 = vmatpush1.bf16.msra.mxu0 %v2382
    %3838 = vmatprep.subr.bf16.mxu0 %v2399
    %3839 = vmatpush1.bf16.msra.mxu0 %v2398
    %3840 = vmatprep.subr.bf16.mxu0 %v2415
    %3841 = vmatpush1.bf16.msra.mxu0 %v2414
    %3842 = vmatprep.subr.bf16.mxu0 %v2431
    %3843 = vmatpush1.bf16.msra.mxu0 %v2430
    %3844 = vmatprep.subr.bf16.mxu0 %v2447
    %3845 = vmatpush1.bf16.msra.mxu0 %v2446
    %3846 = vmatprep.subr.bf16.mxu0 %v2463
    %3847 = vmatpush1.bf16.msra.mxu0 %v2462
    %3848 = vmatprep.subr.bf16.mxu0 %v2479
    %3849 = vmatpush1.bf16.msra.mxu0 %v2478
    %3850 = vmatprep.subr.bf16.mxu0 %v2495
    %3851 = vmatpush1.bf16.msra.mxu0 %v2494
    %3852 = vmatprep.subr.bf16.mxu0 %v2511
    %3853 = vmatpush1.bf16.msra.mxu0 %v2510
    %3854 = vmatprep.subr.bf16.mxu0 %v2527
    %3855 = vmatpush1.bf16.msra.mxu0 %v2526
    %3856 = vmatprep.subr.bf16.mxu0 %v2543
    %3857 = vmatpush1.bf16.msra.mxu0 %v2542
    %3858 = vmatprep.subr.bf16.mxu0 %v2559
    %3859 = vmatpush1.bf16.msra.mxu0 %v2558
    %3860 = vmatprep.mubr.bf16.mxu0 %v3663
    %3861 = vmatmul.mubr.bf16.gmra.mrb[0].mxu0 %v3662
    %v3862 = vpop.f32.mrb[0].mxu0
    %v3863 = vadd.f32 0.0, %v3862
    %v3864 = vpop.f32.mrb[0].mxu0
    %v3865 = vadd.f32 0.0, %v3864
    %v3866 = vpop.f32.mrb[0].mxu0
    %v3867 = vpop.f32.mrb[0].mxu0
    %3868 = vdwg.mxu0
    %3869 = vmatprep.subr.bf16.mxu0 %v2321
    %3870 = vmatpush1.bf16.msra.mxu0 %v2320
    %3871 = vmatprep.subr.bf16.mxu0 %v2337
    %3872 = vmatpush1.bf16.msra.mxu0 %v2336
    %3873 = vmatprep.subr.bf16.mxu0 %v2353
    %3874 = vmatpush1.bf16.msra.mxu0 %v2352
    %3875 = vmatprep.subr.bf16.mxu0 %v2369
    %3876 = vmatpush1.bf16.msra.mxu0 %v2368
    %3877 = vmatprep.subr.bf16.mxu0 %v2385
    %3878 = vmatpush1.bf16.msra.mxu0 %v2384
    %3879 = vmatprep.subr.bf16.mxu0 %v2401
    %3880 = vmatpush1.bf16.msra.mxu0 %v2400
    %3881 = vmatprep.subr.bf16.mxu0 %v2417
    %3882 = vmatpush1.bf16.msra.mxu0 %v2416
    %3883 = vmatprep.subr.bf16.mxu0 %v2433
    %3884 = vmatpush1.bf16.msra.mxu0 %v2432
    %3885 = vmatprep.subr.bf16.mxu0 %v2449
    %3886 = vmatpush1.bf16.msra.mxu0 %v2448
    %3887 = vmatprep.subr.bf16.mxu0 %v2465
    %3888 = vmatpush1.bf16.msra.mxu0 %v2464
    %3889 = vmatprep.subr.bf16.mxu0 %v2481
    %3890 = vmatpush1.bf16.msra.mxu0 %v2480
    %3891 = vmatprep.subr.bf16.mxu0 %v2497
    %3892 = vmatpush1.bf16.msra.mxu0 %v2496
    %3893 = vmatprep.subr.bf16.mxu0 %v2513
    %3894 = vmatpush1.bf16.msra.mxu0 %v2512
    %3895 = vmatprep.subr.bf16.mxu0 %v2529
    %3896 = vmatpush1.bf16.msra.mxu0 %v2528
    %3897 = vmatprep.subr.bf16.mxu0 %v2545
    %3898 = vmatpush1.bf16.msra.mxu0 %v2544
    %3899 = vmatprep.subr.bf16.mxu0 %v2561
    %3900 = vmatpush1.bf16.msra.mxu0 %v2560
    %3901 = vmatprep.mubr.bf16.mxu0 %v3663
    %3902 = vmatmul.mubr.bf16.gmra.mrb[0].mxu0 %v3662
    %v3903 = vpop.f32.mrb[0].mxu0
    %v3904 = vadd.f32 0.0, %v3903
    %v3905 = vpop.f32.mrb[0].mxu0
    %v3906 = vadd.f32 0.0, %v3905
    %v3907 = vpop.f32.mrb[0].mxu0
    %v3908 = vpop.f32.mrb[0].mxu0
    %3909 = vdwg.mxu0
    %3910 = vmatprep.subr.bf16.mxu0 %v2323
    %3911 = vmatpush1.bf16.msra.mxu0 %v2322
    %3912 = vmatprep.subr.bf16.mxu0 %v2339
    %3913 = vmatpush1.bf16.msra.mxu0 %v2338
    %3914 = vmatprep.subr.bf16.mxu0 %v2355
    %3915 = vmatpush1.bf16.msra.mxu0 %v2354
    %3916 = vmatprep.subr.bf16.mxu0 %v2371
    %3917 = vmatpush1.bf16.msra.mxu0 %v2370
    %3918 = vmatprep.subr.bf16.mxu0 %v2387
    %3919 = vmatpush1.bf16.msra.mxu0 %v2386
    %3920 = vmatprep.subr.bf16.mxu0 %v2403
    %3921 = vmatpush1.bf16.msra.mxu0 %v2402
    %3922 = vmatprep.subr.bf16.mxu0 %v2419
    %3923 = vmatpush1.bf16.msra.mxu0 %v2418
    %3924 = vmatprep.subr.bf16.mxu0 %v2435
    %3925 = vmatpush1.bf16.msra.mxu0 %v2434
    %3926 = vmatprep.subr.bf16.mxu0 %v2451
    %3927 = vmatpush1.bf16.msra.mxu0 %v2450
    %3928 = vmatprep.subr.bf16.mxu0 %v2467
    %3929 = vmatpush1.bf16.msra.mxu0 %v2466
    %3930 = vmatprep.subr.bf16.mxu0 %v2483
    %3931 = vmatpush1.bf16.msra.mxu0 %v2482
    %3932 = vmatprep.subr.bf16.mxu0 %v2499
    %3933 = vmatpush1.bf16.msra.mxu0 %v2498
    %3934 = vmatprep.subr.bf16.mxu0 %v2515
    %3935 = vmatpush1.bf16.msra.mxu0 %v2514
    %3936 = vmatprep.subr.bf16.mxu0 %v2531
    %3937 = vmatpush1.bf16.msra.mxu0 %v2530
    %3938 = vmatprep.subr.bf16.mxu0 %v2547
    %3939 = vmatpush1.bf16.msra.mxu0 %v2546
    %3940 = vmatprep.subr.bf16.mxu0 %v2563
    %3941 = vmatpush1.bf16.msra.mxu0 %v2562
    %3942 = vmatprep.mubr.bf16.mxu0 %v3663
    %3943 = vmatmul.mubr.bf16.gmra.mrb[0].mxu0 %v3662
    %v3944 = vpop.f32.mrb[0].mxu0
    %v3945 = vadd.f32 0.0, %v3944
    %v3946 = vpop.f32.mrb[0].mxu0
    %v3947 = vadd.f32 0.0, %v3946
    %v3948 = vpop.f32.mrb[0].mxu0
    %v3949 = vpop.f32.mrb[0].mxu0
    %3950 = vdwg.mxu0
    %3951 = vmatprep.subr.bf16.mxu0 %v2325
    %3952 = vmatpush1.bf16.msra.mxu0 %v2324
    %3953 = vmatprep.subr.bf16.mxu0 %v2341
    %3954 = vmatpush1.bf16.msra.mxu0 %v2340
    %3955 = vmatprep.subr.bf16.mxu0 %v2357
    %3956 = vmatpush1.bf16.msra.mxu0 %v2356
    %3957 = vmatprep.subr.bf16.mxu0 %v2373
    %3958 = vmatpush1.bf16.msra.mxu0 %v2372
    %3959 = vmatprep.subr.bf16.mxu0 %v2389
    %3960 = vmatpush1.bf16.msra.mxu0 %v2388
    %3961 = vmatprep.subr.bf16.mxu0 %v2405
    %3962 = vmatpush1.bf16.msra.mxu0 %v2404
    %3963 = vmatprep.subr.bf16.mxu0 %v2421
    %3964 = vmatpush1.bf16.msra.mxu0 %v2420
    %3965 = vmatprep.subr.bf16.mxu0 %v2437
    %3966 = vmatpush1.bf16.msra.mxu0 %v2436
    %3967 = vmatprep.subr.bf16.mxu0 %v2453
    %3968 = vmatpush1.bf16.msra.mxu0 %v2452
    %3969 = vmatprep.subr.bf16.mxu0 %v2469
    %3970 = vmatpush1.bf16.msra.mxu0 %v2468
    %3971 = vmatprep.subr.bf16.mxu0 %v2485
    %3972 = vmatpush1.bf16.msra.mxu0 %v2484
    %3973 = vmatprep.subr.bf16.mxu0 %v2501
    %3974 = vmatpush1.bf16.msra.mxu0 %v2500
    %3975 = vmatprep.subr.bf16.mxu0 %v2517
    %3976 = vmatpush1.bf16.msra.mxu0 %v2516
    %3977 = vmatprep.subr.bf16.mxu0 %v2533
    %3978 = vmatpush1.bf16.msra.mxu0 %v2532
    %3979 = vmatprep.subr.bf16.mxu0 %v2549
    %3980 = vmatpush1.bf16.msra.mxu0 %v2548
    %3981 = vmatprep.subr.bf16.mxu0 %v2565
    %3982 = vmatpush1.bf16.msra.mxu0 %v2564
    %3983 = vmatprep.mubr.bf16.mxu0 %v3663
    %3984 = vmatmul.mubr.bf16.gmra.mrb[0].mxu0 %v3662
    %v3985 = vpop.f32.mrb[0].mxu0
    %v3986 = vadd.f32 0.0, %v3985
    %v3987 = vpop.f32.mrb[0].mxu0
    %v3988 = vadd.f32 0.0, %v3987
    %v3989 = vpop.f32.mrb[0].mxu0
    %v3990 = vpop.f32.mrb[0].mxu0
    %3991 = vdwg.mxu0
    %v3992 = vmul.f32 %v3482, %v3150
    %v3993 = vmul.f32 %v3483, %v3150
    %v3994 = vmul.f32 %v3484, %v3153
    %v3995 = vmul.f32 %v3485, %v3153
    %v3996 = vadd.f32 %v3992, %v3994
    %v3997 = vadd.f32 %v3993, %v3995
    %v3998 = vmul.f32 %v3486, %v3158
    %v3999 = vmul.f32 %v3487, %v3158
    %v4000 = vadd.f32 %v3996, %v3998
    %v4001 = vadd.f32 %v3997, %v3999
    %v4002 = vmul.f32 %v3488, %v3163
    %v4003 = vmul.f32 %v3489, %v3163
    %v4004 = vadd.f32 %v4000, %v4002
    %v4005 = vadd.f32 %v4001, %v4003
    %v4006 = vadd.f32 %v4004, %v3168
    %v4007 = vadd.f32 %v4005, %v3168
    %v4008 = vmul.f32 %v3482, %v3171
    %v4009 = vmul.f32 %v3483, %v3171
    %v4010 = vmul.f32 %v3484, %v3174
    %v4011 = vmul.f32 %v3485, %v3174
    %v4012 = vadd.f32 %v4008, %v4010
    %v4013 = vadd.f32 %v4009, %v4011
    %v4014 = vmul.f32 %v3486, %v3179
    %v4015 = vmul.f32 %v3487, %v3179
    %v4016 = vadd.f32 %v4012, %v4014
    %v4017 = vadd.f32 %v4013, %v4015
    %v4018 = vmul.f32 %v3488, %v3184
    %v4019 = vmul.f32 %v3489, %v3184
    %v4020 = vadd.f32 %v4016, %v4018
    %v4021 = vadd.f32 %v4017, %v4019
    %v4022 = vadd.f32 %v4020, %v3189
    %v4023 = vadd.f32 %v4021, %v3189
    %v4024 = vmul.f32 %v3482, %v3192
    %v4025 = vmul.f32 %v3483, %v3192
    %v4026 = vmul.f32 %v3484, %v3195
    %v4027 = vmul.f32 %v3485, %v3195
    %v4028 = vadd.f32 %v4024, %v4026
    %v4029 = vadd.f32 %v4025, %v4027
    %v4030 = vmul.f32 %v3486, %v3200
    %v4031 = vmul.f32 %v3487, %v3200
    %v4032 = vadd.f32 %v4028, %v4030
    %v4033 = vadd.f32 %v4029, %v4031
    %v4034 = vmul.f32 %v3488, %v3205
    %v4035 = vmul.f32 %v3489, %v3205
    %v4036 = vadd.f32 %v4032, %v4034
    %v4037 = vadd.f32 %v4033, %v4035
    %v4038 = vadd.f32 %v4036, %v3210
    %v4039 = vadd.f32 %v4037, %v3210
    %v4040 = vmul.f32 %v3482, %v3213
    %v4041 = vmul.f32 %v3483, %v3213
    %v4042 = vmul.f32 %v3484, %v3216
    %v4043 = vmul.f32 %v3485, %v3216
    %v4044 = vadd.f32 %v4040, %v4042
    %v4045 = vadd.f32 %v4041, %v4043
    %v4046 = vmul.f32 %v3486, %v3221
    %v4047 = vmul.f32 %v3487, %v3221
    %v4048 = vadd.f32 %v4044, %v4046
    %v4049 = vadd.f32 %v4045, %v4047
    %v4050 = vmul.f32 %v3488, %v3226
    %v4051 = vmul.f32 %v3489, %v3226
    %v4052 = vadd.f32 %v4048, %v4050
    %v4053 = vadd.f32 %v4049, %v4051
    %v4054 = vadd.f32 %v4052, %v3231
    %v4055 = vadd.f32 %v4053, %v3231
    %v4056 = vadd.f32 %v3699, %v4006
    %v4057 = vadd.f32 %v3701, %v4007
    %v4058 = vadd.f32 %v3740, %v4022
    %v4059 = vadd.f32 %v3742, %v4023
    %v4060 = vadd.f32 %v3781, %v4038
    %v4061 = vadd.f32 %v3783, %v4039
    %v4062 = vadd.f32 %v3822, %v4054
    %v4063 = vadd.f32 %v3824, %v4055
    %vm4064 = vcmp.ge.f32.partialorder %v4056, 0.0
    %vm4065 = vcmp.ge.f32.partialorder %v4057, 0.0
    %vm4066 = vcmp.ge.f32.partialorder %v4058, 0.0
    %vm4067 = vcmp.ge.f32.partialorder %v4059, 0.0
    %vm4068 = vcmp.ge.f32.partialorder %v4060, 0.0
    %vm4069 = vcmp.ge.f32.partialorder %v4061, 0.0
    %vm4070 = vcmp.ge.f32.partialorder %v4062, 0.0
    %vm4071 = vcmp.ge.f32.partialorder %v4063, 0.0
    %v4072 = vmul.f32 %v4056, 0.25
    %v4073 = vmul.f32 %v4057, 0.25
    %v4074 = vmul.f32 %v4058, 0.25
    %v4075 = vmul.f32 %v4059, 0.25
    %v4076 = vmul.f32 %v4060, 0.25
    %v4077 = vmul.f32 %v4061, 0.25
    %v4078 = vmul.f32 %v4062, 0.25
    %v4079 = vmul.f32 %v4063, 0.25
    %v4080 = vsel %vm4064, %v4056, %v4072
    %v4081 = vsel %vm4065, %v4057, %v4073
    %v4082 = vsel %vm4066, %v4058, %v4074
    %v4083 = vsel %vm4067, %v4059, %v4075
    %v4084 = vsel %vm4068, %v4060, %v4076
    %v4085 = vsel %vm4069, %v4061, %v4077
    %v4086 = vsel %vm4070, %v4062, %v4078
    %v4087 = vsel %vm4071, %v4063, %v4079
    %v4088 = vmul.f32 %v3482, %v3266
    %v4089 = vmul.f32 %v3483, %v3266
    %v4090 = vmul.f32 %v3484, %v3269
    %v4091 = vmul.f32 %v3485, %v3269
    %v4092 = vadd.f32 %v4088, %v4090
    %v4093 = vadd.f32 %v4089, %v4091
    %v4094 = vmul.f32 %v3486, %v3274
    %v4095 = vmul.f32 %v3487, %v3274
    %v4096 = vadd.f32 %v4092, %v4094
    %v4097 = vadd.f32 %v4093, %v4095
    %v4098 = vmul.f32 %v3488, %v3279
    %v4099 = vmul.f32 %v3489, %v3279
    %v4100 = vadd.f32 %v4096, %v4098
    %v4101 = vadd.f32 %v4097, %v4099
    %v4102 = vadd.f32 %v4100, %v3284
    %v4103 = vadd.f32 %v4101, %v3284
    %v4104 = vmul.f32 %v3482, %v3287
    %v4105 = vmul.f32 %v3483, %v3287
    %v4106 = vmul.f32 %v3484, %v3290
    %v4107 = vmul.f32 %v3485, %v3290
    %v4108 = vadd.f32 %v4104, %v4106
    %v4109 = vadd.f32 %v4105, %v4107
    %v4110 = vmul.f32 %v3486, %v3295
    %v4111 = vmul.f32 %v3487, %v3295
    %v4112 = vadd.f32 %v4108, %v4110
    %v4113 = vadd.f32 %v4109, %v4111
    %v4114 = vmul.f32 %v3488, %v3300
    %v4115 = vmul.f32 %v3489, %v3300
    %v4116 = vadd.f32 %v4112, %v4114
    %v4117 = vadd.f32 %v4113, %v4115
    %v4118 = vadd.f32 %v4116, %v3305
    %v4119 = vadd.f32 %v4117, %v3305
    %v4120 = vmul.f32 %v3482, %v3308
    %v4121 = vmul.f32 %v3483, %v3308
    %v4122 = vmul.f32 %v3484, %v3311
    %v4123 = vmul.f32 %v3485, %v3311
    %v4124 = vadd.f32 %v4120, %v4122
    %v4125 = vadd.f32 %v4121, %v4123
    %v4126 = vmul.f32 %v3486, %v3316
    %v4127 = vmul.f32 %v3487, %v3316
    %v4128 = vadd.f32 %v4124, %v4126
    %v4129 = vadd.f32 %v4125, %v4127
    %v4130 = vmul.f32 %v3488, %v3321
    %v4131 = vmul.f32 %v3489, %v3321
    %v4132 = vadd.f32 %v4128, %v4130
    %v4133 = vadd.f32 %v4129, %v4131
    %v4134 = vadd.f32 %v4132, %v3326
    %v4135 = vadd.f32 %v4133, %v3326
    %v4136 = vmul.f32 %v3482, %v3329
    %v4137 = vmul.f32 %v3483, %v3329
    %v4138 = vmul.f32 %v3484, %v3332
    %v4139 = vmul.f32 %v3485, %v3332
    %v4140 = vadd.f32 %v4136, %v4138
    %v4141 = vadd.f32 %v4137, %v4139
    %v4142 = vmul.f32 %v3486, %v3337
    %v4143 = vmul.f32 %v3487, %v3337
    %v4144 = vadd.f32 %v4140, %v4142
    %v4145 = vadd.f32 %v4141, %v4143
    %v4146 = vmul.f32 %v3488, %v3342
    %v4147 = vmul.f32 %v3489, %v3342
    %v4148 = vadd.f32 %v4144, %v4146
    %v4149 = vadd.f32 %v4145, %v4147
    %v4150 = vadd.f32 %v4148, %v3347
    %v4151 = vadd.f32 %v4149, %v3347
    %v4152 = vadd.f32 %v3863, %v4102
    %v4153 = vadd.f32 %v3865, %v4103
    %v4154 = vadd.f32 %v3904, %v4118
    %v4155 = vadd.f32 %v3906, %v4119
    %v4156 = vadd.f32 %v3945, %v4134
    %v4157 = vadd.f32 %v3947, %v4135
    %v4158 = vadd.f32 %v3986, %v4150
    %v4159 = vadd.f32 %v3988, %v4151
    %vm4160 = vcmp.ge.f32.partialorder %v4152, 0.0
    %vm4161 = vcmp.ge.f32.partialorder %v4153, 0.0
    %vm4162 = vcmp.ge.f32.partialorder %v4154, 0.0
    %vm4163 = vcmp.ge.f32.partialorder %v4155, 0.0
    %vm4164 = vcmp.ge.f32.partialorder %v4156, 0.0
    %vm4165 = vcmp.ge.f32.partialorder %v4157, 0.0
    %vm4166 = vcmp.ge.f32.partialorder %v4158, 0.0
    %vm4167 = vcmp.ge.f32.partialorder %v4159, 0.0
    %v4168 = vmul.f32 %v4152, 0.25
    %v4169 = vmul.f32 %v4153, 0.25
    %v4170 = vmul.f32 %v4154, 0.25
    %v4171 = vmul.f32 %v4155, 0.25
    %v4172 = vmul.f32 %v4156, 0.25
    %v4173 = vmul.f32 %v4157, 0.25
    %v4174 = vmul.f32 %v4158, 0.25
    %v4175 = vmul.f32 %v4159, 0.25
    %v4176 = vsel %vm4160, %v4152, %v4168
    %v4177 = vsel %vm4161, %v4153, %v4169
    %v4178 = vsel %vm4162, %v4154, %v4170
    %v4179 = vsel %vm4163, %v4155, %v4171
    %v4180 = vsel %vm4164, %v4156, %v4172
    %v4181 = vsel %vm4165, %v4157, %v4173
    %v4182 = vsel %vm4166, %v4158, %v4174
    %v4183 = vsel %vm4167, %v4159, %v4175
    %v4184 = vadd.f32 %v4080, %v4176
    %v4185 = vadd.f32 %v4081, %v4177
    %v4186 = vadd.f32 %v4082, %v4178
    %v4187 = vadd.f32 %v4083, %v4179
    %v4188 = vadd.f32 %v4084, %v4180
    %v4189 = vadd.f32 %v4085, %v4181
    %v4190 = vadd.f32 %v4086, %v4182
    %v4191 = vadd.f32 %v4087, %v4183
    %v4192 = vadd.f32 %v4184, %v3482
    %v4193 = vadd.f32 %v4185, %v3483
    %v4194 = vadd.f32 %v4186, %v3484
    %v4195 = vadd.f32 %v4187, %v3485
    %v4196 = vadd.f32 %v4188, %v3486
    %v4197 = vadd.f32 %v4189, %v3487
    %v4198 = vadd.f32 %v4190, %v3488
    %v4199 = vadd.f32 %v4191, %v3489
    %v4200 = vmul.f32 %v4192, %v3398
    %v4201 = vmul.f32 %v4193, %v3398
    %v4202 = vmul.f32 %v4194, %v3401
    %v4203 = vmul.f32 %v4195, %v3401
    %v4204 = vadd.f32 %v4200, %v4202
    %v4205 = vadd.f32 %v4201, %v4203
    %v4206 = vmul.f32 %v4196, %v3406
    %v4207 = vmul.f32 %v4197, %v3406
    %v4208 = vadd.f32 %v4204, %v4206
    %v4209 = vadd.f32 %v4205, %v4207
    %v4210 = vmul.f32 %v4198, %v3411
    %v4211 = vmul.f32 %v4199, %v3411
    %v4212 = vadd.f32 %v4208, %v4210
    %v4213 = vadd.f32 %v4209, %v4211
    %v4214 = vadd.f32 %v4212, %v3416
    %v4215 = vadd.f32 %v4213, %v3416
    %v4216 = vmul.f32 %v4192, %v3419
    %v4217 = vmul.f32 %v4193, %v3419
    %v4218 = vmul.f32 %v4194, %v3422
    %v4219 = vmul.f32 %v4195, %v3422
    %v4220 = vadd.f32 %v4216, %v4218
    %v4221 = vadd.f32 %v4217, %v4219
    %v4222 = vmul.f32 %v4196, %v3427
    %v4223 = vmul.f32 %v4197, %v3427
    %v4224 = vadd.f32 %v4220, %v4222
    %v4225 = vadd.f32 %v4221, %v4223
    %v4226 = vmul.f32 %v4198, %v3432
    %v4227 = vmul.f32 %v4199, %v3432
    %v4228 = vadd.f32 %v4224, %v4226
    %v4229 = vadd.f32 %v4225, %v4227
    %v4230 = vadd.f32 %v4228, %v3437
    %v4231 = vadd.f32 %v4229, %v3437
    %v4232 = vmul.f32 %v4192, %v3440
    %v4233 = vmul.f32 %v4193, %v3440
    %v4234 = vmul.f32 %v4194, %v3443
    %v4235 = vmul.f32 %v4195, %v3443
    %v4236 = vadd.f32 %v4232, %v4234
    %v4237 = vadd.f32 %v4233, %v4235
    %v4238 = vmul.f32 %v4196, %v3448
    %v4239 = vmul.f32 %v4197, %v3448
    %v4240 = vadd.f32 %v4236, %v4238
    %v4241 = vadd.f32 %v4237, %v4239
    %v4242 = vmul.f32 %v4198, %v3453
    %v4243 = vmul.f32 %v4199, %v3453
    %v4244 = vadd.f32 %v4240, %v4242
    %v4245 = vadd.f32 %v4241, %v4243
    %v4246 = vadd.f32 %v4244, %v3458
    %v4247 = vadd.f32 %v4245, %v3458
    %v4248 = vmul.f32 %v4192, %v3461
    %v4249 = vmul.f32 %v4193, %v3461
    %v4250 = vmul.f32 %v4194, %v3464
    %v4251 = vmul.f32 %v4195, %v3464
    %v4252 = vadd.f32 %v4248, %v4250
    %v4253 = vadd.f32 %v4249, %v4251
    %v4254 = vmul.f32 %v4196, %v3469
    %v4255 = vmul.f32 %v4197, %v3469
    %v4256 = vadd.f32 %v4252, %v4254
    %v4257 = vadd.f32 %v4253, %v4255
    %v4258 = vmul.f32 %v4198, %v3474
    %v4259 = vmul.f32 %v4199, %v3474
    %v4260 = vadd.f32 %v4256, %v4258
    %v4261 = vadd.f32 %v4257, %v4259
    %v4262 = vadd.f32 %v4260, %v3479
    %v4263 = vadd.f32 %v4261, %v3479
    %v4264 = vadd.f32 %v4214, %v3482
    %v4265 = vadd.f32 %v4215, %v3483
    %v4266 = vadd.f32 %v4230, %v3484
    %v4267 = vadd.f32 %v4231, %v3485
    %v4268 = vadd.f32 %v4246, %v3486
    %v4269 = vadd.f32 %v4247, %v3487
    %v4270 = vadd.f32 %v4262, %v3488
    %v4271 = vadd.f32 %v4263, %v3489
    %v4272 = vpack.c.bf16 %v4264, %v4264
    %v4273 = vpack.c.bf16 %v4265, %v4265
    %v4274 = vpack.c.bf16 %v4266, %v4266
    %v4275 = vpack.c.bf16 %v4267, %v4267
    %v4276 = vpack.c.bf16 %v4268, %v4268
    %v4277 = vpack.c.bf16 %v4269, %v4269
    %v4278 = vpack.c.bf16 %v4270, %v4270
    %v4279 = vpack.c.bf16 %v4271, %v4271
    %4280 = vmatprep.subr.bf16.mxu0 %v1121
    %4281 = vmatpush1.bf16.msra.mxu0 %v1120
    %4282 = vmatprep.subr.bf16.mxu0 %v1123
    %4283 = vmatpush1.bf16.msra.mxu0 %v1122
    %4284 = vmatprep.subr.bf16.mxu0 %v1125
    %4285 = vmatpush1.bf16.msra.mxu0 %v1124
    %4286 = vmatprep.subr.bf16.mxu0 %v1127
    %4287 = vmatpush1.bf16.msra.mxu0 %v1126
    %4288 = vmatprep.subr.bf16.mxu0 %v1129
    %4289 = vmatpush1.bf16.msra.mxu0 %v1128
    %4290 = vmatprep.subr.bf16.mxu0 %v1131
    %4291 = vmatpush1.bf16.msra.mxu0 %v1130
    %4292 = vmatprep.subr.bf16.mxu0 %v1133
    %4293 = vmatpush1.bf16.msra.mxu0 %v1132
    %4294 = vmatprep.subr.bf16.mxu0 %v1135
    %4295 = vmatpush1.bf16.msra.mxu0 %v1134
    %4296 = vmatprep.subr.bf16.mxu0 %v1137
    %4297 = vmatpush1.bf16.msra.mxu0 %v1136
    %4298 = vmatprep.subr.bf16.mxu0 %v1139
    %4299 = vmatpush1.bf16.msra.mxu0 %v1138
    %4300 = vmatprep.subr.bf16.mxu0 %v1141
    %4301 = vmatpush1.bf16.msra.mxu0 %v1140
    %4302 = vmatprep.subr.bf16.mxu0 %v1143
    %4303 = vmatpush1.bf16.msra.mxu0 %v1142
    %4304 = vmatprep.subr.bf16.mxu0 %v1145
    %4305 = vmatpush1.bf16.msra.mxu0 %v1144
    %4306 = vmatprep.subr.bf16.mxu0 %v1147
    %4307 = vmatpush1.bf16.msra.mxu0 %v1146
    %4308 = vmatprep.subr.bf16.mxu0 %v1149
    %4309 = vmatpush1.bf16.msra.mxu0 %v1148
    %4310 = vmatprep.subr.bf16.mxu0 %v1151
    %4311 = vmatpush1.bf16.msra.mxu0 %v1150
    %4312 = vmatprep.mubr.bf16.mxu0 %v4273
    %4313 = vmatmul.mubr.bf16.gmra.mrb[0].mxu0 %v4272
    %v4314 = vpop.f32.mrb[0].mxu0
    %v4315 = vadd.f32 0.0, %v4314
    %v4316 = vpop.f32.mrb[0].mxu0
    %v4317 = vadd.f32 0.0, %v4316
    %v4318 = vpop.f32.mrb[0].mxu0
    %v4319 = vpop.f32.mrb[0].mxu0
    %4320 = vdwg.mxu0
    %4321 = vmatprep.subr.bf16.mxu0 %v1153
    %4322 = vmatpush1.bf16.msra.mxu0 %v1152
    %4323 = vmatprep.subr.bf16.mxu0 %v1155
    %4324 = vmatpush1.bf16.msra.mxu0 %v1154
    %4325 = vmatprep.subr.bf16.mxu0 %v1157
    %4326 = vmatpush1.bf16.msra.mxu0 %v1156
    %4327 = vmatprep.subr.bf16.mxu0 %v1159
    %4328 = vmatpush1.bf16.msra.mxu0 %v1158
    %4329 = vmatprep.subr.bf16.mxu0 %v1161
    %4330 = vmatpush1.bf16.msra.mxu0 %v1160
    %4331 = vmatprep.subr.bf16.mxu0 %v1163
    %4332 = vmatpush1.bf16.msra.mxu0 %v1162
    %4333 = vmatprep.subr.bf16.mxu0 %v1165
    %4334 = vmatpush1.bf16.msra.mxu0 %v1164
    %4335 = vmatprep.subr.bf16.mxu0 %v1167
    %4336 = vmatpush1.bf16.msra.mxu0 %v1166
    %4337 = vmatprep.subr.bf16.mxu0 %v1169
    %4338 = vmatpush1.bf16.msra.mxu0 %v1168
    %4339 = vmatprep.subr.bf16.mxu0 %v1171
    %4340 = vmatpush1.bf16.msra.mxu0 %v1170
    %4341 = vmatprep.subr.bf16.mxu0 %v1173
    %4342 = vmatpush1.bf16.msra.mxu0 %v1172
    %4343 = vmatprep.subr.bf16.mxu0 %v1175
    %4344 = vmatpush1.bf16.msra.mxu0 %v1174
    %4345 = vmatprep.subr.bf16.mxu0 %v1177
    %4346 = vmatpush1.bf16.msra.mxu0 %v1176
    %4347 = vmatprep.subr.bf16.mxu0 %v1179
    %4348 = vmatpush1.bf16.msra.mxu0 %v1178
    %4349 = vmatprep.subr.bf16.mxu0 %v1181
    %4350 = vmatpush1.bf16.msra.mxu0 %v1180
    %4351 = vmatprep.subr.bf16.mxu0 %v1183
    %4352 = vmatpush1.bf16.msra.mxu0 %v1182
    %4353 = vmatprep.mubr.bf16.mxu0 %v4275
    %4354 = vmatmul.mubr.bf16.gmra.mrb[0].mxu0 %v4274
    %v4355 = vpop.f32.mrb[0].mxu0
    %v4356 = vadd.f32 %v4315, %v4355
    %v4357 = vpop.f32.mrb[0].mxu0
    %v4358 = vadd.f32 %v4317, %v4357
    %v4359 = vpop.f32.mrb[0].mxu0
    %v4360 = vpop.f32.mrb[0].mxu0
    %4361 = vdwg.mxu0
    %4362 = vmatprep.subr.bf16.mxu0 %v1185
    %4363 = vmatpush1.bf16.msra.mxu0 %v1184
    %4364 = vmatprep.subr.bf16.mxu0 %v1187
    %4365 = vmatpush1.bf16.msra.mxu0 %v1186
    %4366 = vmatprep.subr.bf16.mxu0 %v1189
    %4367 = vmatpush1.bf16.msra.mxu0 %v1188
    %4368 = vmatprep.subr.bf16.mxu0 %v1191
    %4369 = vmatpush1.bf16.msra.mxu0 %v1190
    %4370 = vmatprep.subr.bf16.mxu0 %v1193
    %4371 = vmatpush1.bf16.msra.mxu0 %v1192
    %4372 = vmatprep.subr.bf16.mxu0 %v1195
    %4373 = vmatpush1.bf16.msra.mxu0 %v1194
    %4374 = vmatprep.subr.bf16.mxu0 %v1197
    %4375 = vmatpush1.bf16.msra.mxu0 %v1196
    %4376 = vmatprep.subr.bf16.mxu0 %v1199
    %4377 = vmatpush1.bf16.msra.mxu0 %v1198
    %4378 = vmatprep.subr.bf16.mxu0 %v1201
    %4379 = vmatpush1.bf16.msra.mxu0 %v1200
    %4380 = vmatprep.subr.bf16.mxu0 %v1203
    %4381 = vmatpush1.bf16.msra.mxu0 %v1202
    %4382 = vmatprep.subr.bf16.mxu0 %v1205
    %4383 = vmatpush1.bf16.msra.mxu0 %v1204
    %4384 = vmatprep.subr.bf16.mxu0 %v1207
    %4385 = vmatpush1.bf16.msra.mxu0 %v1206
    %4386 = vmatprep.subr.bf16.mxu0 %v1209
    %4387 = vmatpush1.bf16.msra.mxu0 %v1208
    %4388 = vmatprep.subr.bf16.mxu0 %v1211
    %4389 = vmatpush1.bf16.msra.mxu0 %v1210
    %4390 = vmatprep.subr.bf16.mxu0 %v1213
    %4391 = vmatpush1.bf16.msra.mxu0 %v1212
    %4392 = vmatprep.subr.bf16.mxu0 %v1215
    %4393 = vmatpush1.bf16.msra.mxu0 %v1214
    %4394 = vmatprep.mubr.bf16.mxu0 %v4277
    %4395 = vmatmul.mubr.bf16.gmra.mrb[0].mxu0 %v4276
    %v4396 = vpop.f32.mrb[0].mxu0
    %v4397 = vadd.f32 %v4356, %v4396
    %v4398 = vpop.f32.mrb[0].mxu0
    %v4399 = vadd.f32 %v4358, %v4398
    %v4400 = vpop.f32.mrb[0].mxu0
    %v4401 = vpop.f32.mrb[0].mxu0
    %4402 = vdwg.mxu0
    %4403 = vmatprep.subr.bf16.mxu0 %v1217
    %4404 = vmatpush1.bf16.msra.mxu0 %v1216
    %4405 = vmatprep.subr.bf16.mxu0 %v1219
    %4406 = vmatpush1.bf16.msra.mxu0 %v1218
    %4407 = vmatprep.subr.bf16.mxu0 %v1221
    %4408 = vmatpush1.bf16.msra.mxu0 %v1220
    %4409 = vmatprep.subr.bf16.mxu0 %v1223
    %4410 = vmatpush1.bf16.msra.mxu0 %v1222
    %4411 = vmatprep.subr.bf16.mxu0 %v1225
    %4412 = vmatpush1.bf16.msra.mxu0 %v1224
    %4413 = vmatprep.subr.bf16.mxu0 %v1227
    %4414 = vmatpush1.bf16.msra.mxu0 %v1226
    %4415 = vmatprep.subr.bf16.mxu0 %v1229
    %4416 = vmatpush1.bf16.msra.mxu0 %v1228
    %4417 = vmatprep.subr.bf16.mxu0 %v1231
    %4418 = vmatpush1.bf16.msra.mxu0 %v1230
    %4419 = vmatprep.subr.bf16.mxu0 %v1233
    %4420 = vmatpush1.bf16.msra.mxu0 %v1232
    %4421 = vmatprep.subr.bf16.mxu0 %v1235
    %4422 = vmatpush1.bf16.msra.mxu0 %v1234
    %4423 = vmatprep.subr.bf16.mxu0 %v1237
    %4424 = vmatpush1.bf16.msra.mxu0 %v1236
    %4425 = vmatprep.subr.bf16.mxu0 %v1239
    %4426 = vmatpush1.bf16.msra.mxu0 %v1238
    %4427 = vmatprep.subr.bf16.mxu0 %v1241
    %4428 = vmatpush1.bf16.msra.mxu0 %v1240
    %4429 = vmatprep.subr.bf16.mxu0 %v1243
    %4430 = vmatpush1.bf16.msra.mxu0 %v1242
    %4431 = vmatprep.subr.bf16.mxu0 %v1245
    %4432 = vmatpush1.bf16.msra.mxu0 %v1244
    %4433 = vmatprep.subr.bf16.mxu0 %v1247
    %4434 = vmatpush1.bf16.msra.mxu0 %v1246
    %4435 = vmatprep.mubr.bf16.mxu0 %v4279
    %4436 = vmatmul.mubr.bf16.gmra.mrb[0].mxu0 %v4278
    %v4437 = vpop.f32.mrb[0].mxu0
    %v4438 = vadd.f32 %v4397, %v4437
    %v4439 = vpop.f32.mrb[0].mxu0
    %v4440 = vadd.f32 %v4399, %v4439
    %v4441 = vpop.f32.mrb[0].mxu0
    %v4442 = vpop.f32.mrb[0].mxu0
    %4443 = vdwg.mxu0
    %v4444 = vpack.c.bf16 %v4438, %v4438
    %v4445 = vpack.c.bf16 %v4440, %v4440
    %4446 = vmatprep.subr.bf16.mxu0 %v2311
    %4447 = vmatpush1.bf16.msra.mxu0 %v2310
    %4448 = vmatprep.subr.bf16.mxu0 %v2327
    %4449 = vmatpush1.bf16.msra.mxu0 %v2326
    %4450 = vmatprep.subr.bf16.mxu0 %v2343
    %4451 = vmatpush1.bf16.msra.mxu0 %v2342
    %4452 = vmatprep.subr.bf16.mxu0 %v2359
    %4453 = vmatpush1.bf16.msra.mxu0 %v2358
    %4454 = vmatprep.subr.bf16.mxu0 %v2375
    %4455 = vmatpush1.bf16.msra.mxu0 %v2374
    %4456 = vmatprep.subr.bf16.mxu0 %v2391
    %4457 = vmatpush1.bf16.msra.mxu0 %v2390
    %4458 = vmatprep.subr.bf16.mxu0 %v2407
    %4459 = vmatpush1.bf16.msra.mxu0 %v2406
    %4460 = vmatprep.subr.bf16.mxu0 %v2423
    %4461 = vmatpush1.bf16.msra.mxu0 %v2422
    %4462 = vmatprep.subr.bf16.mxu0 %v2439
    %4463 = vmatpush1.bf16.msra.mxu0 %v2438
    %4464 = vmatprep.subr.bf16.mxu0 %v2455
    %4465 = vmatpush1.bf16.msra.mxu0 %v2454
    %4466 = vmatprep.subr.bf16.mxu0 %v2471
    %4467 = vmatpush1.bf16.msra.mxu0 %v2470
    %4468 = vmatprep.subr.bf16.mxu0 %v2487
    %4469 = vmatpush1.bf16.msra.mxu0 %v2486
    %4470 = vmatprep.subr.bf16.mxu0 %v2503
    %4471 = vmatpush1.bf16.msra.mxu0 %v2502
    %4472 = vmatprep.subr.bf16.mxu0 %v2519
    %4473 = vmatpush1.bf16.msra.mxu0 %v2518
    %4474 = vmatprep.subr.bf16.mxu0 %v2535
    %4475 = vmatpush1.bf16.msra.mxu0 %v2534
    %4476 = vmatprep.subr.bf16.mxu0 %v2551
    %4477 = vmatpush1.bf16.msra.mxu0 %v2550
    %4478 = vmatprep.mubr.bf16.mxu0 %v4445
    %4479 = vmatmul.mubr.bf16.gmra.mrb[0].mxu0 %v4444
    %v4480 = vpop.f32.mrb[0].mxu0
    %v4481 = vadd.f32 0.0, %v4480
    %v4482 = vpop.f32.mrb[0].mxu0
    %v4483 = vadd.f32 0.0, %v4482
    %v4484 = vpop.f32.mrb[0].mxu0
    %v4485 = vpop.f32.mrb[0].mxu0
    %4486 = vdwg.mxu0
    %4487 = vmatprep.subr.bf16.mxu0 %v2313
    %4488 = vmatpush1.bf16.msra.mxu0 %v2312
    %4489 = vmatprep.subr.bf16.mxu0 %v2329
    %4490 = vmatpush1.bf16.msra.mxu0 %v2328
    %4491 = vmatprep.subr.bf16.mxu0 %v2345
    %4492 = vmatpush1.bf16.msra.mxu0 %v2344
    %4493 = vmatprep.subr.bf16.mxu0 %v2361
    %4494 = vmatpush1.bf16.msra.mxu0 %v2360
    %4495 = vmatprep.subr.bf16.mxu0 %v2377
    %4496 = vmatpush1.bf16.msra.mxu0 %v2376
    %4497 = vmatprep.subr.bf16.mxu0 %v2393
    %4498 = vmatpush1.bf16.msra.mxu0 %v2392
    %4499 = vmatprep.subr.bf16.mxu0 %v2409
    %4500 = vmatpush1.bf16.msra.mxu0 %v2408
    %4501 = vmatprep.subr.bf16.mxu0 %v2425
    %4502 = vmatpush1.bf16.msra.mxu0 %v2424
    %4503 = vmatprep.subr.bf16.mxu0 %v2441
    %4504 = vmatpush1.bf16.msra.mxu0 %v2440
    %4505 = vmatprep.subr.bf16.mxu0 %v2457
    %4506 = vmatpush1.bf16.msra.mxu0 %v2456
    %4507 = vmatprep.subr.bf16.mxu0 %v2473
    %4508 = vmatpush1.bf16.msra.mxu0 %v2472
    %4509 = vmatprep.subr.bf16.mxu0 %v2489
    %4510 = vmatpush1.bf16.msra.mxu0 %v2488
    %4511 = vmatprep.subr.bf16.mxu0 %v2505
    %4512 = vmatpush1.bf16.msra.mxu0 %v2504
    %4513 = vmatprep.subr.bf16.mxu0 %v2521
    %4514 = vmatpush1.bf16.msra.mxu0 %v2520
    %4515 = vmatprep.subr.bf16.mxu0 %v2537
    %4516 = vmatpush1.bf16.msra.mxu0 %v2536
    %4517 = vmatprep.subr.bf16.mxu0 %v2553
    %4518 = vmatpush1.bf16.msra.mxu0 %v2552
    %4519 = vmatprep.mubr.bf16.mxu0 %v4445
    %4520 = vmatmul.mubr.bf16.gmra.mrb[0].mxu0 %v4444
    %v4521 = vpop.f32.mrb[0].mxu0
    %v4522 = vadd.f32 0.0, %v4521
    %v4523 = vpop.f32.mrb[0].mxu0
    %v4524 = vadd.f32 0.0, %v4523
    %v4525 = vpop.f32.mrb[0].mxu0
    %v4526 = vpop.f32.mrb[0].mxu0
    %4527 = vdwg.mxu0
    %4528 = vmatprep.subr.bf16.mxu0 %v2315
    %4529 = vmatpush1.bf16.msra.mxu0 %v2314
    %4530 = vmatprep.subr.bf16.mxu0 %v2331
    %4531 = vmatpush1.bf16.msra.mxu0 %v2330
    %4532 = vmatprep.subr.bf16.mxu0 %v2347
    %4533 = vmatpush1.bf16.msra.mxu0 %v2346
    %4534 = vmatprep.subr.bf16.mxu0 %v2363
    %4535 = vmatpush1.bf16.msra.mxu0 %v2362
    %4536 = vmatprep.subr.bf16.mxu0 %v2379
    %4537 = vmatpush1.bf16.msra.mxu0 %v2378
    %4538 = vmatprep.subr.bf16.mxu0 %v2395
    %4539 = vmatpush1.bf16.msra.mxu0 %v2394
    %4540 = vmatprep.subr.bf16.mxu0 %v2411
    %4541 = vmatpush1.bf16.msra.mxu0 %v2410
    %4542 = vmatprep.subr.bf16.mxu0 %v2427
    %4543 = vmatpush1.bf16.msra.mxu0 %v2426
    %4544 = vmatprep.subr.bf16.mxu0 %v2443
    %4545 = vmatpush1.bf16.msra.mxu0 %v2442
    %4546 = vmatprep.subr.bf16.mxu0 %v2459
    %4547 = vmatpush1.bf16.msra.mxu0 %v2458
    %4548 = vmatprep.subr.bf16.mxu0 %v2475
    %4549 = vmatpush1.bf16.msra.mxu0 %v2474
    %4550 = vmatprep.subr.bf16.mxu0 %v2491
    %4551 = vmatpush1.bf16.msra.mxu0 %v2490
    %4552 = vmatprep.subr.bf16.mxu0 %v2507
    %4553 = vmatpush1.bf16.msra.mxu0 %v2506
    %4554 = vmatprep.subr.bf16.mxu0 %v2523
    %4555 = vmatpush1.bf16.msra.mxu0 %v2522
    %4556 = vmatprep.subr.bf16.mxu0 %v2539
    %4557 = vmatpush1.bf16.msra.mxu0 %v2538
    %4558 = vmatprep.subr.bf16.mxu0 %v2555
    %4559 = vmatpush1.bf16.msra.mxu0 %v2554
    %4560 = vmatprep.mubr.bf16.mxu0 %v4445
    %4561 = vmatmul.mubr.bf16.gmra.mrb[0].mxu0 %v4444
    %v4562 = vpop.f32.mrb[0].mxu0
    %v4563 = vadd.f32 0.0, %v4562
    %v4564 = vpop.f32.mrb[0].mxu0
    %v4565 = vadd.f32 0.0, %v4564
    %v4566 = vpop.f32.mrb[0].mxu0
    %v4567 = vpop.f32.mrb[0].mxu0
    %4568 = vdwg.mxu0
    %4569 = vmatprep.subr.bf16.mxu0 %v2317
    %4570 = vmatpush1.bf16.msra.mxu0 %v2316
    %4571 = vmatprep.subr.bf16.mxu0 %v2333
    %4572 = vmatpush1.bf16.msra.mxu0 %v2332
    %4573 = vmatprep.subr.bf16.mxu0 %v2349
    %4574 = vmatpush1.bf16.msra.mxu0 %v2348
    %4575 = vmatprep.subr.bf16.mxu0 %v2365
    %4576 = vmatpush1.bf16.msra.mxu0 %v2364
    %4577 = vmatprep.subr.bf16.mxu0 %v2381
    %4578 = vmatpush1.bf16.msra.mxu0 %v2380
    %4579 = vmatprep.subr.bf16.mxu0 %v2397
    %4580 = vmatpush1.bf16.msra.mxu0 %v2396
    %4581 = vmatprep.subr.bf16.mxu0 %v2413
    %4582 = vmatpush1.bf16.msra.mxu0 %v2412
    %4583 = vmatprep.subr.bf16.mxu0 %v2429
    %4584 = vmatpush1.bf16.msra.mxu0 %v2428
    %4585 = vmatprep.subr.bf16.mxu0 %v2445
    %4586 = vmatpush1.bf16.msra.mxu0 %v2444
    %4587 = vmatprep.subr.bf16.mxu0 %v2461
    %4588 = vmatpush1.bf16.msra.mxu0 %v2460
    %4589 = vmatprep.subr.bf16.mxu0 %v2477
    %4590 = vmatpush1.bf16.msra.mxu0 %v2476
    %4591 = vmatprep.subr.bf16.mxu0 %v2493
    %4592 = vmatpush1.bf16.msra.mxu0 %v2492
    %4593 = vmatprep.subr.bf16.mxu0 %v2509
    %4594 = vmatpush1.bf16.msra.mxu0 %v2508
    %4595 = vmatprep.subr.bf16.mxu0 %v2525
    %4596 = vmatpush1.bf16.msra.mxu0 %v2524
    %4597 = vmatprep.subr.bf16.mxu0 %v2541
    %4598 = vmatpush1.bf16.msra.mxu0 %v2540
    %4599 = vmatprep.subr.bf16.mxu0 %v2557
    %4600 = vmatpush1.bf16.msra.mxu0 %v2556
    %4601 = vmatprep.mubr.bf16.mxu0 %v4445
    %4602 = vmatmul.mubr.bf16.gmra.mrb[0].mxu0 %v4444
    %v4603 = vpop.f32.mrb[0].mxu0
    %v4604 = vadd.f32 0.0, %v4603
    %v4605 = vpop.f32.mrb[0].mxu0
    %v4606 = vadd.f32 0.0, %v4605
    %v4607 = vpop.f32.mrb[0].mxu0
    %v4608 = vpop.f32.mrb[0].mxu0
    %4609 = vdwg.mxu0
    %4610 = vmatprep.subr.bf16.mxu0 %v2319
    %4611 = vmatpush1.bf16.msra.mxu0 %v2318
    %4612 = vmatprep.subr.bf16.mxu0 %v2335
    %4613 = vmatpush1.bf16.msra.mxu0 %v2334
    %4614 = vmatprep.subr.bf16.mxu0 %v2351
    %4615 = vmatpush1.bf16.msra.mxu0 %v2350
    %4616 = vmatprep.subr.bf16.mxu0 %v2367
    %4617 = vmatpush1.bf16.msra.mxu0 %v2366
    %4618 = vmatprep.subr.bf16.mxu0 %v2383
    %4619 = vmatpush1.bf16.msra.mxu0 %v2382
    %4620 = vmatprep.subr.bf16.mxu0 %v2399
    %4621 = vmatpush1.bf16.msra.mxu0 %v2398
    %4622 = vmatprep.subr.bf16.mxu0 %v2415
    %4623 = vmatpush1.bf16.msra.mxu0 %v2414
    %4624 = vmatprep.subr.bf16.mxu0 %v2431
    %4625 = vmatpush1.bf16.msra.mxu0 %v2430
    %4626 = vmatprep.subr.bf16.mxu0 %v2447
    %4627 = vmatpush1.bf16.msra.mxu0 %v2446
    %4628 = vmatprep.subr.bf16.mxu0 %v2463
    %4629 = vmatpush1.bf16.msra.mxu0 %v2462
    %4630 = vmatprep.subr.bf16.mxu0 %v2479
    %4631 = vmatpush1.bf16.msra.mxu0 %v2478
    %4632 = vmatprep.subr.bf16.mxu0 %v2495
    %4633 = vmatpush1.bf16.msra.mxu0 %v2494
    %4634 = vmatprep.subr.bf16.mxu0 %v2511
    %4635 = vmatpush1.bf16.msra.mxu0 %v2510
    %4636 = vmatprep.subr.bf16.mxu0 %v2527
    %4637 = vmatpush1.bf16.msra.mxu0 %v2526
    %4638 = vmatprep.subr.bf16.mxu0 %v2543
    %4639 = vmatpush1.bf16.msra.mxu0 %v2542
    %4640 = vmatprep.subr.bf16.mxu0 %v2559
    %4641 = vmatpush1.bf16.msra.mxu0 %v2558
    %4642 = vmatprep.mubr.bf16.mxu0 %v4445
    %4643 = vmatmul.mubr.bf16.gmra.mrb[0].mxu0 %v4444
    %v4644 = vpop.f32.mrb[0].mxu0
    %v4645 = vadd.f32 0.0, %v4644
    %v4646 = vpop.f32.mrb[0].mxu0
    %v4647 = vadd.f32 0.0, %v4646
    %v4648 = vpop.f32.mrb[0].mxu0
    %v4649 = vpop.f32.mrb[0].mxu0
    %4650 = vdwg.mxu0
    %4651 = vmatprep.subr.bf16.mxu0 %v2321
    %4652 = vmatpush1.bf16.msra.mxu0 %v2320
    %4653 = vmatprep.subr.bf16.mxu0 %v2337
    %4654 = vmatpush1.bf16.msra.mxu0 %v2336
    %4655 = vmatprep.subr.bf16.mxu0 %v2353
    %4656 = vmatpush1.bf16.msra.mxu0 %v2352
    %4657 = vmatprep.subr.bf16.mxu0 %v2369
    %4658 = vmatpush1.bf16.msra.mxu0 %v2368
    %4659 = vmatprep.subr.bf16.mxu0 %v2385
    %4660 = vmatpush1.bf16.msra.mxu0 %v2384
    %4661 = vmatprep.subr.bf16.mxu0 %v2401
    %4662 = vmatpush1.bf16.msra.mxu0 %v2400
    %4663 = vmatprep.subr.bf16.mxu0 %v2417
    %4664 = vmatpush1.bf16.msra.mxu0 %v2416
    %4665 = vmatprep.subr.bf16.mxu0 %v2433
    %4666 = vmatpush1.bf16.msra.mxu0 %v2432
    %4667 = vmatprep.subr.bf16.mxu0 %v2449
    %4668 = vmatpush1.bf16.msra.mxu0 %v2448
    %4669 = vmatprep.subr.bf16.mxu0 %v2465
    %4670 = vmatpush1.bf16.msra.mxu0 %v2464
    %4671 = vmatprep.subr.bf16.mxu0 %v2481
    %4672 = vmatpush1.bf16.msra.mxu0 %v2480
    %4673 = vmatprep.subr.bf16.mxu0 %v2497
    %4674 = vmatpush1.bf16.msra.mxu0 %v2496
    %4675 = vmatprep.subr.bf16.mxu0 %v2513
    %4676 = vmatpush1.bf16.msra.mxu0 %v2512
    %4677 = vmatprep.subr.bf16.mxu0 %v2529
    %4678 = vmatpush1.bf16.msra.mxu0 %v2528
    %4679 = vmatprep.subr.bf16.mxu0 %v2545
    %4680 = vmatpush1.bf16.msra.mxu0 %v2544
    %4681 = vmatprep.subr.bf16.mxu0 %v2561
    %4682 = vmatpush1.bf16.msra.mxu0 %v2560
    %4683 = vmatprep.mubr.bf16.mxu0 %v4445
    %4684 = vmatmul.mubr.bf16.gmra.mrb[0].mxu0 %v4444
    %v4685 = vpop.f32.mrb[0].mxu0
    %v4686 = vadd.f32 0.0, %v4685
    %v4687 = vpop.f32.mrb[0].mxu0
    %v4688 = vadd.f32 0.0, %v4687
    %v4689 = vpop.f32.mrb[0].mxu0
    %v4690 = vpop.f32.mrb[0].mxu0
    %4691 = vdwg.mxu0
    %4692 = vmatprep.subr.bf16.mxu0 %v2323
    %4693 = vmatpush1.bf16.msra.mxu0 %v2322
    %4694 = vmatprep.subr.bf16.mxu0 %v2339
    %4695 = vmatpush1.bf16.msra.mxu0 %v2338
    %4696 = vmatprep.subr.bf16.mxu0 %v2355
    %4697 = vmatpush1.bf16.msra.mxu0 %v2354
    %4698 = vmatprep.subr.bf16.mxu0 %v2371
    %4699 = vmatpush1.bf16.msra.mxu0 %v2370
    %4700 = vmatprep.subr.bf16.mxu0 %v2387
    %4701 = vmatpush1.bf16.msra.mxu0 %v2386
    %4702 = vmatprep.subr.bf16.mxu0 %v2403
    %4703 = vmatpush1.bf16.msra.mxu0 %v2402
    %4704 = vmatprep.subr.bf16.mxu0 %v2419
    %4705 = vmatpush1.bf16.msra.mxu0 %v2418
    %4706 = vmatprep.subr.bf16.mxu0 %v2435
    %4707 = vmatpush1.bf16.msra.mxu0 %v2434
    %4708 = vmatprep.subr.bf16.mxu0 %v2451
    %4709 = vmatpush1.bf16.msra.mxu0 %v2450
    %4710 = vmatprep.subr.bf16.mxu0 %v2467
    %4711 = vmatpush1.bf16.msra.mxu0 %v2466
    %4712 = vmatprep.subr.bf16.mxu0 %v2483
    %4713 = vmatpush1.bf16.msra.mxu0 %v2482
    %4714 = vmatprep.subr.bf16.mxu0 %v2499
    %4715 = vmatpush1.bf16.msra.mxu0 %v2498
    %4716 = vmatprep.subr.bf16.mxu0 %v2515
    %4717 = vmatpush1.bf16.msra.mxu0 %v2514
    %4718 = vmatprep.subr.bf16.mxu0 %v2531
    %4719 = vmatpush1.bf16.msra.mxu0 %v2530
    %4720 = vmatprep.subr.bf16.mxu0 %v2547
    %4721 = vmatpush1.bf16.msra.mxu0 %v2546
    %4722 = vmatprep.subr.bf16.mxu0 %v2563
    %4723 = vmatpush1.bf16.msra.mxu0 %v2562
    %4724 = vmatprep.mubr.bf16.mxu0 %v4445
    %4725 = vmatmul.mubr.bf16.gmra.mrb[0].mxu0 %v4444
    %v4726 = vpop.f32.mrb[0].mxu0
    %v4727 = vadd.f32 0.0, %v4726
    %v4728 = vpop.f32.mrb[0].mxu0
    %v4729 = vadd.f32 0.0, %v4728
    %v4730 = vpop.f32.mrb[0].mxu0
    %v4731 = vpop.f32.mrb[0].mxu0
    %4732 = vdwg.mxu0
    %4733 = vmatprep.subr.bf16.mxu0 %v2325
    %4734 = vmatpush1.bf16.msra.mxu0 %v2324
    %4735 = vmatprep.subr.bf16.mxu0 %v2341
    %4736 = vmatpush1.bf16.msra.mxu0 %v2340
    %4737 = vmatprep.subr.bf16.mxu0 %v2357
    %4738 = vmatpush1.bf16.msra.mxu0 %v2356
    %4739 = vmatprep.subr.bf16.mxu0 %v2373
    %4740 = vmatpush1.bf16.msra.mxu0 %v2372
    %4741 = vmatprep.subr.bf16.mxu0 %v2389
    %4742 = vmatpush1.bf16.msra.mxu0 %v2388
    %4743 = vmatprep.subr.bf16.mxu0 %v2405
    %4744 = vmatpush1.bf16.msra.mxu0 %v2404
    %4745 = vmatprep.subr.bf16.mxu0 %v2421
    %4746 = vmatpush1.bf16.msra.mxu0 %v2420
    %4747 = vmatprep.subr.bf16.mxu0 %v2437
    %4748 = vmatpush1.bf16.msra.mxu0 %v2436
    %4749 = vmatprep.subr.bf16.mxu0 %v2453
    %4750 = vmatpush1.bf16.msra.mxu0 %v2452
    %4751 = vmatprep.subr.bf16.mxu0 %v2469
    %4752 = vmatpush1.bf16.msra.mxu0 %v2468
    %4753 = vmatprep.subr.bf16.mxu0 %v2485
    %4754 = vmatpush1.bf16.msra.mxu0 %v2484
    %4755 = vmatprep.subr.bf16.mxu0 %v2501
    %4756 = vmatpush1.bf16.msra.mxu0 %v2500
    %4757 = vmatprep.subr.bf16.mxu0 %v2517
    %4758 = vmatpush1.bf16.msra.mxu0 %v2516
    %4759 = vmatprep.subr.bf16.mxu0 %v2533
    %4760 = vmatpush1.bf16.msra.mxu0 %v2532
    %4761 = vmatprep.subr.bf16.mxu0 %v2549
    %4762 = vmatpush1.bf16.msra.mxu0 %v2548
    %4763 = vmatprep.subr.bf16.mxu0 %v2565
    %4764 = vmatpush1.bf16.msra.mxu0 %v2564
    %4765 = vmatprep.mubr.bf16.mxu0 %v4445
    %4766 = vmatmul.mubr.bf16.gmra.mrb[0].mxu0 %v4444
    %v4767 = vpop.f32.mrb[0].mxu0
    %v4768 = vadd.f32 0.0, %v4767
    %v4769 = vpop.f32.mrb[0].mxu0
    %v4770 = vadd.f32 0.0, %v4769
    %v4771 = vpop.f32.mrb[0].mxu0
    %v4772 = vpop.f32.mrb[0].mxu0
    %4773 = vdwg.mxu0
    %v4774 = vmul.f32 %v4264, %v3150
    %v4775 = vmul.f32 %v4265, %v3150
    %v4776 = vmul.f32 %v4266, %v3153
    %v4777 = vmul.f32 %v4267, %v3153
    %v4778 = vadd.f32 %v4774, %v4776
    %v4779 = vadd.f32 %v4775, %v4777
    %v4780 = vmul.f32 %v4268, %v3158
    %v4781 = vmul.f32 %v4269, %v3158
    %v4782 = vadd.f32 %v4778, %v4780
    %v4783 = vadd.f32 %v4779, %v4781
    %v4784 = vmul.f32 %v4270, %v3163
    %v4785 = vmul.f32 %v4271, %v3163
    %v4786 = vadd.f32 %v4782, %v4784
    %v4787 = vadd.f32 %v4783, %v4785
    %v4788 = vadd.f32 %v4786, %v3168
    %v4789 = vadd.f32 %v4787, %v3168
    %v4790 = vmul.f32 %v4264, %v3171
    %v4791 = vmul.f32 %v4265, %v3171
    %v4792 = vmul.f32 %v4266, %v3174
    %v4793 = vmul.f32 %v4267, %v3174
    %v4794 = vadd.f32 %v4790, %v4792
    %v4795 = vadd.f32 %v4791, %v4793
    %v4796 = vmul.f32 %v4268, %v3179
    %v4797 = vmul.f32 %v4269, %v3179
    %v4798 = vadd.f32 %v4794, %v4796
    %v4799 = vadd.f32 %v4795, %v4797
    %v4800 = vmul.f32 %v4270, %v3184
    %v4801 = vmul.f32 %v4271, %v3184
    %v4802 = vadd.f32 %v4798, %v4800
    %v4803 = vadd.f32 %v4799, %v4801
    %v4804 = vadd.f32 %v4802, %v3189
    %v4805 = vadd.f32 %v4803, %v3189
    %v4806 = vmul.f32 %v4264, %v3192
    %v4807 = vmul.f32 %v4265, %v3192
    %v4808 = vmul.f32 %v4266, %v3195
    %v4809 = vmul.f32 %v4267, %v3195
    %v4810 = vadd.f32 %v4806, %v4808
    %v4811 = vadd.f32 %v4807, %v4809
    %v4812 = vmul.f32 %v4268, %v3200
    %v4813 = vmul.f32 %v4269, %v3200
    %v4814 = vadd.f32 %v4810, %v4812
    %v4815 = vadd.f32 %v4811, %v4813
    %v4816 = vmul.f32 %v4270, %v3205
    %v4817 = vmul.f32 %v4271, %v3205
    %v4818 = vadd.f32 %v4814, %v4816
    %v4819 = vadd.f32 %v4815, %v4817
    %v4820 = vadd.f32 %v4818, %v3210
    %v4821 = vadd.f32 %v4819, %v3210
    %v4822 = vmul.f32 %v4264, %v3213
    %v4823 = vmul.f32 %v4265, %v3213
    %v4824 = vmul.f32 %v4266, %v3216
    %v4825 = vmul.f32 %v4267, %v3216
    %v4826 = vadd.f32 %v4822, %v4824
    %v4827 = vadd.f32 %v4823, %v4825
    %v4828 = vmul.f32 %v4268, %v3221
    %v4829 = vmul.f32 %v4269, %v3221
    %v4830 = vadd.f32 %v4826, %v4828
    %v4831 = vadd.f32 %v4827, %v4829
    %v4832 = vmul.f32 %v4270, %v3226
    %v4833 = vmul.f32 %v4271, %v3226
    %v4834 = vadd.f32 %v4830, %v4832
    %v4835 = vadd.f32 %v4831, %v4833
    %v4836 = vadd.f32 %v4834, %v3231
    %v4837 = vadd.f32 %v4835, %v3231
    %v4838 = vadd.f32 %v4481, %v4788
    %v4839 = vadd.f32 %v4483, %v4789
    %v4840 = vadd.f32 %v4522, %v4804
    %v4841 = vadd.f32 %v4524, %v4805
    %v4842 = vadd.f32 %v4563, %v4820
    %v4843 = vadd.f32 %v4565, %v4821
    %v4844 = vadd.f32 %v4604, %v4836
    %v4845 = vadd.f32 %v4606, %v4837
    %vm4846 = vcmp.ge.f32.partialorder %v4838, 0.0
    %vm4847 = vcmp.ge.f32.partialorder %v4839, 0.0
    %vm4848 = vcmp.ge.f32.partialorder %v4840, 0.0
    %vm4849 = vcmp.ge.f32.partialorder %v4841, 0.0
    %vm4850 = vcmp.ge.f32.partialorder %v4842, 0.0
    %vm4851 = vcmp.ge.f32.partialorder %v4843, 0.0
    %vm4852 = vcmp.ge.f32.partialorder %v4844, 0.0
    %vm4853 = vcmp.ge.f32.partialorder %v4845, 0.0
    %v4854 = vmul.f32 %v4838, 0.25
    %v4855 = vmul.f32 %v4839, 0.25
    %v4856 = vmul.f32 %v4840, 0.25
    %v4857 = vmul.f32 %v4841, 0.25
    %v4858 = vmul.f32 %v4842, 0.25
    %v4859 = vmul.f32 %v4843, 0.25
    %v4860 = vmul.f32 %v4844, 0.25
    %v4861 = vmul.f32 %v4845, 0.25
    %v4862 = vsel %vm4846, %v4838, %v4854
    %v4863 = vsel %vm4847, %v4839, %v4855
    %v4864 = vsel %vm4848, %v4840, %v4856
    %v4865 = vsel %vm4849, %v4841, %v4857
    %v4866 = vsel %vm4850, %v4842, %v4858
    %v4867 = vsel %vm4851, %v4843, %v4859
    %v4868 = vsel %vm4852, %v4844, %v4860
    %v4869 = vsel %vm4853, %v4845, %v4861
    %v4870 = vmul.f32 %v4264, %v3266
    %v4871 = vmul.f32 %v4265, %v3266
    %v4872 = vmul.f32 %v4266, %v3269
    %v4873 = vmul.f32 %v4267, %v3269
    %v4874 = vadd.f32 %v4870, %v4872
    %v4875 = vadd.f32 %v4871, %v4873
    %v4876 = vmul.f32 %v4268, %v3274
    %v4877 = vmul.f32 %v4269, %v3274
    %v4878 = vadd.f32 %v4874, %v4876
    %v4879 = vadd.f32 %v4875, %v4877
    %v4880 = vmul.f32 %v4270, %v3279
    %v4881 = vmul.f32 %v4271, %v3279
    %v4882 = vadd.f32 %v4878, %v4880
    %v4883 = vadd.f32 %v4879, %v4881
    %v4884 = vadd.f32 %v4882, %v3284
    %v4885 = vadd.f32 %v4883, %v3284
    %v4886 = vmul.f32 %v4264, %v3287
    %v4887 = vmul.f32 %v4265, %v3287
    %v4888 = vmul.f32 %v4266, %v3290
    %v4889 = vmul.f32 %v4267, %v3290
    %v4890 = vadd.f32 %v4886, %v4888
    %v4891 = vadd.f32 %v4887, %v4889
    %v4892 = vmul.f32 %v4268, %v3295
    %v4893 = vmul.f32 %v4269, %v3295
    %v4894 = vadd.f32 %v4890, %v4892
    %v4895 = vadd.f32 %v4891, %v4893
    %v4896 = vmul.f32 %v4270, %v3300
    %v4897 = vmul.f32 %v4271, %v3300
    %v4898 = vadd.f32 %v4894, %v4896
    %v4899 = vadd.f32 %v4895, %v4897
    %v4900 = vadd.f32 %v4898, %v3305
    %v4901 = vadd.f32 %v4899, %v3305
    %v4902 = vmul.f32 %v4264, %v3308
    %v4903 = vmul.f32 %v4265, %v3308
    %v4904 = vmul.f32 %v4266, %v3311
    %v4905 = vmul.f32 %v4267, %v3311
    %v4906 = vadd.f32 %v4902, %v4904
    %v4907 = vadd.f32 %v4903, %v4905
    %v4908 = vmul.f32 %v4268, %v3316
    %v4909 = vmul.f32 %v4269, %v3316
    %v4910 = vadd.f32 %v4906, %v4908
    %v4911 = vadd.f32 %v4907, %v4909
    %v4912 = vmul.f32 %v4270, %v3321
    %v4913 = vmul.f32 %v4271, %v3321
    %v4914 = vadd.f32 %v4910, %v4912
    %v4915 = vadd.f32 %v4911, %v4913
    %v4916 = vadd.f32 %v4914, %v3326
    %v4917 = vadd.f32 %v4915, %v3326
    %v4918 = vmul.f32 %v4264, %v3329
    %v4919 = vmul.f32 %v4265, %v3329
    %v4920 = vmul.f32 %v4266, %v3332
    %v4921 = vmul.f32 %v4267, %v3332
    %v4922 = vadd.f32 %v4918, %v4920
    %v4923 = vadd.f32 %v4919, %v4921
    %v4924 = vmul.f32 %v4268, %v3337
    %v4925 = vmul.f32 %v4269, %v3337
    %v4926 = vadd.f32 %v4922, %v4924
    %v4927 = vadd.f32 %v4923, %v4925
    %v4928 = vmul.f32 %v4270, %v3342
    %v4929 = vmul.f32 %v4271, %v3342
    %v4930 = vadd.f32 %v4926, %v4928
    %v4931 = vadd.f32 %v4927, %v4929
    %v4932 = vadd.f32 %v4930, %v3347
    %v4933 = vadd.f32 %v4931, %v3347
    %v4934 = vadd.f32 %v4645, %v4884
    %v4935 = vadd.f32 %v4647, %v4885
    %v4936 = vadd.f32 %v4686, %v4900
    %v4937 = vadd.f32 %v4688, %v4901
    %v4938 = vadd.f32 %v4727, %v4916
    %v4939 = vadd.f32 %v4729, %v4917
    %v4940 = vadd.f32 %v4768, %v4932
    %v4941 = vadd.f32 %v4770, %v4933
    %vm4942 = vcmp.ge.f32.partialorder %v4934, 0.0
    %vm4943 = vcmp.ge.f32.partialorder %v4935, 0.0
    %vm4944 = vcmp.ge.f32.partialorder %v4936, 0.0
    %vm4945 = vcmp.ge.f32.partialorder %v4937, 0.0
    %vm4946 = vcmp.ge.f32.partialorder %v4938, 0.0
    %vm4947 = vcmp.ge.f32.partialorder %v4939, 0.0
    %vm4948 = vcmp.ge.f32.partialorder %v4940, 0.0
    %vm4949 = vcmp.ge.f32.partialorder %v4941, 0.0
    %v4950 = vmul.f32 %v4934, 0.25
    %v4951 = vmul.f32 %v4935, 0.25
    %v4952 = vmul.f32 %v4936, 0.25
    %v4953 = vmul.f32 %v4937, 0.25
    %v4954 = vmul.f32 %v4938, 0.25
    %v4955 = vmul.f32 %v4939, 0.25
    %v4956 = vmul.f32 %v4940, 0.25
    %v4957 = vmul.f32 %v4941, 0.25
    %v4958 = vsel %vm4942, %v4934, %v4950
    %v4959 = vsel %vm4943, %v4935, %v4951
    %v4960 = vsel %vm4944, %v4936, %v4952
    %v4961 = vsel %vm4945, %v4937, %v4953
    %v4962 = vsel %vm4946, %v4938, %v4954
    %v4963 = vsel %vm4947, %v4939, %v4955
    %v4964 = vsel %vm4948, %v4940, %v4956
    %v4965 = vsel %vm4949, %v4941, %v4957
    %v4966 = vadd.f32 %v4862, %v4958
    %v4967 = vadd.f32 %v4863, %v4959
    %v4968 = vadd.f32 %v4864, %v4960
    %v4969 = vadd.f32 %v4865, %v4961
    %v4970 = vadd.f32 %v4866, %v4962
    %v4971 = vadd.f32 %v4867, %v4963
    %v4972 = vadd.f32 %v4868, %v4964
    %v4973 = vadd.f32 %v4869, %v4965
    %v4974 = vadd.f32 %v4966, %v4264
    %v4975 = vadd.f32 %v4967, %v4265
    %v4976 = vadd.f32 %v4968, %v4266
    %v4977 = vadd.f32 %v4969, %v4267
    %v4978 = vadd.f32 %v4970, %v4268
    %v4979 = vadd.f32 %v4971, %v4269
    %v4980 = vadd.f32 %v4972, %v4270
    %v4981 = vadd.f32 %v4973, %v4271
    %v4982 = vmul.f32 %v4974, %v3398
    %v4983 = vmul.f32 %v4975, %v3398
    %v4984 = vmul.f32 %v4976, %v3401
    %v4985 = vmul.f32 %v4977, %v3401
    %v4986 = vadd.f32 %v4982, %v4984
    %v4987 = vadd.f32 %v4983, %v4985
    %v4988 = vmul.f32 %v4978, %v3406
    %v4989 = vmul.f32 %v4979, %v3406
    %v4990 = vadd.f32 %v4986, %v4988
    %v4991 = vadd.f32 %v4987, %v4989
    %v4992 = vmul.f32 %v4980, %v3411
    %v4993 = vmul.f32 %v4981, %v3411
    %v4994 = vadd.f32 %v4990, %v4992
    %v4995 = vadd.f32 %v4991, %v4993
    %v4996 = vadd.f32 %v4994, %v3416
    %v4997 = vadd.f32 %v4995, %v3416
    %v4998 = vmul.f32 %v4974, %v3419
    %v4999 = vmul.f32 %v4975, %v3419
    %v5000 = vmul.f32 %v4976, %v3422
    %v5001 = vmul.f32 %v4977, %v3422
    %v5002 = vadd.f32 %v4998, %v5000
    %v5003 = vadd.f32 %v4999, %v5001
    %v5004 = vmul.f32 %v4978, %v3427
    %v5005 = vmul.f32 %v4979, %v3427
    %v5006 = vadd.f32 %v5002, %v5004
    %v5007 = vadd.f32 %v5003, %v5005
    %v5008 = vmul.f32 %v4980, %v3432
    %v5009 = vmul.f32 %v4981, %v3432
    %v5010 = vadd.f32 %v5006, %v5008
    %v5011 = vadd.f32 %v5007, %v5009
    %v5012 = vadd.f32 %v5010, %v3437
    %v5013 = vadd.f32 %v5011, %v3437
    %v5014 = vmul.f32 %v4974, %v3440
    %v5015 = vmul.f32 %v4975, %v3440
    %v5016 = vmul.f32 %v4976, %v3443
    %v5017 = vmul.f32 %v4977, %v3443
    %v5018 = vadd.f32 %v5014, %v5016
    %v5019 = vadd.f32 %v5015, %v5017
    %v5020 = vmul.f32 %v4978, %v3448
    %v5021 = vmul.f32 %v4979, %v3448
    %v5022 = vadd.f32 %v5018, %v5020
    %v5023 = vadd.f32 %v5019, %v5021
    %v5024 = vmul.f32 %v4980, %v3453
    %v5025 = vmul.f32 %v4981, %v3453
    %v5026 = vadd.f32 %v5022, %v5024
    %v5027 = vadd.f32 %v5023, %v5025
    %v5028 = vadd.f32 %v5026, %v3458
    %v5029 = vadd.f32 %v5027, %v3458
    %v5030 = vmul.f32 %v4974, %v3461
    %v5031 = vmul.f32 %v4975, %v3461
    %v5032 = vmul.f32 %v4976, %v3464
    %v5033 = vmul.f32 %v4977, %v3464
    %v5034 = vadd.f32 %v5030, %v5032
    %v5035 = vadd.f32 %v5031, %v5033
    %v5036 = vmul.f32 %v4978, %v3469
    %v5037 = vmul.f32 %v4979, %v3469
    %v5038 = vadd.f32 %v5034, %v5036
    %v5039 = vadd.f32 %v5035, %v5037
    %v5040 = vmul.f32 %v4980, %v3474
    %v5041 = vmul.f32 %v4981, %v3474
    %v5042 = vadd.f32 %v5038, %v5040
    %v5043 = vadd.f32 %v5039, %v5041
    %v5044 = vadd.f32 %v5042, %v3479
    %v5045 = vadd.f32 %v5043, %v3479
    %v5046 = vadd.f32 %v4996, %v4264
    %v5047 = vadd.f32 %v4997, %v4265
    %v5048 = vadd.f32 %v5012, %v4266
    %v5049 = vadd.f32 %v5013, %v4267
    %v5050 = vadd.f32 %v5028, %v4268
    %v5051 = vadd.f32 %v5029, %v4269
    %v5052 = vadd.f32 %v5044, %v4270
    %v5053 = vadd.f32 %v5045, %v4271
    %v5054 = vpack.c.bf16 %v5046, %v5046
    %v5055 = vpack.c.bf16 %v5047, %v5047
    %v5056 = vpack.c.bf16 %v5048, %v5048
    %v5057 = vpack.c.bf16 %v5049, %v5049
    %v5058 = vpack.c.bf16 %v5050, %v5050
    %v5059 = vpack.c.bf16 %v5051, %v5051
    %v5060 = vpack.c.bf16 %v5052, %v5052
    %v5061 = vpack.c.bf16 %v5053, %v5053
    %5062 = vmatprep.subr.bf16.mxu0 %v1121
    %5063 = vmatpush1.bf16.msra.mxu0 %v1120
    %5064 = vmatprep.subr.bf16.mxu0 %v1123
    %5065 = vmatpush1.bf16.msra.mxu0 %v1122
    %5066 = vmatprep.subr.bf16.mxu0 %v1125
    %5067 = vmatpush1.bf16.msra.mxu0 %v1124
    %5068 = vmatprep.subr.bf16.mxu0 %v1127
    %5069 = vmatpush1.bf16.msra.mxu0 %v1126
    %5070 = vmatprep.subr.bf16.mxu0 %v1129
    %5071 = vmatpush1.bf16.msra.mxu0 %v1128
    %5072 = vmatprep.subr.bf16.mxu0 %v1131
    %5073 = vmatpush1.bf16.msra.mxu0 %v1130
    %5074 = vmatprep.subr.bf16.mxu0 %v1133
    %5075 = vmatpush1.bf16.msra.mxu0 %v1132
    %5076 = vmatprep.subr.bf16.mxu0 %v1135
    %5077 = vmatpush1.bf16.msra.mxu0 %v1134
    %5078 = vmatprep.subr.bf16.mxu0 %v1137
    %5079 = vmatpush1.bf16.msra.mxu0 %v1136
    %5080 = vmatprep.subr.bf16.mxu0 %v1139
    %5081 = vmatpush1.bf16.msra.mxu0 %v1138
    %5082 = vmatprep.subr.bf16.mxu0 %v1141
    %5083 = vmatpush1.bf16.msra.mxu0 %v1140
    %5084 = vmatprep.subr.bf16.mxu0 %v1143
    %5085 = vmatpush1.bf16.msra.mxu0 %v1142
    %5086 = vmatprep.subr.bf16.mxu0 %v1145
    %5087 = vmatpush1.bf16.msra.mxu0 %v1144
    %5088 = vmatprep.subr.bf16.mxu0 %v1147
    %5089 = vmatpush1.bf16.msra.mxu0 %v1146
    %5090 = vmatprep.subr.bf16.mxu0 %v1149
    %5091 = vmatpush1.bf16.msra.mxu0 %v1148
    %5092 = vmatprep.subr.bf16.mxu0 %v1151
    %5093 = vmatpush1.bf16.msra.mxu0 %v1150
    %5094 = vmatprep.mubr.bf16.mxu0 %v5055
    %5095 = vmatmul.mubr.bf16.gmra.mrb[0].mxu0 %v5054
    %v5096 = vpop.f32.mrb[0].mxu0
    %v5097 = vadd.f32 0.0, %v5096
    %v5098 = vpop.f32.mrb[0].mxu0
    %v5099 = vadd.f32 0.0, %v5098
    %v5100 = vpop.f32.mrb[0].mxu0
    %v5101 = vpop.f32.mrb[0].mxu0
    %5102 = vdwg.mxu0
    %5103 = vmatprep.subr.bf16.mxu0 %v1153
    %5104 = vmatpush1.bf16.msra.mxu0 %v1152
    %5105 = vmatprep.subr.bf16.mxu0 %v1155
    %5106 = vmatpush1.bf16.msra.mxu0 %v1154
    %5107 = vmatprep.subr.bf16.mxu0 %v1157
    %5108 = vmatpush1.bf16.msra.mxu0 %v1156
    %5109 = vmatprep.subr.bf16.mxu0 %v1159
    %5110 = vmatpush1.bf16.msra.mxu0 %v1158
    %5111 = vmatprep.subr.bf16.mxu0 %v1161
    %5112 = vmatpush1.bf16.msra.mxu0 %v1160
    %5113 = vmatprep.subr.bf16.mxu0 %v1163
    %5114 = vmatpush1.bf16.msra.mxu0 %v1162
    %5115 = vmatprep.subr.bf16.mxu0 %v1165
    %5116 = vmatpush1.bf16.msra.mxu0 %v1164
    %5117 = vmatprep.subr.bf16.mxu0 %v1167
    %5118 = vmatpush1.bf16.msra.mxu0 %v1166
    %5119 = vmatprep.subr.bf16.mxu0 %v1169
    %5120 = vmatpush1.bf16.msra.mxu0 %v1168
    %5121 = vmatprep.subr.bf16.mxu0 %v1171
    %5122 = vmatpush1.bf16.msra.mxu0 %v1170
    %5123 = vmatprep.subr.bf16.mxu0 %v1173
    %5124 = vmatpush1.bf16.msra.mxu0 %v1172
    %5125 = vmatprep.subr.bf16.mxu0 %v1175
    %5126 = vmatpush1.bf16.msra.mxu0 %v1174
    %5127 = vmatprep.subr.bf16.mxu0 %v1177
    %5128 = vmatpush1.bf16.msra.mxu0 %v1176
    %5129 = vmatprep.subr.bf16.mxu0 %v1179
    %5130 = vmatpush1.bf16.msra.mxu0 %v1178
    %5131 = vmatprep.subr.bf16.mxu0 %v1181
    %5132 = vmatpush1.bf16.msra.mxu0 %v1180
    %5133 = vmatprep.subr.bf16.mxu0 %v1183
    %5134 = vmatpush1.bf16.msra.mxu0 %v1182
    %5135 = vmatprep.mubr.bf16.mxu0 %v5057
    %5136 = vmatmul.mubr.bf16.gmra.mrb[0].mxu0 %v5056
    %v5137 = vpop.f32.mrb[0].mxu0
    %v5138 = vadd.f32 %v5097, %v5137
    %v5139 = vpop.f32.mrb[0].mxu0
    %v5140 = vadd.f32 %v5099, %v5139
    %v5141 = vpop.f32.mrb[0].mxu0
    %v5142 = vpop.f32.mrb[0].mxu0
    %5143 = vdwg.mxu0
    %5144 = vmatprep.subr.bf16.mxu0 %v1185
    %5145 = vmatpush1.bf16.msra.mxu0 %v1184
    %5146 = vmatprep.subr.bf16.mxu0 %v1187
    %5147 = vmatpush1.bf16.msra.mxu0 %v1186
    %5148 = vmatprep.subr.bf16.mxu0 %v1189
    %5149 = vmatpush1.bf16.msra.mxu0 %v1188
    %5150 = vmatprep.subr.bf16.mxu0 %v1191
    %5151 = vmatpush1.bf16.msra.mxu0 %v1190
    %5152 = vmatprep.subr.bf16.mxu0 %v1193
    %5153 = vmatpush1.bf16.msra.mxu0 %v1192
    %5154 = vmatprep.subr.bf16.mxu0 %v1195
    %5155 = vmatpush1.bf16.msra.mxu0 %v1194
    %5156 = vmatprep.subr.bf16.mxu0 %v1197
    %5157 = vmatpush1.bf16.msra.mxu0 %v1196
    %5158 = vmatprep.subr.bf16.mxu0 %v1199
    %5159 = vmatpush1.bf16.msra.mxu0 %v1198
    %5160 = vmatprep.subr.bf16.mxu0 %v1201
    %5161 = vmatpush1.bf16.msra.mxu0 %v1200
    %5162 = vmatprep.subr.bf16.mxu0 %v1203
    %5163 = vmatpush1.bf16.msra.mxu0 %v1202
    %5164 = vmatprep.subr.bf16.mxu0 %v1205
    %5165 = vmatpush1.bf16.msra.mxu0 %v1204
    %5166 = vmatprep.subr.bf16.mxu0 %v1207
    %5167 = vmatpush1.bf16.msra.mxu0 %v1206
    %5168 = vmatprep.subr.bf16.mxu0 %v1209
    %5169 = vmatpush1.bf16.msra.mxu0 %v1208
    %5170 = vmatprep.subr.bf16.mxu0 %v1211
    %5171 = vmatpush1.bf16.msra.mxu0 %v1210
    %5172 = vmatprep.subr.bf16.mxu0 %v1213
    %5173 = vmatpush1.bf16.msra.mxu0 %v1212
    %5174 = vmatprep.subr.bf16.mxu0 %v1215
    %5175 = vmatpush1.bf16.msra.mxu0 %v1214
    %5176 = vmatprep.mubr.bf16.mxu0 %v5059
    %5177 = vmatmul.mubr.bf16.gmra.mrb[0].mxu0 %v5058
    %v5178 = vpop.f32.mrb[0].mxu0
    %v5179 = vadd.f32 %v5138, %v5178
    %v5180 = vpop.f32.mrb[0].mxu0
    %v5181 = vadd.f32 %v5140, %v5180
    %v5182 = vpop.f32.mrb[0].mxu0
    %v5183 = vpop.f32.mrb[0].mxu0
    %5184 = vdwg.mxu0
    %5185 = vmatprep.subr.bf16.mxu0 %v1217
    %5186 = vmatpush1.bf16.msra.mxu0 %v1216
    %5187 = vmatprep.subr.bf16.mxu0 %v1219
    %5188 = vmatpush1.bf16.msra.mxu0 %v1218
    %5189 = vmatprep.subr.bf16.mxu0 %v1221
    %5190 = vmatpush1.bf16.msra.mxu0 %v1220
    %5191 = vmatprep.subr.bf16.mxu0 %v1223
    %5192 = vmatpush1.bf16.msra.mxu0 %v1222
    %5193 = vmatprep.subr.bf16.mxu0 %v1225
    %5194 = vmatpush1.bf16.msra.mxu0 %v1224
    %5195 = vmatprep.subr.bf16.mxu0 %v1227
    %5196 = vmatpush1.bf16.msra.mxu0 %v1226
    %5197 = vmatprep.subr.bf16.mxu0 %v1229
    %5198 = vmatpush1.bf16.msra.mxu0 %v1228
    %5199 = vmatprep.subr.bf16.mxu0 %v1231
    %5200 = vmatpush1.bf16.msra.mxu0 %v1230
    %5201 = vmatprep.subr.bf16.mxu0 %v1233
    %5202 = vmatpush1.bf16.msra.mxu0 %v1232
    %5203 = vmatprep.subr.bf16.mxu0 %v1235
    %5204 = vmatpush1.bf16.msra.mxu0 %v1234
    %5205 = vmatprep.subr.bf16.mxu0 %v1237
    %5206 = vmatpush1.bf16.msra.mxu0 %v1236
    %5207 = vmatprep.subr.bf16.mxu0 %v1239
    %5208 = vmatpush1.bf16.msra.mxu0 %v1238
    %5209 = vmatprep.subr.bf16.mxu0 %v1241
    %5210 = vmatpush1.bf16.msra.mxu0 %v1240
    %5211 = vmatprep.subr.bf16.mxu0 %v1243
    %5212 = vmatpush1.bf16.msra.mxu0 %v1242
    %5213 = vmatprep.subr.bf16.mxu0 %v1245
    %5214 = vmatpush1.bf16.msra.mxu0 %v1244
    %5215 = vmatprep.subr.bf16.mxu0 %v1247
    %5216 = vmatpush1.bf16.msra.mxu0 %v1246
    %5217 = vmatprep.mubr.bf16.mxu0 %v5061
    %5218 = vmatmul.mubr.bf16.gmra.mrb[0].mxu0 %v5060
    %v5219 = vpop.f32.mrb[0].mxu0
    %v5220 = vadd.f32 %v5179, %v5219
    %v5221 = vpop.f32.mrb[0].mxu0
    %v5222 = vadd.f32 %v5181, %v5221
    %v5223 = vpop.f32.mrb[0].mxu0
    %v5224 = vpop.f32.mrb[0].mxu0
    %5225 = vdwg.mxu0
    %v5226 = vpack.c.bf16 %v5220, %v5220
    %v5227 = vpack.c.bf16 %v5222, %v5222
    %5228 = vmatprep.subr.bf16.mxu0 %v2311
    %5229 = vmatpush1.bf16.msra.mxu0 %v2310
    %5230 = vmatprep.subr.bf16.mxu0 %v2327
    %5231 = vmatpush1.bf16.msra.mxu0 %v2326
    %5232 = vmatprep.subr.bf16.mxu0 %v2343
    %5233 = vmatpush1.bf16.msra.mxu0 %v2342
    %5234 = vmatprep.subr.bf16.mxu0 %v2359
    %5235 = vmatpush1.bf16.msra.mxu0 %v2358
    %5236 = vmatprep.subr.bf16.mxu0 %v2375
    %5237 = vmatpush1.bf16.msra.mxu0 %v2374
    %5238 = vmatprep.subr.bf16.mxu0 %v2391
    %5239 = vmatpush1.bf16.msra.mxu0 %v2390
    %5240 = vmatprep.subr.bf16.mxu0 %v2407
    %5241 = vmatpush1.bf16.msra.mxu0 %v2406
    %5242 = vmatprep.subr.bf16.mxu0 %v2423
    %5243 = vmatpush1.bf16.msra.mxu0 %v2422
    %5244 = vmatprep.subr.bf16.mxu0 %v2439
    %5245 = vmatpush1.bf16.msra.mxu0 %v2438
    %5246 = vmatprep.subr.bf16.mxu0 %v2455
    %5247 = vmatpush1.bf16.msra.mxu0 %v2454
    %5248 = vmatprep.subr.bf16.mxu0 %v2471
    %5249 = vmatpush1.bf16.msra.mxu0 %v2470
    %5250 = vmatprep.subr.bf16.mxu0 %v2487
    %5251 = vmatpush1.bf16.msra.mxu0 %v2486
    %5252 = vmatprep.subr.bf16.mxu0 %v2503
    %5253 = vmatpush1.bf16.msra.mxu0 %v2502
    %5254 = vmatprep.subr.bf16.mxu0 %v2519
    %5255 = vmatpush1.bf16.msra.mxu0 %v2518
    %5256 = vmatprep.subr.bf16.mxu0 %v2535
    %5257 = vmatpush1.bf16.msra.mxu0 %v2534
    %5258 = vmatprep.subr.bf16.mxu0 %v2551
    %5259 = vmatpush1.bf16.msra.mxu0 %v2550
    %5260 = vmatprep.mubr.bf16.mxu0 %v5227
    %5261 = vmatmul.mubr.bf16.gmra.mrb[0].mxu0 %v5226
    %v5262 = vpop.f32.mrb[0].mxu0
    %v5263 = vadd.f32 0.0, %v5262
    %v5264 = vpop.f32.mrb[0].mxu0
    %v5265 = vadd.f32 0.0, %v5264
    %v5266 = vpop.f32.mrb[0].mxu0
    %v5267 = vpop.f32.mrb[0].mxu0
    %5268 = vdwg.mxu0
    %5269 = vmatprep.subr.bf16.mxu0 %v2313
    %5270 = vmatpush1.bf16.msra.mxu0 %v2312
    %5271 = vmatprep.subr.bf16.mxu0 %v2329
    %5272 = vmatpush1.bf16.msra.mxu0 %v2328
    %5273 = vmatprep.subr.bf16.mxu0 %v2345
    %5274 = vmatpush1.bf16.msra.mxu0 %v2344
    %5275 = vmatprep.subr.bf16.mxu0 %v2361
    %5276 = vmatpush1.bf16.msra.mxu0 %v2360
    %5277 = vmatprep.subr.bf16.mxu0 %v2377
    %5278 = vmatpush1.bf16.msra.mxu0 %v2376
    %5279 = vmatprep.subr.bf16.mxu0 %v2393
    %5280 = vmatpush1.bf16.msra.mxu0 %v2392
    %5281 = vmatprep.subr.bf16.mxu0 %v2409
    %5282 = vmatpush1.bf16.msra.mxu0 %v2408
    %5283 = vmatprep.subr.bf16.mxu0 %v2425
    %5284 = vmatpush1.bf16.msra.mxu0 %v2424
    %5285 = vmatprep.subr.bf16.mxu0 %v2441
    %5286 = vmatpush1.bf16.msra.mxu0 %v2440
    %5287 = vmatprep.subr.bf16.mxu0 %v2457
    %5288 = vmatpush1.bf16.msra.mxu0 %v2456
    %5289 = vmatprep.subr.bf16.mxu0 %v2473
    %5290 = vmatpush1.bf16.msra.mxu0 %v2472
    %5291 = vmatprep.subr.bf16.mxu0 %v2489
    %5292 = vmatpush1.bf16.msra.mxu0 %v2488
    %5293 = vmatprep.subr.bf16.mxu0 %v2505
    %5294 = vmatpush1.bf16.msra.mxu0 %v2504
    %5295 = vmatprep.subr.bf16.mxu0 %v2521
    %5296 = vmatpush1.bf16.msra.mxu0 %v2520
    %5297 = vmatprep.subr.bf16.mxu0 %v2537
    %5298 = vmatpush1.bf16.msra.mxu0 %v2536
    %5299 = vmatprep.subr.bf16.mxu0 %v2553
    %5300 = vmatpush1.bf16.msra.mxu0 %v2552
    %5301 = vmatprep.mubr.bf16.mxu0 %v5227
    %5302 = vmatmul.mubr.bf16.gmra.mrb[0].mxu0 %v5226
    %v5303 = vpop.f32.mrb[0].mxu0
    %v5304 = vadd.f32 0.0, %v5303
    %v5305 = vpop.f32.mrb[0].mxu0
    %v5306 = vadd.f32 0.0, %v5305
    %v5307 = vpop.f32.mrb[0].mxu0
    %v5308 = vpop.f32.mrb[0].mxu0
    %5309 = vdwg.mxu0
    %5310 = vmatprep.subr.bf16.mxu0 %v2315
    %5311 = vmatpush1.bf16.msra.mxu0 %v2314
    %5312 = vmatprep.subr.bf16.mxu0 %v2331
    %5313 = vmatpush1.bf16.msra.mxu0 %v2330
    %5314 = vmatprep.subr.bf16.mxu0 %v2347
    %5315 = vmatpush1.bf16.msra.mxu0 %v2346
    %5316 = vmatprep.subr.bf16.mxu0 %v2363
    %5317 = vmatpush1.bf16.msra.mxu0 %v2362
    %5318 = vmatprep.subr.bf16.mxu0 %v2379
    %5319 = vmatpush1.bf16.msra.mxu0 %v2378
    %5320 = vmatprep.subr.bf16.mxu0 %v2395
    %5321 = vmatpush1.bf16.msra.mxu0 %v2394
    %5322 = vmatprep.subr.bf16.mxu0 %v2411
    %5323 = vmatpush1.bf16.msra.mxu0 %v2410
    %5324 = vmatprep.subr.bf16.mxu0 %v2427
    %5325 = vmatpush1.bf16.msra.mxu0 %v2426
    %5326 = vmatprep.subr.bf16.mxu0 %v2443
    %5327 = vmatpush1.bf16.msra.mxu0 %v2442
    %5328 = vmatprep.subr.bf16.mxu0 %v2459
    %5329 = vmatpush1.bf16.msra.mxu0 %v2458
    %5330 = vmatprep.subr.bf16.mxu0 %v2475
    %5331 = vmatpush1.bf16.msra.mxu0 %v2474
    %5332 = vmatprep.subr.bf16.mxu0 %v2491
    %5333 = vmatpush1.bf16.msra.mxu0 %v2490
    %5334 = vmatprep.subr.bf16.mxu0 %v2507
    %5335 = vmatpush1.bf16.msra.mxu0 %v2506
    %5336 = vmatprep.subr.bf16.mxu0 %v2523
    %5337 = vmatpush1.bf16.msra.mxu0 %v2522
    %5338 = vmatprep.subr.bf16.mxu0 %v2539
    %5339 = vmatpush1.bf16.msra.mxu0 %v2538
    %5340 = vmatprep.subr.bf16.mxu0 %v2555
    %5341 = vmatpush1.bf16.msra.mxu0 %v2554
    %5342 = vmatprep.mubr.bf16.mxu0 %v5227
    %5343 = vmatmul.mubr.bf16.gmra.mrb[0].mxu0 %v5226
    %v5344 = vpop.f32.mrb[0].mxu0
    %v5345 = vadd.f32 0.0, %v5344
    %v5346 = vpop.f32.mrb[0].mxu0
    %v5347 = vadd.f32 0.0, %v5346
    %v5348 = vpop.f32.mrb[0].mxu0
    %v5349 = vpop.f32.mrb[0].mxu0
    %5350 = vdwg.mxu0
    %5351 = vmatprep.subr.bf16.mxu0 %v2317
    %5352 = vmatpush1.bf16.msra.mxu0 %v2316
    %5353 = vmatprep.subr.bf16.mxu0 %v2333
    %5354 = vmatpush1.bf16.msra.mxu0 %v2332
    %5355 = vmatprep.subr.bf16.mxu0 %v2349
    %5356 = vmatpush1.bf16.msra.mxu0 %v2348
    %5357 = vmatprep.subr.bf16.mxu0 %v2365
    %5358 = vmatpush1.bf16.msra.mxu0 %v2364
    %5359 = vmatprep.subr.bf16.mxu0 %v2381
    %5360 = vmatpush1.bf16.msra.mxu0 %v2380
    %5361 = vmatprep.subr.bf16.mxu0 %v2397
    %5362 = vmatpush1.bf16.msra.mxu0 %v2396
    %5363 = vmatprep.subr.bf16.mxu0 %v2413
    %5364 = vmatpush1.bf16.msra.mxu0 %v2412
    %5365 = vmatprep.subr.bf16.mxu0 %v2429
    %5366 = vmatpush1.bf16.msra.mxu0 %v2428
    %5367 = vmatprep.subr.bf16.mxu0 %v2445
    %5368 = vmatpush1.bf16.msra.mxu0 %v2444
    %5369 = vmatprep.subr.bf16.mxu0 %v2461
    %5370 = vmatpush1.bf16.msra.mxu0 %v2460
    %5371 = vmatprep.subr.bf16.mxu0 %v2477
    %5372 = vmatpush1.bf16.msra.mxu0 %v2476
    %5373 = vmatprep.subr.bf16.mxu0 %v2493
    %5374 = vmatpush1.bf16.msra.mxu0 %v2492
    %5375 = vmatprep.subr.bf16.mxu0 %v2509
    %5376 = vmatpush1.bf16.msra.mxu0 %v2508
    %5377 = vmatprep.subr.bf16.mxu0 %v2525
    %5378 = vmatpush1.bf16.msra.mxu0 %v2524
    %5379 = vmatprep.subr.bf16.mxu0 %v2541
    %5380 = vmatpush1.bf16.msra.mxu0 %v2540
    %5381 = vmatprep.subr.bf16.mxu0 %v2557
    %5382 = vmatpush1.bf16.msra.mxu0 %v2556
    %5383 = vmatprep.mubr.bf16.mxu0 %v5227
    %5384 = vmatmul.mubr.bf16.gmra.mrb[0].mxu0 %v5226
    %v5385 = vpop.f32.mrb[0].mxu0
    %v5386 = vadd.f32 0.0, %v5385
    %v5387 = vpop.f32.mrb[0].mxu0
    %v5388 = vadd.f32 0.0, %v5387
    %v5389 = vpop.f32.mrb[0].mxu0
    %v5390 = vpop.f32.mrb[0].mxu0
    %5391 = vdwg.mxu0
    %5392 = vmatprep.subr.bf16.mxu0 %v2319
    %5393 = vmatpush1.bf16.msra.mxu0 %v2318
    %5394 = vmatprep.subr.bf16.mxu0 %v2335
    %5395 = vmatpush1.bf16.msra.mxu0 %v2334
    %5396 = vmatprep.subr.bf16.mxu0 %v2351
    %5397 = vmatpush1.bf16.msra.mxu0 %v2350
    %5398 = vmatprep.subr.bf16.mxu0 %v2367
    %5399 = vmatpush1.bf16.msra.mxu0 %v2366
    %5400 = vmatprep.subr.bf16.mxu0 %v2383
    %5401 = vmatpush1.bf16.msra.mxu0 %v2382
    %5402 = vmatprep.subr.bf16.mxu0 %v2399
    %5403 = vmatpush1.bf16.msra.mxu0 %v2398
    %5404 = vmatprep.subr.bf16.mxu0 %v2415
    %5405 = vmatpush1.bf16.msra.mxu0 %v2414
    %5406 = vmatprep.subr.bf16.mxu0 %v2431
    %5407 = vmatpush1.bf16.msra.mxu0 %v2430
    %5408 = vmatprep.subr.bf16.mxu0 %v2447
    %5409 = vmatpush1.bf16.msra.mxu0 %v2446
    %5410 = vmatprep.subr.bf16.mxu0 %v2463
    %5411 = vmatpush1.bf16.msra.mxu0 %v2462
    %5412 = vmatprep.subr.bf16.mxu0 %v2479
    %5413 = vmatpush1.bf16.msra.mxu0 %v2478
    %5414 = vmatprep.subr.bf16.mxu0 %v2495
    %5415 = vmatpush1.bf16.msra.mxu0 %v2494
    %5416 = vmatprep.subr.bf16.mxu0 %v2511
    %5417 = vmatpush1.bf16.msra.mxu0 %v2510
    %5418 = vmatprep.subr.bf16.mxu0 %v2527
    %5419 = vmatpush1.bf16.msra.mxu0 %v2526
    %5420 = vmatprep.subr.bf16.mxu0 %v2543
    %5421 = vmatpush1.bf16.msra.mxu0 %v2542
    %5422 = vmatprep.subr.bf16.mxu0 %v2559
    %5423 = vmatpush1.bf16.msra.mxu0 %v2558
    %5424 = vmatprep.mubr.bf16.mxu0 %v5227
    %5425 = vmatmul.mubr.bf16.gmra.mrb[0].mxu0 %v5226
    %v5426 = vpop.f32.mrb[0].mxu0
    %v5427 = vadd.f32 0.0, %v5426
    %v5428 = vpop.f32.mrb[0].mxu0
    %v5429 = vadd.f32 0.0, %v5428
    %v5430 = vpop.f32.mrb[0].mxu0
    %v5431 = vpop.f32.mrb[0].mxu0
    %5432 = vdwg.mxu0
    %5433 = vmatprep.subr.bf16.mxu0 %v2321
    %5434 = vmatpush1.bf16.msra.mxu0 %v2320
    %5435 = vmatprep.subr.bf16.mxu0 %v2337
    %5436 = vmatpush1.bf16.msra.mxu0 %v2336
    %5437 = vmatprep.subr.bf16.mxu0 %v2353
    %5438 = vmatpush1.bf16.msra.mxu0 %v2352
    %5439 = vmatprep.subr.bf16.mxu0 %v2369
    %5440 = vmatpush1.bf16.msra.mxu0 %v2368
    %5441 = vmatprep.subr.bf16.mxu0 %v2385
    %5442 = vmatpush1.bf16.msra.mxu0 %v2384
    %5443 = vmatprep.subr.bf16.mxu0 %v2401
    %5444 = vmatpush1.bf16.msra.mxu0 %v2400
    %5445 = vmatprep.subr.bf16.mxu0 %v2417
    %5446 = vmatpush1.bf16.msra.mxu0 %v2416
    %5447 = vmatprep.subr.bf16.mxu0 %v2433
    %5448 = vmatpush1.bf16.msra.mxu0 %v2432
    %5449 = vmatprep.subr.bf16.mxu0 %v2449
    %5450 = vmatpush1.bf16.msra.mxu0 %v2448
    %5451 = vmatprep.subr.bf16.mxu0 %v2465
    %5452 = vmatpush1.bf16.msra.mxu0 %v2464
    %5453 = vmatprep.subr.bf16.mxu0 %v2481
    %5454 = vmatpush1.bf16.msra.mxu0 %v2480
    %5455 = vmatprep.subr.bf16.mxu0 %v2497
    %5456 = vmatpush1.bf16.msra.mxu0 %v2496
    %5457 = vmatprep.subr.bf16.mxu0 %v2513
    %5458 = vmatpush1.bf16.msra.mxu0 %v2512
    %5459 = vmatprep.subr.bf16.mxu0 %v2529
    %5460 = vmatpush1.bf16.msra.mxu0 %v2528
    %5461 = vmatprep.subr.bf16.mxu0 %v2545
    %5462 = vmatpush1.bf16.msra.mxu0 %v2544
    %5463 = vmatprep.subr.bf16.mxu0 %v2561
    %5464 = vmatpush1.bf16.msra.mxu0 %v2560
    %5465 = vmatprep.mubr.bf16.mxu0 %v5227
    %5466 = vmatmul.mubr.bf16.gmra.mrb[0].mxu0 %v5226
    %v5467 = vpop.f32.mrb[0].mxu0
    %v5468 = vadd.f32 0.0, %v5467
    %v5469 = vpop.f32.mrb[0].mxu0
    %v5470 = vadd.f32 0.0, %v5469
    %v5471 = vpop.f32.mrb[0].mxu0
    %v5472 = vpop.f32.mrb[0].mxu0
    %5473 = vdwg.mxu0
    %5474 = vmatprep.subr.bf16.mxu0 %v2323
    %5475 = vmatpush1.bf16.msra.mxu0 %v2322
    %5476 = vmatprep.subr.bf16.mxu0 %v2339
    %5477 = vmatpush1.bf16.msra.mxu0 %v2338
    %5478 = vmatprep.subr.bf16.mxu0 %v2355
    %5479 = vmatpush1.bf16.msra.mxu0 %v2354
    %5480 = vmatprep.subr.bf16.mxu0 %v2371
    %5481 = vmatpush1.bf16.msra.mxu0 %v2370
    %5482 = vmatprep.subr.bf16.mxu0 %v2387
    %5483 = vmatpush1.bf16.msra.mxu0 %v2386
    %5484 = vmatprep.subr.bf16.mxu0 %v2403
    %5485 = vmatpush1.bf16.msra.mxu0 %v2402
    %5486 = vmatprep.subr.bf16.mxu0 %v2419
    %5487 = vmatpush1.bf16.msra.mxu0 %v2418
    %5488 = vmatprep.subr.bf16.mxu0 %v2435
    %5489 = vmatpush1.bf16.msra.mxu0 %v2434
    %5490 = vmatprep.subr.bf16.mxu0 %v2451
    %5491 = vmatpush1.bf16.msra.mxu0 %v2450
    %5492 = vmatprep.subr.bf16.mxu0 %v2467
    %5493 = vmatpush1.bf16.msra.mxu0 %v2466
    %5494 = vmatprep.subr.bf16.mxu0 %v2483
    %5495 = vmatpush1.bf16.msra.mxu0 %v2482
    %5496 = vmatprep.subr.bf16.mxu0 %v2499
    %5497 = vmatpush1.bf16.msra.mxu0 %v2498
    %5498 = vmatprep.subr.bf16.mxu0 %v2515
    %5499 = vmatpush1.bf16.msra.mxu0 %v2514
    %5500 = vmatprep.subr.bf16.mxu0 %v2531
    %5501 = vmatpush1.bf16.msra.mxu0 %v2530
    %5502 = vmatprep.subr.bf16.mxu0 %v2547
    %5503 = vmatpush1.bf16.msra.mxu0 %v2546
    %5504 = vmatprep.subr.bf16.mxu0 %v2563
    %5505 = vmatpush1.bf16.msra.mxu0 %v2562
    %5506 = vmatprep.mubr.bf16.mxu0 %v5227
    %5507 = vmatmul.mubr.bf16.gmra.mrb[0].mxu0 %v5226
    %v5508 = vpop.f32.mrb[0].mxu0
    %v5509 = vadd.f32 0.0, %v5508
    %v5510 = vpop.f32.mrb[0].mxu0
    %v5511 = vadd.f32 0.0, %v5510
    %v5512 = vpop.f32.mrb[0].mxu0
    %v5513 = vpop.f32.mrb[0].mxu0
    %5514 = vdwg.mxu0
    %5515 = vmatprep.subr.bf16.mxu0 %v2325
    %5516 = vmatpush1.bf16.msra.mxu0 %v2324
    %5517 = vmatprep.subr.bf16.mxu0 %v2341
    %5518 = vmatpush1.bf16.msra.mxu0 %v2340
    %5519 = vmatprep.subr.bf16.mxu0 %v2357
    %5520 = vmatpush1.bf16.msra.mxu0 %v2356
    %5521 = vmatprep.subr.bf16.mxu0 %v2373
    %5522 = vmatpush1.bf16.msra.mxu0 %v2372
    %5523 = vmatprep.subr.bf16.mxu0 %v2389
    %5524 = vmatpush1.bf16.msra.mxu0 %v2388
    %5525 = vmatprep.subr.bf16.mxu0 %v2405
    %5526 = vmatpush1.bf16.msra.mxu0 %v2404
    %5527 = vmatprep.subr.bf16.mxu0 %v2421
    %5528 = vmatpush1.bf16.msra.mxu0 %v2420
    %5529 = vmatprep.subr.bf16.mxu0 %v2437
    %5530 = vmatpush1.bf16.msra.mxu0 %v2436
    %5531 = vmatprep.subr.bf16.mxu0 %v2453
    %5532 = vmatpush1.bf16.msra.mxu0 %v2452
    %5533 = vmatprep.subr.bf16.mxu0 %v2469
    %5534 = vmatpush1.bf16.msra.mxu0 %v2468
    %5535 = vmatprep.subr.bf16.mxu0 %v2485
    %5536 = vmatpush1.bf16.msra.mxu0 %v2484
    %5537 = vmatprep.subr.bf16.mxu0 %v2501
    %5538 = vmatpush1.bf16.msra.mxu0 %v2500
    %5539 = vmatprep.subr.bf16.mxu0 %v2517
    %5540 = vmatpush1.bf16.msra.mxu0 %v2516
    %5541 = vmatprep.subr.bf16.mxu0 %v2533
    %5542 = vmatpush1.bf16.msra.mxu0 %v2532
    %5543 = vmatprep.subr.bf16.mxu0 %v2549
    %5544 = vmatpush1.bf16.msra.mxu0 %v2548
    %5545 = vmatprep.subr.bf16.mxu0 %v2565
    %5546 = vmatpush1.bf16.msra.mxu0 %v2564
    %5547 = vmatprep.mubr.bf16.mxu0 %v5227
    %5548 = vmatmul.mubr.bf16.gmra.mrb[0].mxu0 %v5226
    %v5549 = vpop.f32.mrb[0].mxu0
    %v5550 = vadd.f32 0.0, %v5549
    %v5551 = vpop.f32.mrb[0].mxu0
    %v5552 = vadd.f32 0.0, %v5551
    %v5553 = vpop.f32.mrb[0].mxu0
    %v5554 = vpop.f32.mrb[0].mxu0
    %5555 = vdwg.mxu0
    %v5556 = vmul.f32 %v5046, %v3150
    %v5557 = vmul.f32 %v5047, %v3150
    %v5558 = vmul.f32 %v5048, %v3153
    %v5559 = vmul.f32 %v5049, %v3153
    %v5560 = vadd.f32 %v5556, %v5558
    %v5561 = vadd.f32 %v5557, %v5559
    %v5562 = vmul.f32 %v5050, %v3158
    %v5563 = vmul.f32 %v5051, %v3158
    %v5564 = vadd.f32 %v5560, %v5562
    %v5565 = vadd.f32 %v5561, %v5563
    %v5566 = vmul.f32 %v5052, %v3163
    %v5567 = vmul.f32 %v5053, %v3163
    %v5568 = vadd.f32 %v5564, %v5566
    %v5569 = vadd.f32 %v5565, %v5567
    %v5570 = vadd.f32 %v5568, %v3168
    %v5571 = vadd.f32 %v5569, %v3168
    %v5572 = vmul.f32 %v5046, %v3171
    %v5573 = vmul.f32 %v5047, %v3171
    %v5574 = vmul.f32 %v5048, %v3174
    %v5575 = vmul.f32 %v5049, %v3174
    %v5576 = vadd.f32 %v5572, %v5574
    %v5577 = vadd.f32 %v5573, %v5575
    %v5578 = vmul.f32 %v5050, %v3179
    %v5579 = vmul.f32 %v5051, %v3179
    %v5580 = vadd.f32 %v5576, %v5578
    %v5581 = vadd.f32 %v5577, %v5579
    %v5582 = vmul.f32 %v5052, %v3184
    %v5583 = vmul.f32 %v5053, %v3184
    %v5584 = vadd.f32 %v5580, %v5582
    %v5585 = vadd.f32 %v5581, %v5583
    %v5586 = vadd.f32 %v5584, %v3189
    %v5587 = vadd.f32 %v5585, %v3189
    %v5588 = vmul.f32 %v5046, %v3192
    %v5589 = vmul.f32 %v5047, %v3192
    %v5590 = vmul.f32 %v5048, %v3195
    %v5591 = vmul.f32 %v5049, %v3195
    %v5592 = vadd.f32 %v5588, %v5590
    %v5593 = vadd.f32 %v5589, %v5591
    %v5594 = vmul.f32 %v5050, %v3200
    %v5595 = vmul.f32 %v5051, %v3200
    %v5596 = vadd.f32 %v5592, %v5594
    %v5597 = vadd.f32 %v5593, %v5595
    %v5598 = vmul.f32 %v5052, %v3205
    %v5599 = vmul.f32 %v5053, %v3205
    %v5600 = vadd.f32 %v5596, %v5598
    %v5601 = vadd.f32 %v5597, %v5599
    %v5602 = vadd.f32 %v5600, %v3210
    %v5603 = vadd.f32 %v5601, %v3210
    %v5604 = vmul.f32 %v5046, %v3213
    %v5605 = vmul.f32 %v5047, %v3213
    %v5606 = vmul.f32 %v5048, %v3216
    %v5607 = vmul.f32 %v5049, %v3216
    %v5608 = vadd.f32 %v5604, %v5606
    %v5609 = vadd.f32 %v5605, %v5607
    %v5610 = vmul.f32 %v5050, %v3221
    %v5611 = vmul.f32 %v5051, %v3221
    %v5612 = vadd.f32 %v5608, %v5610
    %v5613 = vadd.f32 %v5609, %v5611
    %v5614 = vmul.f32 %v5052, %v3226
    %v5615 = vmul.f32 %v5053, %v3226
    %v5616 = vadd.f32 %v5612, %v5614
    %v5617 = vadd.f32 %v5613, %v5615
    %v5618 = vadd.f32 %v5616, %v3231
    %v5619 = vadd.f32 %v5617, %v3231
    %v5620 = vadd.f32 %v5263, %v5570
    %v5621 = vadd.f32 %v5265, %v5571
    %v5622 = vadd.f32 %v5304, %v5586
    %v5623 = vadd.f32 %v5306, %v5587
    %v5624 = vadd.f32 %v5345, %v5602
    %v5625 = vadd.f32 %v5347, %v5603
    %v5626 = vadd.f32 %v5386, %v5618
    %v5627 = vadd.f32 %v5388, %v5619
    %vm5628 = vcmp.ge.f32.partialorder %v5620, 0.0
    %vm5629 = vcmp.ge.f32.partialorder %v5621, 0.0
    %vm5630 = vcmp.ge.f32.partialorder %v5622, 0.0
    %vm5631 = vcmp.ge.f32.partialorder %v5623, 0.0
    %vm5632 = vcmp.ge.f32.partialorder %v5624, 0.0
    %vm5633 = vcmp.ge.f32.partialorder %v5625, 0.0
    %vm5634 = vcmp.ge.f32.partialorder %v5626, 0.0
    %vm5635 = vcmp.ge.f32.partialorder %v5627, 0.0
    %v5636 = vmul.f32 %v5620, 0.25
    %v5637 = vmul.f32 %v5621, 0.25
    %v5638 = vmul.f32 %v5622, 0.25
    %v5639 = vmul.f32 %v5623, 0.25
    %v5640 = vmul.f32 %v5624, 0.25
    %v5641 = vmul.f32 %v5625, 0.25
    %v5642 = vmul.f32 %v5626, 0.25
    %v5643 = vmul.f32 %v5627, 0.25
    %v5644 = vsel %vm5628, %v5620, %v5636
    %v5645 = vsel %vm5629, %v5621, %v5637
    %v5646 = vsel %vm5630, %v5622, %v5638
    %v5647 = vsel %vm5631, %v5623, %v5639
    %v5648 = vsel %vm5632, %v5624, %v5640
    %v5649 = vsel %vm5633, %v5625, %v5641
    %v5650 = vsel %vm5634, %v5626, %v5642
    %v5651 = vsel %vm5635, %v5627, %v5643
    %v5652 = vmul.f32 %v5046, %v3266
    %v5653 = vmul.f32 %v5047, %v3266
    %v5654 = vmul.f32 %v5048, %v3269
    %v5655 = vmul.f32 %v5049, %v3269
    %v5656 = vadd.f32 %v5652, %v5654
    %v5657 = vadd.f32 %v5653, %v5655
    %v5658 = vmul.f32 %v5050, %v3274
    %v5659 = vmul.f32 %v5051, %v3274
    %v5660 = vadd.f32 %v5656, %v5658
    %v5661 = vadd.f32 %v5657, %v5659
    %v5662 = vmul.f32 %v5052, %v3279
    %v5663 = vmul.f32 %v5053, %v3279
    %v5664 = vadd.f32 %v5660, %v5662
    %v5665 = vadd.f32 %v5661, %v5663
    %v5666 = vadd.f32 %v5664, %v3284
    %v5667 = vadd.f32 %v5665, %v3284
    %v5668 = vmul.f32 %v5046, %v3287
    %v5669 = vmul.f32 %v5047, %v3287
    %v5670 = vmul.f32 %v5048, %v3290
    %v5671 = vmul.f32 %v5049, %v3290
    %v5672 = vadd.f32 %v5668, %v5670
    %v5673 = vadd.f32 %v5669, %v5671
    %v5674 = vmul.f32 %v5050, %v3295
    %v5675 = vmul.f32 %v5051, %v3295
    %v5676 = vadd.f32 %v5672, %v5674
    %v5677 = vadd.f32 %v5673, %v5675
    %v5678 = vmul.f32 %v5052, %v3300
    %v5679 = vmul.f32 %v5053, %v3300
    %v5680 = vadd.f32 %v5676, %v5678
    %v5681 = vadd.f32 %v5677, %v5679
    %v5682 = vadd.f32 %v5680, %v3305
    %v5683 = vadd.f32 %v5681, %v3305
    %v5684 = vmul.f32 %v5046, %v3308
    %v5685 = vmul.f32 %v5047, %v3308
    %v5686 = vmul.f32 %v5048, %v3311
    %v5687 = vmul.f32 %v5049, %v3311
    %v5688 = vadd.f32 %v5684, %v5686
    %v5689 = vadd.f32 %v5685, %v5687
    %v5690 = vmul.f32 %v5050, %v3316
    %v5691 = vmul.f32 %v5051, %v3316
    %v5692 = vadd.f32 %v5688, %v5690
    %v5693 = vadd.f32 %v5689, %v5691
    %v5694 = vmul.f32 %v5052, %v3321
    %v5695 = vmul.f32 %v5053, %v3321
    %v5696 = vadd.f32 %v5692, %v5694
    %v5697 = vadd.f32 %v5693, %v5695
    %v5698 = vadd.f32 %v5696, %v3326
    %v5699 = vadd.f32 %v5697, %v3326
    %v5700 = vmul.f32 %v5046, %v3329
    %v5701 = vmul.f32 %v5047, %v3329
    %v5702 = vmul.f32 %v5048, %v3332
    %v5703 = vmul.f32 %v5049, %v3332
    %v5704 = vadd.f32 %v5700, %v5702
    %v5705 = vadd.f32 %v5701, %v5703
    %v5706 = vmul.f32 %v5050, %v3337
    %v5707 = vmul.f32 %v5051, %v3337
    %v5708 = vadd.f32 %v5704, %v5706
    %v5709 = vadd.f32 %v5705, %v5707
    %v5710 = vmul.f32 %v5052, %v3342
    %v5711 = vmul.f32 %v5053, %v3342
    %v5712 = vadd.f32 %v5708, %v5710
    %v5713 = vadd.f32 %v5709, %v5711
    %v5714 = vadd.f32 %v5712, %v3347
    %v5715 = vadd.f32 %v5713, %v3347
    %v5716 = vadd.f32 %v5427, %v5666
    %v5717 = vadd.f32 %v5429, %v5667
    %v5718 = vadd.f32 %v5468, %v5682
    %v5719 = vadd.f32 %v5470, %v5683
    %v5720 = vadd.f32 %v5509, %v5698
    %v5721 = vadd.f32 %v5511, %v5699
    %v5722 = vadd.f32 %v5550, %v5714
    %v5723 = vadd.f32 %v5552, %v5715
    %vm5724 = vcmp.ge.f32.partialorder %v5716, 0.0
    %vm5725 = vcmp.ge.f32.partialorder %v5717, 0.0
    %vm5726 = vcmp.ge.f32.partialorder %v5718, 0.0
    %vm5727 = vcmp.ge.f32.partialorder %v5719, 0.0
    %vm5728 = vcmp.ge.f32.partialorder %v5720, 0.0
    %vm5729 = vcmp.ge.f32.partialorder %v5721, 0.0
    %vm5730 = vcmp.ge.f32.partialorder %v5722, 0.0
    %vm5731 = vcmp.ge.f32.partialorder %v5723, 0.0
    %v5732 = vmul.f32 %v5716, 0.25
    %v5733 = vmul.f32 %v5717, 0.25
    %v5734 = vmul.f32 %v5718, 0.25
    %v5735 = vmul.f32 %v5719, 0.25
    %v5736 = vmul.f32 %v5720, 0.25
    %v5737 = vmul.f32 %v5721, 0.25
    %v5738 = vmul.f32 %v5722, 0.25
    %v5739 = vmul.f32 %v5723, 0.25
    %v5740 = vsel %vm5724, %v5716, %v5732
    %v5741 = vsel %vm5725, %v5717, %v5733
    %v5742 = vsel %vm5726, %v5718, %v5734
    %v5743 = vsel %vm5727, %v5719, %v5735
    %v5744 = vsel %vm5728, %v5720, %v5736
    %v5745 = vsel %vm5729, %v5721, %v5737
    %v5746 = vsel %vm5730, %v5722, %v5738
    %v5747 = vsel %vm5731, %v5723, %v5739
    %v5748 = vadd.f32 %v5644, %v5740
    %v5749 = vadd.f32 %v5645, %v5741
    %v5750 = vadd.f32 %v5646, %v5742
    %v5751 = vadd.f32 %v5647, %v5743
    %v5752 = vadd.f32 %v5648, %v5744
    %v5753 = vadd.f32 %v5649, %v5745
    %v5754 = vadd.f32 %v5650, %v5746
    %v5755 = vadd.f32 %v5651, %v5747
    %v5756 = vadd.f32 %v5748, %v5046
    %v5757 = vadd.f32 %v5749, %v5047
    %v5758 = vadd.f32 %v5750, %v5048
    %v5759 = vadd.f32 %v5751, %v5049
    %v5760 = vadd.f32 %v5752, %v5050
    %v5761 = vadd.f32 %v5753, %v5051
    %v5762 = vadd.f32 %v5754, %v5052
    %v5763 = vadd.f32 %v5755, %v5053
    %v5764 = vmul.f32 %v5756, %v3398
    %v5765 = vmul.f32 %v5757, %v3398
    %v5766 = vmul.f32 %v5758, %v3401
    %v5767 = vmul.f32 %v5759, %v3401
    %v5768 = vadd.f32 %v5764, %v5766
    %v5769 = vadd.f32 %v5765, %v5767
    %v5770 = vmul.f32 %v5760, %v3406
    %v5771 = vmul.f32 %v5761, %v3406
    %v5772 = vadd.f32 %v5768, %v5770
    %v5773 = vadd.f32 %v5769, %v5771
    %v5774 = vmul.f32 %v5762, %v3411
    %v5775 = vmul.f32 %v5763, %v3411
    %v5776 = vadd.f32 %v5772, %v5774
    %v5777 = vadd.f32 %v5773, %v5775
    %v5778 = vadd.f32 %v5776, %v3416
    %v5779 = vadd.f32 %v5777, %v3416
    %v5780 = vmul.f32 %v5756, %v3419
    %v5781 = vmul.f32 %v5757, %v3419
    %v5782 = vmul.f32 %v5758, %v3422
    %v5783 = vmul.f32 %v5759, %v3422
    %v5784 = vadd.f32 %v5780, %v5782
    %v5785 = vadd.f32 %v5781, %v5783
    %v5786 = vmul.f32 %v5760, %v3427
    %v5787 = vmul.f32 %v5761, %v3427
    %v5788 = vadd.f32 %v5784, %v5786
    %v5789 = vadd.f32 %v5785, %v5787
    %v5790 = vmul.f32 %v5762, %v3432
    %v5791 = vmul.f32 %v5763, %v3432
    %v5792 = vadd.f32 %v5788, %v5790
    %v5793 = vadd.f32 %v5789, %v5791
    %v5794 = vadd.f32 %v5792, %v3437
    %v5795 = vadd.f32 %v5793, %v3437
    %v5796 = vmul.f32 %v5756, %v3440
    %v5797 = vmul.f32 %v5757, %v3440
    %v5798 = vmul.f32 %v5758, %v3443
    %v5799 = vmul.f32 %v5759, %v3443
    %v5800 = vadd.f32 %v5796, %v5798
    %v5801 = vadd.f32 %v5797, %v5799
    %v5802 = vmul.f32 %v5760, %v3448
    %v5803 = vmul.f32 %v5761, %v3448
    %v5804 = vadd.f32 %v5800, %v5802
    %v5805 = vadd.f32 %v5801, %v5803
    %v5806 = vmul.f32 %v5762, %v3453
    %v5807 = vmul.f32 %v5763, %v3453
    %v5808 = vadd.f32 %v5804, %v5806
    %v5809 = vadd.f32 %v5805, %v5807
    %v5810 = vadd.f32 %v5808, %v3458
    %v5811 = vadd.f32 %v5809, %v3458
    %v5812 = vmul.f32 %v5756, %v3461
    %v5813 = vmul.f32 %v5757, %v3461
    %v5814 = vmul.f32 %v5758, %v3464
    %v5815 = vmul.f32 %v5759, %v3464
    %v5816 = vadd.f32 %v5812, %v5814
    %v5817 = vadd.f32 %v5813, %v5815
    %v5818 = vmul.f32 %v5760, %v3469
    %v5819 = vmul.f32 %v5761, %v3469
    %v5820 = vadd.f32 %v5816, %v5818
    %v5821 = vadd.f32 %v5817, %v5819
    %v5822 = vmul.f32 %v5762, %v3474
    %v5823 = vmul.f32 %v5763, %v3474
    %v5824 = vadd.f32 %v5820, %v5822
    %v5825 = vadd.f32 %v5821, %v5823
    %v5826 = vadd.f32 %v5824, %v3479
    %v5827 = vadd.f32 %v5825, %v3479
    %v5828 = vadd.f32 %v5778, %v5046
    %v5829 = vadd.f32 %v5779, %v5047
    %v5830 = vadd.f32 %v5794, %v5048
    %v5831 = vadd.f32 %v5795, %v5049
    %v5832 = vadd.f32 %v5810, %v5050
    %v5833 = vadd.f32 %v5811, %v5051
    %v5834 = vadd.f32 %v5826, %v5052
    %v5835 = vadd.f32 %v5827, %v5053
    %v5836 = vmul.f32 %v5828, %v626
    %v5837 = vmul.f32 %v5829, %v626
    %v5838 = vmul.f32 %v5830, %v628
    %v5839 = vmul.f32 %v5831, %v628
    %v5840 = vadd.f32 %v5836, %v5838
    %v5841 = vadd.f32 %v5837, %v5839
    %v5842 = vmul.f32 %v5832, %v634
    %v5843 = vmul.f32 %v5833, %v634
    %v5844 = vadd.f32 %v5840, %v5842
    %v5845 = vadd.f32 %v5841, %v5843
    %v5846 = vmul.f32 %v5834, %v637
    %v5847 = vmul.f32 %v5835, %v637
    %v5848 = vadd.f32 %v5844, %v5846
    %v5849 = vadd.f32 %v5845, %v5847
    %v5850 = vadd.f32 %v5848, %v643
    %v5851 = vadd.f32 %v5849, %v643
    %v5852 = vmul.f32 %v5828, %v645
    %v5853 = vmul.f32 %v5829, %v645
    %v5854 = vmul.f32 %v5830, %v647
    %v5855 = vmul.f32 %v5831, %v647
    %v5856 = vadd.f32 %v5852, %v5854
    %v5857 = vadd.f32 %v5853, %v5855
    %v5858 = vmul.f32 %v5832, %v650
    %v5859 = vmul.f32 %v5833, %v650
    %v5860 = vadd.f32 %v5856, %v5858
    %v5861 = vadd.f32 %v5857, %v5859
    %v5862 = vmul.f32 %v5834, %v653
    %v5863 = vmul.f32 %v5835, %v653
    %v5864 = vadd.f32 %v5860, %v5862
    %v5865 = vadd.f32 %v5861, %v5863
    %v5866 = vadd.f32 %v5864, %v656
    %v5867 = vadd.f32 %v5865, %v656
    %v5868 = vmul.f32 %v5828, %v658
    %v5869 = vmul.f32 %v5829, %v658
    %v5870 = vmul.f32 %v5830, %v660
    %v5871 = vmul.f32 %v5831, %v660
    %v5872 = vadd.f32 %v5868, %v5870
    %v5873 = vadd.f32 %v5869, %v5871
    %v5874 = vmul.f32 %v5832, %v663
    %v5875 = vmul.f32 %v5833, %v663
    %v5876 = vadd.f32 %v5872, %v5874
    %v5877 = vadd.f32 %v5873, %v5875
    %v5878 = vmul.f32 %v5834, %v666
    %v5879 = vmul.f32 %v5835, %v666
    %v5880 = vadd.f32 %v5876, %v5878
    %v5881 = vadd.f32 %v5877, %v5879
    %v5882 = vadd.f32 %v5880, %v669
    %v5883 = vadd.f32 %v5881, %v669
    %v5884 = vmul.f32 %v5828, %v671
    %v5885 = vmul.f32 %v5829, %v671
    %v5886 = vmul.f32 %v5830, %v673
    %v5887 = vmul.f32 %v5831, %v673
    %v5888 = vadd.f32 %v5884, %v5886
    %v5889 = vadd.f32 %v5885, %v5887
    %v5890 = vmul.f32 %v5832, %v676
    %v5891 = vmul.f32 %v5833, %v676
    %v5892 = vadd.f32 %v5888, %v5890
    %v5893 = vadd.f32 %v5889, %v5891
    %v5894 = vmul.f32 %v5834, %v679
    %v5895 = vmul.f32 %v5835, %v679
    %v5896 = vadd.f32 %v5892, %v5894
    %v5897 = vadd.f32 %v5893, %v5895
    %v5898 = vadd.f32 %v5896, %v682
    %v5899 = vadd.f32 %v5897, %v682
    %v5900 = vcombine.high %v624, %v624
    %v5902 = vunpack.c.l.s4 1983009808
    %v5903 = vunpack.c.0.s8 %v5902
    %v5904 = vlaneseq
    %v5905 = vshrl.u32 %v5904, 7
    %v5906 = vsub.s32 %v5903, %v5905
    %v5907 = vrot.slane %v624, %v5906
    %v5909 = vunpack.c.l.s4 1983009808
    %v5910 = vunpack.c.0.s8 %v5909
    %v5911 = vlaneseq
    %v5912 = vshrl.u32 %v5911, 7
    %v5913 = vsub.s32 %v5910, %v5912
    %v5914 = vrot.slane %v5900, %v5913
    %v5915 = vcombine.high %v5907, %v5907
    %v5916 = vcombine.high %v5914, %v5914
    %v5917 = vcombine.high %v625, %v625
    %v5919 = vunpack.c.l.s4 1983009808
    %v5920 = vunpack.c.0.s8 %v5919
    %v5921 = vlaneseq
    %v5922 = vshrl.u32 %v5921, 7
    %v5923 = vsub.s32 %v5920, %v5922
    %v5924 = vrot.slane %v625, %v5923
    %v5926 = vunpack.c.l.s4 1983009808
    %v5927 = vunpack.c.0.s8 %v5926
    %v5928 = vlaneseq
    %v5929 = vshrl.u32 %v5928, 7
    %v5930 = vsub.s32 %v5927, %v5929
    %v5931 = vrot.slane %v5917, %v5930
    %v5932 = vcombine.high %v5924, %v5924
    %v5933 = vcombine.high %v5931, %v5931
    %v5942 = vadd.f32 %v5850, %v5907
    %v5943 = vadd.f32 %v5851, %v5915
    %v5944 = vadd.f32 %v5866, %v5914
    %v5945 = vadd.f32 %v5867, %v5916
    %v5946 = vadd.f32 %v5882, %v5924
    %v5947 = vadd.f32 %v5883, %v5932
    %v5948 = vadd.f32 %v5898, %v5931
    %v5949 = vadd.f32 %v5899, %v5933
    %v5958 = vcombine.low %v5942, %v5943
    %v5959 = vcombine.low %v5944, %v5945
    %v5961 = vunpack.c.l.s4 1983009808
    %v5962 = vunpack.c.0.s8 %v5961
    %v5963 = vlaneseq
    %v5964 = vshrl.u32 %v5963, 7
    %v5965 = vsub.s32 %v5962, %v5964
    %v5966 = vrot.slane %v5958, %v5965
    %v5968 = vunpack.c.l.s4 1983009808
    %v5969 = vunpack.c.0.s8 %v5968
    %v5970 = vlaneseq
    %v5971 = vshrl.u32 %v5970, 7
    %v5972 = vsub.s32 %v5969, %v5971
    %v5973 = vrot.slane %v5959, %v5972
    %v5974 = vcombine.low %v5966, %v5973
    %v5975 = vcombine.low %v5946, %v5947
    %v5976 = vcombine.low %v5948, %v5949
    %v5978 = vunpack.c.l.s4 1983009808
    %v5979 = vunpack.c.0.s8 %v5978
    %v5980 = vlaneseq
    %v5981 = vshrl.u32 %v5980, 7
    %v5982 = vsub.s32 %v5979, %v5981
    %v5983 = vrot.slane %v5975, %v5982
    %v5985 = vunpack.c.l.s4 1983009808
    %v5986 = vunpack.c.0.s8 %v5985
    %v5987 = vlaneseq
    %v5988 = vshrl.u32 %v5987, 7
    %v5989 = vsub.s32 %v5986, %v5988
    %v5990 = vrot.slane %v5976, %v5989
    %v5991 = vcombine.low %v5983, %v5990
    %5994 = vst [vmem:[%s11] sm:$0xff] %v5974
    %5995 = vst [vmem:[%s11 + $0x8] sm:$0xff] %v5991
    // Predicated region
    $region86: #{fin_forward.1} parent=1 // pred_check
      _
    $region87: #{fin_forward.1} parent=1 // pred_check_branch
      %5997 = sbr.rel (0) target = $region89
    $region88: #{fin_forward.1} parent=1 // pred_region
      _
    $region89: #{fin_forward.1} parent=1 // pred_fallthru
      _
    // Predicated region
    $region90: #{fin_forward.1} parent=1 // pred_check
      _
    $region91: #{fin_forward.1} parent=1 // pred_check_branch
      %5999 = sbr.rel (0) target = $region93
    $region92: #{fin_forward.1} parent=1 // pred_region
      _
    $region93: #{fin_forward.1} parent=1 // pred_fallthru
      _
    %6000 = vsyncpa [#allocation3], 1
    %6001 = vsyncpa [#allocation6], 1
    %6002 = vsyncpa [#allocation4], 1
    %6003 = vsyncpa [#allocation9], 1
    %6004 = vsyncpa [#allocation12], 1
    %6005 = vsyncpa [#allocation15], 1
    %6006 = vsyncpa [#allocation18], 1

</llo_original>
